<compile_context>
chip_gen: v6e
topology: v6e:2x2x1
jax: 0.10.0
libtpu: 0.0.40
codegen_flags: <defaults>
</compile_context>

<pallas_src>
import jax
import jax.numpy as jnp
from jax.experimental import pallas as pl
from jax.experimental.pallas import tpu as pltpu  # noqa: F401  (kept for TPU backend)

# ----------------------------- configuration --------------------------------
X_H = X_W = 16
X_DIM = X_H * X_W                 # 256
H_DIM = 32
Z_DIM = 8
U_DIM = 3                          # (angle, tx, ty)
MB = 2                             # batch size (mb_size)
NC = 1
NUM_PARTS_H = NUM_PARTS_W = 2
NUM_PARTS = NUM_PARTS_H * NUM_PARTS_W
PART_H = PART_W = 8
PART_DIM = PART_H * PART_W
U_LARGE = U_DIM * NUM_PARTS        # 12
HEAD_W = 2 * U_DIM + 2 * U_LARGE   # 30 real head columns
HEAD_PAD = 32                      # padded head width
ENC_OUT = 128                      # packed small-output width (lane dense)


# ============================== Pallas kernel ================================

def _popvae_kernel(x_ref, w1_ref, w2_ref, wh_ref, consts_ref, eps_ref,
                   parts_ref, km_ref, enc_ref, xfin_ref, kmt_ref):
    """Whole POPVAE forward (minus the hoisted anchor-move) in one launch."""
    f32 = jnp.float32
    B = x_ref.shape[0]
    NP, H, W = parts_ref.shape
    HW = H * W
    LW = (W - 1).bit_length()      # log2(W)  -- H, W are powers of two (16)
    LHW = (HW - 1).bit_length()    # log2(HW)

    # ------------------ in-kernel constants (iota built) --------------------
    # normalized output-pixel coords repeated per part: (1, NP*HW)
    qq = jax.lax.broadcasted_iota(jnp.int32, (1, NP * HW), 1)
    pq = qq & (HW - 1)
    XN = ((2.0 * (pq & (W - 1)).astype(f32) + 1.0) / W) - 1.0
    YN = ((2.0 * (pq >> LW).astype(f32) + 1.0) / H) - 1.0
    # single-image versions: (1, HW)
    q1 = jax.lax.broadcasted_iota(jnp.int32, (1, HW), 1)
    xn = ((2.0 * (q1 & (W - 1)).astype(f32) + 1.0) / W) - 1.0
    yn = ((2.0 * (q1 >> LW).astype(f32) + 1.0) / H) - 1.0
    # source pixel index columns
    jcol = jax.lax.broadcasted_iota(jnp.int32, (W, 1), 0).astype(f32)
    icol = jax.lax.broadcasted_iota(jnp.int32, (H, 1), 0).astype(f32)
    # unflatten indicator matrices: (1, HW) row -> (H, W) image
    ii = jax.lax.broadcasted_iota(jnp.int32, (H, HW), 0)
    iq = jax.lax.broadcasted_iota(jnp.int32, (H, HW), 1)
    Pm = (ii == (iq >> LW)).astype(f32)                      # (H, HW)
    qj = jax.lax.broadcasted_iota(jnp.int32, (HW, W), 0)
    wj = jax.lax.broadcasted_iota(jnp.int32, (HW, W), 1)
    Qm = ((qj & (W - 1)) == wj).astype(f32)                  # (HW, W)
    # lane -> (part, pixel) selection matrices (3*NP, NP*HW):
    #   row 3n   picks the angle-slot of part n (used on cos(u)/sin(u)),
    #   row 3n+1 picks tx of part n, row 3n+2 picks ty of part n.
    krow = jax.lax.broadcasted_iota(jnp.int32, (3 * NP, NP * HW), 0)
    qsel = jax.lax.broadcasted_iota(jnp.int32, (3 * NP, NP * HW), 1)
    part = qsel >> LHW
    S_ang = (krow == 3 * part).astype(f32)
    S_tx = (krow == 3 * part + 1).astype(f32)
    S_ty = (krow == 3 * part + 2).astype(f32)

    def unflatten(row):                                      # (1,HW) -> (H,W)
        return jnp.dot(Pm * row, Qm, preferred_element_type=f32)

    def resample(img_hw, xs_pix, ys_pix):                    # -> (1,HW)
        # bilinear grid_sample, align_corners=False, padding_mode='zeros'
        wx = jnp.maximum(0.0, 1.0 - jnp.abs(xs_pix - jcol))  # (W, HW)
        wy = jnp.maximum(0.0, 1.0 - jnp.abs(ys_pix - icol))  # (H, HW)
        inner = jnp.dot(img_hw, wx, preferred_element_type=f32)   # (H, HW)
        return jnp.sum(wy * inner, axis=0, keepdims=True)         # (1, HW)

    # ------------------------------ encoder ---------------------------------
    x = x_ref[...]                                           # (B, 256)
    b1 = consts_ref[0:1, :]                                  # (1, 32)
    b2 = consts_ref[1:2, :]
    bh = consts_ref[2:3, :]
    bu2u = consts_ref[3:4, 0:U_DIM]                          # (1, 3)
    wr0 = consts_ref[4:5, 0:U_DIM]                           # u2u weight rows
    wr1 = consts_ref[5:6, 0:U_DIM]
    wr2 = consts_ref[6:7, 0:U_DIM]

    h1 = jnp.maximum(jnp.dot(x, w1_ref[...], preferred_element_type=f32) + b1, 0.0)
    h2 = jnp.maximum(jnp.dot(h1, w2_ref[...], preferred_element_type=f32) + b2, 0.0)
    heads = jnp.dot(h2, wh_ref[...], preferred_element_type=f32) + bh   # (B, 32)

    # global-transform distribution
    gmu = jnp.tanh(heads[:, 0:U_DIM])
    gv_pre = heads[:, U_DIM:2 * U_DIM]
    gvar = jnp.exp(jnp.where(gv_pre > -6.0, gv_pre, 6.0))    # F.threshold(x,-6, 6)
    gu = gmu + gvar * eps_ref[:, 0:U_DIM]                    # sample_u
    # u2u (3x3 Linear) as broadcast-multiply-add (no skinny matmul)
    gu2 = gu[:, 0:1] * wr0 + gu[:, 1:2] * wr1 + gu[:, 2:3] * wr2 + bu2u  # (B, 3)

    # per-part transform distribution
    umu = jnp.tanh(heads[:, 2 * U_DIM:2 * U_DIM + U_LARGE])
    uv_pre = heads[:, 2 * U_DIM + U_LARGE:2 * U_DIM + 2 * U_LARGE]
    uvar = jnp.exp(jnp.where(uv_pre > -6.0, uv_pre, -6.0))   # F.threshold(x,-6,-6)
    u = umu + uvar * eps_ref[:, U_DIM:U_DIM + U_LARGE]       # (B, 12)

    # packed small outputs (single lane-dense 128-wide store)
    pad = jnp.zeros((B, ENC_OUT - (4 * U_DIM + 3 * U_LARGE)), f32)
    enc_ref[...] = jnp.concatenate([gmu, gvar, gu, gu2, umu, uvar, u, pad], axis=1)

    # ------------------- decode: resample coordinates -----------------------
    cos_u = jnp.cos(u)
    sin_u = jnp.sin(u)
    COS = jnp.dot(cos_u, S_ang, preferred_element_type=f32)  # (B, NP*HW)
    SIN = jnp.dot(sin_u, S_ang, preferred_element_type=f32)
    TXc = jnp.dot(u, S_tx, preferred_element_type=f32)
    TYc = jnp.dot(u, S_ty, preferred_element_type=f32)

    def to_px(v):
        return ((v + 1.0) * W - 1.0) * 0.5

    def to_py(v):
        return ((v + 1.0) * H - 1.0) * 0.5

    # per-part rotation+translation (theta = [[c,-s,tx],[s,c,ty]])
    xs_rot = to_px(COS * XN - SIN * YN + TXc)                # (B, NP*HW)
    ys_rot = to_py(SIN * XN + COS * YN + TYc)
    # kernel-map translation (theta_K = [I | t])
    xs_km = to_px(XN + TXc)
    ys_km = to_py(YN + TYc)
    # global transform from gu2 = (angle, tx, ty)
    cg = jnp.cos(gu2[:, 0:1])
    sg = jnp.sin(gu2[:, 0:1])
    xs_g = to_px(cg * xn - sg * yn + gu2[:, 1:2])            # (B, HW)
    ys_g = to_py(sg * xn + cg * yn + gu2[:, 2:3])

    # ------------------------------ decode -----------------------------------
    for b in range(B):
        num = None
        den = None
        for n in range(NP):
            c0, c1 = n * HW, (n + 1) * HW
            # translate the kernel map
            kt = resample(km_ref[b, n], xs_km[b:b + 1, c0:c1], ys_km[b:b + 1, c0:c1])
            kmt_ref[b:b + 1, c0:c1] = kt                     # direct lane-dense store
            # rotate + translate the (precomputed) anchor-moved part
            xp = resample(parts_ref[n], xs_rot[b:b + 1, c0:c1], ys_rot[b:b + 1, c0:c1])
            num = xp * kt if num is None else num + xp * kt
            den = kt if den is None else den + kt
        den = jnp.where(den == 0.0, 1.0, den)                # y[y==0] = 1
        x_comb = num / den                                   # (1, HW)
        xfin_ref[b:b + 1, :] = resample(unflatten(x_comb),
                                        xs_g[b:b + 1, :], ys_g[b:b + 1, :])


# ============================== kernel wrapper ===============================

def popvae_pallas(x_flat, params, eps, parts_anchor, km):
    """x_flat (B,256), eps (B,16), parts_anchor (NP,16,16), km (B,NP,16,16)."""
    B = x_flat.shape[0]
    return pl.pallas_call(
        _popvae_kernel,
        out_shape=(
            jax.ShapeDtypeStruct((B, ENC_OUT), jnp.float32),            # packed enc
            jax.ShapeDtypeStruct((B, X_DIM), jnp.float32),              # x_final
            jax.ShapeDtypeStruct((B, NUM_PARTS * X_DIM), jnp.float32),  # KM_t
        ),
    )(x_flat, params["w1"], params["w2"], params["wh"], params["consts"],
      eps, parts_anchor, km)


# ================================ JAX glue ===================================

def anchor_move(h, w, nph, npw):
    k = nph * npw
    x = (jnp.arange(npw, dtype=jnp.float32) * (w / npw) + w / npw / 2.0) / w - 0.5
    y = (jnp.arange(nph, dtype=jnp.float32) * (h / nph) + h / nph / 2.0) / h - 0.5
    xf = jnp.tile(x, nph)
    yf = jnp.repeat(y, npw)
    Wm = jnp.zeros((k, 2, 3), jnp.float32)
    Wm = Wm.at[:, 0, 0].set(1.0).at[:, 1, 1].set(1.0)
    Wm = Wm.at[:, 0, 2].set(xf).at[:, 1, 2].set(yf)
    return Wm


def rot_tr_matrix(u):
    c = jnp.cos(u[:, 0])
    s = jnp.sin(u[:, 0])
    rot = jnp.stack([jnp.stack([c, -s], axis=-1),
                     jnp.stack([s, c], axis=-1)], axis=1)               # (N,2,2)
    tr = u[:, 1:3].reshape(-1, 2, 1)
    return jnp.concatenate([rot, tr], axis=2)                           # (N,2,3)


def _grid_sample_jax(theta, imgs):
    """Plain-JAX bilinear grid_sample (align_corners=False, zero padding)."""
    N, H, W = imgs.shape
    jj = jnp.arange(W, dtype=jnp.float32)
    ii = jnp.arange(H, dtype=jnp.float32)
    xng = jnp.broadcast_to(((2.0 * jj + 1.0) / W - 1.0)[None, :], (H, W))
    yng = jnp.broadcast_to(((2.0 * ii + 1.0) / H - 1.0)[:, None], (H, W))
    t = theta.reshape(N, 6)
    xs = t[:, 0, None, None] * xng + t[:, 1, None, None] * yng + t[:, 2, None, None]
    ys = t[:, 3, None, None] * xng + t[:, 4, None, None] * yng + t[:, 5, None, None]
    xs = ((xs + 1.0) * W - 1.0) * 0.5
    ys = ((ys + 1.0) * H - 1.0) * 0.5
    wx = jnp.maximum(0.0, 1.0 - jnp.abs(xs[..., None] - jj))            # (N,H,W,Ws)
    wy = jnp.maximum(0.0, 1.0 - jnp.abs(ys[..., None] - ii))            # (N,H,W,Hs)
    return jnp.einsum('nabj,nabi,nij->nab', wx, wy, imgs)


def init_params(key):
    f32 = jnp.float32
    ks = jax.random.split(key, 12)

    def lin(k, din, dout, scale):
        return scale * jax.random.normal(k, (din, dout), f32)

    w1 = lin(ks[0], X_DIM, H_DIM, 0.05)
    b1 = 0.01 * jax.random.normal(ks[1], (H_DIM,), f32)
    w2 = lin(ks[2], H_DIM, H_DIM, 0.05)
    b2 = 0.01 * jax.random.normal(ks[3], (H_DIM,), f32)

    # fused head weight: columns = [h2gumu | h2guvar | h2umu(0) | h2uvar | pad]
    wgmu = lin(ks[4], H_DIM, U_DIM, 0.05)
    wgv = lin(ks[5], H_DIM, U_DIM, 0.01)
    wumu = jnp.zeros((H_DIM, U_LARGE), f32)                 # h2umu zero-init
    wuv = lin(ks[6], H_DIM, U_LARGE, 0.01)
    wh = jnp.concatenate(
        [wgmu, wgv, wumu, wuv, jnp.zeros((H_DIM, HEAD_PAD - HEAD_W), f32)], axis=1)
    bh = jnp.concatenate(
        [0.01 * jax.random.normal(ks[7], (2 * U_DIM,), f32),
         jnp.zeros((U_LARGE,), f32),                        # h2umu bias zero-init
         0.01 * jax.random.normal(ks[8], (U_LARGE,), f32)])

    wu2u = lin(ks[9], U_DIM, U_DIM, 0.1)
    bu2u = 0.01 * jax.random.normal(ks[10], (U_DIM,), f32)

    # packed scalar constants block (one operand instead of six)
    consts = jnp.zeros((8, HEAD_PAD), f32)
    consts = consts.at[0, :H_DIM].set(b1)
    consts = consts.at[1, :H_DIM].set(b2)
    consts = consts.at[2, :HEAD_W].set(bh)
    consts = consts.at[3, :U_DIM].set(bu2u)
    consts = consts.at[4:4 + U_DIM, :U_DIM].set(wu2u)

    wz = lin(ks[11], Z_DIM, NUM_PARTS * PART_DIM, 0.5)      # z2parts (no bias)
    return {"w1": w1, "w2": w2, "wh": wh, "consts": consts, "wz": wz}


def popvae_forward(params, inputs, KM_base, anchor_theta, noise_key):
    """Mirrors POPVAE.forward. inputs: (B, NC, H, W)."""
    B = inputs.shape[0]
    x_flat = inputs.reshape(B, X_DIM).astype(jnp.float32)
    eps = jax.random.normal(noise_key, (B, 16), jnp.float32)   # [eps_g(3)|eps_u(12)|pad]

    # --- input-independent anchor-move hoisted out of the kernel (plain JAX) ---
    parts = jax.nn.sigmoid(jnp.sum(params["wz"], axis=0))       # z2parts(ones)
    parts = parts.reshape(NUM_PARTS, PART_H, PART_W)
    pad_h1 = (X_H - PART_H) // 2
    pad_h2 = X_H - PART_H - pad_h1
    pad_w1 = (X_W - PART_W) // 2
    pad_w2 = X_W - PART_W - pad_w1
    # NOTE: replicates PyTorch F.pad arg order (last dim gets pad_h*, dim -2
    # gets pad_w*); symmetric here since PART_H == PART_W.
    parts_pad = jnp.pad(parts, ((0, 0), (pad_w1, pad_w2), (pad_h1, pad_h2)))
    parts_anchor = _grid_sample_jax(anchor_theta, parts_pad)    # (NP, 16, 16)

    km = KM_base[: B * NUM_PARTS].reshape(B, NUM_PARTS, X_H, X_W)

    enc, xfin, kmt = popvae_pallas(x_flat, params, eps, parts_anchor, km)

    gmu = enc[:, 0:3]
    gvar = enc[:, 3:6]
    gu = enc[:, 6:9]
    umu = enc[:, 12:24]
    uvar = enc[:, 24:36]
    u = enc[:, 36:48].reshape(B * NUM_PARTS, U_DIM)
    theta = rot_tr_matrix(u)                                    # (B*NP, 2, 3)

    x_final = xfin.reshape(B, 1, X_H, X_W)
    parts_moved = jnp.broadcast_to(parts_anchor[None], (B, NUM_PARTS, X_H, X_W))
    KM_t = kmt.reshape(B, NUM_PARTS, X_H, X_W)
    global_U = {"mu": gmu, "var": gvar, "u": gu}
    return (x_final, umu, uvar, u, global_U, parts_moved, KM_t, theta)


# =================================== main ====================================

if __name__ == "__main__":
    key = jax.random.PRNGKey(0)
    k_param, k_in, k_M, k_noise = jax.random.split(key, 4)

    params = init_params(k_param)
    inputs = jax.random.normal(k_in, (MB, NC, X_H, X_W), jnp.float32)
    # M from the constructor: (bsz*num_parts, H, W) "kernel" maps
    M_img = jax.random.uniform(k_M, (MB * NUM_PARTS, X_H, X_W), jnp.float32)

    # __init__-time precomputation: anchor placement + anchored kernel maps
    anchor_theta = anchor_move(X_H, X_W, NUM_PARTS_H, NUM_PARTS_W)      # (NP, 2, 3)
    anchor_rep = jnp.tile(anchor_theta, (MB, 1, 1))                     # (MB*NP, 2, 3)
    KM_base = _grid_sample_jax(anchor_rep, M_img)                       # self.M

    fwd = jax.jit(popvae_forward)
    outs = fwd(params, inputs, KM_base, anchor_theta, k_noise)
    outs = jax.block_until_ready(outs)

    x_final = outs[0]
    assert x_final.shape == (MB, 1, X_H, X_W)
    assert outs[1].shape == (MB, U_LARGE)                    # u_large_mu
    assert outs[3].shape == (MB * NUM_PARTS, U_DIM)          # u
    assert outs[5].shape == (MB, NUM_PARTS, X_H, X_W)        # parts (anchor-moved)
    assert outs[6].shape == (MB, NUM_PARTS, X_H, X_W)        # KM (translated)
    assert outs[7].shape == (MB * NUM_PARTS, 2, 3)           # theta
    assert bool(jnp.all(jnp.isfinite(x_final)))
    assert bool(jnp.all(jnp.isfinite(outs[6])))
    print("KERNEL_OK")
</pallas_src>

<mosaic_0001>
module attributes {stable_mosaic.version = 11 : i64} {
  func.func @_popvae_kernel(%arg0: memref<2x256xf32, #tpu.memory_space<vmem>>, %arg1: memref<256x32xf32, #tpu.memory_space<vmem>>, %arg2: memref<32x32xf32, #tpu.memory_space<vmem>>, %arg3: memref<32x32xf32, #tpu.memory_space<vmem>>, %arg4: memref<8x32xf32, #tpu.memory_space<vmem>>, %arg5: memref<2x16xf32, #tpu.memory_space<vmem>>, %arg6: memref<4x16x16xf32, #tpu.memory_space<vmem>>, %arg7: memref<2x4x16x16xf32, #tpu.memory_space<vmem>>, %arg8: memref<2x128xf32, #tpu.memory_space<vmem>>, %arg9: memref<2x256xf32, #tpu.memory_space<vmem>>, %arg10: memref<2x1024xf32, #tpu.memory_space<vmem>>) attributes {dimension_semantics = [], scalar_prefetch = 0 : i64, scratch_operands = 0 : i64, tpu.core_type = #tpu.core_type<tc>} {
    %0 = tpu.iota {dimensions = array<i32: 1>} : vector<1x1024xi32>
    %c255_i32 = arith.constant 255 : i32
    %1 = vector.broadcast %c255_i32 : i32 to vector<1x1024xi32>
    %2 = arith.andi %0, %1 : vector<1x1024xi32>
    %c15_i32 = arith.constant 15 : i32
    %3 = vector.broadcast %c15_i32 : i32 to vector<1x1024xi32>
    %4 = arith.andi %2, %3 : vector<1x1024xi32>
    %5 = arith.sitofp %4 : vector<1x1024xi32> to vector<1x1024xf32>
    %cst = arith.constant 2.000000e+00 : f32
    %6 = vector.broadcast %cst : f32 to vector<1x1024xf32>
    %7 = arith.mulf %6, %5 : vector<1x1024xf32>
    %cst_0 = arith.constant 1.000000e+00 : f32
    %8 = vector.broadcast %cst_0 : f32 to vector<1x1024xf32>
    %9 = arith.addf %7, %8 : vector<1x1024xf32>
    %cst_1 = arith.constant 1.600000e+01 : f32
    %10 = vector.broadcast %cst_1 : f32 to vector<1x1024xf32>
    %11 = arith.divf %9, %10 : vector<1x1024xf32>
    %cst_2 = arith.constant 1.000000e+00 : f32
    %12 = vector.broadcast %cst_2 : f32 to vector<1x1024xf32>
    %13 = arith.subf %11, %12 : vector<1x1024xf32>
    %c4_i32 = arith.constant 4 : i32
    %14 = vector.broadcast %c4_i32 : i32 to vector<1x1024xi32>
    %15 = arith.shrsi %2, %14 : vector<1x1024xi32>
    %16 = arith.sitofp %15 : vector<1x1024xi32> to vector<1x1024xf32>
    %cst_3 = arith.constant 2.000000e+00 : f32
    %17 = vector.broadcast %cst_3 : f32 to vector<1x1024xf32>
    %18 = arith.mulf %17, %16 : vector<1x1024xf32>
    %cst_4 = arith.constant 1.000000e+00 : f32
    %19 = vector.broadcast %cst_4 : f32 to vector<1x1024xf32>
    %20 = arith.addf %18, %19 : vector<1x1024xf32>
    %cst_5 = arith.constant 1.600000e+01 : f32
    %21 = vector.broadcast %cst_5 : f32 to vector<1x1024xf32>
    %22 = arith.divf %20, %21 : vector<1x1024xf32>
    %cst_6 = arith.constant 1.000000e+00 : f32
    %23 = vector.broadcast %cst_6 : f32 to vector<1x1024xf32>
    %24 = arith.subf %22, %23 : vector<1x1024xf32>
    %25 = tpu.iota {dimensions = array<i32: 1>} : vector<1x256xi32>
    %c15_i32_7 = arith.constant 15 : i32
    %26 = vector.broadcast %c15_i32_7 : i32 to vector<1x256xi32>
    %27 = arith.andi %25, %26 : vector<1x256xi32>
    %28 = arith.sitofp %27 : vector<1x256xi32> to vector<1x256xf32>
    %cst_8 = arith.constant 2.000000e+00 : f32
    %29 = vector.broadcast %cst_8 : f32 to vector<1x256xf32>
    %30 = arith.mulf %29, %28 : vector<1x256xf32>
    %cst_9 = arith.constant 1.000000e+00 : f32
    %31 = vector.broadcast %cst_9 : f32 to vector<1x256xf32>
    %32 = arith.addf %30, %31 : vector<1x256xf32>
    %cst_10 = arith.constant 1.600000e+01 : f32
    %33 = vector.broadcast %cst_10 : f32 to vector<1x256xf32>
    %34 = arith.divf %32, %33 : vector<1x256xf32>
    %cst_11 = arith.constant 1.000000e+00 : f32
    %35 = vector.broadcast %cst_11 : f32 to vector<1x256xf32>
    %36 = arith.subf %34, %35 : vector<1x256xf32>
    %c4_i32_12 = arith.constant 4 : i32
    %37 = vector.broadcast %c4_i32_12 : i32 to vector<1x256xi32>
    %38 = arith.shrsi %25, %37 : vector<1x256xi32>
    %39 = arith.sitofp %38 : vector<1x256xi32> to vector<1x256xf32>
    %cst_13 = arith.constant 2.000000e+00 : f32
    %40 = vector.broadcast %cst_13 : f32 to vector<1x256xf32>
    %41 = arith.mulf %40, %39 : vector<1x256xf32>
    %cst_14 = arith.constant 1.000000e+00 : f32
    %42 = vector.broadcast %cst_14 : f32 to vector<1x256xf32>
    %43 = arith.addf %41, %42 : vector<1x256xf32>
    %cst_15 = arith.constant 1.600000e+01 : f32
    %44 = vector.broadcast %cst_15 : f32 to vector<1x256xf32>
    %45 = arith.divf %43, %44 : vector<1x256xf32>
    %cst_16 = arith.constant 1.000000e+00 : f32
    %46 = vector.broadcast %cst_16 : f32 to vector<1x256xf32>
    %47 = arith.subf %45, %46 : vector<1x256xf32>
    %48 = tpu.iota {dimensions = array<i32: 0>} : vector<16x1xi32>
    %49 = arith.sitofp %48 : vector<16x1xi32> to vector<16x1xf32>
    %50 = tpu.iota {dimensions = array<i32: 0>} : vector<16x1xi32>
    %51 = arith.sitofp %50 : vector<16x1xi32> to vector<16x1xf32>
    %52 = tpu.iota {dimensions = array<i32: 0>} : vector<16x256xi32>
    %53 = tpu.iota {dimensions = array<i32: 1>} : vector<16x256xi32>
    %c4_i32_17 = arith.constant 4 : i32
    %54 = vector.broadcast %c4_i32_17 : i32 to vector<16x256xi32>
    %55 = arith.shrsi %53, %54 : vector<16x256xi32>
    %56 = arith.cmpi eq, %52, %55 : vector<16x256xi32>
    %57 = arith.extui %56 : vector<16x256xi1> to vector<16x256xi32>
    %58 = arith.sitofp %57 : vector<16x256xi32> to vector<16x256xf32>
    %59 = tpu.iota {dimensions = array<i32: 0>} : vector<256x16xi32>
    %60 = tpu.iota {dimensions = array<i32: 1>} : vector<256x16xi32>
    %c15_i32_18 = arith.constant 15 : i32
    %61 = vector.broadcast %c15_i32_18 : i32 to vector<256x16xi32>
    %62 = arith.andi %59, %61 : vector<256x16xi32>
    %63 = arith.cmpi eq, %62, %60 : vector<256x16xi32>
    %64 = arith.extui %63 : vector<256x16xi1> to vector<256x16xi32>
    %65 = arith.sitofp %64 : vector<256x16xi32> to vector<256x16xf32>
    %66 = tpu.iota {dimensions = array<i32: 0>} : vector<12x1024xi32>
    %67 = tpu.iota {dimensions = array<i32: 1>} : vector<12x1024xi32>
    %c8_i32 = arith.constant 8 : i32
    %68 = vector.broadcast %c8_i32 : i32 to vector<12x1024xi32>
    %69 = arith.shrsi %67, %68 : vector<12x1024xi32>
    %c3_i32 = arith.constant 3 : i32
    %70 = vector.broadcast %c3_i32 : i32 to vector<12x1024xi32>
    %71 = arith.muli %70, %69 : vector<12x1024xi32>
    %72 = arith.cmpi eq, %66, %71 : vector<12x1024xi32>
    %73 = arith.extui %72 : vector<12x1024xi1> to vector<12x1024xi32>
    %74 = arith.sitofp %73 : vector<12x1024xi32> to vector<12x1024xf32>
    %c3_i32_19 = arith.constant 3 : i32
    %75 = vector.broadcast %c3_i32_19 : i32 to vector<12x1024xi32>
    %76 = arith.muli %75, %69 : vector<12x1024xi32>
    %c1_i32 = arith.constant 1 : i32
    %77 = vector.broadcast %c1_i32 : i32 to vector<12x1024xi32>
    %78 = arith.addi %76, %77 : vector<12x1024xi32>
    %79 = arith.cmpi eq, %66, %78 : vector<12x1024xi32>
    %80 = arith.extui %79 : vector<12x1024xi1> to vector<12x1024xi32>
    %81 = arith.sitofp %80 : vector<12x1024xi32> to vector<12x1024xf32>
    %c3_i32_20 = arith.constant 3 : i32
    %82 = vector.broadcast %c3_i32_20 : i32 to vector<12x1024xi32>
    %83 = arith.muli %82, %69 : vector<12x1024xi32>
    %c2_i32 = arith.constant 2 : i32
    %84 = vector.broadcast %c2_i32 : i32 to vector<12x1024xi32>
    %85 = arith.addi %83, %84 : vector<12x1024xi32>
    %86 = arith.cmpi eq, %66, %85 : vector<12x1024xi32>
    %87 = arith.extui %86 : vector<12x1024xi1> to vector<12x1024xi32>
    %88 = arith.sitofp %87 : vector<12x1024xi32> to vector<12x1024xf32>
    %c0 = arith.constant 0 : index
    %c0_21 = arith.constant 0 : index
    %89 = vector.load %arg0[%c0, %c0_21] : memref<2x256xf32, #tpu.memory_space<vmem>>, vector<2x256xf32>
    %c0_22 = arith.constant 0 : index
    %c0_23 = arith.constant 0 : index
    %90 = vector.load %arg4[%c0_22, %c0_23] : memref<8x32xf32, #tpu.memory_space<vmem>>, vector<1x32xf32>
    %c1 = arith.constant 1 : index
    %c0_24 = arith.constant 0 : index
    %91 = vector.load %arg4[%c1, %c0_24] : memref<8x32xf32, #tpu.memory_space<vmem>>, vector<1x32xf32>
    %c2 = arith.constant 2 : index
    %c0_25 = arith.constant 0 : index
    %92 = vector.load %arg4[%c2, %c0_25] : memref<8x32xf32, #tpu.memory_space<vmem>>, vector<1x32xf32>
    %c3 = arith.constant 3 : index
    %c0_26 = arith.constant 0 : index
    %93 = vector.load %arg4[%c3, %c0_26] : memref<8x32xf32, #tpu.memory_space<vmem>>, vector<1x3xf32>
    %c4 = arith.constant 4 : index
    %c0_27 = arith.constant 0 : index
    %94 = vector.load %arg4[%c4, %c0_27] : memref<8x32xf32, #tpu.memory_space<vmem>>, vector<1x3xf32>
    %c5 = arith.constant 5 : index
    %c0_28 = arith.constant 0 : index
    %95 = vector.load %arg4[%c5, %c0_28] : memref<8x32xf32, #tpu.memory_space<vmem>>, vector<1x3xf32>
    %c6 = arith.constant 6 : index
    %c0_29 = arith.constant 0 : index
    %96 = vector.load %arg4[%c6, %c0_29] : memref<8x32xf32, #tpu.memory_space<vmem>>, vector<1x3xf32>
    %c0_30 = arith.constant 0 : index
    %c0_31 = arith.constant 0 : index
    %97 = vector.load %arg1[%c0_30, %c0_31] : memref<256x32xf32, #tpu.memory_space<vmem>>, vector<256x32xf32>
    %cst_32 = arith.constant dense<0.000000e+00> : vector<2x32xf32>
    %98 = tpu.matmul %89, %97, %cst_32 {dimension_numbers = #tpu.dot_dimension_numbers<[1], [0], [0], [1], [0, 0, 1, 1], [], []>} : vector<2x256xf32>, vector<256x32xf32>, vector<2x32xf32> -> vector<2x32xf32>
    %99 = vector.broadcast %90 : vector<1x32xf32> to vector<2x32xf32>
    %100 = arith.addf %98, %99 : vector<2x32xf32>
    %cst_33 = arith.constant 0.000000e+00 : f32
    %101 = vector.broadcast %cst_33 : f32 to vector<2x32xf32>
    %102 = arith.maximumf %100, %101 : vector<2x32xf32>
    %c0_34 = arith.constant 0 : index
    %c0_35 = arith.constant 0 : index
    %103 = vector.load %arg2[%c0_34, %c0_35] : memref<32x32xf32, #tpu.memory_space<vmem>>, vector<32x32xf32>
    %cst_36 = arith.constant dense<0.000000e+00> : vector<2x32xf32>
    %104 = tpu.matmul %102, %103, %cst_36 {dimension_numbers = #tpu.dot_dimension_numbers<[1], [0], [0], [1], [0, 0, 1, 1], [], []>} : vector<2x32xf32>, vector<32x32xf32>, vector<2x32xf32> -> vector<2x32xf32>
    %105 = vector.broadcast %91 : vector<1x32xf32> to vector<2x32xf32>
    %106 = arith.addf %104, %105 : vector<2x32xf32>
    %cst_37 = arith.constant 0.000000e+00 : f32
    %107 = vector.broadcast %cst_37 : f32 to vector<2x32xf32>
    %108 = arith.maximumf %106, %107 : vector<2x32xf32>
    %c0_38 = arith.constant 0 : index
    %c0_39 = arith.constant 0 : index
    %109 = vector.load %arg3[%c0_38, %c0_39] : memref<32x32xf32, #tpu.memory_space<vmem>>, vector<32x32xf32>
    %cst_40 = arith.constant dense<0.000000e+00> : vector<2x32xf32>
    %110 = tpu.matmul %108, %109, %cst_40 {dimension_numbers = #tpu.dot_dimension_numbers<[1], [0], [0], [1], [0, 0, 1, 1], [], []>} : vector<2x32xf32>, vector<32x32xf32>, vector<2x32xf32> -> vector<2x32xf32>
    %111 = vector.broadcast %92 : vector<1x32xf32> to vector<2x32xf32>
    %112 = arith.addf %110, %111 : vector<2x32xf32>
    %113 = vector.extract_strided_slice %112 {offsets = [0, 0], sizes = [2, 3], strides = [1, 1]} : vector<2x32xf32> to vector<2x3xf32>
    %114 = math.tanh %113 : vector<2x3xf32>
    %115 = vector.extract_strided_slice %112 {offsets = [0, 3], sizes = [2, 3], strides = [1, 1]} : vector<2x32xf32> to vector<2x3xf32>
    %cst_41 = arith.constant -6.000000e+00 : f32
    %116 = vector.broadcast %cst_41 : f32 to vector<2x3xf32>
    %117 = arith.cmpf ogt, %115, %116 : vector<2x3xf32>
    %cst_42 = arith.constant 6.000000e+00 : f32
    %118 = vector.broadcast %cst_42 : f32 to vector<2x3xf32>
    %119 = arith.select %117, %115, %118 : vector<2x3xi1>, vector<2x3xf32>
    %120 = math.exp %119 : vector<2x3xf32>
    %c0_43 = arith.constant 0 : index
    %c0_44 = arith.constant 0 : index
    %121 = vector.load %arg5[%c0_43, %c0_44] : memref<2x16xf32, #tpu.memory_space<vmem>>, vector<2x3xf32>
    %122 = arith.mulf %120, %121 : vector<2x3xf32>
    %123 = arith.addf %114, %122 : vector<2x3xf32>
    %124 = vector.extract_strided_slice %123 {offsets = [0, 0], sizes = [2, 1], strides = [1, 1]} : vector<2x3xf32> to vector<2x1xf32>
    %125 = vector.broadcast %124 : vector<2x1xf32> to vector<2x3xf32>
    %126 = vector.broadcast %94 : vector<1x3xf32> to vector<2x3xf32>
    %127 = arith.mulf %125, %126 : vector<2x3xf32>
    %128 = vector.extract_strided_slice %123 {offsets = [0, 1], sizes = [2, 1], strides = [1, 1]} : vector<2x3xf32> to vector<2x1xf32>
    %129 = vector.broadcast %128 : vector<2x1xf32> to vector<2x3xf32>
    %130 = vector.broadcast %95 : vector<1x3xf32> to vector<2x3xf32>
    %131 = arith.mulf %129, %130 : vector<2x3xf32>
    %132 = arith.addf %127, %131 : vector<2x3xf32>
    %133 = vector.extract_strided_slice %123 {offsets = [0, 2], sizes = [2, 1], strides = [1, 1]} : vector<2x3xf32> to vector<2x1xf32>
    %134 = vector.broadcast %133 : vector<2x1xf32> to vector<2x3xf32>
    %135 = vector.broadcast %96 : vector<1x3xf32> to vector<2x3xf32>
    %136 = arith.mulf %134, %135 : vector<2x3xf32>
    %137 = arith.addf %132, %136 : vector<2x3xf32>
    %138 = vector.broadcast %93 : vector<1x3xf32> to vector<2x3xf32>
    %139 = arith.addf %137, %138 : vector<2x3xf32>
    %140 = vector.extract_strided_slice %112 {offsets = [0, 6], sizes = [2, 12], strides = [1, 1]} : vector<2x32xf32> to vector<2x12xf32>
    %141 = math.tanh %140 : vector<2x12xf32>
    %142 = vector.extract_strided_slice %112 {offsets = [0, 18], sizes = [2, 12], strides = [1, 1]} : vector<2x32xf32> to vector<2x12xf32>
    %cst_45 = arith.constant -6.000000e+00 : f32
    %143 = vector.broadcast %cst_45 : f32 to vector<2x12xf32>
    %144 = arith.cmpf ogt, %142, %143 : vector<2x12xf32>
    %cst_46 = arith.constant -6.000000e+00 : f32
    %145 = vector.broadcast %cst_46 : f32 to vector<2x12xf32>
    %146 = arith.select %144, %142, %145 : vector<2x12xi1>, vector<2x12xf32>
    %147 = math.exp %146 : vector<2x12xf32>
    %c0_47 = arith.constant 0 : index
    %c3_48 = arith.constant 3 : index
    %148 = vector.load %arg5[%c0_47, %c3_48] : memref<2x16xf32, #tpu.memory_space<vmem>>, vector<2x12xf32>
    %149 = arith.mulf %147, %148 : vector<2x12xf32>
    %150 = arith.addf %141, %149 : vector<2x12xf32>
    %cst_49 = arith.constant 0.000000e+00 : f32
    %151 = vector.broadcast %cst_49 : f32 to vector<2x80xf32>
    %152 = tpu.concatenate %114, %120, %123, %139, %141, %147, %150, %151 in 1 : vector<2x3xf32>, vector<2x3xf32>, vector<2x3xf32>, vector<2x3xf32>, vector<2x12xf32>, vector<2x12xf32>, vector<2x12xf32>, vector<2x80xf32> -> vector<2x128xf32>
    %c0_50 = arith.constant 0 : index
    %c0_51 = arith.constant 0 : index
    %153 = vector.load %arg8[%c0_50, %c0_51] : memref<2x128xf32, #tpu.memory_space<vmem>>, vector<2x128xf32>
    tpu.vector_store %arg8[%c0_50, %c0_51], %152 {strides = array<i32>} : memref<2x128xf32, #tpu.memory_space<vmem>>, vector<2x128xf32>,
    %154 = math.cos %150 : vector<2x12xf32>
    %155 = math.sin %150 : vector<2x12xf32>
    %cst_52 = arith.constant dense<0.000000e+00> : vector<2x1024xf32>
    %156 = tpu.matmul %154, %74, %cst_52 {dimension_numbers = #tpu.dot_dimension_numbers<[1], [0], [0], [1], [0, 0, 1, 1], [], []>} : vector<2x12xf32>, vector<12x1024xf32>, vector<2x1024xf32> -> vector<2x1024xf32>
    %cst_53 = arith.constant dense<0.000000e+00> : vector<2x1024xf32>
    %157 = tpu.matmul %155, %74, %cst_53 {dimension_numbers = #tpu.dot_dimension_numbers<[1], [0], [0], [1], [0, 0, 1, 1], [], []>} : vector<2x12xf32>, vector<12x1024xf32>, vector<2x1024xf32> -> vector<2x1024xf32>
    %cst_54 = arith.constant dense<0.000000e+00> : vector<2x1024xf32>
    %158 = tpu.matmul %150, %81, %cst_54 {dimension_numbers = #tpu.dot_dimension_numbers<[1], [0], [0], [1], [0, 0, 1, 1], [], []>} : vector<2x12xf32>, vector<12x1024xf32>, vector<2x1024xf32> -> vector<2x1024xf32>
    %cst_55 = arith.constant dense<0.000000e+00> : vector<2x1024xf32>
    %159 = tpu.matmul %150, %88, %cst_55 {dimension_numbers = #tpu.dot_dimension_numbers<[1], [0], [0], [1], [0, 0, 1, 1], [], []>} : vector<2x12xf32>, vector<12x1024xf32>, vector<2x1024xf32> -> vector<2x1024xf32>
    %160 = vector.broadcast %13 : vector<1x1024xf32> to vector<2x1024xf32>
    %161 = arith.mulf %156, %160 : vector<2x1024xf32>
    %162 = vector.broadcast %24 : vector<1x1024xf32> to vector<2x1024xf32>
    %163 = arith.mulf %157, %162 : vector<2x1024xf32>
    %164 = arith.subf %161, %163 : vector<2x1024xf32>
    %165 = arith.addf %164, %158 : vector<2x1024xf32>
    %cst_56 = arith.constant 1.000000e+00 : f32
    %166 = vector.broadcast %cst_56 : f32 to vector<2x1024xf32>
    %167 = arith.addf %165, %166 : vector<2x1024xf32>
    %cst_57 = arith.constant 1.600000e+01 : f32
    %168 = vector.broadcast %cst_57 : f32 to vector<2x1024xf32>
    %169 = arith.mulf %167, %168 : vector<2x1024xf32>
    %cst_58 = arith.constant 1.000000e+00 : f32
    %170 = vector.broadcast %cst_58 : f32 to vector<2x1024xf32>
    %171 = arith.subf %169, %170 : vector<2x1024xf32>
    %cst_59 = arith.constant 5.000000e-01 : f32
    %172 = vector.broadcast %cst_59 : f32 to vector<2x1024xf32>
    %173 = arith.mulf %171, %172 : vector<2x1024xf32>
    %174 = vector.broadcast %13 : vector<1x1024xf32> to vector<2x1024xf32>
    %175 = arith.mulf %157, %174 : vector<2x1024xf32>
    %176 = vector.broadcast %24 : vector<1x1024xf32> to vector<2x1024xf32>
    %177 = arith.mulf %156, %176 : vector<2x1024xf32>
    %178 = arith.addf %175, %177 : vector<2x1024xf32>
    %179 = arith.addf %178, %159 : vector<2x1024xf32>
    %cst_60 = arith.constant 1.000000e+00 : f32
    %180 = vector.broadcast %cst_60 : f32 to vector<2x1024xf32>
    %181 = arith.addf %179, %180 : vector<2x1024xf32>
    %cst_61 = arith.constant 1.600000e+01 : f32
    %182 = vector.broadcast %cst_61 : f32 to vector<2x1024xf32>
    %183 = arith.mulf %181, %182 : vector<2x1024xf32>
    %cst_62 = arith.constant 1.000000e+00 : f32
    %184 = vector.broadcast %cst_62 : f32 to vector<2x1024xf32>
    %185 = arith.subf %183, %184 : vector<2x1024xf32>
    %cst_63 = arith.constant 5.000000e-01 : f32
    %186 = vector.broadcast %cst_63 : f32 to vector<2x1024xf32>
    %187 = arith.mulf %185, %186 : vector<2x1024xf32>
    %188 = vector.broadcast %13 : vector<1x1024xf32> to vector<2x1024xf32>
    %189 = arith.addf %188, %158 : vector<2x1024xf32>
    %cst_64 = arith.constant 1.000000e+00 : f32
    %190 = vector.broadcast %cst_64 : f32 to vector<2x1024xf32>
    %191 = arith.addf %189, %190 : vector<2x1024xf32>
    %cst_65 = arith.constant 1.600000e+01 : f32
    %192 = vector.broadcast %cst_65 : f32 to vector<2x1024xf32>
    %193 = arith.mulf %191, %192 : vector<2x1024xf32>
    %cst_66 = arith.constant 1.000000e+00 : f32
    %194 = vector.broadcast %cst_66 : f32 to vector<2x1024xf32>
    %195 = arith.subf %193, %194 : vector<2x1024xf32>
    %cst_67 = arith.constant 5.000000e-01 : f32
    %196 = vector.broadcast %cst_67 : f32 to vector<2x1024xf32>
    %197 = arith.mulf %195, %196 : vector<2x1024xf32>
    %198 = vector.broadcast %24 : vector<1x1024xf32> to vector<2x1024xf32>
    %199 = arith.addf %198, %159 : vector<2x1024xf32>
    %cst_68 = arith.constant 1.000000e+00 : f32
    %200 = vector.broadcast %cst_68 : f32 to vector<2x1024xf32>
    %201 = arith.addf %199, %200 : vector<2x1024xf32>
    %cst_69 = arith.constant 1.600000e+01 : f32
    %202 = vector.broadcast %cst_69 : f32 to vector<2x1024xf32>
    %203 = arith.mulf %201, %202 : vector<2x1024xf32>
    %cst_70 = arith.constant 1.000000e+00 : f32
    %204 = vector.broadcast %cst_70 : f32 to vector<2x1024xf32>
    %205 = arith.subf %203, %204 : vector<2x1024xf32>
    %cst_71 = arith.constant 5.000000e-01 : f32
    %206 = vector.broadcast %cst_71 : f32 to vector<2x1024xf32>
    %207 = arith.mulf %205, %206 : vector<2x1024xf32>
    %208 = vector.extract_strided_slice %139 {offsets = [0, 0], sizes = [2, 1], strides = [1, 1]} : vector<2x3xf32> to vector<2x1xf32>
    %209 = math.cos %208 : vector<2x1xf32>
    %210 = vector.extract_strided_slice %139 {offsets = [0, 0], sizes = [2, 1], strides = [1, 1]} : vector<2x3xf32> to vector<2x1xf32>
    %211 = math.sin %210 : vector<2x1xf32>
    %212 = vector.broadcast %209 : vector<2x1xf32> to vector<2x256xf32>
    %213 = vector.broadcast %36 : vector<1x256xf32> to vector<2x256xf32>
    %214 = arith.mulf %212, %213 : vector<2x256xf32>
    %215 = vector.broadcast %211 : vector<2x1xf32> to vector<2x256xf32>
    %216 = vector.broadcast %47 : vector<1x256xf32> to vector<2x256xf32>
    %217 = arith.mulf %215, %216 : vector<2x256xf32>
    %218 = arith.subf %214, %217 : vector<2x256xf32>
    %219 = vector.extract_strided_slice %139 {offsets = [0, 1], sizes = [2, 1], strides = [1, 1]} : vector<2x3xf32> to vector<2x1xf32>
    %220 = vector.broadcast %219 : vector<2x1xf32> to vector<2x256xf32>
    %221 = arith.addf %218, %220 : vector<2x256xf32>
    %cst_72 = arith.constant 1.000000e+00 : f32
    %222 = vector.broadcast %cst_72 : f32 to vector<2x256xf32>
    %223 = arith.addf %221, %222 : vector<2x256xf32>
    %cst_73 = arith.constant 1.600000e+01 : f32
    %224 = vector.broadcast %cst_73 : f32 to vector<2x256xf32>
    %225 = arith.mulf %223, %224 : vector<2x256xf32>
    %cst_74 = arith.constant 1.000000e+00 : f32
    %226 = vector.broadcast %cst_74 : f32 to vector<2x256xf32>
    %227 = arith.subf %225, %226 : vector<2x256xf32>
    %cst_75 = arith.constant 5.000000e-01 : f32
    %228 = vector.broadcast %cst_75 : f32 to vector<2x256xf32>
    %229 = arith.mulf %227, %228 : vector<2x256xf32>
    %230 = vector.broadcast %211 : vector<2x1xf32> to vector<2x256xf32>
    %231 = vector.broadcast %36 : vector<1x256xf32> to vector<2x256xf32>
    %232 = arith.mulf %230, %231 : vector<2x256xf32>
    %233 = vector.broadcast %209 : vector<2x1xf32> to vector<2x256xf32>
    %234 = vector.broadcast %47 : vector<1x256xf32> to vector<2x256xf32>
    %235 = arith.mulf %233, %234 : vector<2x256xf32>
    %236 = arith.addf %232, %235 : vector<2x256xf32>
    %237 = vector.extract_strided_slice %139 {offsets = [0, 2], sizes = [2, 1], strides = [1, 1]} : vector<2x3xf32> to vector<2x1xf32>
    %238 = vector.broadcast %237 : vector<2x1xf32> to vector<2x256xf32>
    %239 = arith.addf %236, %238 : vector<2x256xf32>
    %cst_76 = arith.constant 1.000000e+00 : f32
    %240 = vector.broadcast %cst_76 : f32 to vector<2x256xf32>
    %241 = arith.addf %239, %240 : vector<2x256xf32>
    %cst_77 = arith.constant 1.600000e+01 : f32
    %242 = vector.broadcast %cst_77 : f32 to vector<2x256xf32>
    %243 = arith.mulf %241, %242 : vector<2x256xf32>
    %cst_78 = arith.constant 1.000000e+00 : f32
    %244 = vector.broadcast %cst_78 : f32 to vector<2x256xf32>
    %245 = arith.subf %243, %244 : vector<2x256xf32>
    %cst_79 = arith.constant 5.000000e-01 : f32
    %246 = vector.broadcast %cst_79 : f32 to vector<2x256xf32>
    %247 = arith.mulf %245, %246 : vector<2x256xf32>
    %c0_80 = arith.constant 0 : index
    %c0_81 = arith.constant 0 : index
    %c0_82 = arith.constant 0 : index
    %c0_83 = arith.constant 0 : index
    %248 = vector.load %arg7[%c0_80, %c0_81, %c0_82, %c0_83] : memref<2x4x16x16xf32, #tpu.memory_space<vmem>>, vector<1x1x16x16xf32>
    %249 = vector.shape_cast %248 : vector<1x1x16x16xf32> to vector<16x16xf32>
    %250 = vector.extract_strided_slice %197 {offsets = [0, 0], sizes = [1, 256], strides = [1, 1]} : vector<2x1024xf32> to vector<1x256xf32>
    %251 = vector.extract_strided_slice %207 {offsets = [0, 0], sizes = [1, 256], strides = [1, 1]} : vector<2x1024xf32> to vector<1x256xf32>
    %252 = vector.broadcast %250 : vector<1x256xf32> to vector<16x256xf32>
    %253 = vector.broadcast %49 : vector<16x1xf32> to vector<16x256xf32>
    %254 = arith.subf %252, %253 : vector<16x256xf32>
    %255 = math.absf %254 : vector<16x256xf32>
    %cst_84 = arith.constant 1.000000e+00 : f32
    %256 = vector.broadcast %cst_84 : f32 to vector<16x256xf32>
    %257 = arith.subf %256, %255 : vector<16x256xf32>
    %cst_85 = arith.constant 0.000000e+00 : f32
    %258 = vector.broadcast %cst_85 : f32 to vector<16x256xf32>
    %259 = arith.maximumf %258, %257 : vector<16x256xf32>
    %260 = vector.broadcast %251 : vector<1x256xf32> to vector<16x256xf32>
    %261 = vector.broadcast %51 : vector<16x1xf32> to vector<16x256xf32>
    %262 = arith.subf %260, %261 : vector<16x256xf32>
    %263 = math.absf %262 : vector<16x256xf32>
    %cst_86 = arith.constant 1.000000e+00 : f32
    %264 = vector.broadcast %cst_86 : f32 to vector<16x256xf32>
    %265 = arith.subf %264, %263 : vector<16x256xf32>
    %cst_87 = arith.constant 0.000000e+00 : f32
    %266 = vector.broadcast %cst_87 : f32 to vector<16x256xf32>
    %267 = arith.maximumf %266, %265 : vector<16x256xf32>
    %cst_88 = arith.constant dense<0.000000e+00> : vector<16x256xf32>
    %268 = tpu.matmul %249, %259, %cst_88 {dimension_numbers = #tpu.dot_dimension_numbers<[1], [0], [0], [1], [0, 0, 1, 1], [], []>} : vector<16x16xf32>, vector<16x256xf32>, vector<16x256xf32> -> vector<16x256xf32>
    %269 = arith.mulf %267, %268 : vector<16x256xf32>
    %cst_89 = arith.constant dense<0.000000e+00> : vector<256xf32>
    %270 = vector.multi_reduction <add>, %269, %cst_89 [0] : vector<16x256xf32> to vector<256xf32>
    %271 = vector.shape_cast %270 : vector<256xf32> to vector<1x256xf32>
    %c0_90 = arith.constant 0 : index
    %c0_91 = arith.constant 0 : index
    %272 = vector.load %arg10[%c0_90, %c0_91] : memref<2x1024xf32, #tpu.memory_space<vmem>>, vector<1x256xf32>
    tpu.vector_store %arg10[%c0_90, %c0_91], %271 {strides = array<i32>} : memref<2x1024xf32, #tpu.memory_space<vmem>>, vector<1x256xf32>,
    %c0_92 = arith.constant 0 : index
    %c0_93 = arith.constant 0 : index
    %c0_94 = arith.constant 0 : index
    %273 = vector.load %arg6[%c0_92, %c0_93, %c0_94] : memref<4x16x16xf32, #tpu.memory_space<vmem>>, vector<1x16x16xf32>
    %274 = vector.shape_cast %273 : vector<1x16x16xf32> to vector<16x16xf32>
    %275 = vector.extract_strided_slice %173 {offsets = [0, 0], sizes = [1, 256], strides = [1, 1]} : vector<2x1024xf32> to vector<1x256xf32>
    %276 = vector.extract_strided_slice %187 {offsets = [0, 0], sizes = [1, 256], strides = [1, 1]} : vector<2x1024xf32> to vector<1x256xf32>
    %277 = vector.broadcast %275 : vector<1x256xf32> to vector<16x256xf32>
    %278 = vector.broadcast %49 : vector<16x1xf32> to vector<16x256xf32>
    %279 = arith.subf %277, %278 : vector<16x256xf32>
    %280 = math.absf %279 : vector<16x256xf32>
    %cst_95 = arith.constant 1.000000e+00 : f32
    %281 = vector.broadcast %cst_95 : f32 to vector<16x256xf32>
    %282 = arith.subf %281, %280 : vector<16x256xf32>
    %cst_96 = arith.constant 0.000000e+00 : f32
    %283 = vector.broadcast %cst_96 : f32 to vector<16x256xf32>
    %284 = arith.maximumf %283, %282 : vector<16x256xf32>
    %285 = vector.broadcast %276 : vector<1x256xf32> to vector<16x256xf32>
    %286 = vector.broadcast %51 : vector<16x1xf32> to vector<16x256xf32>
    %287 = arith.subf %285, %286 : vector<16x256xf32>
    %288 = math.absf %287 : vector<16x256xf32>
    %cst_97 = arith.constant 1.000000e+00 : f32
    %289 = vector.broadcast %cst_97 : f32 to vector<16x256xf32>
    %290 = arith.subf %289, %288 : vector<16x256xf32>
    %cst_98 = arith.constant 0.000000e+00 : f32
    %291 = vector.broadcast %cst_98 : f32 to vector<16x256xf32>
    %292 = arith.maximumf %291, %290 : vector<16x256xf32>
    %cst_99 = arith.constant dense<0.000000e+00> : vector<16x256xf32>
    %293 = tpu.matmul %274, %284, %cst_99 {dimension_numbers = #tpu.dot_dimension_numbers<[1], [0], [0], [1], [0, 0, 1, 1], [], []>} : vector<16x16xf32>, vector<16x256xf32>, vector<16x256xf32> -> vector<16x256xf32>
    %294 = arith.mulf %292, %293 : vector<16x256xf32>
    %cst_100 = arith.constant dense<0.000000e+00> : vector<256xf32>
    %295 = vector.multi_reduction <add>, %294, %cst_100 [0] : vector<16x256xf32> to vector<256xf32>
    %296 = vector.shape_cast %295 : vector<256xf32> to vector<1x256xf32>
    %297 = arith.mulf %296, %271 : vector<1x256xf32>
    %c0_101 = arith.constant 0 : index
    %c1_102 = arith.constant 1 : index
    %c0_103 = arith.constant 0 : index
    %c0_104 = arith.constant 0 : index
    %298 = vector.load %arg7[%c0_101, %c1_102, %c0_103, %c0_104] : memref<2x4x16x16xf32, #tpu.memory_space<vmem>>, vector<1x1x16x16xf32>
    %299 = vector.shape_cast %298 : vector<1x1x16x16xf32> to vector<16x16xf32>
    %300 = vector.extract_strided_slice %197 {offsets = [0, 256], sizes = [1, 256], strides = [1, 1]} : vector<2x1024xf32> to vector<1x256xf32>
    %301 = vector.extract_strided_slice %207 {offsets = [0, 256], sizes = [1, 256], strides = [1, 1]} : vector<2x1024xf32> to vector<1x256xf32>
    %302 = vector.broadcast %300 : vector<1x256xf32> to vector<16x256xf32>
    %303 = vector.broadcast %49 : vector<16x1xf32> to vector<16x256xf32>
    %304 = arith.subf %302, %303 : vector<16x256xf32>
    %305 = math.absf %304 : vector<16x256xf32>
    %cst_105 = arith.constant 1.000000e+00 : f32
    %306 = vector.broadcast %cst_105 : f32 to vector<16x256xf32>
    %307 = arith.subf %306, %305 : vector<16x256xf32>
    %cst_106 = arith.constant 0.000000e+00 : f32
    %308 = vector.broadcast %cst_106 : f32 to vector<16x256xf32>
    %309 = arith.maximumf %308, %307 : vector<16x256xf32>
    %310 = vector.broadcast %301 : vector<1x256xf32> to vector<16x256xf32>
    %311 = vector.broadcast %51 : vector<16x1xf32> to vector<16x256xf32>
    %312 = arith.subf %310, %311 : vector<16x256xf32>
    %313 = math.absf %312 : vector<16x256xf32>
    %cst_107 = arith.constant 1.000000e+00 : f32
    %314 = vector.broadcast %cst_107 : f32 to vector<16x256xf32>
    %315 = arith.subf %314, %313 : vector<16x256xf32>
    %cst_108 = arith.constant 0.000000e+00 : f32
    %316 = vector.broadcast %cst_108 : f32 to vector<16x256xf32>
    %317 = arith.maximumf %316, %315 : vector<16x256xf32>
    %cst_109 = arith.constant dense<0.000000e+00> : vector<16x256xf32>
    %318 = tpu.matmul %299, %309, %cst_109 {dimension_numbers = #tpu.dot_dimension_numbers<[1], [0], [0], [1], [0, 0, 1, 1], [], []>} : vector<16x16xf32>, vector<16x256xf32>, vector<16x256xf32> -> vector<16x256xf32>
    %319 = arith.mulf %317, %318 : vector<16x256xf32>
    %cst_110 = arith.constant dense<0.000000e+00> : vector<256xf32>
    %320 = vector.multi_reduction <add>, %319, %cst_110 [0] : vector<16x256xf32> to vector<256xf32>
    %321 = vector.shape_cast %320 : vector<256xf32> to vector<1x256xf32>
    %c0_111 = arith.constant 0 : index
    %c256 = arith.constant 256 : index
    %322 = vector.load %arg10[%c0_111, %c256] : memref<2x1024xf32, #tpu.memory_space<vmem>>, vector<1x256xf32>
    tpu.vector_store %arg10[%c0_111, %c256], %321 {strides = array<i32>} : memref<2x1024xf32, #tpu.memory_space<vmem>>, vector<1x256xf32>,
    %c1_112 = arith.constant 1 : index
    %c0_113 = arith.constant 0 : index
    %c0_114 = arith.constant 0 : index
    %323 = vector.load %arg6[%c1_112, %c0_113, %c0_114] : memref<4x16x16xf32, #tpu.memory_space<vmem>>, vector<1x16x16xf32>
    %324 = vector.shape_cast %323 : vector<1x16x16xf32> to vector<16x16xf32>
    %325 = vector.extract_strided_slice %173 {offsets = [0, 256], sizes = [1, 256], strides = [1, 1]} : vector<2x1024xf32> to vector<1x256xf32>
    %326 = vector.extract_strided_slice %187 {offsets = [0, 256], sizes = [1, 256], strides = [1, 1]} : vector<2x1024xf32> to vector<1x256xf32>
    %327 = vector.broadcast %325 : vector<1x256xf32> to vector<16x256xf32>
    %328 = vector.broadcast %49 : vector<16x1xf32> to vector<16x256xf32>
    %329 = arith.subf %327, %328 : vector<16x256xf32>
    %330 = math.absf %329 : vector<16x256xf32>
    %cst_115 = arith.constant 1.000000e+00 : f32
    %331 = vector.broadcast %cst_115 : f32 to vector<16x256xf32>
    %332 = arith.subf %331, %330 : vector<16x256xf32>
    %cst_116 = arith.constant 0.000000e+00 : f32
    %333 = vector.broadcast %cst_116 : f32 to vector<16x256xf32>
    %334 = arith.maximumf %333, %332 : vector<16x256xf32>
    %335 = vector.broadcast %326 : vector<1x256xf32> to vector<16x256xf32>
    %336 = vector.broadcast %51 : vector<16x1xf32> to vector<16x256xf32>
    %337 = arith.subf %335, %336 : vector<16x256xf32>
    %338 = math.absf %337 : vector<16x256xf32>
    %cst_117 = arith.constant 1.000000e+00 : f32
    %339 = vector.broadcast %cst_117 : f32 to vector<16x256xf32>
    %340 = arith.subf %339, %338 : vector<16x256xf32>
    %cst_118 = arith.constant 0.000000e+00 : f32
    %341 = vector.broadcast %cst_118 : f32 to vector<16x256xf32>
    %342 = arith.maximumf %341, %340 : vector<16x256xf32>
    %cst_119 = arith.constant dense<0.000000e+00> : vector<16x256xf32>
    %343 = tpu.matmul %324, %334, %cst_119 {dimension_numbers = #tpu.dot_dimension_numbers<[1], [0], [0], [1], [0, 0, 1, 1], [], []>} : vector<16x16xf32>, vector<16x256xf32>, vector<16x256xf32> -> vector<16x256xf32>
    %344 = arith.mulf %342, %343 : vector<16x256xf32>
    %cst_120 = arith.constant dense<0.000000e+00> : vector<256xf32>
    %345 = vector.multi_reduction <add>, %344, %cst_120 [0] : vector<16x256xf32> to vector<256xf32>
    %346 = vector.shape_cast %345 : vector<256xf32> to vector<1x256xf32>
    %347 = arith.mulf %346, %321 : vector<1x256xf32>
    %348 = arith.addf %297, %347 : vector<1x256xf32>
    %349 = arith.addf %271, %321 : vector<1x256xf32>
    %c0_121 = arith.constant 0 : index
    %c2_122 = arith.constant 2 : index
    %c0_123 = arith.constant 0 : index
    %c0_124 = arith.constant 0 : index
    %350 = vector.load %arg7[%c0_121, %c2_122, %c0_123, %c0_124] : memref<2x4x16x16xf32, #tpu.memory_space<vmem>>, vector<1x1x16x16xf32>
    %351 = vector.shape_cast %350 : vector<1x1x16x16xf32> to vector<16x16xf32>
    %352 = vector.extract_strided_slice %197 {offsets = [0, 512], sizes = [1, 256], strides = [1, 1]} : vector<2x1024xf32> to vector<1x256xf32>
    %353 = vector.extract_strided_slice %207 {offsets = [0, 512], sizes = [1, 256], strides = [1, 1]} : vector<2x1024xf32> to vector<1x256xf32>
    %354 = vector.broadcast %352 : vector<1x256xf32> to vector<16x256xf32>
    %355 = vector.broadcast %49 : vector<16x1xf32> to vector<16x256xf32>
    %356 = arith.subf %354, %355 : vector<16x256xf32>
    %357 = math.absf %356 : vector<16x256xf32>
    %cst_125 = arith.constant 1.000000e+00 : f32
    %358 = vector.broadcast %cst_125 : f32 to vector<16x256xf32>
    %359 = arith.subf %358, %357 : vector<16x256xf32>
    %cst_126 = arith.constant 0.000000e+00 : f32
    %360 = vector.broadcast %cst_126 : f32 to vector<16x256xf32>
    %361 = arith.maximumf %360, %359 : vector<16x256xf32>
    %362 = vector.broadcast %353 : vector<1x256xf32> to vector<16x256xf32>
    %363 = vector.broadcast %51 : vector<16x1xf32> to vector<16x256xf32>
    %364 = arith.subf %362, %363 : vector<16x256xf32>
    %365 = math.absf %364 : vector<16x256xf32>
    %cst_127 = arith.constant 1.000000e+00 : f32
    %366 = vector.broadcast %cst_127 : f32 to vector<16x256xf32>
    %367 = arith.subf %366, %365 : vector<16x256xf32>
    %cst_128 = arith.constant 0.000000e+00 : f32
    %368 = vector.broadcast %cst_128 : f32 to vector<16x256xf32>
    %369 = arith.maximumf %368, %367 : vector<16x256xf32>
    %cst_129 = arith.constant dense<0.000000e+00> : vector<16x256xf32>
    %370 = tpu.matmul %351, %361, %cst_129 {dimension_numbers = #tpu.dot_dimension_numbers<[1], [0], [0], [1], [0, 0, 1, 1], [], []>} : vector<16x16xf32>, vector<16x256xf32>, vector<16x256xf32> -> vector<16x256xf32>
    %371 = arith.mulf %369, %370 : vector<16x256xf32>
    %cst_130 = arith.constant dense<0.000000e+00> : vector<256xf32>
    %372 = vector.multi_reduction <add>, %371, %cst_130 [0] : vector<16x256xf32> to vector<256xf32>
    %373 = vector.shape_cast %372 : vector<256xf32> to vector<1x256xf32>
    %c0_131 = arith.constant 0 : index
    %c512 = arith.constant 512 : index
    %374 = vector.load %arg10[%c0_131, %c512] : memref<2x1024xf32, #tpu.memory_space<vmem>>, vector<1x256xf32>
    tpu.vector_store %arg10[%c0_131, %c512], %373 {strides = array<i32>} : memref<2x1024xf32, #tpu.memory_space<vmem>>, vector<1x256xf32>,
    %c2_132 = arith.constant 2 : index
    %c0_133 = arith.constant 0 : index
    %c0_134 = arith.constant 0 : index
    %375 = vector.load %arg6[%c2_132, %c0_133, %c0_134] : memref<4x16x16xf32, #tpu.memory_space<vmem>>, vector<1x16x16xf32>
    %376 = vector.shape_cast %375 : vector<1x16x16xf32> to vector<16x16xf32>
    %377 = vector.extract_strided_slice %173 {offsets = [0, 512], sizes = [1, 256], strides = [1, 1]} : vector<2x1024xf32> to vector<1x256xf32>
    %378 = vector.extract_strided_slice %187 {offsets = [0, 512], sizes = [1, 256], strides = [1, 1]} : vector<2x1024xf32> to vector<1x256xf32>
    %379 = vector.broadcast %377 : vector<1x256xf32> to vector<16x256xf32>
    %380 = vector.broadcast %49 : vector<16x1xf32> to vector<16x256xf32>
    %381 = arith.subf %379, %380 : vector<16x256xf32>
    %382 = math.absf %381 : vector<16x256xf32>
    %cst_135 = arith.constant 1.000000e+00 : f32
    %383 = vector.broadcast %cst_135 : f32 to vector<16x256xf32>
    %384 = arith.subf %383, %382 : vector<16x256xf32>
    %cst_136 = arith.constant 0.000000e+00 : f32
    %385 = vector.broadcast %cst_136 : f32 to vector<16x256xf32>
    %386 = arith.maximumf %385, %384 : vector<16x256xf32>
    %387 = vector.broadcast %378 : vector<1x256xf32> to vector<16x256xf32>
    %388 = vector.broadcast %51 : vector<16x1xf32> to vector<16x256xf32>
    %389 = arith.subf %387, %388 : vector<16x256xf32>
    %390 = math.absf %389 : vector<16x256xf32>
    %cst_137 = arith.constant 1.000000e+00 : f32
    %391 = vector.broadcast %cst_137 : f32 to vector<16x256xf32>
    %392 = arith.subf %391, %390 : vector<16x256xf32>
    %cst_138 = arith.constant 0.000000e+00 : f32
    %393 = vector.broadcast %cst_138 : f32 to vector<16x256xf32>
    %394 = arith.maximumf %393, %392 : vector<16x256xf32>
    %cst_139 = arith.constant dense<0.000000e+00> : vector<16x256xf32>
    %395 = tpu.matmul %376, %386, %cst_139 {dimension_numbers = #tpu.dot_dimension_numbers<[1], [0], [0], [1], [0, 0, 1, 1], [], []>} : vector<16x16xf32>, vector<16x256xf32>, vector<16x256xf32> -> vector<16x256xf32>
    %396 = arith.mulf %394, %395 : vector<16x256xf32>
    %cst_140 = arith.constant dense<0.000000e+00> : vector<256xf32>
    %397 = vector.multi_reduction <add>, %396, %cst_140 [0] : vector<16x256xf32> to vector<256xf32>
    %398 = vector.shape_cast %397 : vector<256xf32> to vector<1x256xf32>
    %399 = arith.mulf %398, %373 : vector<1x256xf32>
    %400 = arith.addf %348, %399 : vector<1x256xf32>
    %401 = arith.addf %349, %373 : vector<1x256xf32>
    %c0_141 = arith.constant 0 : index
    %c3_142 = arith.constant 3 : index
    %c0_143 = arith.constant 0 : index
    %c0_144 = arith.constant 0 : index
    %402 = vector.load %arg7[%c0_141, %c3_142, %c0_143, %c0_144] : memref<2x4x16x16xf32, #tpu.memory_space<vmem>>, vector<1x1x16x16xf32>
    %403 = vector.shape_cast %402 : vector<1x1x16x16xf32> to vector<16x16xf32>
    %404 = vector.extract_strided_slice %197 {offsets = [0, 768], sizes = [1, 256], strides = [1, 1]} : vector<2x1024xf32> to vector<1x256xf32>
    %405 = vector.extract_strided_slice %207 {offsets = [0, 768], sizes = [1, 256], strides = [1, 1]} : vector<2x1024xf32> to vector<1x256xf32>
    %406 = vector.broadcast %404 : vector<1x256xf32> to vector<16x256xf32>
    %407 = vector.broadcast %49 : vector<16x1xf32> to vector<16x256xf32>
    %408 = arith.subf %406, %407 : vector<16x256xf32>
    %409 = math.absf %408 : vector<16x256xf32>
    %cst_145 = arith.constant 1.000000e+00 : f32
    %410 = vector.broadcast %cst_145 : f32 to vector<16x256xf32>
    %411 = arith.subf %410, %409 : vector<16x256xf32>
    %cst_146 = arith.constant 0.000000e+00 : f32
    %412 = vector.broadcast %cst_146 : f32 to vector<16x256xf32>
    %413 = arith.maximumf %412, %411 : vector<16x256xf32>
    %414 = vector.broadcast %405 : vector<1x256xf32> to vector<16x256xf32>
    %415 = vector.broadcast %51 : vector<16x1xf32> to vector<16x256xf32>
    %416 = arith.subf %414, %415 : vector<16x256xf32>
    %417 = math.absf %416 : vector<16x256xf32>
    %cst_147 = arith.constant 1.000000e+00 : f32
    %418 = vector.broadcast %cst_147 : f32 to vector<16x256xf32>
    %419 = arith.subf %418, %417 : vector<16x256xf32>
    %cst_148 = arith.constant 0.000000e+00 : f32
    %420 = vector.broadcast %cst_148 : f32 to vector<16x256xf32>
    %421 = arith.maximumf %420, %419 : vector<16x256xf32>
    %cst_149 = arith.constant dense<0.000000e+00> : vector<16x256xf32>
    %422 = tpu.matmul %403, %413, %cst_149 {dimension_numbers = #tpu.dot_dimension_numbers<[1], [0], [0], [1], [0, 0, 1, 1], [], []>} : vector<16x16xf32>, vector<16x256xf32>, vector<16x256xf32> -> vector<16x256xf32>
    %423 = arith.mulf %421, %422 : vector<16x256xf32>
    %cst_150 = arith.constant dense<0.000000e+00> : vector<256xf32>
    %424 = vector.multi_reduction <add>, %423, %cst_150 [0] : vector<16x256xf32> to vector<256xf32>
    %425 = vector.shape_cast %424 : vector<256xf32> to vector<1x256xf32>
    %c0_151 = arith.constant 0 : index
    %c768 = arith.constant 768 : index
    %426 = vector.load %arg10[%c0_151, %c768] : memref<2x1024xf32, #tpu.memory_space<vmem>>, vector<1x256xf32>
    tpu.vector_store %arg10[%c0_151, %c768], %425 {strides = array<i32>} : memref<2x1024xf32, #tpu.memory_space<vmem>>, vector<1x256xf32>,
    %c3_152 = arith.constant 3 : index
    %c0_153 = arith.constant 0 : index
    %c0_154 = arith.constant 0 : index
    %427 = vector.load %arg6[%c3_152, %c0_153, %c0_154] : memref<4x16x16xf32, #tpu.memory_space<vmem>>, vector<1x16x16xf32>
    %428 = vector.shape_cast %427 : vector<1x16x16xf32> to vector<16x16xf32>
    %429 = vector.extract_strided_slice %173 {offsets = [0, 768], sizes = [1, 256], strides = [1, 1]} : vector<2x1024xf32> to vector<1x256xf32>
    %430 = vector.extract_strided_slice %187 {offsets = [0, 768], sizes = [1, 256], strides = [1, 1]} : vector<2x1024xf32> to vector<1x256xf32>
    %431 = vector.broadcast %429 : vector<1x256xf32> to vector<16x256xf32>
    %432 = vector.broadcast %49 : vector<16x1xf32> to vector<16x256xf32>
    %433 = arith.subf %431, %432 : vector<16x256xf32>
    %434 = math.absf %433 : vector<16x256xf32>
    %cst_155 = arith.constant 1.000000e+00 : f32
    %435 = vector.broadcast %cst_155 : f32 to vector<16x256xf32>
    %436 = arith.subf %435, %434 : vector<16x256xf32>
    %cst_156 = arith.constant 0.000000e+00 : f32
    %437 = vector.broadcast %cst_156 : f32 to vector<16x256xf32>
    %438 = arith.maximumf %437, %436 : vector<16x256xf32>
    %439 = vector.broadcast %430 : vector<1x256xf32> to vector<16x256xf32>
    %440 = vector.broadcast %51 : vector<16x1xf32> to vector<16x256xf32>
    %441 = arith.subf %439, %440 : vector<16x256xf32>
    %442 = math.absf %441 : vector<16x256xf32>
    %cst_157 = arith.constant 1.000000e+00 : f32
    %443 = vector.broadcast %cst_157 : f32 to vector<16x256xf32>
    %444 = arith.subf %443, %442 : vector<16x256xf32>
    %cst_158 = arith.constant 0.000000e+00 : f32
    %445 = vector.broadcast %cst_158 : f32 to vector<16x256xf32>
    %446 = arith.maximumf %445, %444 : vector<16x256xf32>
    %cst_159 = arith.constant dense<0.000000e+00> : vector<16x256xf32>
    %447 = tpu.matmul %428, %438, %cst_159 {dimension_numbers = #tpu.dot_dimension_numbers<[1], [0], [0], [1], [0, 0, 1, 1], [], []>} : vector<16x16xf32>, vector<16x256xf32>, vector<16x256xf32> -> vector<16x256xf32>
    %448 = arith.mulf %446, %447 : vector<16x256xf32>
    %cst_160 = arith.constant dense<0.000000e+00> : vector<256xf32>
    %449 = vector.multi_reduction <add>, %448, %cst_160 [0] : vector<16x256xf32> to vector<256xf32>
    %450 = vector.shape_cast %449 : vector<256xf32> to vector<1x256xf32>
    %451 = arith.mulf %450, %425 : vector<1x256xf32>
    %452 = arith.addf %400, %451 : vector<1x256xf32>
    %453 = arith.addf %401, %425 : vector<1x256xf32>
    %cst_161 = arith.constant 0.000000e+00 : f32
    %454 = vector.broadcast %cst_161 : f32 to vector<1x256xf32>
    %455 = arith.cmpf oeq, %453, %454 : vector<1x256xf32>
    %cst_162 = arith.constant 1.000000e+00 : f32
    %456 = vector.broadcast %cst_162 : f32 to vector<1x256xf32>
    %457 = arith.select %455, %456, %453 : vector<1x256xi1>, vector<1x256xf32>
    %458 = arith.divf %452, %457 : vector<1x256xf32>
    %459 = vector.broadcast %458 : vector<1x256xf32> to vector<16x256xf32>
    %460 = arith.mulf %58, %459 : vector<16x256xf32>
    %cst_163 = arith.constant dense<0.000000e+00> : vector<16x16xf32>
    %461 = tpu.matmul %460, %65, %cst_163 {dimension_numbers = #tpu.dot_dimension_numbers<[1], [0], [0], [1], [0, 0, 1, 1], [], []>} : vector<16x256xf32>, vector<256x16xf32>, vector<16x16xf32> -> vector<16x16xf32>
    %462 = vector.extract_strided_slice %229 {offsets = [0, 0], sizes = [1, 256], strides = [1, 1]} : vector<2x256xf32> to vector<1x256xf32>
    %463 = vector.extract_strided_slice %247 {offsets = [0, 0], sizes = [1, 256], strides = [1, 1]} : vector<2x256xf32> to vector<1x256xf32>
    %464 = vector.broadcast %462 : vector<1x256xf32> to vector<16x256xf32>
    %465 = vector.broadcast %49 : vector<16x1xf32> to vector<16x256xf32>
    %466 = arith.subf %464, %465 : vector<16x256xf32>
    %467 = math.absf %466 : vector<16x256xf32>
    %cst_164 = arith.constant 1.000000e+00 : f32
    %468 = vector.broadcast %cst_164 : f32 to vector<16x256xf32>
    %469 = arith.subf %468, %467 : vector<16x256xf32>
    %cst_165 = arith.constant 0.000000e+00 : f32
    %470 = vector.broadcast %cst_165 : f32 to vector<16x256xf32>
    %471 = arith.maximumf %470, %469 : vector<16x256xf32>
    %472 = vector.broadcast %463 : vector<1x256xf32> to vector<16x256xf32>
    %473 = vector.broadcast %51 : vector<16x1xf32> to vector<16x256xf32>
    %474 = arith.subf %472, %473 : vector<16x256xf32>
    %475 = math.absf %474 : vector<16x256xf32>
    %cst_166 = arith.constant 1.000000e+00 : f32
    %476 = vector.broadcast %cst_166 : f32 to vector<16x256xf32>
    %477 = arith.subf %476, %475 : vector<16x256xf32>
    %cst_167 = arith.constant 0.000000e+00 : f32
    %478 = vector.broadcast %cst_167 : f32 to vector<16x256xf32>
    %479 = arith.maximumf %478, %477 : vector<16x256xf32>
    %cst_168 = arith.constant dense<0.000000e+00> : vector<16x256xf32>
    %480 = tpu.matmul %461, %471, %cst_168 {dimension_numbers = #tpu.dot_dimension_numbers<[1], [0], [0], [1], [0, 0, 1, 1], [], []>} : vector<16x16xf32>, vector<16x256xf32>, vector<16x256xf32> -> vector<16x256xf32>
    %481 = arith.mulf %479, %480 : vector<16x256xf32>
    %cst_169 = arith.constant dense<0.000000e+00> : vector<256xf32>
    %482 = vector.multi_reduction <add>, %481, %cst_169 [0] : vector<16x256xf32> to vector<256xf32>
    %483 = vector.shape_cast %482 : vector<256xf32> to vector<1x256xf32>
    %c0_170 = arith.constant 0 : index
    %c0_171 = arith.constant 0 : index
    %484 = vector.load %arg9[%c0_170, %c0_171] : memref<2x256xf32, #tpu.memory_space<vmem>>, vector<1x256xf32>
    tpu.vector_store %arg9[%c0_170, %c0_171], %483 {strides = array<i32>} : memref<2x256xf32, #tpu.memory_space<vmem>>, vector<1x256xf32>,
    %c1_172 = arith.constant 1 : index
    %c0_173 = arith.constant 0 : index
    %c0_174 = arith.constant 0 : index
    %c0_175 = arith.constant 0 : index
    %485 = vector.load %arg7[%c1_172, %c0_173, %c0_174, %c0_175] : memref<2x4x16x16xf32, #tpu.memory_space<vmem>>, vector<1x1x16x16xf32>
    %486 = vector.shape_cast %485 : vector<1x1x16x16xf32> to vector<16x16xf32>
    %487 = vector.extract_strided_slice %197 {offsets = [1, 0], sizes = [1, 256], strides = [1, 1]} : vector<2x1024xf32> to vector<1x256xf32>
    %488 = vector.extract_strided_slice %207 {offsets = [1, 0], sizes = [1, 256], strides = [1, 1]} : vector<2x1024xf32> to vector<1x256xf32>
    %489 = vector.broadcast %487 : vector<1x256xf32> to vector<16x256xf32>
    %490 = vector.broadcast %49 : vector<16x1xf32> to vector<16x256xf32>
    %491 = arith.subf %489, %490 : vector<16x256xf32>
    %492 = math.absf %491 : vector<16x256xf32>
    %cst_176 = arith.constant 1.000000e+00 : f32
    %493 = vector.broadcast %cst_176 : f32 to vector<16x256xf32>
    %494 = arith.subf %493, %492 : vector<16x256xf32>
    %cst_177 = arith.constant 0.000000e+00 : f32
    %495 = vector.broadcast %cst_177 : f32 to vector<16x256xf32>
    %496 = arith.maximumf %495, %494 : vector<16x256xf32>
    %497 = vector.broadcast %488 : vector<1x256xf32> to vector<16x256xf32>
    %498 = vector.broadcast %51 : vector<16x1xf32> to vector<16x256xf32>
    %499 = arith.subf %497, %498 : vector<16x256xf32>
    %500 = math.absf %499 : vector<16x256xf32>
    %cst_178 = arith.constant 1.000000e+00 : f32
    %501 = vector.broadcast %cst_178 : f32 to vector<16x256xf32>
    %502 = arith.subf %501, %500 : vector<16x256xf32>
    %cst_179 = arith.constant 0.000000e+00 : f32
    %503 = vector.broadcast %cst_179 : f32 to vector<16x256xf32>
    %504 = arith.maximumf %503, %502 : vector<16x256xf32>
    %cst_180 = arith.constant dense<0.000000e+00> : vector<16x256xf32>
    %505 = tpu.matmul %486, %496, %cst_180 {dimension_numbers = #tpu.dot_dimension_numbers<[1], [0], [0], [1], [0, 0, 1, 1], [], []>} : vector<16x16xf32>, vector<16x256xf32>, vector<16x256xf32> -> vector<16x256xf32>
    %506 = arith.mulf %504, %505 : vector<16x256xf32>
    %cst_181 = arith.constant dense<0.000000e+00> : vector<256xf32>
    %507 = vector.multi_reduction <add>, %506, %cst_181 [0] : vector<16x256xf32> to vector<256xf32>
    %508 = vector.shape_cast %507 : vector<256xf32> to vector<1x256xf32>
    %c1_182 = arith.constant 1 : index
    %c0_183 = arith.constant 0 : index
    %509 = vector.load %arg10[%c1_182, %c0_183] : memref<2x1024xf32, #tpu.memory_space<vmem>>, vector<1x256xf32>
    tpu.vector_store %arg10[%c1_182, %c0_183], %508 {strides = array<i32>} : memref<2x1024xf32, #tpu.memory_space<vmem>>, vector<1x256xf32>,
    %c0_184 = arith.constant 0 : index
    %c0_185 = arith.constant 0 : index
    %c0_186 = arith.constant 0 : index
    %510 = vector.load %arg6[%c0_184, %c0_185, %c0_186] : memref<4x16x16xf32, #tpu.memory_space<vmem>>, vector<1x16x16xf32>
    %511 = vector.shape_cast %510 : vector<1x16x16xf32> to vector<16x16xf32>
    %512 = vector.extract_strided_slice %173 {offsets = [1, 0], sizes = [1, 256], strides = [1, 1]} : vector<2x1024xf32> to vector<1x256xf32>
    %513 = vector.extract_strided_slice %187 {offsets = [1, 0], sizes = [1, 256], strides = [1, 1]} : vector<2x1024xf32> to vector<1x256xf32>
    %514 = vector.broadcast %512 : vector<1x256xf32> to vector<16x256xf32>
    %515 = vector.broadcast %49 : vector<16x1xf32> to vector<16x256xf32>
    %516 = arith.subf %514, %515 : vector<16x256xf32>
    %517 = math.absf %516 : vector<16x256xf32>
    %cst_187 = arith.constant 1.000000e+00 : f32
    %518 = vector.broadcast %cst_187 : f32 to vector<16x256xf32>
    %519 = arith.subf %518, %517 : vector<16x256xf32>
    %cst_188 = arith.constant 0.000000e+00 : f32
    %520 = vector.broadcast %cst_188 : f32 to vector<16x256xf32>
    %521 = arith.maximumf %520, %519 : vector<16x256xf32>
    %522 = vector.broadcast %513 : vector<1x256xf32> to vector<16x256xf32>
    %523 = vector.broadcast %51 : vector<16x1xf32> to vector<16x256xf32>
    %524 = arith.subf %522, %523 : vector<16x256xf32>
    %525 = math.absf %524 : vector<16x256xf32>
    %cst_189 = arith.constant 1.000000e+00 : f32
    %526 = vector.broadcast %cst_189 : f32 to vector<16x256xf32>
    %527 = arith.subf %526, %525 : vector<16x256xf32>
    %cst_190 = arith.constant 0.000000e+00 : f32
    %528 = vector.broadcast %cst_190 : f32 to vector<16x256xf32>
    %529 = arith.maximumf %528, %527 : vector<16x256xf32>
    %cst_191 = arith.constant dense<0.000000e+00> : vector<16x256xf32>
    %530 = tpu.matmul %511, %521, %cst_191 {dimension_numbers = #tpu.dot_dimension_numbers<[1], [0], [0], [1], [0, 0, 1, 1], [], []>} : vector<16x16xf32>, vector<16x256xf32>, vector<16x256xf32> -> vector<16x256xf32>
    %531 = arith.mulf %529, %530 : vector<16x256xf32>
    %cst_192 = arith.constant dense<0.000000e+00> : vector<256xf32>
    %532 = vector.multi_reduction <add>, %531, %cst_192 [0] : vector<16x256xf32> to vector<256xf32>
    %533 = vector.shape_cast %532 : vector<256xf32> to vector<1x256xf32>
    %534 = arith.mulf %533, %508 : vector<1x256xf32>
    %c1_193 = arith.constant 1 : index
    %c1_194 = arith.constant 1 : index
    %c0_195 = arith.constant 0 : index
    %c0_196 = arith.constant 0 : index
    %535 = vector.load %arg7[%c1_193, %c1_194, %c0_195, %c0_196] : memref<2x4x16x16xf32, #tpu.memory_space<vmem>>, vector<1x1x16x16xf32>
    %536 = vector.shape_cast %535 : vector<1x1x16x16xf32> to vector<16x16xf32>
    %537 = vector.extract_strided_slice %197 {offsets = [1, 256], sizes = [1, 256], strides = [1, 1]} : vector<2x1024xf32> to vector<1x256xf32>
    %538 = vector.extract_strided_slice %207 {offsets = [1, 256], sizes = [1, 256], strides = [1, 1]} : vector<2x1024xf32> to vector<1x256xf32>
    %539 = vector.broadcast %537 : vector<1x256xf32> to vector<16x256xf32>
    %540 = vector.broadcast %49 : vector<16x1xf32> to vector<16x256xf32>
    %541 = arith.subf %539, %540 : vector<16x256xf32>
    %542 = math.absf %541 : vector<16x256xf32>
    %cst_197 = arith.constant 1.000000e+00 : f32
    %543 = vector.broadcast %cst_197 : f32 to vector<16x256xf32>
    %544 = arith.subf %543, %542 : vector<16x256xf32>
    %cst_198 = arith.constant 0.000000e+00 : f32
    %545 = vector.broadcast %cst_198 : f32 to vector<16x256xf32>
    %546 = arith.maximumf %545, %544 : vector<16x256xf32>
    %547 = vector.broadcast %538 : vector<1x256xf32> to vector<16x256xf32>
    %548 = vector.broadcast %51 : vector<16x1xf32> to vector<16x256xf32>
    %549 = arith.subf %547, %548 : vector<16x256xf32>
    %550 = math.absf %549 : vector<16x256xf32>
    %cst_199 = arith.constant 1.000000e+00 : f32
    %551 = vector.broadcast %cst_199 : f32 to vector<16x256xf32>
    %552 = arith.subf %551, %550 : vector<16x256xf32>
    %cst_200 = arith.constant 0.000000e+00 : f32
    %553 = vector.broadcast %cst_200 : f32 to vector<16x256xf32>
    %554 = arith.maximumf %553, %552 : vector<16x256xf32>
    %cst_201 = arith.constant dense<0.000000e+00> : vector<16x256xf32>
    %555 = tpu.matmul %536, %546, %cst_201 {dimension_numbers = #tpu.dot_dimension_numbers<[1], [0], [0], [1], [0, 0, 1, 1], [], []>} : vector<16x16xf32>, vector<16x256xf32>, vector<16x256xf32> -> vector<16x256xf32>
    %556 = arith.mulf %554, %555 : vector<16x256xf32>
    %cst_202 = arith.constant dense<0.000000e+00> : vector<256xf32>
    %557 = vector.multi_reduction <add>, %556, %cst_202 [0] : vector<16x256xf32> to vector<256xf32>
    %558 = vector.shape_cast %557 : vector<256xf32> to vector<1x256xf32>
    %c1_203 = arith.constant 1 : index
    %c256_204 = arith.constant 256 : index
    %559 = vector.load %arg10[%c1_203, %c256_204] : memref<2x1024xf32, #tpu.memory_space<vmem>>, vector<1x256xf32>
    tpu.vector_store %arg10[%c1_203, %c256_204], %558 {strides = array<i32>} : memref<2x1024xf32, #tpu.memory_space<vmem>>, vector<1x256xf32>,
    %c1_205 = arith.constant 1 : index
    %c0_206 = arith.constant 0 : index
    %c0_207 = arith.constant 0 : index
    %560 = vector.load %arg6[%c1_205, %c0_206, %c0_207] : memref<4x16x16xf32, #tpu.memory_space<vmem>>, vector<1x16x16xf32>
    %561 = vector.shape_cast %560 : vector<1x16x16xf32> to vector<16x16xf32>
    %562 = vector.extract_strided_slice %173 {offsets = [1, 256], sizes = [1, 256], strides = [1, 1]} : vector<2x1024xf32> to vector<1x256xf32>
    %563 = vector.extract_strided_slice %187 {offsets = [1, 256], sizes = [1, 256], strides = [1, 1]} : vector<2x1024xf32> to vector<1x256xf32>
    %564 = vector.broadcast %562 : vector<1x256xf32> to vector<16x256xf32>
    %565 = vector.broadcast %49 : vector<16x1xf32> to vector<16x256xf32>
    %566 = arith.subf %564, %565 : vector<16x256xf32>
    %567 = math.absf %566 : vector<16x256xf32>
    %cst_208 = arith.constant 1.000000e+00 : f32
    %568 = vector.broadcast %cst_208 : f32 to vector<16x256xf32>
    %569 = arith.subf %568, %567 : vector<16x256xf32>
    %cst_209 = arith.constant 0.000000e+00 : f32
    %570 = vector.broadcast %cst_209 : f32 to vector<16x256xf32>
    %571 = arith.maximumf %570, %569 : vector<16x256xf32>
    %572 = vector.broadcast %563 : vector<1x256xf32> to vector<16x256xf32>
    %573 = vector.broadcast %51 : vector<16x1xf32> to vector<16x256xf32>
    %574 = arith.subf %572, %573 : vector<16x256xf32>
    %575 = math.absf %574 : vector<16x256xf32>
    %cst_210 = arith.constant 1.000000e+00 : f32
    %576 = vector.broadcast %cst_210 : f32 to vector<16x256xf32>
    %577 = arith.subf %576, %575 : vector<16x256xf32>
    %cst_211 = arith.constant 0.000000e+00 : f32
    %578 = vector.broadcast %cst_211 : f32 to vector<16x256xf32>
    %579 = arith.maximumf %578, %577 : vector<16x256xf32>
    %cst_212 = arith.constant dense<0.000000e+00> : vector<16x256xf32>
    %580 = tpu.matmul %561, %571, %cst_212 {dimension_numbers = #tpu.dot_dimension_numbers<[1], [0], [0], [1], [0, 0, 1, 1], [], []>} : vector<16x16xf32>, vector<16x256xf32>, vector<16x256xf32> -> vector<16x256xf32>
    %581 = arith.mulf %579, %580 : vector<16x256xf32>
    %cst_213 = arith.constant dense<0.000000e+00> : vector<256xf32>
    %582 = vector.multi_reduction <add>, %581, %cst_213 [0] : vector<16x256xf32> to vector<256xf32>
    %583 = vector.shape_cast %582 : vector<256xf32> to vector<1x256xf32>
    %584 = arith.mulf %583, %558 : vector<1x256xf32>
    %585 = arith.addf %534, %584 : vector<1x256xf32>
    %586 = arith.addf %508, %558 : vector<1x256xf32>
    %c1_214 = arith.constant 1 : index
    %c2_215 = arith.constant 2 : index
    %c0_216 = arith.constant 0 : index
    %c0_217 = arith.constant 0 : index
    %587 = vector.load %arg7[%c1_214, %c2_215, %c0_216, %c0_217] : memref<2x4x16x16xf32, #tpu.memory_space<vmem>>, vector<1x1x16x16xf32>
    %588 = vector.shape_cast %587 : vector<1x1x16x16xf32> to vector<16x16xf32>
    %589 = vector.extract_strided_slice %197 {offsets = [1, 512], sizes = [1, 256], strides = [1, 1]} : vector<2x1024xf32> to vector<1x256xf32>
    %590 = vector.extract_strided_slice %207 {offsets = [1, 512], sizes = [1, 256], strides = [1, 1]} : vector<2x1024xf32> to vector<1x256xf32>
    %591 = vector.broadcast %589 : vector<1x256xf32> to vector<16x256xf32>
    %592 = vector.broadcast %49 : vector<16x1xf32> to vector<16x256xf32>
    %593 = arith.subf %591, %592 : vector<16x256xf32>
    %594 = math.absf %593 : vector<16x256xf32>
    %cst_218 = arith.constant 1.000000e+00 : f32
    %595 = vector.broadcast %cst_218 : f32 to vector<16x256xf32>
    %596 = arith.subf %595, %594 : vector<16x256xf32>
    %cst_219 = arith.constant 0.000000e+00 : f32
    %597 = vector.broadcast %cst_219 : f32 to vector<16x256xf32>
    %598 = arith.maximumf %597, %596 : vector<16x256xf32>
    %599 = vector.broadcast %590 : vector<1x256xf32> to vector<16x256xf32>
    %600 = vector.broadcast %51 : vector<16x1xf32> to vector<16x256xf32>
    %601 = arith.subf %599, %600 : vector<16x256xf32>
    %602 = math.absf %601 : vector<16x256xf32>
    %cst_220 = arith.constant 1.000000e+00 : f32
    %603 = vector.broadcast %cst_220 : f32 to vector<16x256xf32>
    %604 = arith.subf %603, %602 : vector<16x256xf32>
    %cst_221 = arith.constant 0.000000e+00 : f32
    %605 = vector.broadcast %cst_221 : f32 to vector<16x256xf32>
    %606 = arith.maximumf %605, %604 : vector<16x256xf32>
    %cst_222 = arith.constant dense<0.000000e+00> : vector<16x256xf32>
    %607 = tpu.matmul %588, %598, %cst_222 {dimension_numbers = #tpu.dot_dimension_numbers<[1], [0], [0], [1], [0, 0, 1, 1], [], []>} : vector<16x16xf32>, vector<16x256xf32>, vector<16x256xf32> -> vector<16x256xf32>
    %608 = arith.mulf %606, %607 : vector<16x256xf32>
    %cst_223 = arith.constant dense<0.000000e+00> : vector<256xf32>
    %609 = vector.multi_reduction <add>, %608, %cst_223 [0] : vector<16x256xf32> to vector<256xf32>
    %610 = vector.shape_cast %609 : vector<256xf32> to vector<1x256xf32>
    %c1_224 = arith.constant 1 : index
    %c512_225 = arith.constant 512 : index
    %611 = vector.load %arg10[%c1_224, %c512_225] : memref<2x1024xf32, #tpu.memory_space<vmem>>, vector<1x256xf32>
    tpu.vector_store %arg10[%c1_224, %c512_225], %610 {strides = array<i32>} : memref<2x1024xf32, #tpu.memory_space<vmem>>, vector<1x256xf32>,
    %c2_226 = arith.constant 2 : index
    %c0_227 = arith.constant 0 : index
    %c0_228 = arith.constant 0 : index
    %612 = vector.load %arg6[%c2_226, %c0_227, %c0_228] : memref<4x16x16xf32, #tpu.memory_space<vmem>>, vector<1x16x16xf32>
    %613 = vector.shape_cast %612 : vector<1x16x16xf32> to vector<16x16xf32>
    %614 = vector.extract_strided_slice %173 {offsets = [1, 512], sizes = [1, 256], strides = [1, 1]} : vector<2x1024xf32> to vector<1x256xf32>
    %615 = vector.extract_strided_slice %187 {offsets = [1, 512], sizes = [1, 256], strides = [1, 1]} : vector<2x1024xf32> to vector<1x256xf32>
    %616 = vector.broadcast %614 : vector<1x256xf32> to vector<16x256xf32>
    %617 = vector.broadcast %49 : vector<16x1xf32> to vector<16x256xf32>
    %618 = arith.subf %616, %617 : vector<16x256xf32>
    %619 = math.absf %618 : vector<16x256xf32>
    %cst_229 = arith.constant 1.000000e+00 : f32
    %620 = vector.broadcast %cst_229 : f32 to vector<16x256xf32>
    %621 = arith.subf %620, %619 : vector<16x256xf32>
    %cst_230 = arith.constant 0.000000e+00 : f32
    %622 = vector.broadcast %cst_230 : f32 to vector<16x256xf32>
    %623 = arith.maximumf %622, %621 : vector<16x256xf32>
    %624 = vector.broadcast %615 : vector<1x256xf32> to vector<16x256xf32>
    %625 = vector.broadcast %51 : vector<16x1xf32> to vector<16x256xf32>
    %626 = arith.subf %624, %625 : vector<16x256xf32>
    %627 = math.absf %626 : vector<16x256xf32>
    %cst_231 = arith.constant 1.000000e+00 : f32
    %628 = vector.broadcast %cst_231 : f32 to vector<16x256xf32>
    %629 = arith.subf %628, %627 : vector<16x256xf32>
    %cst_232 = arith.constant 0.000000e+00 : f32
    %630 = vector.broadcast %cst_232 : f32 to vector<16x256xf32>
    %631 = arith.maximumf %630, %629 : vector<16x256xf32>
    %cst_233 = arith.constant dense<0.000000e+00> : vector<16x256xf32>
    %632 = tpu.matmul %613, %623, %cst_233 {dimension_numbers = #tpu.dot_dimension_numbers<[1], [0], [0], [1], [0, 0, 1, 1], [], []>} : vector<16x16xf32>, vector<16x256xf32>, vector<16x256xf32> -> vector<16x256xf32>
    %633 = arith.mulf %631, %632 : vector<16x256xf32>
    %cst_234 = arith.constant dense<0.000000e+00> : vector<256xf32>
    %634 = vector.multi_reduction <add>, %633, %cst_234 [0] : vector<16x256xf32> to vector<256xf32>
    %635 = vector.shape_cast %634 : vector<256xf32> to vector<1x256xf32>
    %636 = arith.mulf %635, %610 : vector<1x256xf32>
    %637 = arith.addf %585, %636 : vector<1x256xf32>
    %638 = arith.addf %586, %610 : vector<1x256xf32>
    %c1_235 = arith.constant 1 : index
    %c3_236 = arith.constant 3 : index
    %c0_237 = arith.constant 0 : index
    %c0_238 = arith.constant 0 : index
    %639 = vector.load %arg7[%c1_235, %c3_236, %c0_237, %c0_238] : memref<2x4x16x16xf32, #tpu.memory_space<vmem>>, vector<1x1x16x16xf32>
    %640 = vector.shape_cast %639 : vector<1x1x16x16xf32> to vector<16x16xf32>
    %641 = vector.extract_strided_slice %197 {offsets = [1, 768], sizes = [1, 256], strides = [1, 1]} : vector<2x1024xf32> to vector<1x256xf32>
    %642 = vector.extract_strided_slice %207 {offsets = [1, 768], sizes = [1, 256], strides = [1, 1]} : vector<2x1024xf32> to vector<1x256xf32>
    %643 = vector.broadcast %641 : vector<1x256xf32> to vector<16x256xf32>
    %644 = vector.broadcast %49 : vector<16x1xf32> to vector<16x256xf32>
    %645 = arith.subf %643, %644 : vector<16x256xf32>
    %646 = math.absf %645 : vector<16x256xf32>
    %cst_239 = arith.constant 1.000000e+00 : f32
    %647 = vector.broadcast %cst_239 : f32 to vector<16x256xf32>
    %648 = arith.subf %647, %646 : vector<16x256xf32>
    %cst_240 = arith.constant 0.000000e+00 : f32
    %649 = vector.broadcast %cst_240 : f32 to vector<16x256xf32>
    %650 = arith.maximumf %649, %648 : vector<16x256xf32>
    %651 = vector.broadcast %642 : vector<1x256xf32> to vector<16x256xf32>
    %652 = vector.broadcast %51 : vector<16x1xf32> to vector<16x256xf32>
    %653 = arith.subf %651, %652 : vector<16x256xf32>
    %654 = math.absf %653 : vector<16x256xf32>
    %cst_241 = arith.constant 1.000000e+00 : f32
    %655 = vector.broadcast %cst_241 : f32 to vector<16x256xf32>
    %656 = arith.subf %655, %654 : vector<16x256xf32>
    %cst_242 = arith.constant 0.000000e+00 : f32
    %657 = vector.broadcast %cst_242 : f32 to vector<16x256xf32>
    %658 = arith.maximumf %657, %656 : vector<16x256xf32>
    %cst_243 = arith.constant dense<0.000000e+00> : vector<16x256xf32>
    %659 = tpu.matmul %640, %650, %cst_243 {dimension_numbers = #tpu.dot_dimension_numbers<[1], [0], [0], [1], [0, 0, 1, 1], [], []>} : vector<16x16xf32>, vector<16x256xf32>, vector<16x256xf32> -> vector<16x256xf32>
    %660 = arith.mulf %658, %659 : vector<16x256xf32>
    %cst_244 = arith.constant dense<0.000000e+00> : vector<256xf32>
    %661 = vector.multi_reduction <add>, %660, %cst_244 [0] : vector<16x256xf32> to vector<256xf32>
    %662 = vector.shape_cast %661 : vector<256xf32> to vector<1x256xf32>
    %c1_245 = arith.constant 1 : index
    %c768_246 = arith.constant 768 : index
    %663 = vector.load %arg10[%c1_245, %c768_246] : memref<2x1024xf32, #tpu.memory_space<vmem>>, vector<1x256xf32>
    tpu.vector_store %arg10[%c1_245, %c768_246], %662 {strides = array<i32>} : memref<2x1024xf32, #tpu.memory_space<vmem>>, vector<1x256xf32>,
    %c3_247 = arith.constant 3 : index
    %c0_248 = arith.constant 0 : index
    %c0_249 = arith.constant 0 : index
    %664 = vector.load %arg6[%c3_247, %c0_248, %c0_249] : memref<4x16x16xf32, #tpu.memory_space<vmem>>, vector<1x16x16xf32>
    %665 = vector.shape_cast %664 : vector<1x16x16xf32> to vector<16x16xf32>
    %666 = vector.extract_strided_slice %173 {offsets = [1, 768], sizes = [1, 256], strides = [1, 1]} : vector<2x1024xf32> to vector<1x256xf32>
    %667 = vector.extract_strided_slice %187 {offsets = [1, 768], sizes = [1, 256], strides = [1, 1]} : vector<2x1024xf32> to vector<1x256xf32>
    %668 = vector.broadcast %666 : vector<1x256xf32> to vector<16x256xf32>
    %669 = vector.broadcast %49 : vector<16x1xf32> to vector<16x256xf32>
    %670 = arith.subf %668, %669 : vector<16x256xf32>
    %671 = math.absf %670 : vector<16x256xf32>
    %cst_250 = arith.constant 1.000000e+00 : f32
    %672 = vector.broadcast %cst_250 : f32 to vector<16x256xf32>
    %673 = arith.subf %672, %671 : vector<16x256xf32>
    %cst_251 = arith.constant 0.000000e+00 : f32
    %674 = vector.broadcast %cst_251 : f32 to vector<16x256xf32>
    %675 = arith.maximumf %674, %673 : vector<16x256xf32>
    %676 = vector.broadcast %667 : vector<1x256xf32> to vector<16x256xf32>
    %677 = vector.broadcast %51 : vector<16x1xf32> to vector<16x256xf32>
    %678 = arith.subf %676, %677 : vector<16x256xf32>
    %679 = math.absf %678 : vector<16x256xf32>
    %cst_252 = arith.constant 1.000000e+00 : f32
    %680 = vector.broadcast %cst_252 : f32 to vector<16x256xf32>
    %681 = arith.subf %680, %679 : vector<16x256xf32>
    %cst_253 = arith.constant 0.000000e+00 : f32
    %682 = vector.broadcast %cst_253 : f32 to vector<16x256xf32>
    %683 = arith.maximumf %682, %681 : vector<16x256xf32>
    %cst_254 = arith.constant dense<0.000000e+00> : vector<16x256xf32>
    %684 = tpu.matmul %665, %675, %cst_254 {dimension_numbers = #tpu.dot_dimension_numbers<[1], [0], [0], [1], [0, 0, 1, 1], [], []>} : vector<16x16xf32>, vector<16x256xf32>, vector<16x256xf32> -> vector<16x256xf32>
    %685 = arith.mulf %683, %684 : vector<16x256xf32>
    %cst_255 = arith.constant dense<0.000000e+00> : vector<256xf32>
    %686 = vector.multi_reduction <add>, %685, %cst_255 [0] : vector<16x256xf32> to vector<256xf32>
    %687 = vector.shape_cast %686 : vector<256xf32> to vector<1x256xf32>
    %688 = arith.mulf %687, %662 : vector<1x256xf32>
    %689 = arith.addf %637, %688 : vector<1x256xf32>
    %690 = arith.addf %638, %662 : vector<1x256xf32>
    %cst_256 = arith.constant 0.000000e+00 : f32
    %691 = vector.broadcast %cst_256 : f32 to vector<1x256xf32>
    %692 = arith.cmpf oeq, %690, %691 : vector<1x256xf32>
    %cst_257 = arith.constant 1.000000e+00 : f32
    %693 = vector.broadcast %cst_257 : f32 to vector<1x256xf32>
    %694 = arith.select %692, %693, %690 : vector<1x256xi1>, vector<1x256xf32>
    %695 = arith.divf %689, %694 : vector<1x256xf32>
    %696 = vector.broadcast %695 : vector<1x256xf32> to vector<16x256xf32>
    %697 = arith.mulf %58, %696 : vector<16x256xf32>
    %cst_258 = arith.constant dense<0.000000e+00> : vector<16x16xf32>
    %698 = tpu.matmul %697, %65, %cst_258 {dimension_numbers = #tpu.dot_dimension_numbers<[1], [0], [0], [1], [0, 0, 1, 1], [], []>} : vector<16x256xf32>, vector<256x16xf32>, vector<16x16xf32> -> vector<16x16xf32>
    %699 = vector.extract_strided_slice %229 {offsets = [1, 0], sizes = [1, 256], strides = [1, 1]} : vector<2x256xf32> to vector<1x256xf32>
    %700 = vector.extract_strided_slice %247 {offsets = [1, 0], sizes = [1, 256], strides = [1, 1]} : vector<2x256xf32> to vector<1x256xf32>
    %701 = vector.broadcast %699 : vector<1x256xf32> to vector<16x256xf32>
    %702 = vector.broadcast %49 : vector<16x1xf32> to vector<16x256xf32>
    %703 = arith.subf %701, %702 : vector<16x256xf32>
    %704 = math.absf %703 : vector<16x256xf32>
    %cst_259 = arith.constant 1.000000e+00 : f32
    %705 = vector.broadcast %cst_259 : f32 to vector<16x256xf32>
    %706 = arith.subf %705, %704 : vector<16x256xf32>
    %cst_260 = arith.constant 0.000000e+00 : f32
    %707 = vector.broadcast %cst_260 : f32 to vector<16x256xf32>
    %708 = arith.maximumf %707, %706 : vector<16x256xf32>
    %709 = vector.broadcast %700 : vector<1x256xf32> to vector<16x256xf32>
    %710 = vector.broadcast %51 : vector<16x1xf32> to vector<16x256xf32>
    %711 = arith.subf %709, %710 : vector<16x256xf32>
    %712 = math.absf %711 : vector<16x256xf32>
    %cst_261 = arith.constant 1.000000e+00 : f32
    %713 = vector.broadcast %cst_261 : f32 to vector<16x256xf32>
    %714 = arith.subf %713, %712 : vector<16x256xf32>
    %cst_262 = arith.constant 0.000000e+00 : f32
    %715 = vector.broadcast %cst_262 : f32 to vector<16x256xf32>
    %716 = arith.maximumf %715, %714 : vector<16x256xf32>
    %cst_263 = arith.constant dense<0.000000e+00> : vector<16x256xf32>
    %717 = tpu.matmul %698, %708, %cst_263 {dimension_numbers = #tpu.dot_dimension_numbers<[1], [0], [0], [1], [0, 0, 1, 1], [], []>} : vector<16x16xf32>, vector<16x256xf32>, vector<16x256xf32> -> vector<16x256xf32>
    %718 = arith.mulf %716, %717 : vector<16x256xf32>
    %cst_264 = arith.constant dense<0.000000e+00> : vector<256xf32>
    %719 = vector.multi_reduction <add>, %718, %cst_264 [0] : vector<16x256xf32> to vector<256xf32>
    %720 = vector.shape_cast %719 : vector<256xf32> to vector<1x256xf32>
    %c1_265 = arith.constant 1 : index
    %c0_266 = arith.constant 0 : index
    %721 = vector.load %arg9[%c1_265, %c0_266] : memref<2x256xf32, #tpu.memory_space<vmem>>, vector<1x256xf32>
    tpu.vector_store %arg9[%c1_265, %c0_266], %720 {strides = array<i32>} : memref<2x256xf32, #tpu.memory_space<vmem>>, vector<1x256xf32>,
    return
  }
}

</mosaic_0001>

<llo_original>
// kernel: popvae_forward.1
$region0: #{popvae_forward.1}
  #allocation0 [shape = 'u32[]', space=smem, size = 0x4, offset = 0x4, fixed_abs, tag = 'smem constant byte address 0x4 - core index']
  #allocation1 [shape = 'u32[144,128]{1,0:T(1,128)}', space=vmem, size = 0x12000, scoped, tag = 'internal scratch']
  %s0 = inlined_call_operand.vmem [shape: f32[2,256], index: 0, kind: input, shape index: {}]
  %s1 = inlined_call_operand.vmem [shape: f32[256,32], index: 1, kind: input, shape index: {}]
  %s2 = inlined_call_operand.vmem [shape: f32[32,32], index: 2, kind: input, shape index: {}]
  %s3 = inlined_call_operand.vmem [shape: f32[32,32], index: 3, kind: input, shape index: {}]
  %s4 = inlined_call_operand.vmem [shape: f32[8,32], index: 4, kind: input, shape index: {}]
  %s5 = inlined_call_operand.vmem [shape: f32[2,16], index: 5, kind: input, shape index: {}]
  %s6 = inlined_call_operand.vmem [shape: f32[4,16,16], index: 6, kind: input, shape index: {}]
  %s7 = inlined_call_operand.vmem [shape: f32[2,4,16,16], index: 7, kind: input, shape index: {}]
  %s8 = inlined_call_operand.vmem [shape: f32[2,128], index: 8, kind: output, shape index: {0}]
  %s9 = inlined_call_operand.vmem [shape: f32[2,256], index: 9, kind: output, shape index: {1}]
  %s10 = inlined_call_operand.vmem [shape: f32[2,1024], index: 10, kind: output, shape index: {2}]
  %11 = xla_tuple %s8, %s9, %s10
  %s12 = sld [smem:[#allocation0]]
  $region58: #{popvae_forward.1} parent=0
    _
  %s14 = ssub.s32 1, %s12
  %s15 = scalar_select 0, %s14, %s12
  // Predicated region
  $region2: #{popvae_forward.1} parent=0 // pred_check
    _
  $region3: #{popvae_forward.1} parent=0 // pred_check_branch
    %17 = sbr.rel (0) target = $region5
  $region4: #{popvae_forward.1} parent=0 // pred_region
    _
  $region5: #{popvae_forward.1} parent=0 // pred_fallthru
    _
  // Predicated region
  $region6: #{popvae_forward.1} parent=0 // pred_check
    _
  $region7: #{popvae_forward.1} parent=0 // pred_check_branch
    %19 = sbr.rel (0) target = $region9
  $region8: #{popvae_forward.1} parent=0 // pred_region
    _
  $region9: #{popvae_forward.1} parent=0 // pred_fallthru
    _
  // Predicated region
  $region10: #{popvae_forward.1} parent=0 // pred_check
    _
  $region11: #{popvae_forward.1} parent=0 // pred_check_branch
    %21 = sbr.rel (0) target = $region13
  $region12: #{popvae_forward.1} parent=0 // pred_region
    _
  $region13: #{popvae_forward.1} parent=0 // pred_fallthru
    _
  // Predicated region
  $region14: #{popvae_forward.1} parent=0 // pred_check
    _
  $region15: #{popvae_forward.1} parent=0 // pred_check_branch
    %23 = sbr.rel (0) target = $region17
  $region16: #{popvae_forward.1} parent=0 // pred_region
    _
  $region17: #{popvae_forward.1} parent=0 // pred_fallthru
    _
  // Predicated region
  $region18: #{popvae_forward.1} parent=0 // pred_check
    _
  $region19: #{popvae_forward.1} parent=0 // pred_check_branch
    %25 = sbr.rel (0) target = $region21
  $region20: #{popvae_forward.1} parent=0 // pred_region
    _
  $region21: #{popvae_forward.1} parent=0 // pred_fallthru
    _
  // Predicated region
  $region22: #{popvae_forward.1} parent=0 // pred_check
    _
  $region23: #{popvae_forward.1} parent=0 // pred_check_branch
    %27 = sbr.rel (0) target = $region25
  $region24: #{popvae_forward.1} parent=0 // pred_region
    _
  $region25: #{popvae_forward.1} parent=0 // pred_fallthru
    _
  // Predicated region
  $region26: #{popvae_forward.1} parent=0 // pred_check
    _
  $region27: #{popvae_forward.1} parent=0 // pred_check_branch
    %29 = sbr.rel (0) target = $region29
  $region28: #{popvae_forward.1} parent=0 // pred_region
    _
  $region29: #{popvae_forward.1} parent=0 // pred_fallthru
    _
  // Predicated region
  $region30: #{popvae_forward.1} parent=0 // pred_check
    _
  $region31: #{popvae_forward.1} parent=0 // pred_check_branch
    %31 = sbr.rel (0) target = $region33
  $region32: #{popvae_forward.1} parent=0 // pred_region
    _
  $region33: #{popvae_forward.1} parent=0 // pred_fallthru
    _
  %v32 = vlaneseq
  %v33 = vand.u32 %v32, 127
  %v34 = vadd.s32 %v33, 128
  %v35 = vadd.s32 %v33, 256
  %v36 = vadd.s32 %v33, 384
  %v37 = vadd.s32 %v33, 512
  %v38 = vadd.s32 %v33, 640
  %v39 = vadd.s32 %v33, 768
  %v40 = vadd.s32 %v33, 896
  %v41 = vand.u32 %v33, 255
  %v42 = vand.u32 %v34, 255
  %v43 = vand.u32 %v35, 255
  %v44 = vand.u32 %v36, 255
  %v45 = vand.u32 %v37, 255
  %v46 = vand.u32 %v38, 255
  %v47 = vand.u32 %v39, 255
  %v48 = vand.u32 %v40, 255
  %v49 = vand.u32 %v41, 15
  %v50 = vand.u32 %v42, 15
  %v51 = vand.u32 %v43, 15
  %v52 = vand.u32 %v44, 15
  %v53 = vand.u32 %v45, 15
  %v54 = vand.u32 %v46, 15
  %v55 = vand.u32 %v47, 15
  %v56 = vand.u32 %v48, 15
  %v57 = vcvt.s32.f32 %v49
  %v58 = vcvt.s32.f32 %v50
  %v59 = vcvt.s32.f32 %v51
  %v60 = vcvt.s32.f32 %v52
  %v61 = vcvt.s32.f32 %v53
  %v62 = vcvt.s32.f32 %v54
  %v63 = vcvt.s32.f32 %v55
  %v64 = vcvt.s32.f32 %v56
  %v65 = vmul.f32 %v57, 2.0
  %v66 = vmul.f32 %v58, 2.0
  %v67 = vmul.f32 %v59, 2.0
  %v68 = vmul.f32 %v60, 2.0
  %v69 = vmul.f32 %v61, 2.0
  %v70 = vmul.f32 %v62, 2.0
  %v71 = vmul.f32 %v63, 2.0
  %v72 = vmul.f32 %v64, 2.0
  %v73 = vadd.f32 %v65, 1.0
  %v74 = vadd.f32 %v66, 1.0
  %v75 = vadd.f32 %v67, 1.0
  %v76 = vadd.f32 %v68, 1.0
  %v77 = vadd.f32 %v69, 1.0
  %v78 = vadd.f32 %v70, 1.0
  %v79 = vadd.f32 %v71, 1.0
  %v80 = vadd.f32 %v72, 1.0
  %v81 = vrcp.pop 16.0
  %v82 = vmul.f32 %v73, %v81
  %v83 = vmul.f32 %v74, %v81
  %v84 = vmul.f32 %v75, %v81
  %v85 = vmul.f32 %v76, %v81
  %v86 = vmul.f32 %v77, %v81
  %v87 = vmul.f32 %v78, %v81
  %v88 = vmul.f32 %v79, %v81
  %v89 = vmul.f32 %v80, %v81
  %v90 = vsub.f32 %v82, 1.0
  %v91 = vsub.f32 %v83, 1.0
  %v92 = vsub.f32 %v84, 1.0
  %v93 = vsub.f32 %v85, 1.0
  %v94 = vsub.f32 %v86, 1.0
  %v95 = vsub.f32 %v87, 1.0
  %v96 = vsub.f32 %v88, 1.0
  %v97 = vsub.f32 %v89, 1.0
  %v98 = vshra.s32 %v41, 4
  %v99 = vshra.s32 %v42, 4
  %v100 = vshra.s32 %v43, 4
  %v101 = vshra.s32 %v44, 4
  %v102 = vshra.s32 %v45, 4
  %v103 = vshra.s32 %v46, 4
  %v104 = vshra.s32 %v47, 4
  %v105 = vshra.s32 %v48, 4
  %v106 = vcvt.s32.f32 %v98
  %v107 = vcvt.s32.f32 %v99
  %v108 = vcvt.s32.f32 %v100
  %v109 = vcvt.s32.f32 %v101
  %v110 = vcvt.s32.f32 %v102
  %v111 = vcvt.s32.f32 %v103
  %v112 = vcvt.s32.f32 %v104
  %v113 = vcvt.s32.f32 %v105
  %v114 = vmul.f32 %v106, 2.0
  %v115 = vmul.f32 %v107, 2.0
  %v116 = vmul.f32 %v108, 2.0
  %v117 = vmul.f32 %v109, 2.0
  %v118 = vmul.f32 %v110, 2.0
  %v119 = vmul.f32 %v111, 2.0
  %v120 = vmul.f32 %v112, 2.0
  %v121 = vmul.f32 %v113, 2.0
  %v122 = vadd.f32 %v114, 1.0
  %v123 = vadd.f32 %v115, 1.0
  %v124 = vadd.f32 %v116, 1.0
  %v125 = vadd.f32 %v117, 1.0
  %v126 = vadd.f32 %v118, 1.0
  %v127 = vadd.f32 %v119, 1.0
  %v128 = vadd.f32 %v120, 1.0
  %v129 = vadd.f32 %v121, 1.0
  %v130 = vmul.f32 %v122, %v81
  %v131 = vmul.f32 %v123, %v81
  %v132 = vmul.f32 %v124, %v81
  %v133 = vmul.f32 %v125, %v81
  %v134 = vmul.f32 %v126, %v81
  %v135 = vmul.f32 %v127, %v81
  %v136 = vmul.f32 %v128, %v81
  %v137 = vmul.f32 %v129, %v81
  %v138 = vsub.f32 %v130, 1.0
  %v139 = vsub.f32 %v131, 1.0
  %v140 = vsub.f32 %v132, 1.0
  %v141 = vsub.f32 %v133, 1.0
  %v142 = vsub.f32 %v134, 1.0
  %v143 = vsub.f32 %v135, 1.0
  %v144 = vsub.f32 %v136, 1.0
  %v145 = vsub.f32 %v137, 1.0
  %v146 = vand.u32 %v33, 15
  %v147 = vand.u32 %v34, 15
  %v148 = vcvt.s32.f32 %v146
  %v149 = vcvt.s32.f32 %v147
  %v150 = vmul.f32 %v148, 2.0
  %v151 = vmul.f32 %v149, 2.0
  %v152 = vadd.f32 %v150, 1.0
  %v153 = vadd.f32 %v151, 1.0
  %v154 = vmul.f32 %v152, %v81
  %v155 = vmul.f32 %v153, %v81
  %v156 = vsub.f32 %v154, 1.0
  %v157 = vsub.f32 %v155, 1.0
  %v158 = vshra.s32 %v33, 4
  %v159 = vshra.s32 %v34, 4
  %v160 = vcvt.s32.f32 %v158
  %v161 = vcvt.s32.f32 %v159
  %v162 = vmul.f32 %v160, 2.0
  %v163 = vmul.f32 %v161, 2.0
  %v164 = vadd.f32 %v162, 1.0
  %v165 = vadd.f32 %v163, 1.0
  %v166 = vmul.f32 %v164, %v81
  %v167 = vmul.f32 %v165, %v81
  %v168 = vsub.f32 %v166, 1.0
  %v169 = vsub.f32 %v167, 1.0
  %v170 = vlaneseq
  %v171 = vshrl.u32 %v170, 7
  %v172 = vadd.s32 %v171, 8
  %v173 = vcvt.s32.f32 %v171
  %v174 = vcvt.s32.f32 %v172
  %vm175 = vcmp.eq.s32.totalorder %v171, %v158
  %vm176 = vcmp.eq.s32.totalorder %v171, %v159
  %vm177 = vcmp.eq.s32.totalorder %v172, %v158
  %vm178 = vcmp.eq.s32.totalorder %v172, %v159
  %v179 = vsel %vm175, 1, 0
  %v180 = vsel %vm176, 1, 0
  %v181 = vsel %vm177, 1, 0
  %v182 = vsel %vm178, 1, 0
  %v183 = vcvt.s32.f32 %v179
  %v184 = vcvt.s32.f32 %v180
  %v185 = vcvt.s32.f32 %v181
  %v186 = vcvt.s32.f32 %v182
  %v187 = vadd.s32 %v171, 16
  %v188 = vadd.s32 %v171, 24
  %v189 = vadd.s32 %v171, 32
  %v190 = vadd.s32 %v171, 40
  %v191 = vadd.s32 %v171, 48
  %v192 = vadd.s32 %v171, 56
  %v193 = vadd.s32 %v171, 64
  %v194 = vadd.s32 %v171, 72
  %v195 = vadd.s32 %v171, 80
  %v196 = vadd.s32 %v171, 88
  %v197 = vadd.s32 %v171, 96
  %v198 = vadd.s32 %v171, 104
  %v199 = vadd.s32 %v171, 112
  %v200 = vadd.s32 %v171, 120
  %v201 = vadd.s32 %v171, 128
  %v202 = vadd.s32 %v171, 136
  %v203 = vadd.s32 %v171, 144
  %v204 = vadd.s32 %v171, 152
  %v205 = vadd.s32 %v171, 160
  %v206 = vadd.s32 %v171, 168
  %v207 = vadd.s32 %v171, 176
  %v208 = vadd.s32 %v171, 184
  %v209 = vadd.s32 %v171, 192
  %v210 = vadd.s32 %v171, 200
  %v211 = vadd.s32 %v171, 208
  %v212 = vadd.s32 %v171, 216
  %v213 = vadd.s32 %v171, 224
  %v214 = vadd.s32 %v171, 232
  %v215 = vadd.s32 %v171, 240
  %v216 = vadd.s32 %v171, 248
  %v217 = vand.u32 %v171, 15
  %v218 = vand.u32 %v172, 15
  %v219 = vand.u32 %v187, 15
  %v220 = vand.u32 %v188, 15
  %v221 = vand.u32 %v189, 15
  %v222 = vand.u32 %v190, 15
  %v223 = vand.u32 %v191, 15
  %v224 = vand.u32 %v192, 15
  %v225 = vand.u32 %v193, 15
  %v226 = vand.u32 %v194, 15
  %v227 = vand.u32 %v195, 15
  %v228 = vand.u32 %v196, 15
  %v229 = vand.u32 %v197, 15
  %v230 = vand.u32 %v198, 15
  %v231 = vand.u32 %v199, 15
  %v232 = vand.u32 %v200, 15
  %v233 = vand.u32 %v201, 15
  %v234 = vand.u32 %v202, 15
  %v235 = vand.u32 %v203, 15
  %v236 = vand.u32 %v204, 15
  %v237 = vand.u32 %v205, 15
  %v238 = vand.u32 %v206, 15
  %v239 = vand.u32 %v207, 15
  %v240 = vand.u32 %v208, 15
  %v241 = vand.u32 %v209, 15
  %v242 = vand.u32 %v210, 15
  %v243 = vand.u32 %v211, 15
  %v244 = vand.u32 %v212, 15
  %v245 = vand.u32 %v213, 15
  %v246 = vand.u32 %v214, 15
  %v247 = vand.u32 %v215, 15
  %v248 = vand.u32 %v216, 15
  %vm249 = vcmp.eq.s32.totalorder %v217, %v33
  %vm250 = vcmp.eq.s32.totalorder %v218, %v33
  %vm251 = vcmp.eq.s32.totalorder %v219, %v33
  %vm252 = vcmp.eq.s32.totalorder %v220, %v33
  %vm253 = vcmp.eq.s32.totalorder %v221, %v33
  %vm254 = vcmp.eq.s32.totalorder %v222, %v33
  %vm255 = vcmp.eq.s32.totalorder %v223, %v33
  %vm256 = vcmp.eq.s32.totalorder %v224, %v33
  %vm257 = vcmp.eq.s32.totalorder %v225, %v33
  %vm258 = vcmp.eq.s32.totalorder %v226, %v33
  %vm259 = vcmp.eq.s32.totalorder %v227, %v33
  %vm260 = vcmp.eq.s32.totalorder %v228, %v33
  %vm261 = vcmp.eq.s32.totalorder %v229, %v33
  %vm262 = vcmp.eq.s32.totalorder %v230, %v33
  %vm263 = vcmp.eq.s32.totalorder %v231, %v33
  %vm264 = vcmp.eq.s32.totalorder %v232, %v33
  %vm265 = vcmp.eq.s32.totalorder %v233, %v33
  %vm266 = vcmp.eq.s32.totalorder %v234, %v33
  %vm267 = vcmp.eq.s32.totalorder %v235, %v33
  %vm268 = vcmp.eq.s32.totalorder %v236, %v33
  %vm269 = vcmp.eq.s32.totalorder %v237, %v33
  %vm270 = vcmp.eq.s32.totalorder %v238, %v33
  %vm271 = vcmp.eq.s32.totalorder %v239, %v33
  %vm272 = vcmp.eq.s32.totalorder %v240, %v33
  %vm273 = vcmp.eq.s32.totalorder %v241, %v33
  %vm274 = vcmp.eq.s32.totalorder %v242, %v33
  %vm275 = vcmp.eq.s32.totalorder %v243, %v33
  %vm276 = vcmp.eq.s32.totalorder %v244, %v33
  %vm277 = vcmp.eq.s32.totalorder %v245, %v33
  %vm278 = vcmp.eq.s32.totalorder %v246, %v33
  %vm279 = vcmp.eq.s32.totalorder %v247, %v33
  %vm280 = vcmp.eq.s32.totalorder %v248, %v33
  %v281 = vsel %vm249, 1, 0
  %v282 = vsel %vm250, 1, 0
  %v283 = vsel %vm251, 1, 0
  %v284 = vsel %vm252, 1, 0
  %v285 = vsel %vm253, 1, 0
  %v286 = vsel %vm254, 1, 0
  %v287 = vsel %vm255, 1, 0
  %v288 = vsel %vm256, 1, 0
  %v289 = vsel %vm257, 1, 0
  %v290 = vsel %vm258, 1, 0
  %v291 = vsel %vm259, 1, 0
  %v292 = vsel %vm260, 1, 0
  %v293 = vsel %vm261, 1, 0
  %v294 = vsel %vm262, 1, 0
  %v295 = vsel %vm263, 1, 0
  %v296 = vsel %vm264, 1, 0
  %v297 = vsel %vm265, 1, 0
  %v298 = vsel %vm266, 1, 0
  %v299 = vsel %vm267, 1, 0
  %v300 = vsel %vm268, 1, 0
  %v301 = vsel %vm269, 1, 0
  %v302 = vsel %vm270, 1, 0
  %v303 = vsel %vm271, 1, 0
  %v304 = vsel %vm272, 1, 0
  %v305 = vsel %vm273, 1, 0
  %v306 = vsel %vm274, 1, 0
  %v307 = vsel %vm275, 1, 0
  %v308 = vsel %vm276, 1, 0
  %v309 = vsel %vm277, 1, 0
  %v310 = vsel %vm278, 1, 0
  %v311 = vsel %vm279, 1, 0
  %v312 = vsel %vm280, 1, 0
  %v313 = vcvt.s32.f32 %v281
  %v314 = vcvt.s32.f32 %v282
  %v315 = vcvt.s32.f32 %v283
  %v316 = vcvt.s32.f32 %v284
  %v317 = vcvt.s32.f32 %v285
  %v318 = vcvt.s32.f32 %v286
  %v319 = vcvt.s32.f32 %v287
  %v320 = vcvt.s32.f32 %v288
  %v321 = vcvt.s32.f32 %v289
  %v322 = vcvt.s32.f32 %v290
  %v323 = vcvt.s32.f32 %v291
  %v324 = vcvt.s32.f32 %v292
  %v325 = vcvt.s32.f32 %v293
  %v326 = vcvt.s32.f32 %v294
  %v327 = vcvt.s32.f32 %v295
  %v328 = vcvt.s32.f32 %v296
  %v329 = vcvt.s32.f32 %v297
  %v330 = vcvt.s32.f32 %v298
  %v331 = vcvt.s32.f32 %v299
  %v332 = vcvt.s32.f32 %v300
  %v333 = vcvt.s32.f32 %v301
  %v334 = vcvt.s32.f32 %v302
  %v335 = vcvt.s32.f32 %v303
  %v336 = vcvt.s32.f32 %v304
  %v337 = vcvt.s32.f32 %v305
  %v338 = vcvt.s32.f32 %v306
  %v339 = vcvt.s32.f32 %v307
  %v340 = vcvt.s32.f32 %v308
  %v341 = vcvt.s32.f32 %v309
  %v342 = vcvt.s32.f32 %v310
  %v343 = vcvt.s32.f32 %v311
  %v344 = vcvt.s32.f32 %v312
  %v345 = vshra.s32 %v33, 8
  %v346 = vshra.s32 %v34, 8
  %v347 = vshra.s32 %v35, 8
  %v348 = vshra.s32 %v36, 8
  %v349 = vshra.s32 %v37, 8
  %v350 = vshra.s32 %v38, 8
  %v351 = vshra.s32 %v39, 8
  %v352 = vshra.s32 %v40, 8
  %v353 = vmul.u32 %v345, 3
  %v354 = vmul.u32 %v346, 3
  %v355 = vmul.u32 %v347, 3
  %v356 = vmul.u32 %v348, 3
  %v357 = vmul.u32 %v349, 3
  %v358 = vmul.u32 %v350, 3
  %v359 = vmul.u32 %v351, 3
  %v360 = vmul.u32 %v352, 3
  %vm361 = vcmp.eq.s32.totalorder %v171, %v353
  %vm362 = vcmp.eq.s32.totalorder %v171, %v354
  %vm363 = vcmp.eq.s32.totalorder %v171, %v355
  %vm364 = vcmp.eq.s32.totalorder %v171, %v356
  %vm365 = vcmp.eq.s32.totalorder %v171, %v357
  %vm366 = vcmp.eq.s32.totalorder %v171, %v358
  %vm367 = vcmp.eq.s32.totalorder %v171, %v359
  %vm368 = vcmp.eq.s32.totalorder %v171, %v360
  %vm369 = vcmp.eq.s32.totalorder %v172, %v353
  %vm370 = vcmp.eq.s32.totalorder %v172, %v354
  %vm371 = vcmp.eq.s32.totalorder %v172, %v355
  %vm372 = vcmp.eq.s32.totalorder %v172, %v356
  %vm373 = vcmp.eq.s32.totalorder %v172, %v357
  %vm374 = vcmp.eq.s32.totalorder %v172, %v358
  %vm375 = vcmp.eq.s32.totalorder %v172, %v359
  %vm376 = vcmp.eq.s32.totalorder %v172, %v360
  %v377 = vsel %vm361, 1, 0
  %v378 = vsel %vm362, 1, 0
  %v379 = vsel %vm363, 1, 0
  %v380 = vsel %vm364, 1, 0
  %v381 = vsel %vm365, 1, 0
  %v382 = vsel %vm366, 1, 0
  %v383 = vsel %vm367, 1, 0
  %v384 = vsel %vm368, 1, 0
  %v385 = vsel %vm369, 1, 0
  %v386 = vsel %vm370, 1, 0
  %v387 = vsel %vm371, 1, 0
  %v388 = vsel %vm372, 1, 0
  %v389 = vsel %vm373, 1, 0
  %v390 = vsel %vm374, 1, 0
  %v391 = vsel %vm375, 1, 0
  %v392 = vsel %vm376, 1, 0
  %v393 = vcvt.s32.f32 %v377
  %v394 = vcvt.s32.f32 %v378
  %v395 = vcvt.s32.f32 %v379
  %v396 = vcvt.s32.f32 %v380
  %v397 = vcvt.s32.f32 %v381
  %v398 = vcvt.s32.f32 %v382
  %v399 = vcvt.s32.f32 %v383
  %v400 = vcvt.s32.f32 %v384
  %v401 = vcvt.s32.f32 %v385
  %v402 = vcvt.s32.f32 %v386
  %v403 = vcvt.s32.f32 %v387
  %v404 = vcvt.s32.f32 %v388
  %v405 = vcvt.s32.f32 %v389
  %v406 = vcvt.s32.f32 %v390
  %v407 = vcvt.s32.f32 %v391
  %v408 = vcvt.s32.f32 %v392
  %v409 = vadd.s32 %v353, 1
  %v410 = vadd.s32 %v354, 1
  %v411 = vadd.s32 %v355, 1
  %v412 = vadd.s32 %v356, 1
  %v413 = vadd.s32 %v357, 1
  %v414 = vadd.s32 %v358, 1
  %v415 = vadd.s32 %v359, 1
  %v416 = vadd.s32 %v360, 1
  %vm417 = vcmp.eq.s32.totalorder %v171, %v409
  %vm418 = vcmp.eq.s32.totalorder %v171, %v410
  %vm419 = vcmp.eq.s32.totalorder %v171, %v411
  %vm420 = vcmp.eq.s32.totalorder %v171, %v412
  %vm421 = vcmp.eq.s32.totalorder %v171, %v413
  %vm422 = vcmp.eq.s32.totalorder %v171, %v414
  %vm423 = vcmp.eq.s32.totalorder %v171, %v415
  %vm424 = vcmp.eq.s32.totalorder %v171, %v416
  %vm425 = vcmp.eq.s32.totalorder %v172, %v409
  %vm426 = vcmp.eq.s32.totalorder %v172, %v410
  %vm427 = vcmp.eq.s32.totalorder %v172, %v411
  %vm428 = vcmp.eq.s32.totalorder %v172, %v412
  %vm429 = vcmp.eq.s32.totalorder %v172, %v413
  %vm430 = vcmp.eq.s32.totalorder %v172, %v414
  %vm431 = vcmp.eq.s32.totalorder %v172, %v415
  %vm432 = vcmp.eq.s32.totalorder %v172, %v416
  %v433 = vsel %vm417, 1, 0
  %v434 = vsel %vm418, 1, 0
  %v435 = vsel %vm419, 1, 0
  %v436 = vsel %vm420, 1, 0
  %v437 = vsel %vm421, 1, 0
  %v438 = vsel %vm422, 1, 0
  %v439 = vsel %vm423, 1, 0
  %v440 = vsel %vm424, 1, 0
  %v441 = vsel %vm425, 1, 0
  %v442 = vsel %vm426, 1, 0
  %v443 = vsel %vm427, 1, 0
  %v444 = vsel %vm428, 1, 0
  %v445 = vsel %vm429, 1, 0
  %v446 = vsel %vm430, 1, 0
  %v447 = vsel %vm431, 1, 0
  %v448 = vsel %vm432, 1, 0
  %v449 = vcvt.s32.f32 %v433
  %v450 = vcvt.s32.f32 %v434
  %v451 = vcvt.s32.f32 %v435
  %v452 = vcvt.s32.f32 %v436
  %v453 = vcvt.s32.f32 %v437
  %v454 = vcvt.s32.f32 %v438
  %v455 = vcvt.s32.f32 %v439
  %v456 = vcvt.s32.f32 %v440
  %v457 = vcvt.s32.f32 %v441
  %v458 = vcvt.s32.f32 %v442
  %v459 = vcvt.s32.f32 %v443
  %v460 = vcvt.s32.f32 %v444
  %v461 = vcvt.s32.f32 %v445
  %v462 = vcvt.s32.f32 %v446
  %v463 = vcvt.s32.f32 %v447
  %v464 = vcvt.s32.f32 %v448
  %v465 = vadd.s32 %v353, 2
  %v466 = vadd.s32 %v354, 2
  %v467 = vadd.s32 %v355, 2
  %v468 = vadd.s32 %v356, 2
  %v469 = vadd.s32 %v357, 2
  %v470 = vadd.s32 %v358, 2
  %v471 = vadd.s32 %v359, 2
  %v472 = vadd.s32 %v360, 2
  %vm473 = vcmp.eq.s32.totalorder %v171, %v465
  %vm474 = vcmp.eq.s32.totalorder %v171, %v466
  %vm475 = vcmp.eq.s32.totalorder %v171, %v467
  %vm476 = vcmp.eq.s32.totalorder %v171, %v468
  %vm477 = vcmp.eq.s32.totalorder %v171, %v469
  %vm478 = vcmp.eq.s32.totalorder %v171, %v470
  %vm479 = vcmp.eq.s32.totalorder %v171, %v471
  %vm480 = vcmp.eq.s32.totalorder %v171, %v472
  %vm481 = vcmp.eq.s32.totalorder %v172, %v465
  %vm482 = vcmp.eq.s32.totalorder %v172, %v466
  %vm483 = vcmp.eq.s32.totalorder %v172, %v467
  %vm484 = vcmp.eq.s32.totalorder %v172, %v468
  %vm485 = vcmp.eq.s32.totalorder %v172, %v469
  %vm486 = vcmp.eq.s32.totalorder %v172, %v470
  %vm487 = vcmp.eq.s32.totalorder %v172, %v471
  %vm488 = vcmp.eq.s32.totalorder %v172, %v472
  %v489 = vsel %vm473, 1, 0
  %v490 = vsel %vm474, 1, 0
  %v491 = vsel %vm475, 1, 0
  %v492 = vsel %vm476, 1, 0
  %v493 = vsel %vm477, 1, 0
  %v494 = vsel %vm478, 1, 0
  %v495 = vsel %vm479, 1, 0
  %v496 = vsel %vm480, 1, 0
  %v497 = vsel %vm481, 1, 0
  %v498 = vsel %vm482, 1, 0
  %v499 = vsel %vm483, 1, 0
  %v500 = vsel %vm484, 1, 0
  %v501 = vsel %vm485, 1, 0
  %v502 = vsel %vm486, 1, 0
  %v503 = vsel %vm487, 1, 0
  %v504 = vsel %vm488, 1, 0
  %v505 = vcvt.s32.f32 %v489
  %v506 = vcvt.s32.f32 %v490
  %v507 = vcvt.s32.f32 %v491
  %v508 = vcvt.s32.f32 %v492
  %v509 = vcvt.s32.f32 %v493
  %v510 = vcvt.s32.f32 %v494
  %v511 = vcvt.s32.f32 %v495
  %v512 = vcvt.s32.f32 %v496
  %v513 = vcvt.s32.f32 %v497
  %v514 = vcvt.s32.f32 %v498
  %v515 = vcvt.s32.f32 %v499
  %v516 = vcvt.s32.f32 %v500
  %v517 = vcvt.s32.f32 %v501
  %v518 = vcvt.s32.f32 %v502
  %v519 = vcvt.s32.f32 %v503
  %v520 = vcvt.s32.f32 %v504
  %v521 = vld [vmem:[%s0] sm:$0xf]
  %v522 = vld [vmem:[%s4] sm:$0x1]
  %v523 = vld [vmem:[%s4 + $0x1] sm:$0x1]
  %v524 = vld [vmem:[%s4 + $0x2] sm:$0x1]
  %v525 = vld [vmem:[%s4 + $0x3] sm:$0x1]
  %v526 = vld [vmem:[%s4 + $0x4] sm:$0x1]
  %v527 = vld [vmem:[%s4 + $0x5] sm:$0x1]
  %v528 = vld [vmem:[%s4 + $0x6] sm:$0x1]
  %v529 = vld [vmem:[%s1] sm:$0xff]
  %v530 = vld [vmem:[%s1 + $0x8] sm:$0xff]
  %v531 = vld [vmem:[%s1 + $0x10] sm:$0xff]
  %v532 = vld [vmem:[%s1 + $0x18] sm:$0xff]
  %v533 = vld [vmem:[%s1 + $0x20] sm:$0xff]
  %v534 = vld [vmem:[%s1 + $0x28] sm:$0xff]
  %v535 = vld [vmem:[%s1 + $0x30] sm:$0xff]
  %v536 = vld [vmem:[%s1 + $0x38] sm:$0xff]
  %v537 = vld [vmem:[%s1 + $0x40] sm:$0xff]
  %v538 = vld [vmem:[%s1 + $0x48] sm:$0xff]
  %v539 = vld [vmem:[%s1 + $0x50] sm:$0xff]
  %v540 = vld [vmem:[%s1 + $0x58] sm:$0xff]
  %v541 = vld [vmem:[%s1 + $0x60] sm:$0xff]
  %v542 = vld [vmem:[%s1 + $0x68] sm:$0xff]
  %v543 = vld [vmem:[%s1 + $0x70] sm:$0xff]
  %v544 = vld [vmem:[%s1 + $0x78] sm:$0xff]
  %v545 = vld [vmem:[%s1 + $0x80] sm:$0xff]
  %v546 = vld [vmem:[%s1 + $0x88] sm:$0xff]
  %v547 = vld [vmem:[%s1 + $0x90] sm:$0xff]
  %v548 = vld [vmem:[%s1 + $0x98] sm:$0xff]
  %v549 = vld [vmem:[%s1 + $0xa0] sm:$0xff]
  %v550 = vld [vmem:[%s1 + $0xa8] sm:$0xff]
  %v551 = vld [vmem:[%s1 + $0xb0] sm:$0xff]
  %v552 = vld [vmem:[%s1 + $0xb8] sm:$0xff]
  %v553 = vld [vmem:[%s1 + $0xc0] sm:$0xff]
  %v554 = vld [vmem:[%s1 + $0xc8] sm:$0xff]
  %v555 = vld [vmem:[%s1 + $0xd0] sm:$0xff]
  %v556 = vld [vmem:[%s1 + $0xd8] sm:$0xff]
  %v557 = vld [vmem:[%s1 + $0xe0] sm:$0xff]
  %v558 = vld [vmem:[%s1 + $0xe8] sm:$0xff]
  %v559 = vld [vmem:[%s1 + $0xf0] sm:$0xff]
  %v560 = vld [vmem:[%s1 + $0xf8] sm:$0xff]
  %v561 = vlaneseq
  %v562 = vshrl.u32 %v561, 7
  %v563 = vsub.s32 0, %v562
  %v564 = vrot.slane %v522, %v563
  %v567 = vunpack.c.l.s4 1983009808
  %v568 = vunpack.c.0.s8 %v567
  %v569 = vlaneseq
  %v570 = vshrl.u32 %v569, 7
  %v571 = vsub.s32 %v568, %v570
  %v572 = vrot.slane %v521, %v571
  %v573 = vcombine.high %v572, %v572
  %576 = vmatprep.subr.mxu0 0.0
  %577 = vmatpush1.msra.mxu0 %v544
  %578 = vmatprep.subr.mxu0 0.0
  %579 = vmatpush1.msra.mxu0 %v543
  %580 = vmatprep.subr.mxu0 0.0
  %581 = vmatpush1.msra.mxu0 %v542
  %582 = vmatprep.subr.mxu0 0.0
  %583 = vmatpush1.msra.mxu0 %v541
  %584 = vmatprep.subr.mxu0 0.0
  %585 = vmatpush1.msra.mxu0 %v540
  %586 = vmatprep.subr.mxu0 0.0
  %587 = vmatpush1.msra.mxu0 %v539
  %588 = vmatprep.subr.mxu0 0.0
  %589 = vmatpush1.msra.mxu0 %v538
  %590 = vmatprep.subr.mxu0 0.0
  %591 = vmatpush1.msra.mxu0 %v537
  %592 = vmatprep.subr.mxu0 0.0
  %593 = vmatpush1.msra.mxu0 %v536
  %594 = vmatprep.subr.mxu0 0.0
  %595 = vmatpush1.msra.mxu0 %v535
  %596 = vmatprep.subr.mxu0 0.0
  %597 = vmatpush1.msra.mxu0 %v534
  %598 = vmatprep.subr.mxu0 0.0
  %599 = vmatpush1.msra.mxu0 %v533
  %600 = vmatprep.subr.mxu0 0.0
  %601 = vmatpush1.msra.mxu0 %v532
  %602 = vmatprep.subr.mxu0 0.0
  %603 = vmatpush1.msra.mxu0 %v531
  %604 = vmatprep.subr.mxu0 0.0
  %605 = vmatpush1.msra.mxu0 %v530
  %606 = vmatprep.subr.mxu0 0.0
  %607 = vmatpush1.msra.mxu0 %v529
  %608 = vmatprep.subr.mxu0 0.0
  %609 = vmatpush2.msra.mxu0 %v560
  %610 = vmatprep.subr.mxu0 0.0
  %611 = vmatpush2.msra.mxu0 %v559
  %612 = vmatprep.subr.mxu0 0.0
  %613 = vmatpush2.msra.mxu0 %v558
  %614 = vmatprep.subr.mxu0 0.0
  %615 = vmatpush2.msra.mxu0 %v557
  %616 = vmatprep.subr.mxu0 0.0
  %617 = vmatpush2.msra.mxu0 %v556
  %618 = vmatprep.subr.mxu0 0.0
  %619 = vmatpush2.msra.mxu0 %v555
  %620 = vmatprep.subr.mxu0 0.0
  %621 = vmatpush2.msra.mxu0 %v554
  %622 = vmatprep.subr.mxu0 0.0
  %623 = vmatpush2.msra.mxu0 %v553
  %624 = vmatprep.subr.mxu0 0.0
  %625 = vmatpush2.msra.mxu0 %v552
  %626 = vmatprep.subr.mxu0 0.0
  %627 = vmatpush2.msra.mxu0 %v551
  %628 = vmatprep.subr.mxu0 0.0
  %629 = vmatpush2.msra.mxu0 %v550
  %630 = vmatprep.subr.mxu0 0.0
  %631 = vmatpush2.msra.mxu0 %v549
  %632 = vmatprep.subr.mxu0 0.0
  %633 = vmatpush2.msra.mxu0 %v548
  %634 = vmatprep.subr.mxu0 0.0
  %635 = vmatpush2.msra.mxu0 %v547
  %636 = vmatprep.subr.mxu0 0.0
  %637 = vmatpush2.msra.mxu0 %v546
  %638 = vmatprep.subr.mxu0 0.0
  %639 = vmatpush2.msra.mxu0 %v545
  %640 = vmatprep.mubr.f32.mxu0 %v573
  %641 = vmatmul.mubr.f32.gmra.mxu0 %v572
  %v642 = vpop.f32.mrf.mxu0
  %v643 = vadd.f32 %v564, %v642
  %v644 = vpop.f32.mrf.mxu0
  %645 = vdwg.mxu0
  %v646 = vmax.f32 %v643, 0.0
  %v647 = vld [vmem:[%s2] sm:$0xff]
  %v648 = vld [vmem:[%s2 + $0x8] sm:$0xff]
  %v649 = vld [vmem:[%s2 + $0x10] sm:$0xff]
  %v650 = vld [vmem:[%s2 + $0x18] sm:$0xff]
  %v651 = vlaneseq
  %v652 = vshrl.u32 %v651, 7
  %v653 = vsub.s32 0, %v652
  %v654 = vrot.slane %v523, %v653
  %vm655 = vcmask 261120
  %v657 = vsel %vm655, %v646, 0
  %659 = vmatprep.subr.mxu0 0.0
  %660 = vmatpush1.msra.mxu0 0.0
  %661 = vmatprep.subr.mxu0 0.0
  %662 = vmatpush1.msra.mxu0 0.0
  %663 = vmatprep.subr.mxu0 0.0
  %664 = vmatpush1.msra.mxu0 0.0
  %665 = vmatprep.subr.mxu0 0.0
  %666 = vmatpush1.msra.mxu0 0.0
  %667 = vmatprep.subr.mxu0 0.0
  %668 = vmatpush1.msra.mxu0 0.0
  %669 = vmatprep.subr.mxu0 0.0
  %670 = vmatpush1.msra.mxu0 0.0
  %671 = vmatprep.subr.mxu0 0.0
  %672 = vmatpush1.msra.mxu0 0.0
  %673 = vmatprep.subr.mxu0 0.0
  %674 = vmatpush1.msra.mxu0 0.0
  %675 = vmatprep.subr.mxu0 0.0
  %676 = vmatpush1.msra.mxu0 0.0
  %677 = vmatprep.subr.mxu0 0.0
  %678 = vmatpush1.msra.mxu0 0.0
  %679 = vmatprep.subr.mxu0 0.0
  %680 = vmatpush1.msra.mxu0 0.0
  %681 = vmatprep.subr.mxu0 0.0
  %682 = vmatpush1.msra.mxu0 0.0
  %683 = vmatprep.subr.mxu0 0.0
  %684 = vmatpush1.msra.mxu0 %v650
  %685 = vmatprep.subr.mxu0 0.0
  %686 = vmatpush1.msra.mxu0 %v649
  %687 = vmatprep.subr.mxu0 0.0
  %688 = vmatpush1.msra.mxu0 %v648
  %689 = vmatprep.subr.mxu0 0.0
  %690 = vmatpush1.msra.mxu0 %v647
  %691 = vmatprep.subr.mxu0 0.0
  %692 = vmatpush2.msra.mxu0 0.0
  %693 = vmatprep.subr.mxu0 0.0
  %694 = vmatpush2.msra.mxu0 0.0
  %695 = vmatprep.subr.mxu0 0.0
  %696 = vmatpush2.msra.mxu0 0.0
  %697 = vmatprep.subr.mxu0 0.0
  %698 = vmatpush2.msra.mxu0 0.0
  %699 = vmatprep.subr.mxu0 0.0
  %700 = vmatpush2.msra.mxu0 0.0
  %701 = vmatprep.subr.mxu0 0.0
  %702 = vmatpush2.msra.mxu0 0.0
  %703 = vmatprep.subr.mxu0 0.0
  %704 = vmatpush2.msra.mxu0 0.0
  %705 = vmatprep.subr.mxu0 0.0
  %706 = vmatpush2.msra.mxu0 0.0
  %707 = vmatprep.subr.mxu0 0.0
  %708 = vmatpush2.msra.mxu0 0.0
  %709 = vmatprep.subr.mxu0 0.0
  %710 = vmatpush2.msra.mxu0 0.0
  %711 = vmatprep.subr.mxu0 0.0
  %712 = vmatpush2.msra.mxu0 0.0
  %713 = vmatprep.subr.mxu0 0.0
  %714 = vmatpush2.msra.mxu0 0.0
  %715 = vmatprep.subr.mxu0 0.0
  %716 = vmatpush2.msra.mxu0 0.0
  %717 = vmatprep.subr.mxu0 0.0
  %718 = vmatpush2.msra.mxu0 0.0
  %719 = vmatprep.subr.mxu0 0.0
  %720 = vmatpush2.msra.mxu0 0.0
  %721 = vmatprep.subr.mxu0 0.0
  %722 = vmatpush2.msra.mxu0 0.0
  %723 = vmatprep.mubr.f32.mxu0 0.0
  %724 = vmatmul.mubr.f32.gmra.mxu0 %v657
  %v725 = vpop.f32.mrf.mxu0
  %v726 = vadd.f32 %v654, %v725
  %v727 = vpop.f32.mrf.mxu0
  %728 = vdwg.mxu0
  %v729 = vmax.f32 %v726, 0.0
  %v730 = vld [vmem:[%s3] sm:$0xff]
  %v731 = vld [vmem:[%s3 + $0x8] sm:$0xff]
  %v732 = vld [vmem:[%s3 + $0x10] sm:$0xff]
  %v733 = vld [vmem:[%s3 + $0x18] sm:$0xff]
  %v734 = vlaneseq
  %v735 = vshrl.u32 %v734, 7
  %v736 = vsub.s32 0, %v735
  %v737 = vrot.slane %v524, %v736
  %v739 = vsel %vm655, %v729, 0
  %741 = vmatprep.subr.mxu0 0.0
  %742 = vmatpush1.msra.mxu0 0.0
  %743 = vmatprep.subr.mxu0 0.0
  %744 = vmatpush1.msra.mxu0 0.0
  %745 = vmatprep.subr.mxu0 0.0
  %746 = vmatpush1.msra.mxu0 0.0
  %747 = vmatprep.subr.mxu0 0.0
  %748 = vmatpush1.msra.mxu0 0.0
  %749 = vmatprep.subr.mxu0 0.0
  %750 = vmatpush1.msra.mxu0 0.0
  %751 = vmatprep.subr.mxu0 0.0
  %752 = vmatpush1.msra.mxu0 0.0
  %753 = vmatprep.subr.mxu0 0.0
  %754 = vmatpush1.msra.mxu0 0.0
  %755 = vmatprep.subr.mxu0 0.0
  %756 = vmatpush1.msra.mxu0 0.0
  %757 = vmatprep.subr.mxu0 0.0
  %758 = vmatpush1.msra.mxu0 0.0
  %759 = vmatprep.subr.mxu0 0.0
  %760 = vmatpush1.msra.mxu0 0.0
  %761 = vmatprep.subr.mxu0 0.0
  %762 = vmatpush1.msra.mxu0 0.0
  %763 = vmatprep.subr.mxu0 0.0
  %764 = vmatpush1.msra.mxu0 0.0
  %765 = vmatprep.subr.mxu0 0.0
  %766 = vmatpush1.msra.mxu0 %v733
  %767 = vmatprep.subr.mxu0 0.0
  %768 = vmatpush1.msra.mxu0 %v732
  %769 = vmatprep.subr.mxu0 0.0
  %770 = vmatpush1.msra.mxu0 %v731
  %771 = vmatprep.subr.mxu0 0.0
  %772 = vmatpush1.msra.mxu0 %v730
  %773 = vmatprep.subr.mxu0 0.0
  %774 = vmatpush2.msra.mxu0 0.0
  %775 = vmatprep.subr.mxu0 0.0
  %776 = vmatpush2.msra.mxu0 0.0
  %777 = vmatprep.subr.mxu0 0.0
  %778 = vmatpush2.msra.mxu0 0.0
  %779 = vmatprep.subr.mxu0 0.0
  %780 = vmatpush2.msra.mxu0 0.0
  %781 = vmatprep.subr.mxu0 0.0
  %782 = vmatpush2.msra.mxu0 0.0
  %783 = vmatprep.subr.mxu0 0.0
  %784 = vmatpush2.msra.mxu0 0.0
  %785 = vmatprep.subr.mxu0 0.0
  %786 = vmatpush2.msra.mxu0 0.0
  %787 = vmatprep.subr.mxu0 0.0
  %788 = vmatpush2.msra.mxu0 0.0
  %789 = vmatprep.subr.mxu0 0.0
  %790 = vmatpush2.msra.mxu0 0.0
  %791 = vmatprep.subr.mxu0 0.0
  %792 = vmatpush2.msra.mxu0 0.0
  %793 = vmatprep.subr.mxu0 0.0
  %794 = vmatpush2.msra.mxu0 0.0
  %795 = vmatprep.subr.mxu0 0.0
  %796 = vmatpush2.msra.mxu0 0.0
  %797 = vmatprep.subr.mxu0 0.0
  %798 = vmatpush2.msra.mxu0 0.0
  %799 = vmatprep.subr.mxu0 0.0
  %800 = vmatpush2.msra.mxu0 0.0
  %801 = vmatprep.subr.mxu0 0.0
  %802 = vmatpush2.msra.mxu0 0.0
  %803 = vmatprep.subr.mxu0 0.0
  %804 = vmatpush2.msra.mxu0 0.0
  %805 = vmatprep.mubr.f32.mxu0 0.0
  %806 = vmatmul.mubr.f32.gmra.mxu0 %v739
  %v807 = vpop.f32.mrf.mxu0
  %v808 = vadd.f32 %v737, %v807
  %v809 = vpop.f32.mrf.mxu0
  %810 = vdwg.mxu0
  %v811 = vtanh.pop %v808
  %vm812 = vcmp.gt.f32.partialorder %v808, -6.0
  %v813 = vsel %vm812, %v808, 6.0
  %v814 = vmul.f32 %v813, 1.442695
  %v815 = vpow.pop %v814
  %v816 = vld [vmem:[%s5] sm:$0x3]
  %818 = vrot.lane.b32.xlu0 %v816, 3
  %v819 = vpop.permute.xlu0 %818
  %v821 = vmul.f32 %v815, %v819
  %823 = vrot.lane.b32.xlu0 %v821, 125
  %v824 = vpop.permute.xlu0 %823
  %v826 = vadd.f32 %v811, %v824
  %828 = vset.pattern.permute.xlu0 0
  %829 = vperm.xlu0 %828, %v826
  %v830 = vpop.permute.xlu0 %829
  %v832 = vlaneseq
  %v833 = vshrl.u32 %v832, 7
  %v834 = vsub.s32 0, %v833
  %v835 = vrot.slane %v526, %v834
  %v836 = vmul.f32 %v830, %v835
  %837 = vset.pattern.permute.xlu0 1
  %838 = vperm.xlu0 %837, %v826
  %v839 = vpop.permute.xlu0 %838
  %v841 = vlaneseq
  %v842 = vshrl.u32 %v841, 7
  %v843 = vsub.s32 0, %v842
  %v844 = vrot.slane %v527, %v843
  %v845 = vmul.f32 %v839, %v844
  %v846 = vadd.f32 %v836, %v845
  %847 = vset.pattern.permute.xlu0 2
  %848 = vperm.xlu0 %847, %v826
  %v849 = vpop.permute.xlu0 %848
  %v851 = vlaneseq
  %v852 = vshrl.u32 %v851, 7
  %v853 = vsub.s32 0, %v852
  %v854 = vrot.slane %v528, %v853
  %v855 = vmul.f32 %v849, %v854
  %v856 = vadd.f32 %v846, %v855
  %v857 = vlaneseq
  %v858 = vshrl.u32 %v857, 7
  %v859 = vsub.s32 0, %v858
  %v860 = vrot.slane %v525, %v859
  %v861 = vadd.f32 %v856, %v860
  %v862 = vsel %vm812, %v808, -6.0
  %v863 = vmul.f32 %v862, 1.442695
  %v864 = vpow.pop %v863
  %865 = vrot.lane.b32.xlu0 %v816, 15
  %v866 = vpop.permute.xlu0 %865
  %v868 = vmul.f32 %v864, %v866
  %870 = vrot.lane.b32.xlu0 %v868, 116
  %v871 = vpop.permute.xlu0 %870
  %v873 = vadd.f32 %v811, %v871
  %874 = vrot.lane.b32.xlu0 %v826, 6
  %v875 = vpop.permute.xlu0 %874
  %878 = vrot.lane.b32.xlu0 %v861, 9
  %v879 = vpop.permute.xlu0 %878
  %882 = vrot.lane.b32.xlu0 %v811, 6
  %v883 = vpop.permute.xlu0 %882
  %886 = vrot.lane.b32.xlu0 %v864, 6
  %v887 = vpop.permute.xlu0 %886
  %890 = vrot.lane.b32.xlu0 %v873, 30
  %v891 = vpop.permute.xlu0 %890
  %vm893 = vcmask 23552
  %v894 = vsel %vm893, %v811, %v815
  %vm895 = vcmask 48128
  %v896 = vsel %vm895, %v894, %v875
  %vm897 = vcmask 72704
  %v898 = vsel %vm897, %v896, %v879
  %vm899 = vcmask 97280
  %v900 = vsel %vm899, %v898, %v883
  %vm901 = vcmask 195584
  %v902 = vsel %vm901, %v900, %v887
  %vm903 = vcmask 293888
  %v904 = vsel %vm903, %v902, %v891
  %vm905 = vcmask 392192
  %v906 = vsel %vm905, %v904, 0.0
  %907 = vst [vmem:[%s8] sm:$0x3] %v906
  %v908 = vand.u32 2147483647, %v873
  %vm909 = vcmp.le.f32.partialorder %v908, 0.7853982
  %vm910 = vcmp.lt.s32.totalorder %v873, 0
  %v911 = vand.u32 %v873, 2139095040
  %v912 = vshrl.u32 %v911, 23
  %v913 = vsub.s32 %v912, 127
  %v914 = vand.u32 2147483647, %v873
  %v915 = vand.u32 %v914, 8388607
  %v916 = vor.u32 %v915, 8388608
  %v917 = vsub.s32 0, %v916
  %v918 = vadd.s32 %v913, 1
  %vm919 = vcmp.gt.s32.totalorder %v918, 0
  %v920 = vsel %vm919, %v918, 0
  %v921 = vshrl.u32 %v920, 5
  %v922 = vand.u32 %v920, 31
  %v923 = vsub.s32 32, %v922
  %v924 = vshrl.u32 683565275, %v923
  %v925 = vshll.u32 683565275, %v922
  %v926 = vshrl.u32 2475754826, %v923
  %v927 = vor.u32 %v925, %v926
  %v928 = vshll.u32 2475754826, %v922
  %v929 = vshrl.u32 2131351028, %v923
  %v930 = vor.u32 %v928, %v929
  %v931 = vshll.u32 2131351028, %v922
  %v932 = vshrl.u32 2102212464, %v923
  %v933 = vor.u32 %v931, %v932
  %v934 = vshll.u32 2102212464, %v922
  %v935 = vshrl.u32 920167782, %v923
  %v936 = vor.u32 %v934, %v935
  %v937 = vshll.u32 920167782, %v922
  %v938 = vshrl.u32 1326507024, %v923
  %v939 = vor.u32 %v937, %v938
  %vm940 = vcmp.lt.s32.totalorder %v921, 1
  %vm941 = vcmp.lt.s32.totalorder %v921, 2
  %vm942 = vcmp.lt.s32.totalorder %v921, 3
  %vm943 = vcmp.lt.s32.totalorder %v921, 4
  %v944 = vsel %vm940, %v924, %v927
  %v945 = vsel %vm943, %v933, 2102212464
  %v946 = vsel %vm942, %v930, %v945
  %v947 = vsel %vm941, %v944, %v946
  %v948 = vsel %vm940, %v927, %v930
  %v949 = vsel %vm943, %v936, 920167782
  %v950 = vsel %vm942, %v933, %v949
  %v951 = vsel %vm941, %v948, %v950
  %v952 = vsel %vm940, %v930, %v933
  %v953 = vsel %vm943, %v939, 1326507024
  %v954 = vsel %vm942, %v936, %v953
  %v955 = vsel %vm941, %v952, %v954
  %v956 = vshll.u32 %v916, 8
  %v957 = vmul.u32.u64.compose %v956, %v955
  %v958 = vextract.low.u32 %v957
  %v959 = vextract.high.u32 %v957
  %v960 = vmul.u32.u64.compose %v956, %v951
  %v961 = vextract.low.u32 %v960
  %v962 = vextract.high.u32 %v960
  %v963 = vmul.u32 %v956, %v947
  %v964 = vadd.s32 %v959, %v961
  %vm965 = vc.u32 %v959, %v961
  %v966 = vadd.s32 %v962, 1
  %v967 = vsel %vm965, %v966, %v962
  %v968 = vadd.s32 %v963, %v967
  %v969 = vadd.s32 %v968, 536870912
  %v970 = vshrl.u32 %v969, 30
  %v971 = vshll.u32 %v970, 30
  %v972 = vsub.s32 %v968, %v971
  %vm973 = vcmp.lt.s32.totalorder %v972, 0
  %v974 = vsub.s32 0, %v972
  %v975 = vsel %vm973, %v974, %v972
  %v976 = vclz %v975
  %v977 = vsub.s32 %v976, 2
  %vm978 = vcmp.gt.s32.totalorder 0, %v977
  %v979 = vsel %vm978, 0, %v977
  %v980 = vsub.s32 32, %v979
  %v981 = vshll.u32 %v972, %v979
  %v982 = vshrl.u32 %v964, %v980
  %v983 = vor.u32 %v981, %v982
  %v984 = vsub.s32 4294967266, %v979
  %v985 = vadd.s32 %v984, 127
  %v986 = vshll.u32 %v985, 23
  %v987 = vor.u32 4788187, %v986
  %v988 = vand.u32 2147483647, %v987
  %v990 = vcvt.s32.f32 %v983
  %v991 = vmul.f32 %v990, %v988
  %v992 = vxor.u32 %v991, 2147483648
  %v993 = vsel %vm910, %v992, %v991
  %v994 = vsub.s32 4, %v970
  %v995 = vsel %vm910, %v994, %v970
  %v996 = vsel %vm909, %v873, %v993
  %v997 = vsel %vm909, 0, %v995
  %v998 = vcosq.f32.pop %v996
  %v999 = vsinq.f32.pop %v996
  %vm1000 = vweird.f32 %v873
  %v1001 = vand.u32 %v997, 3
  %vm1002 = vcmp.lt.s32.totalorder %v1001, 2
  %vm1003 = vcmp.eq.s32.totalorder %v1001, 0
  %v1004 = vxor.u32 %v999, 2147483648
  %v1005 = vsel %vm1003, %v998, %v1004
  %vm1006 = vcmp.eq.s32.totalorder %v1001, 2
  %v1007 = vxor.u32 %v998, 2147483648
  %v1008 = vsel %vm1006, %v1007, %v999
  %v1009 = vsel %vm1002, %v1005, %v1008
  %v1010 = vsel %vm1000, nan, %v1009
  %v1011 = vand.u32 2147483647, %v873
  %vm1012 = vcmp.le.f32.partialorder %v1011, 0.7853982
  %vm1013 = vcmp.lt.s32.totalorder %v873, 0
  %v1014 = vand.u32 %v873, 2139095040
  %v1015 = vshrl.u32 %v1014, 23
  %v1016 = vsub.s32 %v1015, 127
  %v1017 = vand.u32 2147483647, %v873
  %v1018 = vand.u32 %v1017, 8388607
  %v1019 = vor.u32 %v1018, 8388608
  %v1020 = vsub.s32 0, %v1019
  %v1021 = vadd.s32 %v1016, 1
  %vm1022 = vcmp.gt.s32.totalorder %v1021, 0
  %v1023 = vsel %vm1022, %v1021, 0
  %v1024 = vshrl.u32 %v1023, 5
  %v1025 = vand.u32 %v1023, 31
  %v1026 = vsub.s32 32, %v1025
  %v1027 = vshrl.u32 683565275, %v1026
  %v1028 = vshll.u32 683565275, %v1025
  %v1029 = vshrl.u32 2475754826, %v1026
  %v1030 = vor.u32 %v1028, %v1029
  %v1031 = vshll.u32 2475754826, %v1025
  %v1032 = vshrl.u32 2131351028, %v1026
  %v1033 = vor.u32 %v1031, %v1032
  %v1034 = vshll.u32 2131351028, %v1025
  %v1035 = vshrl.u32 2102212464, %v1026
  %v1036 = vor.u32 %v1034, %v1035
  %v1037 = vshll.u32 2102212464, %v1025
  %v1038 = vshrl.u32 920167782, %v1026
  %v1039 = vor.u32 %v1037, %v1038
  %v1040 = vshll.u32 920167782, %v1025
  %v1041 = vshrl.u32 1326507024, %v1026
  %v1042 = vor.u32 %v1040, %v1041
  %vm1043 = vcmp.lt.s32.totalorder %v1024, 1
  %vm1044 = vcmp.lt.s32.totalorder %v1024, 2
  %vm1045 = vcmp.lt.s32.totalorder %v1024, 3
  %vm1046 = vcmp.lt.s32.totalorder %v1024, 4
  %v1047 = vsel %vm1043, %v1027, %v1030
  %v1048 = vsel %vm1046, %v1036, 2102212464
  %v1049 = vsel %vm1045, %v1033, %v1048
  %v1050 = vsel %vm1044, %v1047, %v1049
  %v1051 = vsel %vm1043, %v1030, %v1033
  %v1052 = vsel %vm1046, %v1039, 920167782
  %v1053 = vsel %vm1045, %v1036, %v1052
  %v1054 = vsel %vm1044, %v1051, %v1053
  %v1055 = vsel %vm1043, %v1033, %v1036
  %v1056 = vsel %vm1046, %v1042, 1326507024
  %v1057 = vsel %vm1045, %v1039, %v1056
  %v1058 = vsel %vm1044, %v1055, %v1057
  %v1059 = vshll.u32 %v1019, 8
  %v1060 = vmul.u32.u64.compose %v1059, %v1058
  %v1061 = vextract.low.u32 %v1060
  %v1062 = vextract.high.u32 %v1060
  %v1063 = vmul.u32.u64.compose %v1059, %v1054
  %v1064 = vextract.low.u32 %v1063
  %v1065 = vextract.high.u32 %v1063
  %v1066 = vmul.u32 %v1059, %v1050
  %v1067 = vadd.s32 %v1062, %v1064
  %vm1068 = vc.u32 %v1062, %v1064
  %v1069 = vadd.s32 %v1065, 1
  %v1070 = vsel %vm1068, %v1069, %v1065
  %v1071 = vadd.s32 %v1066, %v1070
  %v1072 = vadd.s32 %v1071, 536870912
  %v1073 = vshrl.u32 %v1072, 30
  %v1074 = vshll.u32 %v1073, 30
  %v1075 = vsub.s32 %v1071, %v1074
  %vm1076 = vcmp.lt.s32.totalorder %v1075, 0
  %v1077 = vsub.s32 0, %v1075
  %v1078 = vsel %vm1076, %v1077, %v1075
  %v1079 = vclz %v1078
  %v1080 = vsub.s32 %v1079, 2
  %vm1081 = vcmp.gt.s32.totalorder 0, %v1080
  %v1082 = vsel %vm1081, 0, %v1080
  %v1083 = vsub.s32 32, %v1082
  %v1084 = vshll.u32 %v1075, %v1082
  %v1085 = vshrl.u32 %v1067, %v1083
  %v1086 = vor.u32 %v1084, %v1085
  %v1087 = vsub.s32 4294967266, %v1082
  %v1088 = vadd.s32 %v1087, 127
  %v1089 = vshll.u32 %v1088, 23
  %v1090 = vor.u32 4788187, %v1089
  %v1091 = vand.u32 2147483647, %v1090
  %v1093 = vcvt.s32.f32 %v1086
  %v1094 = vmul.f32 %v1093, %v1091
  %v1095 = vxor.u32 %v1094, 2147483648
  %v1096 = vsel %vm1013, %v1095, %v1094
  %v1097 = vsub.s32 4, %v1073
  %v1098 = vsel %vm1013, %v1097, %v1073
  %v1099 = vsel %vm1012, %v873, %v1096
  %v1100 = vsel %vm1012, 0, %v1098
  %v1101 = vcosq.f32.pop %v1099
  %v1102 = vsinq.f32.pop %v1099
  %vm1103 = vweird.f32 %v873
  %v1104 = vadd.s32 %v1100, 3
  %v1105 = vand.u32 %v1104, 3
  %vm1106 = vcmp.lt.s32.totalorder %v1105, 2
  %vm1107 = vcmp.eq.s32.totalorder %v1105, 0
  %v1108 = vxor.u32 %v1102, 2147483648
  %v1109 = vsel %vm1107, %v1101, %v1108
  %vm1110 = vcmp.eq.s32.totalorder %v1105, 2
  %v1111 = vxor.u32 %v1101, 2147483648
  %v1112 = vsel %vm1110, %v1111, %v1102
  %v1113 = vsel %vm1106, %v1109, %v1112
  %v1114 = vsel %vm1103, nan, %v1113
  %1116 = vrot.lane.b32.xlu0 %v1010, 122
  %v1117 = vpop.permute.xlu0 %1116
  %v1118 = vsel %vm899, %v1117, 0
  %vm1120 = vcmask 1043456
  %v1122 = vsel %vm1120, %v401, 0
  %v1125 = vsel %vm1120, %v402, 0
  %v1128 = vsel %vm1120, %v403, 0
  %v1131 = vsel %vm1120, %v404, 0
  %v1134 = vsel %vm1120, %v405, 0
  %v1137 = vsel %vm1120, %v406, 0
  %v1140 = vsel %vm1120, %v407, 0
  %v1143 = vsel %vm1120, %v408, 0
  %1145 = vmatprep.subr.mxu0 0.0
  %1146 = vmatpush1.msra.mxu0 0.0
  %1147 = vmatprep.subr.mxu0 0.0
  %1148 = vmatpush1.msra.mxu0 0.0
  %1149 = vmatprep.subr.mxu0 0.0
  %1150 = vmatpush1.msra.mxu0 0.0
  %1151 = vmatprep.subr.mxu0 0.0
  %1152 = vmatpush1.msra.mxu0 0.0
  %1153 = vmatprep.subr.mxu0 0.0
  %1154 = vmatpush1.msra.mxu0 0.0
  %1155 = vmatprep.subr.mxu0 0.0
  %1156 = vmatpush1.msra.mxu0 0.0
  %1157 = vmatprep.subr.mxu0 0.0
  %1158 = vmatpush1.msra.mxu0 0.0
  %1159 = vmatprep.subr.mxu0 0.0
  %1160 = vmatpush1.msra.mxu0 0.0
  %1161 = vmatprep.subr.mxu0 0.0
  %1162 = vmatpush1.msra.mxu0 0.0
  %1163 = vmatprep.subr.mxu0 0.0
  %1164 = vmatpush1.msra.mxu0 0.0
  %1165 = vmatprep.subr.mxu0 0.0
  %1166 = vmatpush1.msra.mxu0 0.0
  %1167 = vmatprep.subr.mxu0 0.0
  %1168 = vmatpush1.msra.mxu0 0.0
  %1169 = vmatprep.subr.mxu0 0.0
  %1170 = vmatpush1.msra.mxu0 0.0
  %1171 = vmatprep.subr.mxu0 0.0
  %1172 = vmatpush1.msra.mxu0 0.0
  %1173 = vmatprep.subr.mxu0 %v1125
  %1174 = vmatpush1.msra.mxu0 %v1122
  %1175 = vmatprep.subr.mxu0 %v394
  %1176 = vmatpush1.msra.mxu0 %v393
  %1177 = vmatprep.subr.mxu0 0.0
  %1178 = vmatpush2.msra.mxu0 0.0
  %1179 = vmatprep.subr.mxu0 0.0
  %1180 = vmatpush2.msra.mxu0 0.0
  %1181 = vmatprep.subr.mxu0 0.0
  %1182 = vmatpush2.msra.mxu0 0.0
  %1183 = vmatprep.subr.mxu0 0.0
  %1184 = vmatpush2.msra.mxu0 0.0
  %1185 = vmatprep.subr.mxu0 0.0
  %1186 = vmatpush2.msra.mxu0 0.0
  %1187 = vmatprep.subr.mxu0 0.0
  %1188 = vmatpush2.msra.mxu0 0.0
  %1189 = vmatprep.subr.mxu0 0.0
  %1190 = vmatpush2.msra.mxu0 0.0
  %1191 = vmatprep.subr.mxu0 0.0
  %1192 = vmatpush2.msra.mxu0 0.0
  %1193 = vmatprep.subr.mxu0 0.0
  %1194 = vmatpush2.msra.mxu0 0.0
  %1195 = vmatprep.subr.mxu0 0.0
  %1196 = vmatpush2.msra.mxu0 0.0
  %1197 = vmatprep.subr.mxu0 0.0
  %1198 = vmatpush2.msra.mxu0 0.0
  %1199 = vmatprep.subr.mxu0 0.0
  %1200 = vmatpush2.msra.mxu0 0.0
  %1201 = vmatprep.subr.mxu0 0.0
  %1202 = vmatpush2.msra.mxu0 0.0
  %1203 = vmatprep.subr.mxu0 0.0
  %1204 = vmatpush2.msra.mxu0 0.0
  %1205 = vmatprep.subr.mxu0 0.0
  %1206 = vmatpush2.msra.mxu0 0.0
  %1207 = vmatprep.subr.mxu0 0.0
  %1208 = vmatpush2.msra.mxu0 0.0
  %1209 = vmatprep.mubr.f32.mxu0 0.0
  %1210 = vmatmul.mubr.f32.gmra.mxu0 %v1118
  %v1211 = vpop.f32.mrf.mxu0
  %v1212 = vadd.f32 0.0, %v1211
  %v1213 = vpop.f32.mrf.mxu0
  %v1214 = vadd.f32 0.0, %v1213
  %1215 = vdwg.mxu0
  %1216 = vmatprep.subr.mxu0 0.0
  %1217 = vmatpush1.msra.mxu0 0.0
  %1218 = vmatprep.subr.mxu0 0.0
  %1219 = vmatpush1.msra.mxu0 0.0
  %1220 = vmatprep.subr.mxu0 0.0
  %1221 = vmatpush1.msra.mxu0 0.0
  %1222 = vmatprep.subr.mxu0 0.0
  %1223 = vmatpush1.msra.mxu0 0.0
  %1224 = vmatprep.subr.mxu0 0.0
  %1225 = vmatpush1.msra.mxu0 0.0
  %1226 = vmatprep.subr.mxu0 0.0
  %1227 = vmatpush1.msra.mxu0 0.0
  %1228 = vmatprep.subr.mxu0 0.0
  %1229 = vmatpush1.msra.mxu0 0.0
  %1230 = vmatprep.subr.mxu0 0.0
  %1231 = vmatpush1.msra.mxu0 0.0
  %1232 = vmatprep.subr.mxu0 0.0
  %1233 = vmatpush1.msra.mxu0 0.0
  %1234 = vmatprep.subr.mxu0 0.0
  %1235 = vmatpush1.msra.mxu0 0.0
  %1236 = vmatprep.subr.mxu0 0.0
  %1237 = vmatpush1.msra.mxu0 0.0
  %1238 = vmatprep.subr.mxu0 0.0
  %1239 = vmatpush1.msra.mxu0 0.0
  %1240 = vmatprep.subr.mxu0 0.0
  %1241 = vmatpush1.msra.mxu0 0.0
  %1242 = vmatprep.subr.mxu0 0.0
  %1243 = vmatpush1.msra.mxu0 0.0
  %1244 = vmatprep.subr.mxu0 %v1131
  %1245 = vmatpush1.msra.mxu0 %v1128
  %1246 = vmatprep.subr.mxu0 %v396
  %1247 = vmatpush1.msra.mxu0 %v395
  %1248 = vmatprep.subr.mxu0 0.0
  %1249 = vmatpush2.msra.mxu0 0.0
  %1250 = vmatprep.subr.mxu0 0.0
  %1251 = vmatpush2.msra.mxu0 0.0
  %1252 = vmatprep.subr.mxu0 0.0
  %1253 = vmatpush2.msra.mxu0 0.0
  %1254 = vmatprep.subr.mxu0 0.0
  %1255 = vmatpush2.msra.mxu0 0.0
  %1256 = vmatprep.subr.mxu0 0.0
  %1257 = vmatpush2.msra.mxu0 0.0
  %1258 = vmatprep.subr.mxu0 0.0
  %1259 = vmatpush2.msra.mxu0 0.0
  %1260 = vmatprep.subr.mxu0 0.0
  %1261 = vmatpush2.msra.mxu0 0.0
  %1262 = vmatprep.subr.mxu0 0.0
  %1263 = vmatpush2.msra.mxu0 0.0
  %1264 = vmatprep.subr.mxu0 0.0
  %1265 = vmatpush2.msra.mxu0 0.0
  %1266 = vmatprep.subr.mxu0 0.0
  %1267 = vmatpush2.msra.mxu0 0.0
  %1268 = vmatprep.subr.mxu0 0.0
  %1269 = vmatpush2.msra.mxu0 0.0
  %1270 = vmatprep.subr.mxu0 0.0
  %1271 = vmatpush2.msra.mxu0 0.0
  %1272 = vmatprep.subr.mxu0 0.0
  %1273 = vmatpush2.msra.mxu0 0.0
  %1274 = vmatprep.subr.mxu0 0.0
  %1275 = vmatpush2.msra.mxu0 0.0
  %1276 = vmatprep.subr.mxu0 0.0
  %1277 = vmatpush2.msra.mxu0 0.0
  %1278 = vmatprep.subr.mxu0 0.0
  %1279 = vmatpush2.msra.mxu0 0.0
  %1280 = vmatprep.mubr.f32.mxu0 0.0
  %1281 = vmatmul.mubr.f32.gmra.mxu0 %v1118
  %v1282 = vpop.f32.mrf.mxu0
  %v1283 = vadd.f32 0.0, %v1282
  %v1284 = vpop.f32.mrf.mxu0
  %v1285 = vadd.f32 0.0, %v1284
  %1286 = vdwg.mxu0
  %1287 = vmatprep.subr.mxu0 0.0
  %1288 = vmatpush1.msra.mxu0 0.0
  %1289 = vmatprep.subr.mxu0 0.0
  %1290 = vmatpush1.msra.mxu0 0.0
  %1291 = vmatprep.subr.mxu0 0.0
  %1292 = vmatpush1.msra.mxu0 0.0
  %1293 = vmatprep.subr.mxu0 0.0
  %1294 = vmatpush1.msra.mxu0 0.0
  %1295 = vmatprep.subr.mxu0 0.0
  %1296 = vmatpush1.msra.mxu0 0.0
  %1297 = vmatprep.subr.mxu0 0.0
  %1298 = vmatpush1.msra.mxu0 0.0
  %1299 = vmatprep.subr.mxu0 0.0
  %1300 = vmatpush1.msra.mxu0 0.0
  %1301 = vmatprep.subr.mxu0 0.0
  %1302 = vmatpush1.msra.mxu0 0.0
  %1303 = vmatprep.subr.mxu0 0.0
  %1304 = vmatpush1.msra.mxu0 0.0
  %1305 = vmatprep.subr.mxu0 0.0
  %1306 = vmatpush1.msra.mxu0 0.0
  %1307 = vmatprep.subr.mxu0 0.0
  %1308 = vmatpush1.msra.mxu0 0.0
  %1309 = vmatprep.subr.mxu0 0.0
  %1310 = vmatpush1.msra.mxu0 0.0
  %1311 = vmatprep.subr.mxu0 0.0
  %1312 = vmatpush1.msra.mxu0 0.0
  %1313 = vmatprep.subr.mxu0 0.0
  %1314 = vmatpush1.msra.mxu0 0.0
  %1315 = vmatprep.subr.mxu0 %v1137
  %1316 = vmatpush1.msra.mxu0 %v1134
  %1317 = vmatprep.subr.mxu0 %v398
  %1318 = vmatpush1.msra.mxu0 %v397
  %1319 = vmatprep.subr.mxu0 0.0
  %1320 = vmatpush2.msra.mxu0 0.0
  %1321 = vmatprep.subr.mxu0 0.0
  %1322 = vmatpush2.msra.mxu0 0.0
  %1323 = vmatprep.subr.mxu0 0.0
  %1324 = vmatpush2.msra.mxu0 0.0
  %1325 = vmatprep.subr.mxu0 0.0
  %1326 = vmatpush2.msra.mxu0 0.0
  %1327 = vmatprep.subr.mxu0 0.0
  %1328 = vmatpush2.msra.mxu0 0.0
  %1329 = vmatprep.subr.mxu0 0.0
  %1330 = vmatpush2.msra.mxu0 0.0
  %1331 = vmatprep.subr.mxu0 0.0
  %1332 = vmatpush2.msra.mxu0 0.0
  %1333 = vmatprep.subr.mxu0 0.0
  %1334 = vmatpush2.msra.mxu0 0.0
  %1335 = vmatprep.subr.mxu0 0.0
  %1336 = vmatpush2.msra.mxu0 0.0
  %1337 = vmatprep.subr.mxu0 0.0
  %1338 = vmatpush2.msra.mxu0 0.0
  %1339 = vmatprep.subr.mxu0 0.0
  %1340 = vmatpush2.msra.mxu0 0.0
  %1341 = vmatprep.subr.mxu0 0.0
  %1342 = vmatpush2.msra.mxu0 0.0
  %1343 = vmatprep.subr.mxu0 0.0
  %1344 = vmatpush2.msra.mxu0 0.0
  %1345 = vmatprep.subr.mxu0 0.0
  %1346 = vmatpush2.msra.mxu0 0.0
  %1347 = vmatprep.subr.mxu0 0.0
  %1348 = vmatpush2.msra.mxu0 0.0
  %1349 = vmatprep.subr.mxu0 0.0
  %1350 = vmatpush2.msra.mxu0 0.0
  %1351 = vmatprep.mubr.f32.mxu0 0.0
  %1352 = vmatmul.mubr.f32.gmra.mxu0 %v1118
  %v1353 = vpop.f32.mrf.mxu0
  %v1354 = vadd.f32 0.0, %v1353
  %v1355 = vpop.f32.mrf.mxu0
  %v1356 = vadd.f32 0.0, %v1355
  %1357 = vdwg.mxu0
  %1358 = vmatprep.subr.mxu0 0.0
  %1359 = vmatpush1.msra.mxu0 0.0
  %1360 = vmatprep.subr.mxu0 0.0
  %1361 = vmatpush1.msra.mxu0 0.0
  %1362 = vmatprep.subr.mxu0 0.0
  %1363 = vmatpush1.msra.mxu0 0.0
  %1364 = vmatprep.subr.mxu0 0.0
  %1365 = vmatpush1.msra.mxu0 0.0
  %1366 = vmatprep.subr.mxu0 0.0
  %1367 = vmatpush1.msra.mxu0 0.0
  %1368 = vmatprep.subr.mxu0 0.0
  %1369 = vmatpush1.msra.mxu0 0.0
  %1370 = vmatprep.subr.mxu0 0.0
  %1371 = vmatpush1.msra.mxu0 0.0
  %1372 = vmatprep.subr.mxu0 0.0
  %1373 = vmatpush1.msra.mxu0 0.0
  %1374 = vmatprep.subr.mxu0 0.0
  %1375 = vmatpush1.msra.mxu0 0.0
  %1376 = vmatprep.subr.mxu0 0.0
  %1377 = vmatpush1.msra.mxu0 0.0
  %1378 = vmatprep.subr.mxu0 0.0
  %1379 = vmatpush1.msra.mxu0 0.0
  %1380 = vmatprep.subr.mxu0 0.0
  %1381 = vmatpush1.msra.mxu0 0.0
  %1382 = vmatprep.subr.mxu0 0.0
  %1383 = vmatpush1.msra.mxu0 0.0
  %1384 = vmatprep.subr.mxu0 0.0
  %1385 = vmatpush1.msra.mxu0 0.0
  %1386 = vmatprep.subr.mxu0 %v1143
  %1387 = vmatpush1.msra.mxu0 %v1140
  %1388 = vmatprep.subr.mxu0 %v400
  %1389 = vmatpush1.msra.mxu0 %v399
  %1390 = vmatprep.subr.mxu0 0.0
  %1391 = vmatpush2.msra.mxu0 0.0
  %1392 = vmatprep.subr.mxu0 0.0
  %1393 = vmatpush2.msra.mxu0 0.0
  %1394 = vmatprep.subr.mxu0 0.0
  %1395 = vmatpush2.msra.mxu0 0.0
  %1396 = vmatprep.subr.mxu0 0.0
  %1397 = vmatpush2.msra.mxu0 0.0
  %1398 = vmatprep.subr.mxu0 0.0
  %1399 = vmatpush2.msra.mxu0 0.0
  %1400 = vmatprep.subr.mxu0 0.0
  %1401 = vmatpush2.msra.mxu0 0.0
  %1402 = vmatprep.subr.mxu0 0.0
  %1403 = vmatpush2.msra.mxu0 0.0
  %1404 = vmatprep.subr.mxu0 0.0
  %1405 = vmatpush2.msra.mxu0 0.0
  %1406 = vmatprep.subr.mxu0 0.0
  %1407 = vmatpush2.msra.mxu0 0.0
  %1408 = vmatprep.subr.mxu0 0.0
  %1409 = vmatpush2.msra.mxu0 0.0
  %1410 = vmatprep.subr.mxu0 0.0
  %1411 = vmatpush2.msra.mxu0 0.0
  %1412 = vmatprep.subr.mxu0 0.0
  %1413 = vmatpush2.msra.mxu0 0.0
  %1414 = vmatprep.subr.mxu0 0.0
  %1415 = vmatpush2.msra.mxu0 0.0
  %1416 = vmatprep.subr.mxu0 0.0
  %1417 = vmatpush2.msra.mxu0 0.0
  %1418 = vmatprep.subr.mxu0 0.0
  %1419 = vmatpush2.msra.mxu0 0.0
  %1420 = vmatprep.subr.mxu0 0.0
  %1421 = vmatpush2.msra.mxu0 0.0
  %1422 = vmatprep.mubr.f32.mxu0 0.0
  %1423 = vmatmul.mubr.f32.gmra.mxu0 %v1118
  %v1424 = vpop.f32.mrf.mxu0
  %v1425 = vadd.f32 0.0, %v1424
  %v1426 = vpop.f32.mrf.mxu0
  %v1427 = vadd.f32 0.0, %v1426
  %1428 = vdwg.mxu0
  %1430 = vrot.lane.b32.xlu0 %v1114, 122
  %v1431 = vpop.permute.xlu0 %1430
  %v1432 = vsel %vm899, %v1431, 0
  %1434 = vmatprep.subr.mxu0 0.0
  %1435 = vmatpush1.msra.mxu0 0.0
  %1436 = vmatprep.subr.mxu0 0.0
  %1437 = vmatpush1.msra.mxu0 0.0
  %1438 = vmatprep.subr.mxu0 0.0
  %1439 = vmatpush1.msra.mxu0 0.0
  %1440 = vmatprep.subr.mxu0 0.0
  %1441 = vmatpush1.msra.mxu0 0.0
  %1442 = vmatprep.subr.mxu0 0.0
  %1443 = vmatpush1.msra.mxu0 0.0
  %1444 = vmatprep.subr.mxu0 0.0
  %1445 = vmatpush1.msra.mxu0 0.0
  %1446 = vmatprep.subr.mxu0 0.0
  %1447 = vmatpush1.msra.mxu0 0.0
  %1448 = vmatprep.subr.mxu0 0.0
  %1449 = vmatpush1.msra.mxu0 0.0
  %1450 = vmatprep.subr.mxu0 0.0
  %1451 = vmatpush1.msra.mxu0 0.0
  %1452 = vmatprep.subr.mxu0 0.0
  %1453 = vmatpush1.msra.mxu0 0.0
  %1454 = vmatprep.subr.mxu0 0.0
  %1455 = vmatpush1.msra.mxu0 0.0
  %1456 = vmatprep.subr.mxu0 0.0
  %1457 = vmatpush1.msra.mxu0 0.0
  %1458 = vmatprep.subr.mxu0 0.0
  %1459 = vmatpush1.msra.mxu0 0.0
  %1460 = vmatprep.subr.mxu0 0.0
  %1461 = vmatpush1.msra.mxu0 0.0
  %1462 = vmatprep.subr.mxu0 %v1125
  %1463 = vmatpush1.msra.mxu0 %v1122
  %1464 = vmatprep.subr.mxu0 %v394
  %1465 = vmatpush1.msra.mxu0 %v393
  %1466 = vmatprep.subr.mxu0 0.0
  %1467 = vmatpush2.msra.mxu0 0.0
  %1468 = vmatprep.subr.mxu0 0.0
  %1469 = vmatpush2.msra.mxu0 0.0
  %1470 = vmatprep.subr.mxu0 0.0
  %1471 = vmatpush2.msra.mxu0 0.0
  %1472 = vmatprep.subr.mxu0 0.0
  %1473 = vmatpush2.msra.mxu0 0.0
  %1474 = vmatprep.subr.mxu0 0.0
  %1475 = vmatpush2.msra.mxu0 0.0
  %1476 = vmatprep.subr.mxu0 0.0
  %1477 = vmatpush2.msra.mxu0 0.0
  %1478 = vmatprep.subr.mxu0 0.0
  %1479 = vmatpush2.msra.mxu0 0.0
  %1480 = vmatprep.subr.mxu0 0.0
  %1481 = vmatpush2.msra.mxu0 0.0
  %1482 = vmatprep.subr.mxu0 0.0
  %1483 = vmatpush2.msra.mxu0 0.0
  %1484 = vmatprep.subr.mxu0 0.0
  %1485 = vmatpush2.msra.mxu0 0.0
  %1486 = vmatprep.subr.mxu0 0.0
  %1487 = vmatpush2.msra.mxu0 0.0
  %1488 = vmatprep.subr.mxu0 0.0
  %1489 = vmatpush2.msra.mxu0 0.0
  %1490 = vmatprep.subr.mxu0 0.0
  %1491 = vmatpush2.msra.mxu0 0.0
  %1492 = vmatprep.subr.mxu0 0.0
  %1493 = vmatpush2.msra.mxu0 0.0
  %1494 = vmatprep.subr.mxu0 0.0
  %1495 = vmatpush2.msra.mxu0 0.0
  %1496 = vmatprep.subr.mxu0 0.0
  %1497 = vmatpush2.msra.mxu0 0.0
  %1498 = vmatprep.mubr.f32.mxu0 0.0
  %1499 = vmatmul.mubr.f32.gmra.mxu0 %v1432
  %v1500 = vpop.f32.mrf.mxu0
  %v1501 = vadd.f32 0.0, %v1500
  %v1502 = vpop.f32.mrf.mxu0
  %v1503 = vadd.f32 0.0, %v1502
  %1504 = vdwg.mxu0
  %1505 = vmatprep.subr.mxu0 0.0
  %1506 = vmatpush1.msra.mxu0 0.0
  %1507 = vmatprep.subr.mxu0 0.0
  %1508 = vmatpush1.msra.mxu0 0.0
  %1509 = vmatprep.subr.mxu0 0.0
  %1510 = vmatpush1.msra.mxu0 0.0
  %1511 = vmatprep.subr.mxu0 0.0
  %1512 = vmatpush1.msra.mxu0 0.0
  %1513 = vmatprep.subr.mxu0 0.0
  %1514 = vmatpush1.msra.mxu0 0.0
  %1515 = vmatprep.subr.mxu0 0.0
  %1516 = vmatpush1.msra.mxu0 0.0
  %1517 = vmatprep.subr.mxu0 0.0
  %1518 = vmatpush1.msra.mxu0 0.0
  %1519 = vmatprep.subr.mxu0 0.0
  %1520 = vmatpush1.msra.mxu0 0.0
  %1521 = vmatprep.subr.mxu0 0.0
  %1522 = vmatpush1.msra.mxu0 0.0
  %1523 = vmatprep.subr.mxu0 0.0
  %1524 = vmatpush1.msra.mxu0 0.0
  %1525 = vmatprep.subr.mxu0 0.0
  %1526 = vmatpush1.msra.mxu0 0.0
  %1527 = vmatprep.subr.mxu0 0.0
  %1528 = vmatpush1.msra.mxu0 0.0
  %1529 = vmatprep.subr.mxu0 0.0
  %1530 = vmatpush1.msra.mxu0 0.0
  %1531 = vmatprep.subr.mxu0 0.0
  %1532 = vmatpush1.msra.mxu0 0.0
  %1533 = vmatprep.subr.mxu0 %v1131
  %1534 = vmatpush1.msra.mxu0 %v1128
  %1535 = vmatprep.subr.mxu0 %v396
  %1536 = vmatpush1.msra.mxu0 %v395
  %1537 = vmatprep.subr.mxu0 0.0
  %1538 = vmatpush2.msra.mxu0 0.0
  %1539 = vmatprep.subr.mxu0 0.0
  %1540 = vmatpush2.msra.mxu0 0.0
  %1541 = vmatprep.subr.mxu0 0.0
  %1542 = vmatpush2.msra.mxu0 0.0
  %1543 = vmatprep.subr.mxu0 0.0
  %1544 = vmatpush2.msra.mxu0 0.0
  %1545 = vmatprep.subr.mxu0 0.0
  %1546 = vmatpush2.msra.mxu0 0.0
  %1547 = vmatprep.subr.mxu0 0.0
  %1548 = vmatpush2.msra.mxu0 0.0
  %1549 = vmatprep.subr.mxu0 0.0
  %1550 = vmatpush2.msra.mxu0 0.0
  %1551 = vmatprep.subr.mxu0 0.0
  %1552 = vmatpush2.msra.mxu0 0.0
  %1553 = vmatprep.subr.mxu0 0.0
  %1554 = vmatpush2.msra.mxu0 0.0
  %1555 = vmatprep.subr.mxu0 0.0
  %1556 = vmatpush2.msra.mxu0 0.0
  %1557 = vmatprep.subr.mxu0 0.0
  %1558 = vmatpush2.msra.mxu0 0.0
  %1559 = vmatprep.subr.mxu0 0.0
  %1560 = vmatpush2.msra.mxu0 0.0
  %1561 = vmatprep.subr.mxu0 0.0
  %1562 = vmatpush2.msra.mxu0 0.0
  %1563 = vmatprep.subr.mxu0 0.0
  %1564 = vmatpush2.msra.mxu0 0.0
  %1565 = vmatprep.subr.mxu0 0.0
  %1566 = vmatpush2.msra.mxu0 0.0
  %1567 = vmatprep.subr.mxu0 0.0
  %1568 = vmatpush2.msra.mxu0 0.0
  %1569 = vmatprep.mubr.f32.mxu0 0.0
  %1570 = vmatmul.mubr.f32.gmra.mxu0 %v1432
  %v1571 = vpop.f32.mrf.mxu0
  %v1572 = vadd.f32 0.0, %v1571
  %v1573 = vpop.f32.mrf.mxu0
  %v1574 = vadd.f32 0.0, %v1573
  %1575 = vdwg.mxu0
  %1576 = vmatprep.subr.mxu0 0.0
  %1577 = vmatpush1.msra.mxu0 0.0
  %1578 = vmatprep.subr.mxu0 0.0
  %1579 = vmatpush1.msra.mxu0 0.0
  %1580 = vmatprep.subr.mxu0 0.0
  %1581 = vmatpush1.msra.mxu0 0.0
  %1582 = vmatprep.subr.mxu0 0.0
  %1583 = vmatpush1.msra.mxu0 0.0
  %1584 = vmatprep.subr.mxu0 0.0
  %1585 = vmatpush1.msra.mxu0 0.0
  %1586 = vmatprep.subr.mxu0 0.0
  %1587 = vmatpush1.msra.mxu0 0.0
  %1588 = vmatprep.subr.mxu0 0.0
  %1589 = vmatpush1.msra.mxu0 0.0
  %1590 = vmatprep.subr.mxu0 0.0
  %1591 = vmatpush1.msra.mxu0 0.0
  %1592 = vmatprep.subr.mxu0 0.0
  %1593 = vmatpush1.msra.mxu0 0.0
  %1594 = vmatprep.subr.mxu0 0.0
  %1595 = vmatpush1.msra.mxu0 0.0
  %1596 = vmatprep.subr.mxu0 0.0
  %1597 = vmatpush1.msra.mxu0 0.0
  %1598 = vmatprep.subr.mxu0 0.0
  %1599 = vmatpush1.msra.mxu0 0.0
  %1600 = vmatprep.subr.mxu0 0.0
  %1601 = vmatpush1.msra.mxu0 0.0
  %1602 = vmatprep.subr.mxu0 0.0
  %1603 = vmatpush1.msra.mxu0 0.0
  %1604 = vmatprep.subr.mxu0 %v1137
  %1605 = vmatpush1.msra.mxu0 %v1134
  %1606 = vmatprep.subr.mxu0 %v398
  %1607 = vmatpush1.msra.mxu0 %v397
  %1608 = vmatprep.subr.mxu0 0.0
  %1609 = vmatpush2.msra.mxu0 0.0
  %1610 = vmatprep.subr.mxu0 0.0
  %1611 = vmatpush2.msra.mxu0 0.0
  %1612 = vmatprep.subr.mxu0 0.0
  %1613 = vmatpush2.msra.mxu0 0.0
  %1614 = vmatprep.subr.mxu0 0.0
  %1615 = vmatpush2.msra.mxu0 0.0
  %1616 = vmatprep.subr.mxu0 0.0
  %1617 = vmatpush2.msra.mxu0 0.0
  %1618 = vmatprep.subr.mxu0 0.0
  %1619 = vmatpush2.msra.mxu0 0.0
  %1620 = vmatprep.subr.mxu0 0.0
  %1621 = vmatpush2.msra.mxu0 0.0
  %1622 = vmatprep.subr.mxu0 0.0
  %1623 = vmatpush2.msra.mxu0 0.0
  %1624 = vmatprep.subr.mxu0 0.0
  %1625 = vmatpush2.msra.mxu0 0.0
  %1626 = vmatprep.subr.mxu0 0.0
  %1627 = vmatpush2.msra.mxu0 0.0
  %1628 = vmatprep.subr.mxu0 0.0
  %1629 = vmatpush2.msra.mxu0 0.0
  %1630 = vmatprep.subr.mxu0 0.0
  %1631 = vmatpush2.msra.mxu0 0.0
  %1632 = vmatprep.subr.mxu0 0.0
  %1633 = vmatpush2.msra.mxu0 0.0
  %1634 = vmatprep.subr.mxu0 0.0
  %1635 = vmatpush2.msra.mxu0 0.0
  %1636 = vmatprep.subr.mxu0 0.0
  %1637 = vmatpush2.msra.mxu0 0.0
  %1638 = vmatprep.subr.mxu0 0.0
  %1639 = vmatpush2.msra.mxu0 0.0
  %1640 = vmatprep.mubr.f32.mxu0 0.0
  %1641 = vmatmul.mubr.f32.gmra.mxu0 %v1432
  %v1642 = vpop.f32.mrf.mxu0
  %v1643 = vadd.f32 0.0, %v1642
  %v1644 = vpop.f32.mrf.mxu0
  %v1645 = vadd.f32 0.0, %v1644
  %1646 = vdwg.mxu0
  %1647 = vmatprep.subr.mxu0 0.0
  %1648 = vmatpush1.msra.mxu0 0.0
  %1649 = vmatprep.subr.mxu0 0.0
  %1650 = vmatpush1.msra.mxu0 0.0
  %1651 = vmatprep.subr.mxu0 0.0
  %1652 = vmatpush1.msra.mxu0 0.0
  %1653 = vmatprep.subr.mxu0 0.0
  %1654 = vmatpush1.msra.mxu0 0.0
  %1655 = vmatprep.subr.mxu0 0.0
  %1656 = vmatpush1.msra.mxu0 0.0
  %1657 = vmatprep.subr.mxu0 0.0
  %1658 = vmatpush1.msra.mxu0 0.0
  %1659 = vmatprep.subr.mxu0 0.0
  %1660 = vmatpush1.msra.mxu0 0.0
  %1661 = vmatprep.subr.mxu0 0.0
  %1662 = vmatpush1.msra.mxu0 0.0
  %1663 = vmatprep.subr.mxu0 0.0
  %1664 = vmatpush1.msra.mxu0 0.0
  %1665 = vmatprep.subr.mxu0 0.0
  %1666 = vmatpush1.msra.mxu0 0.0
  %1667 = vmatprep.subr.mxu0 0.0
  %1668 = vmatpush1.msra.mxu0 0.0
  %1669 = vmatprep.subr.mxu0 0.0
  %1670 = vmatpush1.msra.mxu0 0.0
  %1671 = vmatprep.subr.mxu0 0.0
  %1672 = vmatpush1.msra.mxu0 0.0
  %1673 = vmatprep.subr.mxu0 0.0
  %1674 = vmatpush1.msra.mxu0 0.0
  %1675 = vmatprep.subr.mxu0 %v1143
  %1676 = vmatpush1.msra.mxu0 %v1140
  %1677 = vmatprep.subr.mxu0 %v400
  %1678 = vmatpush1.msra.mxu0 %v399
  %1679 = vmatprep.subr.mxu0 0.0
  %1680 = vmatpush2.msra.mxu0 0.0
  %1681 = vmatprep.subr.mxu0 0.0
  %1682 = vmatpush2.msra.mxu0 0.0
  %1683 = vmatprep.subr.mxu0 0.0
  %1684 = vmatpush2.msra.mxu0 0.0
  %1685 = vmatprep.subr.mxu0 0.0
  %1686 = vmatpush2.msra.mxu0 0.0
  %1687 = vmatprep.subr.mxu0 0.0
  %1688 = vmatpush2.msra.mxu0 0.0
  %1689 = vmatprep.subr.mxu0 0.0
  %1690 = vmatpush2.msra.mxu0 0.0
  %1691 = vmatprep.subr.mxu0 0.0
  %1692 = vmatpush2.msra.mxu0 0.0
  %1693 = vmatprep.subr.mxu0 0.0
  %1694 = vmatpush2.msra.mxu0 0.0
  %1695 = vmatprep.subr.mxu0 0.0
  %1696 = vmatpush2.msra.mxu0 0.0
  %1697 = vmatprep.subr.mxu0 0.0
  %1698 = vmatpush2.msra.mxu0 0.0
  %1699 = vmatprep.subr.mxu0 0.0
  %1700 = vmatpush2.msra.mxu0 0.0
  %1701 = vmatprep.subr.mxu0 0.0
  %1702 = vmatpush2.msra.mxu0 0.0
  %1703 = vmatprep.subr.mxu0 0.0
  %1704 = vmatpush2.msra.mxu0 0.0
  %1705 = vmatprep.subr.mxu0 0.0
  %1706 = vmatpush2.msra.mxu0 0.0
  %1707 = vmatprep.subr.mxu0 0.0
  %1708 = vmatpush2.msra.mxu0 0.0
  %1709 = vmatprep.subr.mxu0 0.0
  %1710 = vmatpush2.msra.mxu0 0.0
  %1711 = vmatprep.mubr.f32.mxu0 0.0
  %1712 = vmatmul.mubr.f32.gmra.mxu0 %v1432
  %v1713 = vpop.f32.mrf.mxu0
  %v1714 = vadd.f32 0.0, %v1713
  %v1715 = vpop.f32.mrf.mxu0
  %v1716 = vadd.f32 0.0, %v1715
  %1717 = vdwg.mxu0
  %1718 = vrot.lane.b32.xlu0 %v873, 122
  %v1719 = vpop.permute.xlu0 %1718
  %v1720 = vsel %vm899, %v1719, 0
  %v1723 = vsel %vm1120, %v457, 0
  %v1726 = vsel %vm1120, %v458, 0
  %v1729 = vsel %vm1120, %v459, 0
  %v1732 = vsel %vm1120, %v460, 0
  %v1735 = vsel %vm1120, %v461, 0
  %v1738 = vsel %vm1120, %v462, 0
  %v1741 = vsel %vm1120, %v463, 0
  %v1744 = vsel %vm1120, %v464, 0
  %1746 = vmatprep.subr.mxu0 0.0
  %1747 = vmatpush1.msra.mxu0 0.0
  %1748 = vmatprep.subr.mxu0 0.0
  %1749 = vmatpush1.msra.mxu0 0.0
  %1750 = vmatprep.subr.mxu0 0.0
  %1751 = vmatpush1.msra.mxu0 0.0
  %1752 = vmatprep.subr.mxu0 0.0
  %1753 = vmatpush1.msra.mxu0 0.0
  %1754 = vmatprep.subr.mxu0 0.0
  %1755 = vmatpush1.msra.mxu0 0.0
  %1756 = vmatprep.subr.mxu0 0.0
  %1757 = vmatpush1.msra.mxu0 0.0
  %1758 = vmatprep.subr.mxu0 0.0
  %1759 = vmatpush1.msra.mxu0 0.0
  %1760 = vmatprep.subr.mxu0 0.0
  %1761 = vmatpush1.msra.mxu0 0.0
  %1762 = vmatprep.subr.mxu0 0.0
  %1763 = vmatpush1.msra.mxu0 0.0
  %1764 = vmatprep.subr.mxu0 0.0
  %1765 = vmatpush1.msra.mxu0 0.0
  %1766 = vmatprep.subr.mxu0 0.0
  %1767 = vmatpush1.msra.mxu0 0.0
  %1768 = vmatprep.subr.mxu0 0.0
  %1769 = vmatpush1.msra.mxu0 0.0
  %1770 = vmatprep.subr.mxu0 0.0
  %1771 = vmatpush1.msra.mxu0 0.0
  %1772 = vmatprep.subr.mxu0 0.0
  %1773 = vmatpush1.msra.mxu0 0.0
  %1774 = vmatprep.subr.mxu0 %v1726
  %1775 = vmatpush1.msra.mxu0 %v1723
  %1776 = vmatprep.subr.mxu0 %v450
  %1777 = vmatpush1.msra.mxu0 %v449
  %1778 = vmatprep.subr.mxu0 0.0
  %1779 = vmatpush2.msra.mxu0 0.0
  %1780 = vmatprep.subr.mxu0 0.0
  %1781 = vmatpush2.msra.mxu0 0.0
  %1782 = vmatprep.subr.mxu0 0.0
  %1783 = vmatpush2.msra.mxu0 0.0
  %1784 = vmatprep.subr.mxu0 0.0
  %1785 = vmatpush2.msra.mxu0 0.0
  %1786 = vmatprep.subr.mxu0 0.0
  %1787 = vmatpush2.msra.mxu0 0.0
  %1788 = vmatprep.subr.mxu0 0.0
  %1789 = vmatpush2.msra.mxu0 0.0
  %1790 = vmatprep.subr.mxu0 0.0
  %1791 = vmatpush2.msra.mxu0 0.0
  %1792 = vmatprep.subr.mxu0 0.0
  %1793 = vmatpush2.msra.mxu0 0.0
  %1794 = vmatprep.subr.mxu0 0.0
  %1795 = vmatpush2.msra.mxu0 0.0
  %1796 = vmatprep.subr.mxu0 0.0
  %1797 = vmatpush2.msra.mxu0 0.0
  %1798 = vmatprep.subr.mxu0 0.0
  %1799 = vmatpush2.msra.mxu0 0.0
  %1800 = vmatprep.subr.mxu0 0.0
  %1801 = vmatpush2.msra.mxu0 0.0
  %1802 = vmatprep.subr.mxu0 0.0
  %1803 = vmatpush2.msra.mxu0 0.0
  %1804 = vmatprep.subr.mxu0 0.0
  %1805 = vmatpush2.msra.mxu0 0.0
  %1806 = vmatprep.subr.mxu0 0.0
  %1807 = vmatpush2.msra.mxu0 0.0
  %1808 = vmatprep.subr.mxu0 0.0
  %1809 = vmatpush2.msra.mxu0 0.0
  %1810 = vmatprep.mubr.f32.mxu0 0.0
  %1811 = vmatmul.mubr.f32.gmra.mxu0 %v1720
  %v1812 = vpop.f32.mrf.mxu0
  %v1813 = vadd.f32 0.0, %v1812
  %v1814 = vpop.f32.mrf.mxu0
  %v1815 = vadd.f32 0.0, %v1814
  %1816 = vdwg.mxu0
  %1817 = vmatprep.subr.mxu0 0.0
  %1818 = vmatpush1.msra.mxu0 0.0
  %1819 = vmatprep.subr.mxu0 0.0
  %1820 = vmatpush1.msra.mxu0 0.0
  %1821 = vmatprep.subr.mxu0 0.0
  %1822 = vmatpush1.msra.mxu0 0.0
  %1823 = vmatprep.subr.mxu0 0.0
  %1824 = vmatpush1.msra.mxu0 0.0
  %1825 = vmatprep.subr.mxu0 0.0
  %1826 = vmatpush1.msra.mxu0 0.0
  %1827 = vmatprep.subr.mxu0 0.0
  %1828 = vmatpush1.msra.mxu0 0.0
  %1829 = vmatprep.subr.mxu0 0.0
  %1830 = vmatpush1.msra.mxu0 0.0
  %1831 = vmatprep.subr.mxu0 0.0
  %1832 = vmatpush1.msra.mxu0 0.0
  %1833 = vmatprep.subr.mxu0 0.0
  %1834 = vmatpush1.msra.mxu0 0.0
  %1835 = vmatprep.subr.mxu0 0.0
  %1836 = vmatpush1.msra.mxu0 0.0
  %1837 = vmatprep.subr.mxu0 0.0
  %1838 = vmatpush1.msra.mxu0 0.0
  %1839 = vmatprep.subr.mxu0 0.0
  %1840 = vmatpush1.msra.mxu0 0.0
  %1841 = vmatprep.subr.mxu0 0.0
  %1842 = vmatpush1.msra.mxu0 0.0
  %1843 = vmatprep.subr.mxu0 0.0
  %1844 = vmatpush1.msra.mxu0 0.0
  %1845 = vmatprep.subr.mxu0 %v1732
  %1846 = vmatpush1.msra.mxu0 %v1729
  %1847 = vmatprep.subr.mxu0 %v452
  %1848 = vmatpush1.msra.mxu0 %v451
  %1849 = vmatprep.subr.mxu0 0.0
  %1850 = vmatpush2.msra.mxu0 0.0
  %1851 = vmatprep.subr.mxu0 0.0
  %1852 = vmatpush2.msra.mxu0 0.0
  %1853 = vmatprep.subr.mxu0 0.0
  %1854 = vmatpush2.msra.mxu0 0.0
  %1855 = vmatprep.subr.mxu0 0.0
  %1856 = vmatpush2.msra.mxu0 0.0
  %1857 = vmatprep.subr.mxu0 0.0
  %1858 = vmatpush2.msra.mxu0 0.0
  %1859 = vmatprep.subr.mxu0 0.0
  %1860 = vmatpush2.msra.mxu0 0.0
  %1861 = vmatprep.subr.mxu0 0.0
  %1862 = vmatpush2.msra.mxu0 0.0
  %1863 = vmatprep.subr.mxu0 0.0
  %1864 = vmatpush2.msra.mxu0 0.0
  %1865 = vmatprep.subr.mxu0 0.0
  %1866 = vmatpush2.msra.mxu0 0.0
  %1867 = vmatprep.subr.mxu0 0.0
  %1868 = vmatpush2.msra.mxu0 0.0
  %1869 = vmatprep.subr.mxu0 0.0
  %1870 = vmatpush2.msra.mxu0 0.0
  %1871 = vmatprep.subr.mxu0 0.0
  %1872 = vmatpush2.msra.mxu0 0.0
  %1873 = vmatprep.subr.mxu0 0.0
  %1874 = vmatpush2.msra.mxu0 0.0
  %1875 = vmatprep.subr.mxu0 0.0
  %1876 = vmatpush2.msra.mxu0 0.0
  %1877 = vmatprep.subr.mxu0 0.0
  %1878 = vmatpush2.msra.mxu0 0.0
  %1879 = vmatprep.subr.mxu0 0.0
  %1880 = vmatpush2.msra.mxu0 0.0
  %1881 = vmatprep.mubr.f32.mxu0 0.0
  %1882 = vmatmul.mubr.f32.gmra.mxu0 %v1720
  %v1883 = vpop.f32.mrf.mxu0
  %v1884 = vadd.f32 0.0, %v1883
  %v1885 = vpop.f32.mrf.mxu0
  %v1886 = vadd.f32 0.0, %v1885
  %1887 = vdwg.mxu0
  %1888 = vmatprep.subr.mxu0 0.0
  %1889 = vmatpush1.msra.mxu0 0.0
  %1890 = vmatprep.subr.mxu0 0.0
  %1891 = vmatpush1.msra.mxu0 0.0
  %1892 = vmatprep.subr.mxu0 0.0
  %1893 = vmatpush1.msra.mxu0 0.0
  %1894 = vmatprep.subr.mxu0 0.0
  %1895 = vmatpush1.msra.mxu0 0.0
  %1896 = vmatprep.subr.mxu0 0.0
  %1897 = vmatpush1.msra.mxu0 0.0
  %1898 = vmatprep.subr.mxu0 0.0
  %1899 = vmatpush1.msra.mxu0 0.0
  %1900 = vmatprep.subr.mxu0 0.0
  %1901 = vmatpush1.msra.mxu0 0.0
  %1902 = vmatprep.subr.mxu0 0.0
  %1903 = vmatpush1.msra.mxu0 0.0
  %1904 = vmatprep.subr.mxu0 0.0
  %1905 = vmatpush1.msra.mxu0 0.0
  %1906 = vmatprep.subr.mxu0 0.0
  %1907 = vmatpush1.msra.mxu0 0.0
  %1908 = vmatprep.subr.mxu0 0.0
  %1909 = vmatpush1.msra.mxu0 0.0
  %1910 = vmatprep.subr.mxu0 0.0
  %1911 = vmatpush1.msra.mxu0 0.0
  %1912 = vmatprep.subr.mxu0 0.0
  %1913 = vmatpush1.msra.mxu0 0.0
  %1914 = vmatprep.subr.mxu0 0.0
  %1915 = vmatpush1.msra.mxu0 0.0
  %1916 = vmatprep.subr.mxu0 %v1738
  %1917 = vmatpush1.msra.mxu0 %v1735
  %1918 = vmatprep.subr.mxu0 %v454
  %1919 = vmatpush1.msra.mxu0 %v453
  %1920 = vmatprep.subr.mxu0 0.0
  %1921 = vmatpush2.msra.mxu0 0.0
  %1922 = vmatprep.subr.mxu0 0.0
  %1923 = vmatpush2.msra.mxu0 0.0
  %1924 = vmatprep.subr.mxu0 0.0
  %1925 = vmatpush2.msra.mxu0 0.0
  %1926 = vmatprep.subr.mxu0 0.0
  %1927 = vmatpush2.msra.mxu0 0.0
  %1928 = vmatprep.subr.mxu0 0.0
  %1929 = vmatpush2.msra.mxu0 0.0
  %1930 = vmatprep.subr.mxu0 0.0
  %1931 = vmatpush2.msra.mxu0 0.0
  %1932 = vmatprep.subr.mxu0 0.0
  %1933 = vmatpush2.msra.mxu0 0.0
  %1934 = vmatprep.subr.mxu0 0.0
  %1935 = vmatpush2.msra.mxu0 0.0
  %1936 = vmatprep.subr.mxu0 0.0
  %1937 = vmatpush2.msra.mxu0 0.0
  %1938 = vmatprep.subr.mxu0 0.0
  %1939 = vmatpush2.msra.mxu0 0.0
  %1940 = vmatprep.subr.mxu0 0.0
  %1941 = vmatpush2.msra.mxu0 0.0
  %1942 = vmatprep.subr.mxu0 0.0
  %1943 = vmatpush2.msra.mxu0 0.0
  %1944 = vmatprep.subr.mxu0 0.0
  %1945 = vmatpush2.msra.mxu0 0.0
  %1946 = vmatprep.subr.mxu0 0.0
  %1947 = vmatpush2.msra.mxu0 0.0
  %1948 = vmatprep.subr.mxu0 0.0
  %1949 = vmatpush2.msra.mxu0 0.0
  %1950 = vmatprep.subr.mxu0 0.0
  %1951 = vmatpush2.msra.mxu0 0.0
  %1952 = vmatprep.mubr.f32.mxu0 0.0
  %1953 = vmatmul.mubr.f32.gmra.mxu0 %v1720
  %v1954 = vpop.f32.mrf.mxu0
  %v1955 = vadd.f32 0.0, %v1954
  %v1956 = vpop.f32.mrf.mxu0
  %v1957 = vadd.f32 0.0, %v1956
  %1958 = vdwg.mxu0
  %1959 = vmatprep.subr.mxu0 0.0
  %1960 = vmatpush1.msra.mxu0 0.0
  %1961 = vmatprep.subr.mxu0 0.0
  %1962 = vmatpush1.msra.mxu0 0.0
  %1963 = vmatprep.subr.mxu0 0.0
  %1964 = vmatpush1.msra.mxu0 0.0
  %1965 = vmatprep.subr.mxu0 0.0
  %1966 = vmatpush1.msra.mxu0 0.0
  %1967 = vmatprep.subr.mxu0 0.0
  %1968 = vmatpush1.msra.mxu0 0.0
  %1969 = vmatprep.subr.mxu0 0.0
  %1970 = vmatpush1.msra.mxu0 0.0
  %1971 = vmatprep.subr.mxu0 0.0
  %1972 = vmatpush1.msra.mxu0 0.0
  %1973 = vmatprep.subr.mxu0 0.0
  %1974 = vmatpush1.msra.mxu0 0.0
  %1975 = vmatprep.subr.mxu0 0.0
  %1976 = vmatpush1.msra.mxu0 0.0
  %1977 = vmatprep.subr.mxu0 0.0
  %1978 = vmatpush1.msra.mxu0 0.0
  %1979 = vmatprep.subr.mxu0 0.0
  %1980 = vmatpush1.msra.mxu0 0.0
  %1981 = vmatprep.subr.mxu0 0.0
  %1982 = vmatpush1.msra.mxu0 0.0
  %1983 = vmatprep.subr.mxu0 0.0
  %1984 = vmatpush1.msra.mxu0 0.0
  %1985 = vmatprep.subr.mxu0 0.0
  %1986 = vmatpush1.msra.mxu0 0.0
  %1987 = vmatprep.subr.mxu0 %v1744
  %1988 = vmatpush1.msra.mxu0 %v1741
  %1989 = vmatprep.subr.mxu0 %v456
  %1990 = vmatpush1.msra.mxu0 %v455
  %1991 = vmatprep.subr.mxu0 0.0
  %1992 = vmatpush2.msra.mxu0 0.0
  %1993 = vmatprep.subr.mxu0 0.0
  %1994 = vmatpush2.msra.mxu0 0.0
  %1995 = vmatprep.subr.mxu0 0.0
  %1996 = vmatpush2.msra.mxu0 0.0
  %1997 = vmatprep.subr.mxu0 0.0
  %1998 = vmatpush2.msra.mxu0 0.0
  %1999 = vmatprep.subr.mxu0 0.0
  %2000 = vmatpush2.msra.mxu0 0.0
  %2001 = vmatprep.subr.mxu0 0.0
  %2002 = vmatpush2.msra.mxu0 0.0
  %2003 = vmatprep.subr.mxu0 0.0
  %2004 = vmatpush2.msra.mxu0 0.0
  %2005 = vmatprep.subr.mxu0 0.0
  %2006 = vmatpush2.msra.mxu0 0.0
  %2007 = vmatprep.subr.mxu0 0.0
  %2008 = vmatpush2.msra.mxu0 0.0
  %2009 = vmatprep.subr.mxu0 0.0
  %2010 = vmatpush2.msra.mxu0 0.0
  %2011 = vmatprep.subr.mxu0 0.0
  %2012 = vmatpush2.msra.mxu0 0.0
  %2013 = vmatprep.subr.mxu0 0.0
  %2014 = vmatpush2.msra.mxu0 0.0
  %2015 = vmatprep.subr.mxu0 0.0
  %2016 = vmatpush2.msra.mxu0 0.0
  %2017 = vmatprep.subr.mxu0 0.0
  %2018 = vmatpush2.msra.mxu0 0.0
  %2019 = vmatprep.subr.mxu0 0.0
  %2020 = vmatpush2.msra.mxu0 0.0
  %2021 = vmatprep.subr.mxu0 0.0
  %2022 = vmatpush2.msra.mxu0 0.0
  %2023 = vmatprep.mubr.f32.mxu0 0.0
  %2024 = vmatmul.mubr.f32.gmra.mxu0 %v1720
  %v2025 = vpop.f32.mrf.mxu0
  %v2026 = vadd.f32 0.0, %v2025
  %v2027 = vpop.f32.mrf.mxu0
  %v2028 = vadd.f32 0.0, %v2027
  %2029 = vdwg.mxu0
  %v2031 = vsel %vm1120, %v513, 0
  %v2034 = vsel %vm1120, %v514, 0
  %v2037 = vsel %vm1120, %v515, 0
  %v2040 = vsel %vm1120, %v516, 0
  %v2043 = vsel %vm1120, %v517, 0
  %v2046 = vsel %vm1120, %v518, 0
  %v2049 = vsel %vm1120, %v519, 0
  %v2052 = vsel %vm1120, %v520, 0
  %2054 = vmatprep.subr.mxu0 0.0
  %2055 = vmatpush1.msra.mxu0 0.0
  %2056 = vmatprep.subr.mxu0 0.0
  %2057 = vmatpush1.msra.mxu0 0.0
  %2058 = vmatprep.subr.mxu0 0.0
  %2059 = vmatpush1.msra.mxu0 0.0
  %2060 = vmatprep.subr.mxu0 0.0
  %2061 = vmatpush1.msra.mxu0 0.0
  %2062 = vmatprep.subr.mxu0 0.0
  %2063 = vmatpush1.msra.mxu0 0.0
  %2064 = vmatprep.subr.mxu0 0.0
  %2065 = vmatpush1.msra.mxu0 0.0
  %2066 = vmatprep.subr.mxu0 0.0
  %2067 = vmatpush1.msra.mxu0 0.0
  %2068 = vmatprep.subr.mxu0 0.0
  %2069 = vmatpush1.msra.mxu0 0.0
  %2070 = vmatprep.subr.mxu0 0.0
  %2071 = vmatpush1.msra.mxu0 0.0
  %2072 = vmatprep.subr.mxu0 0.0
  %2073 = vmatpush1.msra.mxu0 0.0
  %2074 = vmatprep.subr.mxu0 0.0
  %2075 = vmatpush1.msra.mxu0 0.0
  %2076 = vmatprep.subr.mxu0 0.0
  %2077 = vmatpush1.msra.mxu0 0.0
  %2078 = vmatprep.subr.mxu0 0.0
  %2079 = vmatpush1.msra.mxu0 0.0
  %2080 = vmatprep.subr.mxu0 0.0
  %2081 = vmatpush1.msra.mxu0 0.0
  %2082 = vmatprep.subr.mxu0 %v2034
  %2083 = vmatpush1.msra.mxu0 %v2031
  %2084 = vmatprep.subr.mxu0 %v506
  %2085 = vmatpush1.msra.mxu0 %v505
  %2086 = vmatprep.subr.mxu0 0.0
  %2087 = vmatpush2.msra.mxu0 0.0
  %2088 = vmatprep.subr.mxu0 0.0
  %2089 = vmatpush2.msra.mxu0 0.0
  %2090 = vmatprep.subr.mxu0 0.0
  %2091 = vmatpush2.msra.mxu0 0.0
  %2092 = vmatprep.subr.mxu0 0.0
  %2093 = vmatpush2.msra.mxu0 0.0
  %2094 = vmatprep.subr.mxu0 0.0
  %2095 = vmatpush2.msra.mxu0 0.0
  %2096 = vmatprep.subr.mxu0 0.0
  %2097 = vmatpush2.msra.mxu0 0.0
  %2098 = vmatprep.subr.mxu0 0.0
  %2099 = vmatpush2.msra.mxu0 0.0
  %2100 = vmatprep.subr.mxu0 0.0
  %2101 = vmatpush2.msra.mxu0 0.0
  %2102 = vmatprep.subr.mxu0 0.0
  %2103 = vmatpush2.msra.mxu0 0.0
  %2104 = vmatprep.subr.mxu0 0.0
  %2105 = vmatpush2.msra.mxu0 0.0
  %2106 = vmatprep.subr.mxu0 0.0
  %2107 = vmatpush2.msra.mxu0 0.0
  %2108 = vmatprep.subr.mxu0 0.0
  %2109 = vmatpush2.msra.mxu0 0.0
  %2110 = vmatprep.subr.mxu0 0.0
  %2111 = vmatpush2.msra.mxu0 0.0
  %2112 = vmatprep.subr.mxu0 0.0
  %2113 = vmatpush2.msra.mxu0 0.0
  %2114 = vmatprep.subr.mxu0 0.0
  %2115 = vmatpush2.msra.mxu0 0.0
  %2116 = vmatprep.subr.mxu0 0.0
  %2117 = vmatpush2.msra.mxu0 0.0
  %2118 = vmatprep.mubr.f32.mxu0 0.0
  %2119 = vmatmul.mubr.f32.gmra.mxu0 %v1720
  %v2120 = vpop.f32.mrf.mxu0
  %v2121 = vadd.f32 0.0, %v2120
  %v2122 = vpop.f32.mrf.mxu0
  %v2123 = vadd.f32 0.0, %v2122
  %2124 = vdwg.mxu0
  %2125 = vmatprep.subr.mxu0 0.0
  %2126 = vmatpush1.msra.mxu0 0.0
  %2127 = vmatprep.subr.mxu0 0.0
  %2128 = vmatpush1.msra.mxu0 0.0
  %2129 = vmatprep.subr.mxu0 0.0
  %2130 = vmatpush1.msra.mxu0 0.0
  %2131 = vmatprep.subr.mxu0 0.0
  %2132 = vmatpush1.msra.mxu0 0.0
  %2133 = vmatprep.subr.mxu0 0.0
  %2134 = vmatpush1.msra.mxu0 0.0
  %2135 = vmatprep.subr.mxu0 0.0
  %2136 = vmatpush1.msra.mxu0 0.0
  %2137 = vmatprep.subr.mxu0 0.0
  %2138 = vmatpush1.msra.mxu0 0.0
  %2139 = vmatprep.subr.mxu0 0.0
  %2140 = vmatpush1.msra.mxu0 0.0
  %2141 = vmatprep.subr.mxu0 0.0
  %2142 = vmatpush1.msra.mxu0 0.0
  %2143 = vmatprep.subr.mxu0 0.0
  %2144 = vmatpush1.msra.mxu0 0.0
  %2145 = vmatprep.subr.mxu0 0.0
  %2146 = vmatpush1.msra.mxu0 0.0
  %2147 = vmatprep.subr.mxu0 0.0
  %2148 = vmatpush1.msra.mxu0 0.0
  %2149 = vmatprep.subr.mxu0 0.0
  %2150 = vmatpush1.msra.mxu0 0.0
  %2151 = vmatprep.subr.mxu0 0.0
  %2152 = vmatpush1.msra.mxu0 0.0
  %2153 = vmatprep.subr.mxu0 %v2040
  %2154 = vmatpush1.msra.mxu0 %v2037
  %2155 = vmatprep.subr.mxu0 %v508
  %2156 = vmatpush1.msra.mxu0 %v507
  %2157 = vmatprep.subr.mxu0 0.0
  %2158 = vmatpush2.msra.mxu0 0.0
  %2159 = vmatprep.subr.mxu0 0.0
  %2160 = vmatpush2.msra.mxu0 0.0
  %2161 = vmatprep.subr.mxu0 0.0
  %2162 = vmatpush2.msra.mxu0 0.0
  %2163 = vmatprep.subr.mxu0 0.0
  %2164 = vmatpush2.msra.mxu0 0.0
  %2165 = vmatprep.subr.mxu0 0.0
  %2166 = vmatpush2.msra.mxu0 0.0
  %2167 = vmatprep.subr.mxu0 0.0
  %2168 = vmatpush2.msra.mxu0 0.0
  %2169 = vmatprep.subr.mxu0 0.0
  %2170 = vmatpush2.msra.mxu0 0.0
  %2171 = vmatprep.subr.mxu0 0.0
  %2172 = vmatpush2.msra.mxu0 0.0
  %2173 = vmatprep.subr.mxu0 0.0
  %2174 = vmatpush2.msra.mxu0 0.0
  %2175 = vmatprep.subr.mxu0 0.0
  %2176 = vmatpush2.msra.mxu0 0.0
  %2177 = vmatprep.subr.mxu0 0.0
  %2178 = vmatpush2.msra.mxu0 0.0
  %2179 = vmatprep.subr.mxu0 0.0
  %2180 = vmatpush2.msra.mxu0 0.0
  %2181 = vmatprep.subr.mxu0 0.0
  %2182 = vmatpush2.msra.mxu0 0.0
  %2183 = vmatprep.subr.mxu0 0.0
  %2184 = vmatpush2.msra.mxu0 0.0
  %2185 = vmatprep.subr.mxu0 0.0
  %2186 = vmatpush2.msra.mxu0 0.0
  %2187 = vmatprep.subr.mxu0 0.0
  %2188 = vmatpush2.msra.mxu0 0.0
  %2189 = vmatprep.mubr.f32.mxu0 0.0
  %2190 = vmatmul.mubr.f32.gmra.mxu0 %v1720
  %v2191 = vpop.f32.mrf.mxu0
  %v2192 = vadd.f32 0.0, %v2191
  %v2193 = vpop.f32.mrf.mxu0
  %v2194 = vadd.f32 0.0, %v2193
  %2195 = vdwg.mxu0
  %2196 = vmatprep.subr.mxu0 0.0
  %2197 = vmatpush1.msra.mxu0 0.0
  %2198 = vmatprep.subr.mxu0 0.0
  %2199 = vmatpush1.msra.mxu0 0.0
  %2200 = vmatprep.subr.mxu0 0.0
  %2201 = vmatpush1.msra.mxu0 0.0
  %2202 = vmatprep.subr.mxu0 0.0
  %2203 = vmatpush1.msra.mxu0 0.0
  %2204 = vmatprep.subr.mxu0 0.0
  %2205 = vmatpush1.msra.mxu0 0.0
  %2206 = vmatprep.subr.mxu0 0.0
  %2207 = vmatpush1.msra.mxu0 0.0
  %2208 = vmatprep.subr.mxu0 0.0
  %2209 = vmatpush1.msra.mxu0 0.0
  %2210 = vmatprep.subr.mxu0 0.0
  %2211 = vmatpush1.msra.mxu0 0.0
  %2212 = vmatprep.subr.mxu0 0.0
  %2213 = vmatpush1.msra.mxu0 0.0
  %2214 = vmatprep.subr.mxu0 0.0
  %2215 = vmatpush1.msra.mxu0 0.0
  %2216 = vmatprep.subr.mxu0 0.0
  %2217 = vmatpush1.msra.mxu0 0.0
  %2218 = vmatprep.subr.mxu0 0.0
  %2219 = vmatpush1.msra.mxu0 0.0
  %2220 = vmatprep.subr.mxu0 0.0
  %2221 = vmatpush1.msra.mxu0 0.0
  %2222 = vmatprep.subr.mxu0 0.0
  %2223 = vmatpush1.msra.mxu0 0.0
  %2224 = vmatprep.subr.mxu0 %v2046
  %2225 = vmatpush1.msra.mxu0 %v2043
  %2226 = vmatprep.subr.mxu0 %v510
  %2227 = vmatpush1.msra.mxu0 %v509
  %2228 = vmatprep.subr.mxu0 0.0
  %2229 = vmatpush2.msra.mxu0 0.0
  %2230 = vmatprep.subr.mxu0 0.0
  %2231 = vmatpush2.msra.mxu0 0.0
  %2232 = vmatprep.subr.mxu0 0.0
  %2233 = vmatpush2.msra.mxu0 0.0
  %2234 = vmatprep.subr.mxu0 0.0
  %2235 = vmatpush2.msra.mxu0 0.0
  %2236 = vmatprep.subr.mxu0 0.0
  %2237 = vmatpush2.msra.mxu0 0.0
  %2238 = vmatprep.subr.mxu0 0.0
  %2239 = vmatpush2.msra.mxu0 0.0
  %2240 = vmatprep.subr.mxu0 0.0
  %2241 = vmatpush2.msra.mxu0 0.0
  %2242 = vmatprep.subr.mxu0 0.0
  %2243 = vmatpush2.msra.mxu0 0.0
  %2244 = vmatprep.subr.mxu0 0.0
  %2245 = vmatpush2.msra.mxu0 0.0
  %2246 = vmatprep.subr.mxu0 0.0
  %2247 = vmatpush2.msra.mxu0 0.0
  %2248 = vmatprep.subr.mxu0 0.0
  %2249 = vmatpush2.msra.mxu0 0.0
  %2250 = vmatprep.subr.mxu0 0.0
  %2251 = vmatpush2.msra.mxu0 0.0
  %2252 = vmatprep.subr.mxu0 0.0
  %2253 = vmatpush2.msra.mxu0 0.0
  %2254 = vmatprep.subr.mxu0 0.0
  %2255 = vmatpush2.msra.mxu0 0.0
  %2256 = vmatprep.subr.mxu0 0.0
  %2257 = vmatpush2.msra.mxu0 0.0
  %2258 = vmatprep.subr.mxu0 0.0
  %2259 = vmatpush2.msra.mxu0 0.0
  %2260 = vmatprep.mubr.f32.mxu0 0.0
  %2261 = vmatmul.mubr.f32.gmra.mxu0 %v1720
  %v2262 = vpop.f32.mrf.mxu0
  %v2263 = vadd.f32 0.0, %v2262
  %v2264 = vpop.f32.mrf.mxu0
  %v2265 = vadd.f32 0.0, %v2264
  %2266 = vdwg.mxu0
  %2267 = vmatprep.subr.mxu0 0.0
  %2268 = vmatpush1.msra.mxu0 0.0
  %2269 = vmatprep.subr.mxu0 0.0
  %2270 = vmatpush1.msra.mxu0 0.0
  %2271 = vmatprep.subr.mxu0 0.0
  %2272 = vmatpush1.msra.mxu0 0.0
  %2273 = vmatprep.subr.mxu0 0.0
  %2274 = vmatpush1.msra.mxu0 0.0
  %2275 = vmatprep.subr.mxu0 0.0
  %2276 = vmatpush1.msra.mxu0 0.0
  %2277 = vmatprep.subr.mxu0 0.0
  %2278 = vmatpush1.msra.mxu0 0.0
  %2279 = vmatprep.subr.mxu0 0.0
  %2280 = vmatpush1.msra.mxu0 0.0
  %2281 = vmatprep.subr.mxu0 0.0
  %2282 = vmatpush1.msra.mxu0 0.0
  %2283 = vmatprep.subr.mxu0 0.0
  %2284 = vmatpush1.msra.mxu0 0.0
  %2285 = vmatprep.subr.mxu0 0.0
  %2286 = vmatpush1.msra.mxu0 0.0
  %2287 = vmatprep.subr.mxu0 0.0
  %2288 = vmatpush1.msra.mxu0 0.0
  %2289 = vmatprep.subr.mxu0 0.0
  %2290 = vmatpush1.msra.mxu0 0.0
  %2291 = vmatprep.subr.mxu0 0.0
  %2292 = vmatpush1.msra.mxu0 0.0
  %2293 = vmatprep.subr.mxu0 0.0
  %2294 = vmatpush1.msra.mxu0 0.0
  %2295 = vmatprep.subr.mxu0 %v2052
  %2296 = vmatpush1.msra.mxu0 %v2049
  %2297 = vmatprep.subr.mxu0 %v512
  %2298 = vmatpush1.msra.mxu0 %v511
  %2299 = vmatprep.subr.mxu0 0.0
  %2300 = vmatpush2.msra.mxu0 0.0
  %2301 = vmatprep.subr.mxu0 0.0
  %2302 = vmatpush2.msra.mxu0 0.0
  %2303 = vmatprep.subr.mxu0 0.0
  %2304 = vmatpush2.msra.mxu0 0.0
  %2305 = vmatprep.subr.mxu0 0.0
  %2306 = vmatpush2.msra.mxu0 0.0
  %2307 = vmatprep.subr.mxu0 0.0
  %2308 = vmatpush2.msra.mxu0 0.0
  %2309 = vmatprep.subr.mxu0 0.0
  %2310 = vmatpush2.msra.mxu0 0.0
  %2311 = vmatprep.subr.mxu0 0.0
  %2312 = vmatpush2.msra.mxu0 0.0
  %2313 = vmatprep.subr.mxu0 0.0
  %2314 = vmatpush2.msra.mxu0 0.0
  %2315 = vmatprep.subr.mxu0 0.0
  %2316 = vmatpush2.msra.mxu0 0.0
  %2317 = vmatprep.subr.mxu0 0.0
  %2318 = vmatpush2.msra.mxu0 0.0
  %2319 = vmatprep.subr.mxu0 0.0
  %2320 = vmatpush2.msra.mxu0 0.0
  %2321 = vmatprep.subr.mxu0 0.0
  %2322 = vmatpush2.msra.mxu0 0.0
  %2323 = vmatprep.subr.mxu0 0.0
  %2324 = vmatpush2.msra.mxu0 0.0
  %2325 = vmatprep.subr.mxu0 0.0
  %2326 = vmatpush2.msra.mxu0 0.0
  %2327 = vmatprep.subr.mxu0 0.0
  %2328 = vmatpush2.msra.mxu0 0.0
  %2329 = vmatprep.subr.mxu0 0.0
  %2330 = vmatpush2.msra.mxu0 0.0
  %2331 = vmatprep.mubr.f32.mxu0 0.0
  %2332 = vmatmul.mubr.f32.gmra.mxu0 %v1720
  %v2333 = vpop.f32.mrf.mxu0
  %v2334 = vadd.f32 0.0, %v2333
  %v2335 = vpop.f32.mrf.mxu0
  %v2336 = vadd.f32 0.0, %v2335
  %2337 = vdwg.mxu0
  %v2338 = vmul.f32 %v1212, %v90
  %v2339 = vmul.f32 %v1214, %v91
  %v2340 = vmul.f32 %v1283, %v92
  %v2341 = vmul.f32 %v1285, %v93
  %v2342 = vmul.f32 %v1354, %v94
  %v2343 = vmul.f32 %v1356, %v95
  %v2344 = vmul.f32 %v1425, %v96
  %v2345 = vmul.f32 %v1427, %v97
  %v2346 = vmul.f32 %v1501, %v138
  %v2347 = vmul.f32 %v1503, %v139
  %v2348 = vmul.f32 %v1572, %v140
  %v2349 = vmul.f32 %v1574, %v141
  %v2350 = vmul.f32 %v1643, %v142
  %v2351 = vmul.f32 %v1645, %v143
  %v2352 = vmul.f32 %v1714, %v144
  %v2353 = vmul.f32 %v1716, %v145
  %v2354 = vsub.f32 %v2338, %v2346
  %v2355 = vsub.f32 %v2339, %v2347
  %v2356 = vsub.f32 %v2340, %v2348
  %v2357 = vsub.f32 %v2341, %v2349
  %v2358 = vsub.f32 %v2342, %v2350
  %v2359 = vsub.f32 %v2343, %v2351
  %v2360 = vsub.f32 %v2344, %v2352
  %v2361 = vsub.f32 %v2345, %v2353
  %v2362 = vadd.f32 %v2354, %v1813
  %v2363 = vadd.f32 %v2355, %v1815
  %v2364 = vadd.f32 %v2356, %v1884
  %v2365 = vadd.f32 %v2357, %v1886
  %v2366 = vadd.f32 %v2358, %v1955
  %v2367 = vadd.f32 %v2359, %v1957
  %v2368 = vadd.f32 %v2360, %v2026
  %v2369 = vadd.f32 %v2361, %v2028
  %v2370 = vadd.f32 %v2362, 1.0
  %v2371 = vadd.f32 %v2363, 1.0
  %v2372 = vadd.f32 %v2364, 1.0
  %v2373 = vadd.f32 %v2365, 1.0
  %v2374 = vadd.f32 %v2366, 1.0
  %v2375 = vadd.f32 %v2367, 1.0
  %v2376 = vadd.f32 %v2368, 1.0
  %v2377 = vadd.f32 %v2369, 1.0
  %v2378 = vmul.f32 %v2370, 16.0
  %v2379 = vmul.f32 %v2371, 16.0
  %v2380 = vmul.f32 %v2372, 16.0
  %v2381 = vmul.f32 %v2373, 16.0
  %v2382 = vmul.f32 %v2374, 16.0
  %v2383 = vmul.f32 %v2375, 16.0
  %v2384 = vmul.f32 %v2376, 16.0
  %v2385 = vmul.f32 %v2377, 16.0
  %v2386 = vsub.f32 %v2378, 1.0
  %v2387 = vsub.f32 %v2379, 1.0
  %v2388 = vsub.f32 %v2380, 1.0
  %v2389 = vsub.f32 %v2381, 1.0
  %v2390 = vsub.f32 %v2382, 1.0
  %v2391 = vsub.f32 %v2383, 1.0
  %v2392 = vsub.f32 %v2384, 1.0
  %v2393 = vsub.f32 %v2385, 1.0
  %v2394 = vmul.f32 %v2386, 0.5
  %v2395 = vmul.f32 %v2387, 0.5
  %v2396 = vmul.f32 %v2388, 0.5
  %v2397 = vmul.f32 %v2389, 0.5
  %v2398 = vmul.f32 %v2390, 0.5
  %v2399 = vmul.f32 %v2391, 0.5
  %v2400 = vmul.f32 %v2392, 0.5
  %v2401 = vmul.f32 %v2393, 0.5
  %v2402 = vmul.f32 %v1501, %v90
  %v2403 = vmul.f32 %v1503, %v91
  %v2404 = vmul.f32 %v1572, %v92
  %v2405 = vmul.f32 %v1574, %v93
  %v2406 = vmul.f32 %v1643, %v94
  %v2407 = vmul.f32 %v1645, %v95
  %v2408 = vmul.f32 %v1714, %v96
  %v2409 = vmul.f32 %v1716, %v97
  %v2410 = vmul.f32 %v1212, %v138
  %v2411 = vmul.f32 %v1214, %v139
  %v2412 = vmul.f32 %v1283, %v140
  %v2413 = vmul.f32 %v1285, %v141
  %v2414 = vmul.f32 %v1354, %v142
  %v2415 = vmul.f32 %v1356, %v143
  %v2416 = vmul.f32 %v1425, %v144
  %v2417 = vmul.f32 %v1427, %v145
  %v2418 = vadd.f32 %v2402, %v2410
  %v2419 = vadd.f32 %v2403, %v2411
  %v2420 = vadd.f32 %v2404, %v2412
  %v2421 = vadd.f32 %v2405, %v2413
  %v2422 = vadd.f32 %v2406, %v2414
  %v2423 = vadd.f32 %v2407, %v2415
  %v2424 = vadd.f32 %v2408, %v2416
  %v2425 = vadd.f32 %v2409, %v2417
  %v2426 = vadd.f32 %v2418, %v2121
  %v2427 = vadd.f32 %v2419, %v2123
  %v2428 = vadd.f32 %v2420, %v2192
  %v2429 = vadd.f32 %v2421, %v2194
  %v2430 = vadd.f32 %v2422, %v2263
  %v2431 = vadd.f32 %v2423, %v2265
  %v2432 = vadd.f32 %v2424, %v2334
  %v2433 = vadd.f32 %v2425, %v2336
  %v2434 = vadd.f32 %v2426, 1.0
  %v2435 = vadd.f32 %v2427, 1.0
  %v2436 = vadd.f32 %v2428, 1.0
  %v2437 = vadd.f32 %v2429, 1.0
  %v2438 = vadd.f32 %v2430, 1.0
  %v2439 = vadd.f32 %v2431, 1.0
  %v2440 = vadd.f32 %v2432, 1.0
  %v2441 = vadd.f32 %v2433, 1.0
  %v2442 = vmul.f32 %v2434, 16.0
  %v2443 = vmul.f32 %v2435, 16.0
  %v2444 = vmul.f32 %v2436, 16.0
  %v2445 = vmul.f32 %v2437, 16.0
  %v2446 = vmul.f32 %v2438, 16.0
  %v2447 = vmul.f32 %v2439, 16.0
  %v2448 = vmul.f32 %v2440, 16.0
  %v2449 = vmul.f32 %v2441, 16.0
  %v2450 = vsub.f32 %v2442, 1.0
  %v2451 = vsub.f32 %v2443, 1.0
  %v2452 = vsub.f32 %v2444, 1.0
  %v2453 = vsub.f32 %v2445, 1.0
  %v2454 = vsub.f32 %v2446, 1.0
  %v2455 = vsub.f32 %v2447, 1.0
  %v2456 = vsub.f32 %v2448, 1.0
  %v2457 = vsub.f32 %v2449, 1.0
  %v2458 = vmul.f32 %v2450, 0.5
  %v2459 = vmul.f32 %v2451, 0.5
  %v2460 = vmul.f32 %v2452, 0.5
  %v2461 = vmul.f32 %v2453, 0.5
  %v2462 = vmul.f32 %v2454, 0.5
  %v2463 = vmul.f32 %v2455, 0.5
  %v2464 = vmul.f32 %v2456, 0.5
  %v2465 = vmul.f32 %v2457, 0.5
  %v2466 = vadd.f32 %v90, %v1813
  %v2467 = vadd.f32 %v91, %v1815
  %v2468 = vadd.f32 %v92, %v1884
  %v2469 = vadd.f32 %v93, %v1886
  %v2470 = vadd.f32 %v94, %v1955
  %v2471 = vadd.f32 %v95, %v1957
  %v2472 = vadd.f32 %v96, %v2026
  %v2473 = vadd.f32 %v97, %v2028
  %v2474 = vadd.f32 %v2466, 1.0
  %v2475 = vadd.f32 %v2467, 1.0
  %v2476 = vadd.f32 %v2468, 1.0
  %v2477 = vadd.f32 %v2469, 1.0
  %v2478 = vadd.f32 %v2470, 1.0
  %v2479 = vadd.f32 %v2471, 1.0
  %v2480 = vadd.f32 %v2472, 1.0
  %v2481 = vadd.f32 %v2473, 1.0
  %v2482 = vmul.f32 %v2474, 16.0
  %v2483 = vmul.f32 %v2475, 16.0
  %v2484 = vmul.f32 %v2476, 16.0
  %v2485 = vmul.f32 %v2477, 16.0
  %v2486 = vmul.f32 %v2478, 16.0
  %v2487 = vmul.f32 %v2479, 16.0
  %v2488 = vmul.f32 %v2480, 16.0
  %v2489 = vmul.f32 %v2481, 16.0
  %v2490 = vsub.f32 %v2482, 1.0
  %v2491 = vsub.f32 %v2483, 1.0
  %v2492 = vsub.f32 %v2484, 1.0
  %v2493 = vsub.f32 %v2485, 1.0
  %v2494 = vsub.f32 %v2486, 1.0
  %v2495 = vsub.f32 %v2487, 1.0
  %v2496 = vsub.f32 %v2488, 1.0
  %v2497 = vsub.f32 %v2489, 1.0
  %v2498 = vmul.f32 %v2490, 0.5
  %v2499 = vmul.f32 %v2491, 0.5
  %v2500 = vmul.f32 %v2492, 0.5
  %v2501 = vmul.f32 %v2493, 0.5
  %v2502 = vmul.f32 %v2494, 0.5
  %v2503 = vmul.f32 %v2495, 0.5
  %v2504 = vmul.f32 %v2496, 0.5
  %v2505 = vmul.f32 %v2497, 0.5
  %v2506 = vadd.f32 %v138, %v2121
  %v2507 = vadd.f32 %v139, %v2123
  %v2508 = vadd.f32 %v140, %v2192
  %v2509 = vadd.f32 %v141, %v2194
  %v2510 = vadd.f32 %v142, %v2263
  %v2511 = vadd.f32 %v143, %v2265
  %v2512 = vadd.f32 %v144, %v2334
  %v2513 = vadd.f32 %v145, %v2336
  %v2514 = vadd.f32 %v2506, 1.0
  %v2515 = vadd.f32 %v2507, 1.0
  %v2516 = vadd.f32 %v2508, 1.0
  %v2517 = vadd.f32 %v2509, 1.0
  %v2518 = vadd.f32 %v2510, 1.0
  %v2519 = vadd.f32 %v2511, 1.0
  %v2520 = vadd.f32 %v2512, 1.0
  %v2521 = vadd.f32 %v2513, 1.0
  %v2522 = vmul.f32 %v2514, 16.0
  %v2523 = vmul.f32 %v2515, 16.0
  %v2524 = vmul.f32 %v2516, 16.0
  %v2525 = vmul.f32 %v2517, 16.0
  %v2526 = vmul.f32 %v2518, 16.0
  %v2527 = vmul.f32 %v2519, 16.0
  %v2528 = vmul.f32 %v2520, 16.0
  %v2529 = vmul.f32 %v2521, 16.0
  %v2530 = vsub.f32 %v2522, 1.0
  %v2531 = vsub.f32 %v2523, 1.0
  %v2532 = vsub.f32 %v2524, 1.0
  %v2533 = vsub.f32 %v2525, 1.0
  %v2534 = vsub.f32 %v2526, 1.0
  %v2535 = vsub.f32 %v2527, 1.0
  %v2536 = vsub.f32 %v2528, 1.0
  %v2537 = vsub.f32 %v2529, 1.0
  %v2538 = vmul.f32 %v2530, 0.5
  %v2539 = vmul.f32 %v2531, 0.5
  %v2540 = vmul.f32 %v2532, 0.5
  %v2541 = vmul.f32 %v2533, 0.5
  %v2542 = vmul.f32 %v2534, 0.5
  %v2543 = vmul.f32 %v2535, 0.5
  %v2544 = vmul.f32 %v2536, 0.5
  %v2545 = vmul.f32 %v2537, 0.5
  %v2546 = vand.u32 2147483647, %v861
  %vm2547 = vcmp.le.f32.partialorder %v2546, 0.7853982
  %vm2548 = vcmp.lt.s32.totalorder %v861, 0
  %v2549 = vand.u32 %v861, 2139095040
  %v2550 = vshrl.u32 %v2549, 23
  %v2551 = vsub.s32 %v2550, 127
  %v2552 = vand.u32 2147483647, %v861
  %v2553 = vand.u32 %v2552, 8388607
  %v2554 = vor.u32 %v2553, 8388608
  %v2555 = vsub.s32 0, %v2554
  %v2556 = vadd.s32 %v2551, 1
  %vm2557 = vcmp.gt.s32.totalorder %v2556, 0
  %v2558 = vsel %vm2557, %v2556, 0
  %v2559 = vshrl.u32 %v2558, 5
  %v2560 = vand.u32 %v2558, 31
  %v2561 = vsub.s32 32, %v2560
  %v2562 = vshrl.u32 683565275, %v2561
  %v2563 = vshll.u32 683565275, %v2560
  %v2564 = vshrl.u32 2475754826, %v2561
  %v2565 = vor.u32 %v2563, %v2564
  %v2566 = vshll.u32 2475754826, %v2560
  %v2567 = vshrl.u32 2131351028, %v2561
  %v2568 = vor.u32 %v2566, %v2567
  %v2569 = vshll.u32 2131351028, %v2560
  %v2570 = vshrl.u32 2102212464, %v2561
  %v2571 = vor.u32 %v2569, %v2570
  %v2572 = vshll.u32 2102212464, %v2560
  %v2573 = vshrl.u32 920167782, %v2561
  %v2574 = vor.u32 %v2572, %v2573
  %v2575 = vshll.u32 920167782, %v2560
  %v2576 = vshrl.u32 1326507024, %v2561
  %v2577 = vor.u32 %v2575, %v2576
  %vm2578 = vcmp.lt.s32.totalorder %v2559, 1
  %vm2579 = vcmp.lt.s32.totalorder %v2559, 2
  %vm2580 = vcmp.lt.s32.totalorder %v2559, 3
  %vm2581 = vcmp.lt.s32.totalorder %v2559, 4
  %v2582 = vsel %vm2578, %v2562, %v2565
  %v2583 = vsel %vm2581, %v2571, 2102212464
  %v2584 = vsel %vm2580, %v2568, %v2583
  %v2585 = vsel %vm2579, %v2582, %v2584
  %v2586 = vsel %vm2578, %v2565, %v2568
  %v2587 = vsel %vm2581, %v2574, 920167782
  %v2588 = vsel %vm2580, %v2571, %v2587
  %v2589 = vsel %vm2579, %v2586, %v2588
  %v2590 = vsel %vm2578, %v2568, %v2571
  %v2591 = vsel %vm2581, %v2577, 1326507024
  %v2592 = vsel %vm2580, %v2574, %v2591
  %v2593 = vsel %vm2579, %v2590, %v2592
  %v2594 = vshll.u32 %v2554, 8
  %v2595 = vmul.u32.u64.compose %v2594, %v2593
  %v2596 = vextract.low.u32 %v2595
  %v2597 = vextract.high.u32 %v2595
  %v2598 = vmul.u32.u64.compose %v2594, %v2589
  %v2599 = vextract.low.u32 %v2598
  %v2600 = vextract.high.u32 %v2598
  %v2601 = vmul.u32 %v2594, %v2585
  %v2602 = vadd.s32 %v2597, %v2599
  %vm2603 = vc.u32 %v2597, %v2599
  %v2604 = vadd.s32 %v2600, 1
  %v2605 = vsel %vm2603, %v2604, %v2600
  %v2606 = vadd.s32 %v2601, %v2605
  %v2607 = vadd.s32 %v2606, 536870912
  %v2608 = vshrl.u32 %v2607, 30
  %v2609 = vshll.u32 %v2608, 30
  %v2610 = vsub.s32 %v2606, %v2609
  %vm2611 = vcmp.lt.s32.totalorder %v2610, 0
  %v2612 = vsub.s32 0, %v2610
  %v2613 = vsel %vm2611, %v2612, %v2610
  %v2614 = vclz %v2613
  %v2615 = vsub.s32 %v2614, 2
  %vm2616 = vcmp.gt.s32.totalorder 0, %v2615
  %v2617 = vsel %vm2616, 0, %v2615
  %v2618 = vsub.s32 32, %v2617
  %v2619 = vshll.u32 %v2610, %v2617
  %v2620 = vshrl.u32 %v2602, %v2618
  %v2621 = vor.u32 %v2619, %v2620
  %v2622 = vsub.s32 4294967266, %v2617
  %v2623 = vadd.s32 %v2622, 127
  %v2624 = vshll.u32 %v2623, 23
  %v2625 = vor.u32 4788187, %v2624
  %v2626 = vand.u32 2147483647, %v2625
  %v2628 = vcvt.s32.f32 %v2621
  %v2629 = vmul.f32 %v2628, %v2626
  %v2630 = vxor.u32 %v2629, 2147483648
  %v2631 = vsel %vm2548, %v2630, %v2629
  %v2632 = vsub.s32 4, %v2608
  %v2633 = vsel %vm2548, %v2632, %v2608
  %v2634 = vsel %vm2547, %v861, %v2631
  %v2635 = vsel %vm2547, 0, %v2633
  %v2636 = vcosq.f32.pop %v2634
  %v2637 = vsinq.f32.pop %v2634
  %vm2638 = vweird.f32 %v861
  %v2639 = vand.u32 %v2635, 3
  %vm2640 = vcmp.lt.s32.totalorder %v2639, 2
  %vm2641 = vcmp.eq.s32.totalorder %v2639, 0
  %v2642 = vxor.u32 %v2637, 2147483648
  %v2643 = vsel %vm2641, %v2636, %v2642
  %vm2644 = vcmp.eq.s32.totalorder %v2639, 2
  %v2645 = vxor.u32 %v2636, 2147483648
  %v2646 = vsel %vm2644, %v2645, %v2637
  %v2647 = vsel %vm2640, %v2643, %v2646
  %v2648 = vsel %vm2638, nan, %v2647
  %v2649 = vand.u32 2147483647, %v861
  %vm2650 = vcmp.le.f32.partialorder %v2649, 0.7853982
  %vm2651 = vcmp.lt.s32.totalorder %v861, 0
  %v2652 = vand.u32 %v861, 2139095040
  %v2653 = vshrl.u32 %v2652, 23
  %v2654 = vsub.s32 %v2653, 127
  %v2655 = vand.u32 2147483647, %v861
  %v2656 = vand.u32 %v2655, 8388607
  %v2657 = vor.u32 %v2656, 8388608
  %v2658 = vsub.s32 0, %v2657
  %v2659 = vadd.s32 %v2654, 1
  %vm2660 = vcmp.gt.s32.totalorder %v2659, 0
  %v2661 = vsel %vm2660, %v2659, 0
  %v2662 = vshrl.u32 %v2661, 5
  %v2663 = vand.u32 %v2661, 31
  %v2664 = vsub.s32 32, %v2663
  %v2665 = vshrl.u32 683565275, %v2664
  %v2666 = vshll.u32 683565275, %v2663
  %v2667 = vshrl.u32 2475754826, %v2664
  %v2668 = vor.u32 %v2666, %v2667
  %v2669 = vshll.u32 2475754826, %v2663
  %v2670 = vshrl.u32 2131351028, %v2664
  %v2671 = vor.u32 %v2669, %v2670
  %v2672 = vshll.u32 2131351028, %v2663
  %v2673 = vshrl.u32 2102212464, %v2664
  %v2674 = vor.u32 %v2672, %v2673
  %v2675 = vshll.u32 2102212464, %v2663
  %v2676 = vshrl.u32 920167782, %v2664
  %v2677 = vor.u32 %v2675, %v2676
  %v2678 = vshll.u32 920167782, %v2663
  %v2679 = vshrl.u32 1326507024, %v2664
  %v2680 = vor.u32 %v2678, %v2679
  %vm2681 = vcmp.lt.s32.totalorder %v2662, 1
  %vm2682 = vcmp.lt.s32.totalorder %v2662, 2
  %vm2683 = vcmp.lt.s32.totalorder %v2662, 3
  %vm2684 = vcmp.lt.s32.totalorder %v2662, 4
  %v2685 = vsel %vm2681, %v2665, %v2668
  %v2686 = vsel %vm2684, %v2674, 2102212464
  %v2687 = vsel %vm2683, %v2671, %v2686
  %v2688 = vsel %vm2682, %v2685, %v2687
  %v2689 = vsel %vm2681, %v2668, %v2671
  %v2690 = vsel %vm2684, %v2677, 920167782
  %v2691 = vsel %vm2683, %v2674, %v2690
  %v2692 = vsel %vm2682, %v2689, %v2691
  %v2693 = vsel %vm2681, %v2671, %v2674
  %v2694 = vsel %vm2684, %v2680, 1326507024
  %v2695 = vsel %vm2683, %v2677, %v2694
  %v2696 = vsel %vm2682, %v2693, %v2695
  %v2697 = vshll.u32 %v2657, 8
  %v2698 = vmul.u32.u64.compose %v2697, %v2696
  %v2699 = vextract.low.u32 %v2698
  %v2700 = vextract.high.u32 %v2698
  %v2701 = vmul.u32.u64.compose %v2697, %v2692
  %v2702 = vextract.low.u32 %v2701
  %v2703 = vextract.high.u32 %v2701
  %v2704 = vmul.u32 %v2697, %v2688
  %v2705 = vadd.s32 %v2700, %v2702
  %vm2706 = vc.u32 %v2700, %v2702
  %v2707 = vadd.s32 %v2703, 1
  %v2708 = vsel %vm2706, %v2707, %v2703
  %v2709 = vadd.s32 %v2704, %v2708
  %v2710 = vadd.s32 %v2709, 536870912
  %v2711 = vshrl.u32 %v2710, 30
  %v2712 = vshll.u32 %v2711, 30
  %v2713 = vsub.s32 %v2709, %v2712
  %vm2714 = vcmp.lt.s32.totalorder %v2713, 0
  %v2715 = vsub.s32 0, %v2713
  %v2716 = vsel %vm2714, %v2715, %v2713
  %v2717 = vclz %v2716
  %v2718 = vsub.s32 %v2717, 2
  %vm2719 = vcmp.gt.s32.totalorder 0, %v2718
  %v2720 = vsel %vm2719, 0, %v2718
  %v2721 = vsub.s32 32, %v2720
  %v2722 = vshll.u32 %v2713, %v2720
  %v2723 = vshrl.u32 %v2705, %v2721
  %v2724 = vor.u32 %v2722, %v2723
  %v2725 = vsub.s32 4294967266, %v2720
  %v2726 = vadd.s32 %v2725, 127
  %v2727 = vshll.u32 %v2726, 23
  %v2728 = vor.u32 4788187, %v2727
  %v2729 = vand.u32 2147483647, %v2728
  %v2731 = vcvt.s32.f32 %v2724
  %v2732 = vmul.f32 %v2731, %v2729
  %v2733 = vxor.u32 %v2732, 2147483648
  %v2734 = vsel %vm2651, %v2733, %v2732
  %v2735 = vsub.s32 4, %v2711
  %v2736 = vsel %vm2651, %v2735, %v2711
  %v2737 = vsel %vm2650, %v861, %v2734
  %v2738 = vsel %vm2650, 0, %v2736
  %v2739 = vcosq.f32.pop %v2737
  %v2740 = vsinq.f32.pop %v2737
  %vm2741 = vweird.f32 %v861
  %v2742 = vadd.s32 %v2738, 3
  %v2743 = vand.u32 %v2742, 3
  %vm2744 = vcmp.lt.s32.totalorder %v2743, 2
  %vm2745 = vcmp.eq.s32.totalorder %v2743, 0
  %v2746 = vxor.u32 %v2740, 2147483648
  %v2747 = vsel %vm2745, %v2739, %v2746
  %vm2748 = vcmp.eq.s32.totalorder %v2743, 2
  %v2749 = vxor.u32 %v2739, 2147483648
  %v2750 = vsel %vm2748, %v2749, %v2740
  %v2751 = vsel %vm2744, %v2747, %v2750
  %v2752 = vsel %vm2741, nan, %v2751
  %2754 = vset.pattern.permute.xlu0 0
  %2755 = vperm.xlu0 %2754, %v2648
  %v2756 = vpop.permute.xlu0 %2755
  %v2758 = vmul.f32 %v2756, %v156
  %v2759 = vmul.f32 %v2756, %v157
  %2761 = vset.pattern.permute.xlu0 0
  %2762 = vperm.xlu0 %2761, %v2752
  %v2763 = vpop.permute.xlu0 %2762
  %v2765 = vmul.f32 %v2763, %v168
  %v2766 = vmul.f32 %v2763, %v169
  %v2767 = vsub.f32 %v2758, %v2765
  %v2768 = vsub.f32 %v2759, %v2766
  %2769 = vset.pattern.permute.xlu0 1
  %2770 = vperm.xlu0 %2769, %v861
  %v2771 = vpop.permute.xlu0 %2770
  %v2773 = vadd.f32 %v2767, %v2771
  %v2774 = vadd.f32 %v2768, %v2771
  %v2775 = vadd.f32 %v2773, 1.0
  %v2776 = vadd.f32 %v2774, 1.0
  %v2777 = vmul.f32 %v2775, 16.0
  %v2778 = vmul.f32 %v2776, 16.0
  %v2779 = vsub.f32 %v2777, 1.0
  %v2780 = vsub.f32 %v2778, 1.0
  %v2781 = vmul.f32 %v2779, 0.5
  %v2782 = vmul.f32 %v2780, 0.5
  %v2783 = vmul.f32 %v2763, %v156
  %v2784 = vmul.f32 %v2763, %v157
  %v2785 = vmul.f32 %v2756, %v168
  %v2786 = vmul.f32 %v2756, %v169
  %v2787 = vadd.f32 %v2783, %v2785
  %v2788 = vadd.f32 %v2784, %v2786
  %2789 = vset.pattern.permute.xlu0 2
  %2790 = vperm.xlu0 %2789, %v861
  %v2791 = vpop.permute.xlu0 %2790
  %v2793 = vadd.f32 %v2787, %v2791
  %v2794 = vadd.f32 %v2788, %v2791
  %v2795 = vadd.f32 %v2793, 1.0
  %v2796 = vadd.f32 %v2794, 1.0
  %v2797 = vmul.f32 %v2795, 16.0
  %v2798 = vmul.f32 %v2796, 16.0
  %v2799 = vsub.f32 %v2797, 1.0
  %v2800 = vsub.f32 %v2798, 1.0
  %v2801 = vmul.f32 %v2799, 0.5
  %v2802 = vmul.f32 %v2800, 0.5
  %v2803 = vld [vmem:[%s7] sm:$0xff]
  %v2804 = vld [vmem:[%s7 + $0x8] sm:$0xff]
  %v2805 = vlaneseq
  %v2806 = vshrl.u32 %v2805, 7
  %v2807 = vsub.s32 0, %v2806
  %v2808 = vrot.slane %v2498, %v2807
  %v2809 = vlaneseq
  %v2810 = vshrl.u32 %v2809, 7
  %v2811 = vsub.s32 0, %v2810
  %v2812 = vrot.slane %v2499, %v2811
  %v2813 = vsub.f32 %v2808, %v173
  %v2814 = vsub.f32 %v2812, %v173
  %v2815 = vsub.f32 %v2808, %v174
  %v2816 = vsub.f32 %v2812, %v174
  %v2817 = vand.u32 2147483647, %v2813
  %v2818 = vand.u32 2147483647, %v2814
  %v2819 = vand.u32 2147483647, %v2815
  %v2820 = vand.u32 2147483647, %v2816
  %v2821 = vsub.f32 1.0, %v2817
  %v2822 = vsub.f32 1.0, %v2818
  %v2823 = vsub.f32 1.0, %v2819
  %v2824 = vsub.f32 1.0, %v2820
  %v2825 = vmax.f32 %v2821, 0.0
  %v2826 = vmax.f32 %v2822, 0.0
  %v2827 = vmax.f32 %v2823, 0.0
  %v2828 = vmax.f32 %v2824, 0.0
  %v2829 = vlaneseq
  %v2830 = vshrl.u32 %v2829, 7
  %v2831 = vsub.s32 0, %v2830
  %v2832 = vrot.slane %v2538, %v2831
  %v2833 = vlaneseq
  %v2834 = vshrl.u32 %v2833, 7
  %v2835 = vsub.s32 0, %v2834
  %v2836 = vrot.slane %v2539, %v2835
  %v2837 = vsub.f32 %v2832, %v173
  %v2838 = vsub.f32 %v2836, %v173
  %v2839 = vsub.f32 %v2832, %v174
  %v2840 = vsub.f32 %v2836, %v174
  %v2841 = vand.u32 2147483647, %v2837
  %v2842 = vand.u32 2147483647, %v2838
  %v2843 = vand.u32 2147483647, %v2839
  %v2844 = vand.u32 2147483647, %v2840
  %v2845 = vsub.f32 1.0, %v2841
  %v2846 = vsub.f32 1.0, %v2842
  %v2847 = vsub.f32 1.0, %v2843
  %v2848 = vsub.f32 1.0, %v2844
  %v2849 = vmax.f32 %v2845, 0.0
  %v2850 = vmax.f32 %v2846, 0.0
  %v2851 = vmax.f32 %v2847, 0.0
  %v2852 = vmax.f32 %v2848, 0.0
  %vm2853 = vcmask 130048
  %v2855 = vsel %vm2853, %v2803, 0
  %v2858 = vsel %vm2853, %v2804, 0
  %2860 = vmatprep.subr.mxu0 0.0
  %2861 = vmatpush1.msra.mxu0 0.0
  %2862 = vmatprep.subr.mxu0 0.0
  %2863 = vmatpush1.msra.mxu0 0.0
  %2864 = vmatprep.subr.mxu0 0.0
  %2865 = vmatpush1.msra.mxu0 0.0
  %2866 = vmatprep.subr.mxu0 0.0
  %2867 = vmatpush1.msra.mxu0 0.0
  %2868 = vmatprep.subr.mxu0 0.0
  %2869 = vmatpush1.msra.mxu0 0.0
  %2870 = vmatprep.subr.mxu0 0.0
  %2871 = vmatpush1.msra.mxu0 0.0
  %2872 = vmatprep.subr.mxu0 0.0
  %2873 = vmatpush1.msra.mxu0 0.0
  %2874 = vmatprep.subr.mxu0 0.0
  %2875 = vmatpush1.msra.mxu0 0.0
  %2876 = vmatprep.subr.mxu0 0.0
  %2877 = vmatpush1.msra.mxu0 0.0
  %2878 = vmatprep.subr.mxu0 0.0
  %2879 = vmatpush1.msra.mxu0 0.0
  %2880 = vmatprep.subr.mxu0 0.0
  %2881 = vmatpush1.msra.mxu0 0.0
  %2882 = vmatprep.subr.mxu0 0.0
  %2883 = vmatpush1.msra.mxu0 0.0
  %2884 = vmatprep.subr.mxu0 0.0
  %2885 = vmatpush1.msra.mxu0 0.0
  %2886 = vmatprep.subr.mxu0 0.0
  %2887 = vmatpush1.msra.mxu0 0.0
  %2888 = vmatprep.subr.mxu0 %v2828
  %2889 = vmatpush1.msra.mxu0 %v2827
  %2890 = vmatprep.subr.mxu0 %v2826
  %2891 = vmatpush1.msra.mxu0 %v2825
  %2892 = vmatprep.subr.mxu0 0.0
  %2893 = vmatpush2.msra.mxu0 0.0
  %2894 = vmatprep.subr.mxu0 0.0
  %2895 = vmatpush2.msra.mxu0 0.0
  %2896 = vmatprep.subr.mxu0 0.0
  %2897 = vmatpush2.msra.mxu0 0.0
  %2898 = vmatprep.subr.mxu0 0.0
  %2899 = vmatpush2.msra.mxu0 0.0
  %2900 = vmatprep.subr.mxu0 0.0
  %2901 = vmatpush2.msra.mxu0 0.0
  %2902 = vmatprep.subr.mxu0 0.0
  %2903 = vmatpush2.msra.mxu0 0.0
  %2904 = vmatprep.subr.mxu0 0.0
  %2905 = vmatpush2.msra.mxu0 0.0
  %2906 = vmatprep.subr.mxu0 0.0
  %2907 = vmatpush2.msra.mxu0 0.0
  %2908 = vmatprep.subr.mxu0 0.0
  %2909 = vmatpush2.msra.mxu0 0.0
  %2910 = vmatprep.subr.mxu0 0.0
  %2911 = vmatpush2.msra.mxu0 0.0
  %2912 = vmatprep.subr.mxu0 0.0
  %2913 = vmatpush2.msra.mxu0 0.0
  %2914 = vmatprep.subr.mxu0 0.0
  %2915 = vmatpush2.msra.mxu0 0.0
  %2916 = vmatprep.subr.mxu0 0.0
  %2917 = vmatpush2.msra.mxu0 0.0
  %2918 = vmatprep.subr.mxu0 0.0
  %2919 = vmatpush2.msra.mxu0 0.0
  %2920 = vmatprep.subr.mxu0 0.0
  %2921 = vmatpush2.msra.mxu0 0.0
  %2922 = vmatprep.subr.mxu0 0.0
  %2923 = vmatpush2.msra.mxu0 0.0
  %2924 = vmatprep.mubr.f32.mxu0 0.0
  %2925 = vmatmul.mubr.f32.gmra.mxu0 %v2855
  %v2926 = vpop.f32.mrf.mxu0
  %v2927 = vadd.f32 0.0, %v2926
  %v2928 = vpop.f32.mrf.mxu0
  %v2929 = vadd.f32 0.0, %v2928
  %2930 = vmatprep.mubr.f32.mxu0 0.0
  %2931 = vmatmul.mubr.f32.gmra.mxu0 %v2858
  %v2932 = vpop.f32.mrf.mxu0
  %v2933 = vadd.f32 0.0, %v2932
  %v2934 = vpop.f32.mrf.mxu0
  %v2935 = vadd.f32 0.0, %v2934
  %2936 = vdwg.mxu0
  %v2937 = vmul.f32 %v2849, %v2927
  %v2938 = vmul.f32 %v2850, %v2929
  %v2939 = vmul.f32 %v2851, %v2933
  %v2940 = vmul.f32 %v2852, %v2935
  %v2941 = vadd.f32 %v2937, %v2939
  %v2942 = vrot.slane %v2941, 4
  %v2943 = vadd.f32 %v2941, %v2942
  %v2944 = vrot.slane %v2943, 2
  %v2945 = vadd.f32 %v2943, %v2944
  %v2946 = vrot.slane %v2945, 1
  %v2947 = vadd.f32 %v2945, %v2946
  %v2948 = vadd.f32 %v2938, %v2940
  %v2949 = vrot.slane %v2948, 4
  %v2950 = vadd.f32 %v2948, %v2949
  %v2951 = vrot.slane %v2950, 2
  %v2952 = vadd.f32 %v2950, %v2951
  %v2953 = vrot.slane %v2952, 1
  %v2954 = vadd.f32 %v2952, %v2953
  %v2957 = vcombine.low %v2947, %v2954
  %v2959 = vunpack.c.l.s4 1966171168
  %v2960 = vunpack.c.0.s8 %v2959
  %v2961 = vlaneseq
  %v2962 = vshrl.u32 %v2961, 7
  %v2963 = vsub.s32 %v2960, %v2962
  %v2964 = vrot.slane %v2957, %v2963
  %v2966 = vunpack.c.l.s4 1966171168
  %v2967 = vunpack.c.0.s8 %v2966
  %v2968 = vlaneseq
  %v2969 = vshrl.u32 %v2968, 7
  %v2970 = vsub.s32 %v2967, %v2969
  %v2971 = vrot.slane %v2964, %v2970
  %v2973 = vlaneseq
  %vm2974 = vcmp.ge.s32.totalorder %v2973, 0
  %vm2975 = vcmp.lt.s32.totalorder %v2973, 256
  %vm2976 = vmand %vm2974, %vm2975
  %2977 = vst.msk [vmem:[%s10] ss:$2 sm:$0x3] %vm2976, %v2971
  %v2978 = vld [vmem:[%s6] sm:$0xff]
  %v2979 = vld [vmem:[%s6 + $0x8] sm:$0xff]
  %v2980 = vlaneseq
  %v2981 = vshrl.u32 %v2980, 7
  %v2982 = vsub.s32 0, %v2981
  %v2983 = vrot.slane %v2394, %v2982
  %v2984 = vlaneseq
  %v2985 = vshrl.u32 %v2984, 7
  %v2986 = vsub.s32 0, %v2985
  %v2987 = vrot.slane %v2395, %v2986
  %v2988 = vsub.f32 %v2983, %v173
  %v2989 = vsub.f32 %v2987, %v173
  %v2990 = vsub.f32 %v2983, %v174
  %v2991 = vsub.f32 %v2987, %v174
  %v2992 = vand.u32 2147483647, %v2988
  %v2993 = vand.u32 2147483647, %v2989
  %v2994 = vand.u32 2147483647, %v2990
  %v2995 = vand.u32 2147483647, %v2991
  %v2996 = vsub.f32 1.0, %v2992
  %v2997 = vsub.f32 1.0, %v2993
  %v2998 = vsub.f32 1.0, %v2994
  %v2999 = vsub.f32 1.0, %v2995
  %v3000 = vmax.f32 %v2996, 0.0
  %v3001 = vmax.f32 %v2997, 0.0
  %v3002 = vmax.f32 %v2998, 0.0
  %v3003 = vmax.f32 %v2999, 0.0
  %v3004 = vlaneseq
  %v3005 = vshrl.u32 %v3004, 7
  %v3006 = vsub.s32 0, %v3005
  %v3007 = vrot.slane %v2458, %v3006
  %v3008 = vlaneseq
  %v3009 = vshrl.u32 %v3008, 7
  %v3010 = vsub.s32 0, %v3009
  %v3011 = vrot.slane %v2459, %v3010
  %v3012 = vsub.f32 %v3007, %v173
  %v3013 = vsub.f32 %v3011, %v173
  %v3014 = vsub.f32 %v3007, %v174
  %v3015 = vsub.f32 %v3011, %v174
  %v3016 = vand.u32 2147483647, %v3012
  %v3017 = vand.u32 2147483647, %v3013
  %v3018 = vand.u32 2147483647, %v3014
  %v3019 = vand.u32 2147483647, %v3015
  %v3020 = vsub.f32 1.0, %v3016
  %v3021 = vsub.f32 1.0, %v3017
  %v3022 = vsub.f32 1.0, %v3018
  %v3023 = vsub.f32 1.0, %v3019
  %v3024 = vmax.f32 %v3020, 0.0
  %v3025 = vmax.f32 %v3021, 0.0
  %v3026 = vmax.f32 %v3022, 0.0
  %v3027 = vmax.f32 %v3023, 0.0
  %v3029 = vsel %vm2853, %v2978, 0
  %v3032 = vsel %vm2853, %v2979, 0
  %3034 = vmatprep.subr.mxu0 0.0
  %3035 = vmatpush1.msra.mxu0 0.0
  %3036 = vmatprep.subr.mxu0 0.0
  %3037 = vmatpush1.msra.mxu0 0.0
  %3038 = vmatprep.subr.mxu0 0.0
  %3039 = vmatpush1.msra.mxu0 0.0
  %3040 = vmatprep.subr.mxu0 0.0
  %3041 = vmatpush1.msra.mxu0 0.0
  %3042 = vmatprep.subr.mxu0 0.0
  %3043 = vmatpush1.msra.mxu0 0.0
  %3044 = vmatprep.subr.mxu0 0.0
  %3045 = vmatpush1.msra.mxu0 0.0
  %3046 = vmatprep.subr.mxu0 0.0
  %3047 = vmatpush1.msra.mxu0 0.0
  %3048 = vmatprep.subr.mxu0 0.0
  %3049 = vmatpush1.msra.mxu0 0.0
  %3050 = vmatprep.subr.mxu0 0.0
  %3051 = vmatpush1.msra.mxu0 0.0
  %3052 = vmatprep.subr.mxu0 0.0
  %3053 = vmatpush1.msra.mxu0 0.0
  %3054 = vmatprep.subr.mxu0 0.0
  %3055 = vmatpush1.msra.mxu0 0.0
  %3056 = vmatprep.subr.mxu0 0.0
  %3057 = vmatpush1.msra.mxu0 0.0
  %3058 = vmatprep.subr.mxu0 0.0
  %3059 = vmatpush1.msra.mxu0 0.0
  %3060 = vmatprep.subr.mxu0 0.0
  %3061 = vmatpush1.msra.mxu0 0.0
  %3062 = vmatprep.subr.mxu0 %v3003
  %3063 = vmatpush1.msra.mxu0 %v3002
  %3064 = vmatprep.subr.mxu0 %v3001
  %3065 = vmatpush1.msra.mxu0 %v3000
  %3066 = vmatprep.subr.mxu0 0.0
  %3067 = vmatpush2.msra.mxu0 0.0
  %3068 = vmatprep.subr.mxu0 0.0
  %3069 = vmatpush2.msra.mxu0 0.0
  %3070 = vmatprep.subr.mxu0 0.0
  %3071 = vmatpush2.msra.mxu0 0.0
  %3072 = vmatprep.subr.mxu0 0.0
  %3073 = vmatpush2.msra.mxu0 0.0
  %3074 = vmatprep.subr.mxu0 0.0
  %3075 = vmatpush2.msra.mxu0 0.0
  %3076 = vmatprep.subr.mxu0 0.0
  %3077 = vmatpush2.msra.mxu0 0.0
  %3078 = vmatprep.subr.mxu0 0.0
  %3079 = vmatpush2.msra.mxu0 0.0
  %3080 = vmatprep.subr.mxu0 0.0
  %3081 = vmatpush2.msra.mxu0 0.0
  %3082 = vmatprep.subr.mxu0 0.0
  %3083 = vmatpush2.msra.mxu0 0.0
  %3084 = vmatprep.subr.mxu0 0.0
  %3085 = vmatpush2.msra.mxu0 0.0
  %3086 = vmatprep.subr.mxu0 0.0
  %3087 = vmatpush2.msra.mxu0 0.0
  %3088 = vmatprep.subr.mxu0 0.0
  %3089 = vmatpush2.msra.mxu0 0.0
  %3090 = vmatprep.subr.mxu0 0.0
  %3091 = vmatpush2.msra.mxu0 0.0
  %3092 = vmatprep.subr.mxu0 0.0
  %3093 = vmatpush2.msra.mxu0 0.0
  %3094 = vmatprep.subr.mxu0 0.0
  %3095 = vmatpush2.msra.mxu0 0.0
  %3096 = vmatprep.subr.mxu0 0.0
  %3097 = vmatpush2.msra.mxu0 0.0
  %3098 = vmatprep.mubr.f32.mxu0 0.0
  %3099 = vmatmul.mubr.f32.gmra.mxu0 %v3029
  %v3100 = vpop.f32.mrf.mxu0
  %v3101 = vadd.f32 0.0, %v3100
  %v3102 = vpop.f32.mrf.mxu0
  %v3103 = vadd.f32 0.0, %v3102
  %3104 = vmatprep.mubr.f32.mxu0 0.0
  %3105 = vmatmul.mubr.f32.gmra.mxu0 %v3032
  %v3106 = vpop.f32.mrf.mxu0
  %v3107 = vadd.f32 0.0, %v3106
  %v3108 = vpop.f32.mrf.mxu0
  %v3109 = vadd.f32 0.0, %v3108
  %3110 = vdwg.mxu0
  %v3111 = vmul.f32 %v3024, %v3101
  %v3112 = vmul.f32 %v3025, %v3103
  %v3113 = vmul.f32 %v3026, %v3107
  %v3114 = vmul.f32 %v3027, %v3109
  %v3115 = vadd.f32 %v3111, %v3113
  %v3116 = vrot.slane %v3115, 4
  %v3117 = vadd.f32 %v3115, %v3116
  %v3118 = vrot.slane %v3117, 2
  %v3119 = vadd.f32 %v3117, %v3118
  %v3120 = vrot.slane %v3119, 1
  %v3121 = vadd.f32 %v3119, %v3120
  %v3122 = vadd.f32 %v3112, %v3114
  %v3123 = vrot.slane %v3122, 4
  %v3124 = vadd.f32 %v3122, %v3123
  %v3125 = vrot.slane %v3124, 2
  %v3126 = vadd.f32 %v3124, %v3125
  %v3127 = vrot.slane %v3126, 1
  %v3128 = vadd.f32 %v3126, %v3127
  %v3129 = vmul.f32 %v3121, %v2947
  %v3130 = vmul.f32 %v3128, %v2954
  %s3131 = scalar_lea.vmem %s7, 16
  %v3132 = vld [vmem:[%s3131] sm:$0xff]
  %v3133 = vld [vmem:[%s3131 + $0x8] sm:$0xff]
  %v3134 = vlaneseq
  %v3135 = vshrl.u32 %v3134, 7
  %v3136 = vsub.s32 0, %v3135
  %v3137 = vrot.slane %v2500, %v3136
  %v3138 = vlaneseq
  %v3139 = vshrl.u32 %v3138, 7
  %v3140 = vsub.s32 0, %v3139
  %v3141 = vrot.slane %v2501, %v3140
  %v3142 = vsub.f32 %v3137, %v173
  %v3143 = vsub.f32 %v3141, %v173
  %v3144 = vsub.f32 %v3137, %v174
  %v3145 = vsub.f32 %v3141, %v174
  %v3146 = vand.u32 2147483647, %v3142
  %v3147 = vand.u32 2147483647, %v3143
  %v3148 = vand.u32 2147483647, %v3144
  %v3149 = vand.u32 2147483647, %v3145
  %v3150 = vsub.f32 1.0, %v3146
  %v3151 = vsub.f32 1.0, %v3147
  %v3152 = vsub.f32 1.0, %v3148
  %v3153 = vsub.f32 1.0, %v3149
  %v3154 = vmax.f32 %v3150, 0.0
  %v3155 = vmax.f32 %v3151, 0.0
  %v3156 = vmax.f32 %v3152, 0.0
  %v3157 = vmax.f32 %v3153, 0.0
  %v3158 = vlaneseq
  %v3159 = vshrl.u32 %v3158, 7
  %v3160 = vsub.s32 0, %v3159
  %v3161 = vrot.slane %v2540, %v3160
  %v3162 = vlaneseq
  %v3163 = vshrl.u32 %v3162, 7
  %v3164 = vsub.s32 0, %v3163
  %v3165 = vrot.slane %v2541, %v3164
  %v3166 = vsub.f32 %v3161, %v173
  %v3167 = vsub.f32 %v3165, %v173
  %v3168 = vsub.f32 %v3161, %v174
  %v3169 = vsub.f32 %v3165, %v174
  %v3170 = vand.u32 2147483647, %v3166
  %v3171 = vand.u32 2147483647, %v3167
  %v3172 = vand.u32 2147483647, %v3168
  %v3173 = vand.u32 2147483647, %v3169
  %v3174 = vsub.f32 1.0, %v3170
  %v3175 = vsub.f32 1.0, %v3171
  %v3176 = vsub.f32 1.0, %v3172
  %v3177 = vsub.f32 1.0, %v3173
  %v3178 = vmax.f32 %v3174, 0.0
  %v3179 = vmax.f32 %v3175, 0.0
  %v3180 = vmax.f32 %v3176, 0.0
  %v3181 = vmax.f32 %v3177, 0.0
  %v3183 = vsel %vm2853, %v3132, 0
  %v3186 = vsel %vm2853, %v3133, 0
  %3188 = vmatprep.subr.mxu0 0.0
  %3189 = vmatpush1.msra.mxu0 0.0
  %3190 = vmatprep.subr.mxu0 0.0
  %3191 = vmatpush1.msra.mxu0 0.0
  %3192 = vmatprep.subr.mxu0 0.0
  %3193 = vmatpush1.msra.mxu0 0.0
  %3194 = vmatprep.subr.mxu0 0.0
  %3195 = vmatpush1.msra.mxu0 0.0
  %3196 = vmatprep.subr.mxu0 0.0
  %3197 = vmatpush1.msra.mxu0 0.0
  %3198 = vmatprep.subr.mxu0 0.0
  %3199 = vmatpush1.msra.mxu0 0.0
  %3200 = vmatprep.subr.mxu0 0.0
  %3201 = vmatpush1.msra.mxu0 0.0
  %3202 = vmatprep.subr.mxu0 0.0
  %3203 = vmatpush1.msra.mxu0 0.0
  %3204 = vmatprep.subr.mxu0 0.0
  %3205 = vmatpush1.msra.mxu0 0.0
  %3206 = vmatprep.subr.mxu0 0.0
  %3207 = vmatpush1.msra.mxu0 0.0
  %3208 = vmatprep.subr.mxu0 0.0
  %3209 = vmatpush1.msra.mxu0 0.0
  %3210 = vmatprep.subr.mxu0 0.0
  %3211 = vmatpush1.msra.mxu0 0.0
  %3212 = vmatprep.subr.mxu0 0.0
  %3213 = vmatpush1.msra.mxu0 0.0
  %3214 = vmatprep.subr.mxu0 0.0
  %3215 = vmatpush1.msra.mxu0 0.0
  %3216 = vmatprep.subr.mxu0 %v3157
  %3217 = vmatpush1.msra.mxu0 %v3156
  %3218 = vmatprep.subr.mxu0 %v3155
  %3219 = vmatpush1.msra.mxu0 %v3154
  %3220 = vmatprep.subr.mxu0 0.0
  %3221 = vmatpush2.msra.mxu0 0.0
  %3222 = vmatprep.subr.mxu0 0.0
  %3223 = vmatpush2.msra.mxu0 0.0
  %3224 = vmatprep.subr.mxu0 0.0
  %3225 = vmatpush2.msra.mxu0 0.0
  %3226 = vmatprep.subr.mxu0 0.0
  %3227 = vmatpush2.msra.mxu0 0.0
  %3228 = vmatprep.subr.mxu0 0.0
  %3229 = vmatpush2.msra.mxu0 0.0
  %3230 = vmatprep.subr.mxu0 0.0
  %3231 = vmatpush2.msra.mxu0 0.0
  %3232 = vmatprep.subr.mxu0 0.0
  %3233 = vmatpush2.msra.mxu0 0.0
  %3234 = vmatprep.subr.mxu0 0.0
  %3235 = vmatpush2.msra.mxu0 0.0
  %3236 = vmatprep.subr.mxu0 0.0
  %3237 = vmatpush2.msra.mxu0 0.0
  %3238 = vmatprep.subr.mxu0 0.0
  %3239 = vmatpush2.msra.mxu0 0.0
  %3240 = vmatprep.subr.mxu0 0.0
  %3241 = vmatpush2.msra.mxu0 0.0
  %3242 = vmatprep.subr.mxu0 0.0
  %3243 = vmatpush2.msra.mxu0 0.0
  %3244 = vmatprep.subr.mxu0 0.0
  %3245 = vmatpush2.msra.mxu0 0.0
  %3246 = vmatprep.subr.mxu0 0.0
  %3247 = vmatpush2.msra.mxu0 0.0
  %3248 = vmatprep.subr.mxu0 0.0
  %3249 = vmatpush2.msra.mxu0 0.0
  %3250 = vmatprep.subr.mxu0 0.0
  %3251 = vmatpush2.msra.mxu0 0.0
  %3252 = vmatprep.mubr.f32.mxu0 0.0
  %3253 = vmatmul.mubr.f32.gmra.mxu0 %v3183
  %v3254 = vpop.f32.mrf.mxu0
  %v3255 = vadd.f32 0.0, %v3254
  %v3256 = vpop.f32.mrf.mxu0
  %v3257 = vadd.f32 0.0, %v3256
  %3258 = vmatprep.mubr.f32.mxu0 0.0
  %3259 = vmatmul.mubr.f32.gmra.mxu0 %v3186
  %v3260 = vpop.f32.mrf.mxu0
  %v3261 = vadd.f32 0.0, %v3260
  %v3262 = vpop.f32.mrf.mxu0
  %v3263 = vadd.f32 0.0, %v3262
  %3264 = vdwg.mxu0
  %v3265 = vmul.f32 %v3178, %v3255
  %v3266 = vmul.f32 %v3179, %v3257
  %v3267 = vmul.f32 %v3180, %v3261
  %v3268 = vmul.f32 %v3181, %v3263
  %v3269 = vadd.f32 %v3265, %v3267
  %v3270 = vrot.slane %v3269, 4
  %v3271 = vadd.f32 %v3269, %v3270
  %v3272 = vrot.slane %v3271, 2
  %v3273 = vadd.f32 %v3271, %v3272
  %v3274 = vrot.slane %v3273, 1
  %v3275 = vadd.f32 %v3273, %v3274
  %v3276 = vadd.f32 %v3266, %v3268
  %v3277 = vrot.slane %v3276, 4
  %v3278 = vadd.f32 %v3276, %v3277
  %v3279 = vrot.slane %v3278, 2
  %v3280 = vadd.f32 %v3278, %v3279
  %v3281 = vrot.slane %v3280, 1
  %v3282 = vadd.f32 %v3280, %v3281
  %v3285 = vcombine.low %v3275, %v3282
  %v3287 = vunpack.c.l.s4 1966171168
  %v3288 = vunpack.c.0.s8 %v3287
  %v3289 = vlaneseq
  %v3290 = vshrl.u32 %v3289, 7
  %v3291 = vsub.s32 %v3288, %v3290
  %v3292 = vrot.slane %v3285, %v3291
  %v3294 = vunpack.c.l.s4 1966171168
  %v3295 = vunpack.c.0.s8 %v3294
  %v3296 = vlaneseq
  %v3297 = vshrl.u32 %v3296, 7
  %v3298 = vsub.s32 %v3295, %v3297
  %v3299 = vrot.slane %v3292, %v3298
  %s3301 = scalar_lea.vmem %s10, 4
  %3302 = vst.msk [vmem:[%s3301] ss:$2 sm:$0x3] %vm2976, %v3299
  %s3303 = scalar_lea.vmem %s6, 16
  %v3304 = vld [vmem:[%s3303] sm:$0xff]
  %v3305 = vld [vmem:[%s3303 + $0x8] sm:$0xff]
  %v3306 = vlaneseq
  %v3307 = vshrl.u32 %v3306, 7
  %v3308 = vsub.s32 0, %v3307
  %v3309 = vrot.slane %v2396, %v3308
  %v3310 = vlaneseq
  %v3311 = vshrl.u32 %v3310, 7
  %v3312 = vsub.s32 0, %v3311
  %v3313 = vrot.slane %v2397, %v3312
  %v3314 = vsub.f32 %v3309, %v173
  %v3315 = vsub.f32 %v3313, %v173
  %v3316 = vsub.f32 %v3309, %v174
  %v3317 = vsub.f32 %v3313, %v174
  %v3318 = vand.u32 2147483647, %v3314
  %v3319 = vand.u32 2147483647, %v3315
  %v3320 = vand.u32 2147483647, %v3316
  %v3321 = vand.u32 2147483647, %v3317
  %v3322 = vsub.f32 1.0, %v3318
  %v3323 = vsub.f32 1.0, %v3319
  %v3324 = vsub.f32 1.0, %v3320
  %v3325 = vsub.f32 1.0, %v3321
  %v3326 = vmax.f32 %v3322, 0.0
  %v3327 = vmax.f32 %v3323, 0.0
  %v3328 = vmax.f32 %v3324, 0.0
  %v3329 = vmax.f32 %v3325, 0.0
  %v3330 = vlaneseq
  %v3331 = vshrl.u32 %v3330, 7
  %v3332 = vsub.s32 0, %v3331
  %v3333 = vrot.slane %v2460, %v3332
  %v3334 = vlaneseq
  %v3335 = vshrl.u32 %v3334, 7
  %v3336 = vsub.s32 0, %v3335
  %v3337 = vrot.slane %v2461, %v3336
  %v3338 = vsub.f32 %v3333, %v173
  %v3339 = vsub.f32 %v3337, %v173
  %v3340 = vsub.f32 %v3333, %v174
  %v3341 = vsub.f32 %v3337, %v174
  %v3342 = vand.u32 2147483647, %v3338
  %v3343 = vand.u32 2147483647, %v3339
  %v3344 = vand.u32 2147483647, %v3340
  %v3345 = vand.u32 2147483647, %v3341
  %v3346 = vsub.f32 1.0, %v3342
  %v3347 = vsub.f32 1.0, %v3343
  %v3348 = vsub.f32 1.0, %v3344
  %v3349 = vsub.f32 1.0, %v3345
  %v3350 = vmax.f32 %v3346, 0.0
  %v3351 = vmax.f32 %v3347, 0.0
  %v3352 = vmax.f32 %v3348, 0.0
  %v3353 = vmax.f32 %v3349, 0.0
  %v3355 = vsel %vm2853, %v3304, 0
  %v3358 = vsel %vm2853, %v3305, 0
  %3360 = vmatprep.subr.mxu0 0.0
  %3361 = vmatpush1.msra.mxu0 0.0
  %3362 = vmatprep.subr.mxu0 0.0
  %3363 = vmatpush1.msra.mxu0 0.0
  %3364 = vmatprep.subr.mxu0 0.0
  %3365 = vmatpush1.msra.mxu0 0.0
  %3366 = vmatprep.subr.mxu0 0.0
  %3367 = vmatpush1.msra.mxu0 0.0
  %3368 = vmatprep.subr.mxu0 0.0
  %3369 = vmatpush1.msra.mxu0 0.0
  %3370 = vmatprep.subr.mxu0 0.0
  %3371 = vmatpush1.msra.mxu0 0.0
  %3372 = vmatprep.subr.mxu0 0.0
  %3373 = vmatpush1.msra.mxu0 0.0
  %3374 = vmatprep.subr.mxu0 0.0
  %3375 = vmatpush1.msra.mxu0 0.0
  %3376 = vmatprep.subr.mxu0 0.0
  %3377 = vmatpush1.msra.mxu0 0.0
  %3378 = vmatprep.subr.mxu0 0.0
  %3379 = vmatpush1.msra.mxu0 0.0
  %3380 = vmatprep.subr.mxu0 0.0
  %3381 = vmatpush1.msra.mxu0 0.0
  %3382 = vmatprep.subr.mxu0 0.0
  %3383 = vmatpush1.msra.mxu0 0.0
  %3384 = vmatprep.subr.mxu0 0.0
  %3385 = vmatpush1.msra.mxu0 0.0
  %3386 = vmatprep.subr.mxu0 0.0
  %3387 = vmatpush1.msra.mxu0 0.0
  %3388 = vmatprep.subr.mxu0 %v3329
  %3389 = vmatpush1.msra.mxu0 %v3328
  %3390 = vmatprep.subr.mxu0 %v3327
  %3391 = vmatpush1.msra.mxu0 %v3326
  %3392 = vmatprep.subr.mxu0 0.0
  %3393 = vmatpush2.msra.mxu0 0.0
  %3394 = vmatprep.subr.mxu0 0.0
  %3395 = vmatpush2.msra.mxu0 0.0
  %3396 = vmatprep.subr.mxu0 0.0
  %3397 = vmatpush2.msra.mxu0 0.0
  %3398 = vmatprep.subr.mxu0 0.0
  %3399 = vmatpush2.msra.mxu0 0.0
  %3400 = vmatprep.subr.mxu0 0.0
  %3401 = vmatpush2.msra.mxu0 0.0
  %3402 = vmatprep.subr.mxu0 0.0
  %3403 = vmatpush2.msra.mxu0 0.0
  %3404 = vmatprep.subr.mxu0 0.0
  %3405 = vmatpush2.msra.mxu0 0.0
  %3406 = vmatprep.subr.mxu0 0.0
  %3407 = vmatpush2.msra.mxu0 0.0
  %3408 = vmatprep.subr.mxu0 0.0
  %3409 = vmatpush2.msra.mxu0 0.0
  %3410 = vmatprep.subr.mxu0 0.0
  %3411 = vmatpush2.msra.mxu0 0.0
  %3412 = vmatprep.subr.mxu0 0.0
  %3413 = vmatpush2.msra.mxu0 0.0
  %3414 = vmatprep.subr.mxu0 0.0
  %3415 = vmatpush2.msra.mxu0 0.0
  %3416 = vmatprep.subr.mxu0 0.0
  %3417 = vmatpush2.msra.mxu0 0.0
  %3418 = vmatprep.subr.mxu0 0.0
  %3419 = vmatpush2.msra.mxu0 0.0
  %3420 = vmatprep.subr.mxu0 0.0
  %3421 = vmatpush2.msra.mxu0 0.0
  %3422 = vmatprep.subr.mxu0 0.0
  %3423 = vmatpush2.msra.mxu0 0.0
  %3424 = vmatprep.mubr.f32.mxu0 0.0
  %3425 = vmatmul.mubr.f32.gmra.mxu0 %v3355
  %v3426 = vpop.f32.mrf.mxu0
  %v3427 = vadd.f32 0.0, %v3426
  %v3428 = vpop.f32.mrf.mxu0
  %v3429 = vadd.f32 0.0, %v3428
  %3430 = vmatprep.mubr.f32.mxu0 0.0
  %3431 = vmatmul.mubr.f32.gmra.mxu0 %v3358
  %v3432 = vpop.f32.mrf.mxu0
  %v3433 = vadd.f32 0.0, %v3432
  %v3434 = vpop.f32.mrf.mxu0
  %v3435 = vadd.f32 0.0, %v3434
  %3436 = vdwg.mxu0
  %v3437 = vmul.f32 %v3350, %v3427
  %v3438 = vmul.f32 %v3351, %v3429
  %v3439 = vmul.f32 %v3352, %v3433
  %v3440 = vmul.f32 %v3353, %v3435
  %v3441 = vadd.f32 %v3437, %v3439
  %v3442 = vrot.slane %v3441, 4
  %v3443 = vadd.f32 %v3441, %v3442
  %v3444 = vrot.slane %v3443, 2
  %v3445 = vadd.f32 %v3443, %v3444
  %v3446 = vrot.slane %v3445, 1
  %v3447 = vadd.f32 %v3445, %v3446
  %v3448 = vadd.f32 %v3438, %v3440
  %v3449 = vrot.slane %v3448, 4
  %v3450 = vadd.f32 %v3448, %v3449
  %v3451 = vrot.slane %v3450, 2
  %v3452 = vadd.f32 %v3450, %v3451
  %v3453 = vrot.slane %v3452, 1
  %v3454 = vadd.f32 %v3452, %v3453
  %v3455 = vmul.f32 %v3447, %v3275
  %v3456 = vmul.f32 %v3454, %v3282
  %v3457 = vadd.f32 %v3129, %v3455
  %v3458 = vadd.f32 %v3130, %v3456
  %v3459 = vadd.f32 %v2947, %v3275
  %v3460 = vadd.f32 %v2954, %v3282
  %s3461 = scalar_lea.vmem %s7, 32
  %v3462 = vld [vmem:[%s3461] sm:$0xff]
  %v3463 = vld [vmem:[%s3461 + $0x8] sm:$0xff]
  %v3464 = vlaneseq
  %v3465 = vshrl.u32 %v3464, 7
  %v3466 = vsub.s32 0, %v3465
  %v3467 = vrot.slane %v2502, %v3466
  %v3468 = vlaneseq
  %v3469 = vshrl.u32 %v3468, 7
  %v3470 = vsub.s32 0, %v3469
  %v3471 = vrot.slane %v2503, %v3470
  %v3472 = vsub.f32 %v3467, %v173
  %v3473 = vsub.f32 %v3471, %v173
  %v3474 = vsub.f32 %v3467, %v174
  %v3475 = vsub.f32 %v3471, %v174
  %v3476 = vand.u32 2147483647, %v3472
  %v3477 = vand.u32 2147483647, %v3473
  %v3478 = vand.u32 2147483647, %v3474
  %v3479 = vand.u32 2147483647, %v3475
  %v3480 = vsub.f32 1.0, %v3476
  %v3481 = vsub.f32 1.0, %v3477
  %v3482 = vsub.f32 1.0, %v3478
  %v3483 = vsub.f32 1.0, %v3479
  %v3484 = vmax.f32 %v3480, 0.0
  %v3485 = vmax.f32 %v3481, 0.0
  %v3486 = vmax.f32 %v3482, 0.0
  %v3487 = vmax.f32 %v3483, 0.0
  %v3488 = vlaneseq
  %v3489 = vshrl.u32 %v3488, 7
  %v3490 = vsub.s32 0, %v3489
  %v3491 = vrot.slane %v2542, %v3490
  %v3492 = vlaneseq
  %v3493 = vshrl.u32 %v3492, 7
  %v3494 = vsub.s32 0, %v3493
  %v3495 = vrot.slane %v2543, %v3494
  %v3496 = vsub.f32 %v3491, %v173
  %v3497 = vsub.f32 %v3495, %v173
  %v3498 = vsub.f32 %v3491, %v174
  %v3499 = vsub.f32 %v3495, %v174
  %v3500 = vand.u32 2147483647, %v3496
  %v3501 = vand.u32 2147483647, %v3497
  %v3502 = vand.u32 2147483647, %v3498
  %v3503 = vand.u32 2147483647, %v3499
  %v3504 = vsub.f32 1.0, %v3500
  %v3505 = vsub.f32 1.0, %v3501
  %v3506 = vsub.f32 1.0, %v3502
  %v3507 = vsub.f32 1.0, %v3503
  %v3508 = vmax.f32 %v3504, 0.0
  %v3509 = vmax.f32 %v3505, 0.0
  %v3510 = vmax.f32 %v3506, 0.0
  %v3511 = vmax.f32 %v3507, 0.0
  %v3513 = vsel %vm2853, %v3462, 0
  %v3516 = vsel %vm2853, %v3463, 0
  %3518 = vmatprep.subr.mxu0 0.0
  %3519 = vmatpush1.msra.mxu0 0.0
  %3520 = vmatprep.subr.mxu0 0.0
  %3521 = vmatpush1.msra.mxu0 0.0
  %3522 = vmatprep.subr.mxu0 0.0
  %3523 = vmatpush1.msra.mxu0 0.0
  %3524 = vmatprep.subr.mxu0 0.0
  %3525 = vmatpush1.msra.mxu0 0.0
  %3526 = vmatprep.subr.mxu0 0.0
  %3527 = vmatpush1.msra.mxu0 0.0
  %3528 = vmatprep.subr.mxu0 0.0
  %3529 = vmatpush1.msra.mxu0 0.0
  %3530 = vmatprep.subr.mxu0 0.0
  %3531 = vmatpush1.msra.mxu0 0.0
  %3532 = vmatprep.subr.mxu0 0.0
  %3533 = vmatpush1.msra.mxu0 0.0
  %3534 = vmatprep.subr.mxu0 0.0
  %3535 = vmatpush1.msra.mxu0 0.0
  %3536 = vmatprep.subr.mxu0 0.0
  %3537 = vmatpush1.msra.mxu0 0.0
  %3538 = vmatprep.subr.mxu0 0.0
  %3539 = vmatpush1.msra.mxu0 0.0
  %3540 = vmatprep.subr.mxu0 0.0
  %3541 = vmatpush1.msra.mxu0 0.0
  %3542 = vmatprep.subr.mxu0 0.0
  %3543 = vmatpush1.msra.mxu0 0.0
  %3544 = vmatprep.subr.mxu0 0.0
  %3545 = vmatpush1.msra.mxu0 0.0
  %3546 = vmatprep.subr.mxu0 %v3487
  %3547 = vmatpush1.msra.mxu0 %v3486
  %3548 = vmatprep.subr.mxu0 %v3485
  %3549 = vmatpush1.msra.mxu0 %v3484
  %3550 = vmatprep.subr.mxu0 0.0
  %3551 = vmatpush2.msra.mxu0 0.0
  %3552 = vmatprep.subr.mxu0 0.0
  %3553 = vmatpush2.msra.mxu0 0.0
  %3554 = vmatprep.subr.mxu0 0.0
  %3555 = vmatpush2.msra.mxu0 0.0
  %3556 = vmatprep.subr.mxu0 0.0
  %3557 = vmatpush2.msra.mxu0 0.0
  %3558 = vmatprep.subr.mxu0 0.0
  %3559 = vmatpush2.msra.mxu0 0.0
  %3560 = vmatprep.subr.mxu0 0.0
  %3561 = vmatpush2.msra.mxu0 0.0
  %3562 = vmatprep.subr.mxu0 0.0
  %3563 = vmatpush2.msra.mxu0 0.0
  %3564 = vmatprep.subr.mxu0 0.0
  %3565 = vmatpush2.msra.mxu0 0.0
  %3566 = vmatprep.subr.mxu0 0.0
  %3567 = vmatpush2.msra.mxu0 0.0
  %3568 = vmatprep.subr.mxu0 0.0
  %3569 = vmatpush2.msra.mxu0 0.0
  %3570 = vmatprep.subr.mxu0 0.0
  %3571 = vmatpush2.msra.mxu0 0.0
  %3572 = vmatprep.subr.mxu0 0.0
  %3573 = vmatpush2.msra.mxu0 0.0
  %3574 = vmatprep.subr.mxu0 0.0
  %3575 = vmatpush2.msra.mxu0 0.0
  %3576 = vmatprep.subr.mxu0 0.0
  %3577 = vmatpush2.msra.mxu0 0.0
  %3578 = vmatprep.subr.mxu0 0.0
  %3579 = vmatpush2.msra.mxu0 0.0
  %3580 = vmatprep.subr.mxu0 0.0
  %3581 = vmatpush2.msra.mxu0 0.0
  %3582 = vmatprep.mubr.f32.mxu0 0.0
  %3583 = vmatmul.mubr.f32.gmra.mxu0 %v3513
  %v3584 = vpop.f32.mrf.mxu0
  %v3585 = vadd.f32 0.0, %v3584
  %v3586 = vpop.f32.mrf.mxu0
  %v3587 = vadd.f32 0.0, %v3586
  %3588 = vmatprep.mubr.f32.mxu0 0.0
  %3589 = vmatmul.mubr.f32.gmra.mxu0 %v3516
  %v3590 = vpop.f32.mrf.mxu0
  %v3591 = vadd.f32 0.0, %v3590
  %v3592 = vpop.f32.mrf.mxu0
  %v3593 = vadd.f32 0.0, %v3592
  %3594 = vdwg.mxu0
  %v3595 = vmul.f32 %v3508, %v3585
  %v3596 = vmul.f32 %v3509, %v3587
  %v3597 = vmul.f32 %v3510, %v3591
  %v3598 = vmul.f32 %v3511, %v3593
  %v3599 = vadd.f32 %v3595, %v3597
  %v3600 = vrot.slane %v3599, 4
  %v3601 = vadd.f32 %v3599, %v3600
  %v3602 = vrot.slane %v3601, 2
  %v3603 = vadd.f32 %v3601, %v3602
  %v3604 = vrot.slane %v3603, 1
  %v3605 = vadd.f32 %v3603, %v3604
  %v3606 = vadd.f32 %v3596, %v3598
  %v3607 = vrot.slane %v3606, 4
  %v3608 = vadd.f32 %v3606, %v3607
  %v3609 = vrot.slane %v3608, 2
  %v3610 = vadd.f32 %v3608, %v3609
  %v3611 = vrot.slane %v3610, 1
  %v3612 = vadd.f32 %v3610, %v3611
  %v3615 = vcombine.low %v3605, %v3612
  %v3617 = vunpack.c.l.s4 1966171168
  %v3618 = vunpack.c.0.s8 %v3617
  %v3619 = vlaneseq
  %v3620 = vshrl.u32 %v3619, 7
  %v3621 = vsub.s32 %v3618, %v3620
  %v3622 = vrot.slane %v3615, %v3621
  %v3624 = vunpack.c.l.s4 1966171168
  %v3625 = vunpack.c.0.s8 %v3624
  %v3626 = vlaneseq
  %v3627 = vshrl.u32 %v3626, 7
  %v3628 = vsub.s32 %v3625, %v3627
  %v3629 = vrot.slane %v3622, %v3628
  %s3631 = scalar_lea.vmem %s10, 8
  %3632 = vst.msk [vmem:[%s3631] ss:$2 sm:$0x3] %vm2976, %v3629
  %s3633 = scalar_lea.vmem %s6, 32
  %v3634 = vld [vmem:[%s3633] sm:$0xff]
  %v3635 = vld [vmem:[%s3633 + $0x8] sm:$0xff]
  %v3636 = vlaneseq
  %v3637 = vshrl.u32 %v3636, 7
  %v3638 = vsub.s32 0, %v3637
  %v3639 = vrot.slane %v2398, %v3638
  %v3640 = vlaneseq
  %v3641 = vshrl.u32 %v3640, 7
  %v3642 = vsub.s32 0, %v3641
  %v3643 = vrot.slane %v2399, %v3642
  %v3644 = vsub.f32 %v3639, %v173
  %v3645 = vsub.f32 %v3643, %v173
  %v3646 = vsub.f32 %v3639, %v174
  %v3647 = vsub.f32 %v3643, %v174
  %v3648 = vand.u32 2147483647, %v3644
  %v3649 = vand.u32 2147483647, %v3645
  %v3650 = vand.u32 2147483647, %v3646
  %v3651 = vand.u32 2147483647, %v3647
  %v3652 = vsub.f32 1.0, %v3648
  %v3653 = vsub.f32 1.0, %v3649
  %v3654 = vsub.f32 1.0, %v3650
  %v3655 = vsub.f32 1.0, %v3651
  %v3656 = vmax.f32 %v3652, 0.0
  %v3657 = vmax.f32 %v3653, 0.0
  %v3658 = vmax.f32 %v3654, 0.0
  %v3659 = vmax.f32 %v3655, 0.0
  %v3660 = vlaneseq
  %v3661 = vshrl.u32 %v3660, 7
  %v3662 = vsub.s32 0, %v3661
  %v3663 = vrot.slane %v2462, %v3662
  %v3664 = vlaneseq
  %v3665 = vshrl.u32 %v3664, 7
  %v3666 = vsub.s32 0, %v3665
  %v3667 = vrot.slane %v2463, %v3666
  %v3668 = vsub.f32 %v3663, %v173
  %v3669 = vsub.f32 %v3667, %v173
  %v3670 = vsub.f32 %v3663, %v174
  %v3671 = vsub.f32 %v3667, %v174
  %v3672 = vand.u32 2147483647, %v3668
  %v3673 = vand.u32 2147483647, %v3669
  %v3674 = vand.u32 2147483647, %v3670
  %v3675 = vand.u32 2147483647, %v3671
  %v3676 = vsub.f32 1.0, %v3672
  %v3677 = vsub.f32 1.0, %v3673
  %v3678 = vsub.f32 1.0, %v3674
  %v3679 = vsub.f32 1.0, %v3675
  %v3680 = vmax.f32 %v3676, 0.0
  %v3681 = vmax.f32 %v3677, 0.0
  %v3682 = vmax.f32 %v3678, 0.0
  %v3683 = vmax.f32 %v3679, 0.0
  %v3685 = vsel %vm2853, %v3634, 0
  %v3688 = vsel %vm2853, %v3635, 0
  %3690 = vmatprep.subr.mxu0 0.0
  %3691 = vmatpush1.msra.mxu0 0.0
  %3692 = vmatprep.subr.mxu0 0.0
  %3693 = vmatpush1.msra.mxu0 0.0
  %3694 = vmatprep.subr.mxu0 0.0
  %3695 = vmatpush1.msra.mxu0 0.0
  %3696 = vmatprep.subr.mxu0 0.0
  %3697 = vmatpush1.msra.mxu0 0.0
  %3698 = vmatprep.subr.mxu0 0.0
  %3699 = vmatpush1.msra.mxu0 0.0
  %3700 = vmatprep.subr.mxu0 0.0
  %3701 = vmatpush1.msra.mxu0 0.0
  %3702 = vmatprep.subr.mxu0 0.0
  %3703 = vmatpush1.msra.mxu0 0.0
  %3704 = vmatprep.subr.mxu0 0.0
  %3705 = vmatpush1.msra.mxu0 0.0
  %3706 = vmatprep.subr.mxu0 0.0
  %3707 = vmatpush1.msra.mxu0 0.0
  %3708 = vmatprep.subr.mxu0 0.0
  %3709 = vmatpush1.msra.mxu0 0.0
  %3710 = vmatprep.subr.mxu0 0.0
  %3711 = vmatpush1.msra.mxu0 0.0
  %3712 = vmatprep.subr.mxu0 0.0
  %3713 = vmatpush1.msra.mxu0 0.0
  %3714 = vmatprep.subr.mxu0 0.0
  %3715 = vmatpush1.msra.mxu0 0.0
  %3716 = vmatprep.subr.mxu0 0.0
  %3717 = vmatpush1.msra.mxu0 0.0
  %3718 = vmatprep.subr.mxu0 %v3659
  %3719 = vmatpush1.msra.mxu0 %v3658
  %3720 = vmatprep.subr.mxu0 %v3657
  %3721 = vmatpush1.msra.mxu0 %v3656
  %3722 = vmatprep.subr.mxu0 0.0
  %3723 = vmatpush2.msra.mxu0 0.0
  %3724 = vmatprep.subr.mxu0 0.0
  %3725 = vmatpush2.msra.mxu0 0.0
  %3726 = vmatprep.subr.mxu0 0.0
  %3727 = vmatpush2.msra.mxu0 0.0
  %3728 = vmatprep.subr.mxu0 0.0
  %3729 = vmatpush2.msra.mxu0 0.0
  %3730 = vmatprep.subr.mxu0 0.0
  %3731 = vmatpush2.msra.mxu0 0.0
  %3732 = vmatprep.subr.mxu0 0.0
  %3733 = vmatpush2.msra.mxu0 0.0
  %3734 = vmatprep.subr.mxu0 0.0
  %3735 = vmatpush2.msra.mxu0 0.0
  %3736 = vmatprep.subr.mxu0 0.0
  %3737 = vmatpush2.msra.mxu0 0.0
  %3738 = vmatprep.subr.mxu0 0.0
  %3739 = vmatpush2.msra.mxu0 0.0
  %3740 = vmatprep.subr.mxu0 0.0
  %3741 = vmatpush2.msra.mxu0 0.0
  %3742 = vmatprep.subr.mxu0 0.0
  %3743 = vmatpush2.msra.mxu0 0.0
  %3744 = vmatprep.subr.mxu0 0.0
  %3745 = vmatpush2.msra.mxu0 0.0
  %3746 = vmatprep.subr.mxu0 0.0
  %3747 = vmatpush2.msra.mxu0 0.0
  %3748 = vmatprep.subr.mxu0 0.0
  %3749 = vmatpush2.msra.mxu0 0.0
  %3750 = vmatprep.subr.mxu0 0.0
  %3751 = vmatpush2.msra.mxu0 0.0
  %3752 = vmatprep.subr.mxu0 0.0
  %3753 = vmatpush2.msra.mxu0 0.0
  %3754 = vmatprep.mubr.f32.mxu0 0.0
  %3755 = vmatmul.mubr.f32.gmra.mxu0 %v3685
  %v3756 = vpop.f32.mrf.mxu0
  %v3757 = vadd.f32 0.0, %v3756
  %v3758 = vpop.f32.mrf.mxu0
  %v3759 = vadd.f32 0.0, %v3758
  %3760 = vmatprep.mubr.f32.mxu0 0.0
  %3761 = vmatmul.mubr.f32.gmra.mxu0 %v3688
  %v3762 = vpop.f32.mrf.mxu0
  %v3763 = vadd.f32 0.0, %v3762
  %v3764 = vpop.f32.mrf.mxu0
  %v3765 = vadd.f32 0.0, %v3764
  %3766 = vdwg.mxu0
  %v3767 = vmul.f32 %v3680, %v3757
  %v3768 = vmul.f32 %v3681, %v3759
  %v3769 = vmul.f32 %v3682, %v3763
  %v3770 = vmul.f32 %v3683, %v3765
  %v3771 = vadd.f32 %v3767, %v3769
  %v3772 = vrot.slane %v3771, 4
  %v3773 = vadd.f32 %v3771, %v3772
  %v3774 = vrot.slane %v3773, 2
  %v3775 = vadd.f32 %v3773, %v3774
  %v3776 = vrot.slane %v3775, 1
  %v3777 = vadd.f32 %v3775, %v3776
  %v3778 = vadd.f32 %v3768, %v3770
  %v3779 = vrot.slane %v3778, 4
  %v3780 = vadd.f32 %v3778, %v3779
  %v3781 = vrot.slane %v3780, 2
  %v3782 = vadd.f32 %v3780, %v3781
  %v3783 = vrot.slane %v3782, 1
  %v3784 = vadd.f32 %v3782, %v3783
  %v3785 = vmul.f32 %v3777, %v3605
  %v3786 = vmul.f32 %v3784, %v3612
  %v3787 = vadd.f32 %v3457, %v3785
  %v3788 = vadd.f32 %v3458, %v3786
  %v3789 = vadd.f32 %v3459, %v3605
  %v3790 = vadd.f32 %v3460, %v3612
  %s3791 = scalar_lea.vmem %s7, 48
  %v3792 = vld [vmem:[%s3791] sm:$0xff]
  %v3793 = vld [vmem:[%s3791 + $0x8] sm:$0xff]
  %v3794 = vlaneseq
  %v3795 = vshrl.u32 %v3794, 7
  %v3796 = vsub.s32 0, %v3795
  %v3797 = vrot.slane %v2504, %v3796
  %v3798 = vlaneseq
  %v3799 = vshrl.u32 %v3798, 7
  %v3800 = vsub.s32 0, %v3799
  %v3801 = vrot.slane %v2505, %v3800
  %v3802 = vsub.f32 %v3797, %v173
  %v3803 = vsub.f32 %v3801, %v173
  %v3804 = vsub.f32 %v3797, %v174
  %v3805 = vsub.f32 %v3801, %v174
  %v3806 = vand.u32 2147483647, %v3802
  %v3807 = vand.u32 2147483647, %v3803
  %v3808 = vand.u32 2147483647, %v3804
  %v3809 = vand.u32 2147483647, %v3805
  %v3810 = vsub.f32 1.0, %v3806
  %v3811 = vsub.f32 1.0, %v3807
  %v3812 = vsub.f32 1.0, %v3808
  %v3813 = vsub.f32 1.0, %v3809
  %v3814 = vmax.f32 %v3810, 0.0
  %v3815 = vmax.f32 %v3811, 0.0
  %v3816 = vmax.f32 %v3812, 0.0
  %v3817 = vmax.f32 %v3813, 0.0
  %v3818 = vlaneseq
  %v3819 = vshrl.u32 %v3818, 7
  %v3820 = vsub.s32 0, %v3819
  %v3821 = vrot.slane %v2544, %v3820
  %v3822 = vlaneseq
  %v3823 = vshrl.u32 %v3822, 7
  %v3824 = vsub.s32 0, %v3823
  %v3825 = vrot.slane %v2545, %v3824
  %v3826 = vsub.f32 %v3821, %v173
  %v3827 = vsub.f32 %v3825, %v173
  %v3828 = vsub.f32 %v3821, %v174
  %v3829 = vsub.f32 %v3825, %v174
  %v3830 = vand.u32 2147483647, %v3826
  %v3831 = vand.u32 2147483647, %v3827
  %v3832 = vand.u32 2147483647, %v3828
  %v3833 = vand.u32 2147483647, %v3829
  %v3834 = vsub.f32 1.0, %v3830
  %v3835 = vsub.f32 1.0, %v3831
  %v3836 = vsub.f32 1.0, %v3832
  %v3837 = vsub.f32 1.0, %v3833
  %v3838 = vmax.f32 %v3834, 0.0
  %v3839 = vmax.f32 %v3835, 0.0
  %v3840 = vmax.f32 %v3836, 0.0
  %v3841 = vmax.f32 %v3837, 0.0
  %v3843 = vsel %vm2853, %v3792, 0
  %v3846 = vsel %vm2853, %v3793, 0
  %3848 = vmatprep.subr.mxu0 0.0
  %3849 = vmatpush1.msra.mxu0 0.0
  %3850 = vmatprep.subr.mxu0 0.0
  %3851 = vmatpush1.msra.mxu0 0.0
  %3852 = vmatprep.subr.mxu0 0.0
  %3853 = vmatpush1.msra.mxu0 0.0
  %3854 = vmatprep.subr.mxu0 0.0
  %3855 = vmatpush1.msra.mxu0 0.0
  %3856 = vmatprep.subr.mxu0 0.0
  %3857 = vmatpush1.msra.mxu0 0.0
  %3858 = vmatprep.subr.mxu0 0.0
  %3859 = vmatpush1.msra.mxu0 0.0
  %3860 = vmatprep.subr.mxu0 0.0
  %3861 = vmatpush1.msra.mxu0 0.0
  %3862 = vmatprep.subr.mxu0 0.0
  %3863 = vmatpush1.msra.mxu0 0.0
  %3864 = vmatprep.subr.mxu0 0.0
  %3865 = vmatpush1.msra.mxu0 0.0
  %3866 = vmatprep.subr.mxu0 0.0
  %3867 = vmatpush1.msra.mxu0 0.0
  %3868 = vmatprep.subr.mxu0 0.0
  %3869 = vmatpush1.msra.mxu0 0.0
  %3870 = vmatprep.subr.mxu0 0.0
  %3871 = vmatpush1.msra.mxu0 0.0
  %3872 = vmatprep.subr.mxu0 0.0
  %3873 = vmatpush1.msra.mxu0 0.0
  %3874 = vmatprep.subr.mxu0 0.0
  %3875 = vmatpush1.msra.mxu0 0.0
  %3876 = vmatprep.subr.mxu0 %v3817
  %3877 = vmatpush1.msra.mxu0 %v3816
  %3878 = vmatprep.subr.mxu0 %v3815
  %3879 = vmatpush1.msra.mxu0 %v3814
  %3880 = vmatprep.subr.mxu0 0.0
  %3881 = vmatpush2.msra.mxu0 0.0
  %3882 = vmatprep.subr.mxu0 0.0
  %3883 = vmatpush2.msra.mxu0 0.0
  %3884 = vmatprep.subr.mxu0 0.0
  %3885 = vmatpush2.msra.mxu0 0.0
  %3886 = vmatprep.subr.mxu0 0.0
  %3887 = vmatpush2.msra.mxu0 0.0
  %3888 = vmatprep.subr.mxu0 0.0
  %3889 = vmatpush2.msra.mxu0 0.0
  %3890 = vmatprep.subr.mxu0 0.0
  %3891 = vmatpush2.msra.mxu0 0.0
  %3892 = vmatprep.subr.mxu0 0.0
  %3893 = vmatpush2.msra.mxu0 0.0
  %3894 = vmatprep.subr.mxu0 0.0
  %3895 = vmatpush2.msra.mxu0 0.0
  %3896 = vmatprep.subr.mxu0 0.0
  %3897 = vmatpush2.msra.mxu0 0.0
  %3898 = vmatprep.subr.mxu0 0.0
  %3899 = vmatpush2.msra.mxu0 0.0
  %3900 = vmatprep.subr.mxu0 0.0
  %3901 = vmatpush2.msra.mxu0 0.0
  %3902 = vmatprep.subr.mxu0 0.0
  %3903 = vmatpush2.msra.mxu0 0.0
  %3904 = vmatprep.subr.mxu0 0.0
  %3905 = vmatpush2.msra.mxu0 0.0
  %3906 = vmatprep.subr.mxu0 0.0
  %3907 = vmatpush2.msra.mxu0 0.0
  %3908 = vmatprep.subr.mxu0 0.0
  %3909 = vmatpush2.msra.mxu0 0.0
  %3910 = vmatprep.subr.mxu0 0.0
  %3911 = vmatpush2.msra.mxu0 0.0
  %3912 = vmatprep.mubr.f32.mxu0 0.0
  %3913 = vmatmul.mubr.f32.gmra.mxu0 %v3843
  %v3914 = vpop.f32.mrf.mxu0
  %v3915 = vadd.f32 0.0, %v3914
  %v3916 = vpop.f32.mrf.mxu0
  %v3917 = vadd.f32 0.0, %v3916
  %3918 = vmatprep.mubr.f32.mxu0 0.0
  %3919 = vmatmul.mubr.f32.gmra.mxu0 %v3846
  %v3920 = vpop.f32.mrf.mxu0
  %v3921 = vadd.f32 0.0, %v3920
  %v3922 = vpop.f32.mrf.mxu0
  %v3923 = vadd.f32 0.0, %v3922
  %3924 = vdwg.mxu0
  %v3925 = vmul.f32 %v3838, %v3915
  %v3926 = vmul.f32 %v3839, %v3917
  %v3927 = vmul.f32 %v3840, %v3921
  %v3928 = vmul.f32 %v3841, %v3923
  %v3929 = vadd.f32 %v3925, %v3927
  %v3930 = vrot.slane %v3929, 4
  %v3931 = vadd.f32 %v3929, %v3930
  %v3932 = vrot.slane %v3931, 2
  %v3933 = vadd.f32 %v3931, %v3932
  %v3934 = vrot.slane %v3933, 1
  %v3935 = vadd.f32 %v3933, %v3934
  %v3936 = vadd.f32 %v3926, %v3928
  %v3937 = vrot.slane %v3936, 4
  %v3938 = vadd.f32 %v3936, %v3937
  %v3939 = vrot.slane %v3938, 2
  %v3940 = vadd.f32 %v3938, %v3939
  %v3941 = vrot.slane %v3940, 1
  %v3942 = vadd.f32 %v3940, %v3941
  %v3945 = vcombine.low %v3935, %v3942
  %v3947 = vunpack.c.l.s4 1966171168
  %v3948 = vunpack.c.0.s8 %v3947
  %v3949 = vlaneseq
  %v3950 = vshrl.u32 %v3949, 7
  %v3951 = vsub.s32 %v3948, %v3950
  %v3952 = vrot.slane %v3945, %v3951
  %v3954 = vunpack.c.l.s4 1966171168
  %v3955 = vunpack.c.0.s8 %v3954
  %v3956 = vlaneseq
  %v3957 = vshrl.u32 %v3956, 7
  %v3958 = vsub.s32 %v3955, %v3957
  %v3959 = vrot.slane %v3952, %v3958
  %s3961 = scalar_lea.vmem %s10, 12
  %3962 = vst.msk [vmem:[%s3961] ss:$2 sm:$0x3] %vm2976, %v3959
  %s3963 = scalar_lea.vmem %s6, 48
  %v3964 = vld [vmem:[%s3963] sm:$0xff]
  %v3965 = vld [vmem:[%s3963 + $0x8] sm:$0xff]
  %v3966 = vlaneseq
  %v3967 = vshrl.u32 %v3966, 7
  %v3968 = vsub.s32 0, %v3967
  %v3969 = vrot.slane %v2400, %v3968
  %v3970 = vlaneseq
  %v3971 = vshrl.u32 %v3970, 7
  %v3972 = vsub.s32 0, %v3971
  %v3973 = vrot.slane %v2401, %v3972
  %v3974 = vsub.f32 %v3969, %v173
  %v3975 = vsub.f32 %v3973, %v173
  %v3976 = vsub.f32 %v3969, %v174
  %v3977 = vsub.f32 %v3973, %v174
  %v3978 = vand.u32 2147483647, %v3974
  %v3979 = vand.u32 2147483647, %v3975
  %v3980 = vand.u32 2147483647, %v3976
  %v3981 = vand.u32 2147483647, %v3977
  %v3982 = vsub.f32 1.0, %v3978
  %v3983 = vsub.f32 1.0, %v3979
  %v3984 = vsub.f32 1.0, %v3980
  %v3985 = vsub.f32 1.0, %v3981
  %v3986 = vmax.f32 %v3982, 0.0
  %v3987 = vmax.f32 %v3983, 0.0
  %v3988 = vmax.f32 %v3984, 0.0
  %v3989 = vmax.f32 %v3985, 0.0
  %v3990 = vlaneseq
  %v3991 = vshrl.u32 %v3990, 7
  %v3992 = vsub.s32 0, %v3991
  %v3993 = vrot.slane %v2464, %v3992
  %v3994 = vlaneseq
  %v3995 = vshrl.u32 %v3994, 7
  %v3996 = vsub.s32 0, %v3995
  %v3997 = vrot.slane %v2465, %v3996
  %v3998 = vsub.f32 %v3993, %v173
  %v3999 = vsub.f32 %v3997, %v173
  %v4000 = vsub.f32 %v3993, %v174
  %v4001 = vsub.f32 %v3997, %v174
  %v4002 = vand.u32 2147483647, %v3998
  %v4003 = vand.u32 2147483647, %v3999
  %v4004 = vand.u32 2147483647, %v4000
  %v4005 = vand.u32 2147483647, %v4001
  %v4006 = vsub.f32 1.0, %v4002
  %v4007 = vsub.f32 1.0, %v4003
  %v4008 = vsub.f32 1.0, %v4004
  %v4009 = vsub.f32 1.0, %v4005
  %v4010 = vmax.f32 %v4006, 0.0
  %v4011 = vmax.f32 %v4007, 0.0
  %v4012 = vmax.f32 %v4008, 0.0
  %v4013 = vmax.f32 %v4009, 0.0
  %v4015 = vsel %vm2853, %v3964, 0
  %v4018 = vsel %vm2853, %v3965, 0
  %4020 = vmatprep.subr.mxu0 0.0
  %4021 = vmatpush1.msra.mxu0 0.0
  %4022 = vmatprep.subr.mxu0 0.0
  %4023 = vmatpush1.msra.mxu0 0.0
  %4024 = vmatprep.subr.mxu0 0.0
  %4025 = vmatpush1.msra.mxu0 0.0
  %4026 = vmatprep.subr.mxu0 0.0
  %4027 = vmatpush1.msra.mxu0 0.0
  %4028 = vmatprep.subr.mxu0 0.0
  %4029 = vmatpush1.msra.mxu0 0.0
  %4030 = vmatprep.subr.mxu0 0.0
  %4031 = vmatpush1.msra.mxu0 0.0
  %4032 = vmatprep.subr.mxu0 0.0
  %4033 = vmatpush1.msra.mxu0 0.0
  %4034 = vmatprep.subr.mxu0 0.0
  %4035 = vmatpush1.msra.mxu0 0.0
  %4036 = vmatprep.subr.mxu0 0.0
  %4037 = vmatpush1.msra.mxu0 0.0
  %4038 = vmatprep.subr.mxu0 0.0
  %4039 = vmatpush1.msra.mxu0 0.0
  %4040 = vmatprep.subr.mxu0 0.0
  %4041 = vmatpush1.msra.mxu0 0.0
  %4042 = vmatprep.subr.mxu0 0.0
  %4043 = vmatpush1.msra.mxu0 0.0
  %4044 = vmatprep.subr.mxu0 0.0
  %4045 = vmatpush1.msra.mxu0 0.0
  %4046 = vmatprep.subr.mxu0 0.0
  %4047 = vmatpush1.msra.mxu0 0.0
  %4048 = vmatprep.subr.mxu0 %v3989
  %4049 = vmatpush1.msra.mxu0 %v3988
  %4050 = vmatprep.subr.mxu0 %v3987
  %4051 = vmatpush1.msra.mxu0 %v3986
  %4052 = vmatprep.subr.mxu0 0.0
  %4053 = vmatpush2.msra.mxu0 0.0
  %4054 = vmatprep.subr.mxu0 0.0
  %4055 = vmatpush2.msra.mxu0 0.0
  %4056 = vmatprep.subr.mxu0 0.0
  %4057 = vmatpush2.msra.mxu0 0.0
  %4058 = vmatprep.subr.mxu0 0.0
  %4059 = vmatpush2.msra.mxu0 0.0
  %4060 = vmatprep.subr.mxu0 0.0
  %4061 = vmatpush2.msra.mxu0 0.0
  %4062 = vmatprep.subr.mxu0 0.0
  %4063 = vmatpush2.msra.mxu0 0.0
  %4064 = vmatprep.subr.mxu0 0.0
  %4065 = vmatpush2.msra.mxu0 0.0
  %4066 = vmatprep.subr.mxu0 0.0
  %4067 = vmatpush2.msra.mxu0 0.0
  %4068 = vmatprep.subr.mxu0 0.0
  %4069 = vmatpush2.msra.mxu0 0.0
  %4070 = vmatprep.subr.mxu0 0.0
  %4071 = vmatpush2.msra.mxu0 0.0
  %4072 = vmatprep.subr.mxu0 0.0
  %4073 = vmatpush2.msra.mxu0 0.0
  %4074 = vmatprep.subr.mxu0 0.0
  %4075 = vmatpush2.msra.mxu0 0.0
  %4076 = vmatprep.subr.mxu0 0.0
  %4077 = vmatpush2.msra.mxu0 0.0
  %4078 = vmatprep.subr.mxu0 0.0
  %4079 = vmatpush2.msra.mxu0 0.0
  %4080 = vmatprep.subr.mxu0 0.0
  %4081 = vmatpush2.msra.mxu0 0.0
  %4082 = vmatprep.subr.mxu0 0.0
  %4083 = vmatpush2.msra.mxu0 0.0
  %4084 = vmatprep.mubr.f32.mxu0 0.0
  %4085 = vmatmul.mubr.f32.gmra.mxu0 %v4015
  %v4086 = vpop.f32.mrf.mxu0
  %v4087 = vadd.f32 0.0, %v4086
  %v4088 = vpop.f32.mrf.mxu0
  %v4089 = vadd.f32 0.0, %v4088
  %4090 = vmatprep.mubr.f32.mxu0 0.0
  %4091 = vmatmul.mubr.f32.gmra.mxu0 %v4018
  %v4092 = vpop.f32.mrf.mxu0
  %v4093 = vadd.f32 0.0, %v4092
  %v4094 = vpop.f32.mrf.mxu0
  %v4095 = vadd.f32 0.0, %v4094
  %4096 = vdwg.mxu0
  %v4097 = vmul.f32 %v4010, %v4087
  %v4098 = vmul.f32 %v4011, %v4089
  %v4099 = vmul.f32 %v4012, %v4093
  %v4100 = vmul.f32 %v4013, %v4095
  %v4101 = vadd.f32 %v4097, %v4099
  %v4102 = vrot.slane %v4101, 4
  %v4103 = vadd.f32 %v4101, %v4102
  %v4104 = vrot.slane %v4103, 2
  %v4105 = vadd.f32 %v4103, %v4104
  %v4106 = vrot.slane %v4105, 1
  %v4107 = vadd.f32 %v4105, %v4106
  %v4108 = vadd.f32 %v4098, %v4100
  %v4109 = vrot.slane %v4108, 4
  %v4110 = vadd.f32 %v4108, %v4109
  %v4111 = vrot.slane %v4110, 2
  %v4112 = vadd.f32 %v4110, %v4111
  %v4113 = vrot.slane %v4112, 1
  %v4114 = vadd.f32 %v4112, %v4113
  %v4115 = vmul.f32 %v4107, %v3935
  %v4116 = vmul.f32 %v4114, %v3942
  %v4117 = vadd.f32 %v3787, %v4115
  %v4118 = vadd.f32 %v3788, %v4116
  %v4119 = vadd.f32 %v3789, %v3935
  %v4120 = vadd.f32 %v3790, %v3942
  %vm4121 = vcmp.eq.f32.partialorder %v4119, 0.0
  %vm4122 = vcmp.eq.f32.partialorder %v4120, 0.0
  %v4123 = vsel %vm4121, 1.0, %v4119
  %v4124 = vsel %vm4122, 1.0, %v4120
  %v4125 = vrcp.pop %v4123
  %v4126 = vmul.f32 %v4117, %v4125
  %v4127 = vrcp.pop %v4124
  %v4128 = vmul.f32 %v4118, %v4127
  %v4129 = vmul.f32 %v183, %v4126
  %v4130 = vmul.f32 %v184, %v4128
  %v4131 = vmul.f32 %v185, %v4126
  %v4132 = vmul.f32 %v186, %v4128
  %4133 = vmatprep.subr.mxu0 0.0
  %4134 = vmatpush1.msra.mxu0 %v328
  %4135 = vmatprep.subr.mxu0 0.0
  %4136 = vmatpush1.msra.mxu0 %v327
  %4137 = vmatprep.subr.mxu0 0.0
  %4138 = vmatpush1.msra.mxu0 %v326
  %4139 = vmatprep.subr.mxu0 0.0
  %4140 = vmatpush1.msra.mxu0 %v325
  %4141 = vmatprep.subr.mxu0 0.0
  %4142 = vmatpush1.msra.mxu0 %v324
  %4143 = vmatprep.subr.mxu0 0.0
  %4144 = vmatpush1.msra.mxu0 %v323
  %4145 = vmatprep.subr.mxu0 0.0
  %4146 = vmatpush1.msra.mxu0 %v322
  %4147 = vmatprep.subr.mxu0 0.0
  %4148 = vmatpush1.msra.mxu0 %v321
  %4149 = vmatprep.subr.mxu0 0.0
  %4150 = vmatpush1.msra.mxu0 %v320
  %4151 = vmatprep.subr.mxu0 0.0
  %4152 = vmatpush1.msra.mxu0 %v319
  %4153 = vmatprep.subr.mxu0 0.0
  %4154 = vmatpush1.msra.mxu0 %v318
  %4155 = vmatprep.subr.mxu0 0.0
  %4156 = vmatpush1.msra.mxu0 %v317
  %4157 = vmatprep.subr.mxu0 0.0
  %4158 = vmatpush1.msra.mxu0 %v316
  %4159 = vmatprep.subr.mxu0 0.0
  %4160 = vmatpush1.msra.mxu0 %v315
  %4161 = vmatprep.subr.mxu0 0.0
  %4162 = vmatpush1.msra.mxu0 %v314
  %4163 = vmatprep.subr.mxu0 0.0
  %4164 = vmatpush1.msra.mxu0 %v313
  %4165 = vmatprep.subr.mxu0 0.0
  %4166 = vmatpush2.msra.mxu0 %v344
  %4167 = vmatprep.subr.mxu0 0.0
  %4168 = vmatpush2.msra.mxu0 %v343
  %4169 = vmatprep.subr.mxu0 0.0
  %4170 = vmatpush2.msra.mxu0 %v342
  %4171 = vmatprep.subr.mxu0 0.0
  %4172 = vmatpush2.msra.mxu0 %v341
  %4173 = vmatprep.subr.mxu0 0.0
  %4174 = vmatpush2.msra.mxu0 %v340
  %4175 = vmatprep.subr.mxu0 0.0
  %4176 = vmatpush2.msra.mxu0 %v339
  %4177 = vmatprep.subr.mxu0 0.0
  %4178 = vmatpush2.msra.mxu0 %v338
  %4179 = vmatprep.subr.mxu0 0.0
  %4180 = vmatpush2.msra.mxu0 %v337
  %4181 = vmatprep.subr.mxu0 0.0
  %4182 = vmatpush2.msra.mxu0 %v336
  %4183 = vmatprep.subr.mxu0 0.0
  %4184 = vmatpush2.msra.mxu0 %v335
  %4185 = vmatprep.subr.mxu0 0.0
  %4186 = vmatpush2.msra.mxu0 %v334
  %4187 = vmatprep.subr.mxu0 0.0
  %4188 = vmatpush2.msra.mxu0 %v333
  %4189 = vmatprep.subr.mxu0 0.0
  %4190 = vmatpush2.msra.mxu0 %v332
  %4191 = vmatprep.subr.mxu0 0.0
  %4192 = vmatpush2.msra.mxu0 %v331
  %4193 = vmatprep.subr.mxu0 0.0
  %4194 = vmatpush2.msra.mxu0 %v330
  %4195 = vmatprep.subr.mxu0 0.0
  %4196 = vmatpush2.msra.mxu0 %v329
  %4197 = vmatprep.mubr.f32.mxu0 %v4130
  %4198 = vmatmul.mubr.f32.gmra.mxu0 %v4129
  %v4199 = vpop.f32.mrf.mxu0
  %v4200 = vadd.f32 0.0, %v4199
  %v4201 = vpop.f32.mrf.mxu0
  %4202 = vmatprep.mubr.f32.mxu0 %v4132
  %4203 = vmatmul.mubr.f32.gmra.mxu0 %v4131
  %v4204 = vpop.f32.mrf.mxu0
  %v4205 = vadd.f32 0.0, %v4204
  %v4206 = vpop.f32.mrf.mxu0
  %4207 = vdwg.mxu0
  %v4208 = vlaneseq
  %v4209 = vshrl.u32 %v4208, 7
  %v4210 = vsub.s32 0, %v4209
  %v4211 = vrot.slane %v2781, %v4210
  %v4212 = vlaneseq
  %v4213 = vshrl.u32 %v4212, 7
  %v4214 = vsub.s32 0, %v4213
  %v4215 = vrot.slane %v2782, %v4214
  %v4216 = vsub.f32 %v4211, %v173
  %v4217 = vsub.f32 %v4215, %v173
  %v4218 = vsub.f32 %v4211, %v174
  %v4219 = vsub.f32 %v4215, %v174
  %v4220 = vand.u32 2147483647, %v4216
  %v4221 = vand.u32 2147483647, %v4217
  %v4222 = vand.u32 2147483647, %v4218
  %v4223 = vand.u32 2147483647, %v4219
  %v4224 = vsub.f32 1.0, %v4220
  %v4225 = vsub.f32 1.0, %v4221
  %v4226 = vsub.f32 1.0, %v4222
  %v4227 = vsub.f32 1.0, %v4223
  %v4228 = vmax.f32 %v4224, 0.0
  %v4229 = vmax.f32 %v4225, 0.0
  %v4230 = vmax.f32 %v4226, 0.0
  %v4231 = vmax.f32 %v4227, 0.0
  %v4232 = vlaneseq
  %v4233 = vshrl.u32 %v4232, 7
  %v4234 = vsub.s32 0, %v4233
  %v4235 = vrot.slane %v2801, %v4234
  %v4236 = vlaneseq
  %v4237 = vshrl.u32 %v4236, 7
  %v4238 = vsub.s32 0, %v4237
  %v4239 = vrot.slane %v2802, %v4238
  %v4240 = vsub.f32 %v4235, %v173
  %v4241 = vsub.f32 %v4239, %v173
  %v4242 = vsub.f32 %v4235, %v174
  %v4243 = vsub.f32 %v4239, %v174
  %v4244 = vand.u32 2147483647, %v4240
  %v4245 = vand.u32 2147483647, %v4241
  %v4246 = vand.u32 2147483647, %v4242
  %v4247 = vand.u32 2147483647, %v4243
  %v4248 = vsub.f32 1.0, %v4244
  %v4249 = vsub.f32 1.0, %v4245
  %v4250 = vsub.f32 1.0, %v4246
  %v4251 = vsub.f32 1.0, %v4247
  %v4252 = vmax.f32 %v4248, 0.0
  %v4253 = vmax.f32 %v4249, 0.0
  %v4254 = vmax.f32 %v4250, 0.0
  %v4255 = vmax.f32 %v4251, 0.0
  %v4257 = vsel %vm2853, %v4200, 0
  %v4260 = vsel %vm2853, %v4205, 0
  %4262 = vmatprep.subr.mxu0 0.0
  %4263 = vmatpush1.msra.mxu0 0.0
  %4264 = vmatprep.subr.mxu0 0.0
  %4265 = vmatpush1.msra.mxu0 0.0
  %4266 = vmatprep.subr.mxu0 0.0
  %4267 = vmatpush1.msra.mxu0 0.0
  %4268 = vmatprep.subr.mxu0 0.0
  %4269 = vmatpush1.msra.mxu0 0.0
  %4270 = vmatprep.subr.mxu0 0.0
  %4271 = vmatpush1.msra.mxu0 0.0
  %4272 = vmatprep.subr.mxu0 0.0
  %4273 = vmatpush1.msra.mxu0 0.0
  %4274 = vmatprep.subr.mxu0 0.0
  %4275 = vmatpush1.msra.mxu0 0.0
  %4276 = vmatprep.subr.mxu0 0.0
  %4277 = vmatpush1.msra.mxu0 0.0
  %4278 = vmatprep.subr.mxu0 0.0
  %4279 = vmatpush1.msra.mxu0 0.0
  %4280 = vmatprep.subr.mxu0 0.0
  %4281 = vmatpush1.msra.mxu0 0.0
  %4282 = vmatprep.subr.mxu0 0.0
  %4283 = vmatpush1.msra.mxu0 0.0
  %4284 = vmatprep.subr.mxu0 0.0
  %4285 = vmatpush1.msra.mxu0 0.0
  %4286 = vmatprep.subr.mxu0 0.0
  %4287 = vmatpush1.msra.mxu0 0.0
  %4288 = vmatprep.subr.mxu0 0.0
  %4289 = vmatpush1.msra.mxu0 0.0
  %4290 = vmatprep.subr.mxu0 %v4231
  %4291 = vmatpush1.msra.mxu0 %v4230
  %4292 = vmatprep.subr.mxu0 %v4229
  %4293 = vmatpush1.msra.mxu0 %v4228
  %4294 = vmatprep.subr.mxu0 0.0
  %4295 = vmatpush2.msra.mxu0 0.0
  %4296 = vmatprep.subr.mxu0 0.0
  %4297 = vmatpush2.msra.mxu0 0.0
  %4298 = vmatprep.subr.mxu0 0.0
  %4299 = vmatpush2.msra.mxu0 0.0
  %4300 = vmatprep.subr.mxu0 0.0
  %4301 = vmatpush2.msra.mxu0 0.0
  %4302 = vmatprep.subr.mxu0 0.0
  %4303 = vmatpush2.msra.mxu0 0.0
  %4304 = vmatprep.subr.mxu0 0.0
  %4305 = vmatpush2.msra.mxu0 0.0
  %4306 = vmatprep.subr.mxu0 0.0
  %4307 = vmatpush2.msra.mxu0 0.0
  %4308 = vmatprep.subr.mxu0 0.0
  %4309 = vmatpush2.msra.mxu0 0.0
  %4310 = vmatprep.subr.mxu0 0.0
  %4311 = vmatpush2.msra.mxu0 0.0
  %4312 = vmatprep.subr.mxu0 0.0
  %4313 = vmatpush2.msra.mxu0 0.0
  %4314 = vmatprep.subr.mxu0 0.0
  %4315 = vmatpush2.msra.mxu0 0.0
  %4316 = vmatprep.subr.mxu0 0.0
  %4317 = vmatpush2.msra.mxu0 0.0
  %4318 = vmatprep.subr.mxu0 0.0
  %4319 = vmatpush2.msra.mxu0 0.0
  %4320 = vmatprep.subr.mxu0 0.0
  %4321 = vmatpush2.msra.mxu0 0.0
  %4322 = vmatprep.subr.mxu0 0.0
  %4323 = vmatpush2.msra.mxu0 0.0
  %4324 = vmatprep.subr.mxu0 0.0
  %4325 = vmatpush2.msra.mxu0 0.0
  %4326 = vmatprep.mubr.f32.mxu0 0.0
  %4327 = vmatmul.mubr.f32.gmra.mxu0 %v4257
  %v4328 = vpop.f32.mrf.mxu0
  %v4329 = vadd.f32 0.0, %v4328
  %v4330 = vpop.f32.mrf.mxu0
  %v4331 = vadd.f32 0.0, %v4330
  %4332 = vmatprep.mubr.f32.mxu0 0.0
  %4333 = vmatmul.mubr.f32.gmra.mxu0 %v4260
  %v4334 = vpop.f32.mrf.mxu0
  %v4335 = vadd.f32 0.0, %v4334
  %v4336 = vpop.f32.mrf.mxu0
  %v4337 = vadd.f32 0.0, %v4336
  %4338 = vdwg.mxu0
  %v4339 = vmul.f32 %v4252, %v4329
  %v4340 = vmul.f32 %v4253, %v4331
  %v4341 = vmul.f32 %v4254, %v4335
  %v4342 = vmul.f32 %v4255, %v4337
  %v4343 = vadd.f32 %v4339, %v4341
  %v4344 = vrot.slane %v4343, 4
  %v4345 = vadd.f32 %v4343, %v4344
  %v4346 = vrot.slane %v4345, 2
  %v4347 = vadd.f32 %v4345, %v4346
  %v4348 = vrot.slane %v4347, 1
  %v4349 = vadd.f32 %v4347, %v4348
  %v4350 = vadd.f32 %v4340, %v4342
  %v4351 = vrot.slane %v4350, 4
  %v4352 = vadd.f32 %v4350, %v4351
  %v4353 = vrot.slane %v4352, 2
  %v4354 = vadd.f32 %v4352, %v4353
  %v4355 = vrot.slane %v4354, 1
  %v4356 = vadd.f32 %v4354, %v4355
  %v4359 = vcombine.low %v4349, %v4356
  %v4361 = vunpack.c.l.s4 1966171168
  %v4362 = vunpack.c.0.s8 %v4361
  %v4363 = vlaneseq
  %v4364 = vshrl.u32 %v4363, 7
  %v4365 = vsub.s32 %v4362, %v4364
  %v4366 = vrot.slane %v4359, %v4365
  %v4368 = vunpack.c.l.s4 1966171168
  %v4369 = vunpack.c.0.s8 %v4368
  %v4370 = vlaneseq
  %v4371 = vshrl.u32 %v4370, 7
  %v4372 = vsub.s32 %v4369, %v4371
  %v4373 = vrot.slane %v4366, %v4372
  %4375 = vst.msk [vmem:[%s9] ss:$2 sm:$0x3] %vm2976, %v4373
  %s4376 = scalar_lea.vmem %s7, 64
  %v4377 = vld [vmem:[%s4376] sm:$0xff]
  %v4378 = vld [vmem:[%s4376 + $0x8] sm:$0xff]
  %v4379 = vlaneseq
  %v4380 = vshrl.u32 %v4379, 7
  %v4381 = vsub.s32 1, %v4380
  %v4382 = vrot.slane %v2498, %v4381
  %v4383 = vlaneseq
  %v4384 = vshrl.u32 %v4383, 7
  %v4385 = vsub.s32 1, %v4384
  %v4386 = vrot.slane %v2499, %v4385
  %v4387 = vsub.f32 %v4382, %v173
  %v4388 = vsub.f32 %v4386, %v173
  %v4389 = vsub.f32 %v4382, %v174
  %v4390 = vsub.f32 %v4386, %v174
  %v4391 = vand.u32 2147483647, %v4387
  %v4392 = vand.u32 2147483647, %v4388
  %v4393 = vand.u32 2147483647, %v4389
  %v4394 = vand.u32 2147483647, %v4390
  %v4395 = vsub.f32 1.0, %v4391
  %v4396 = vsub.f32 1.0, %v4392
  %v4397 = vsub.f32 1.0, %v4393
  %v4398 = vsub.f32 1.0, %v4394
  %v4399 = vmax.f32 %v4395, 0.0
  %v4400 = vmax.f32 %v4396, 0.0
  %v4401 = vmax.f32 %v4397, 0.0
  %v4402 = vmax.f32 %v4398, 0.0
  %v4403 = vlaneseq
  %v4404 = vshrl.u32 %v4403, 7
  %v4405 = vsub.s32 1, %v4404
  %v4406 = vrot.slane %v2538, %v4405
  %v4407 = vlaneseq
  %v4408 = vshrl.u32 %v4407, 7
  %v4409 = vsub.s32 1, %v4408
  %v4410 = vrot.slane %v2539, %v4409
  %v4411 = vsub.f32 %v4406, %v173
  %v4412 = vsub.f32 %v4410, %v173
  %v4413 = vsub.f32 %v4406, %v174
  %v4414 = vsub.f32 %v4410, %v174
  %v4415 = vand.u32 2147483647, %v4411
  %v4416 = vand.u32 2147483647, %v4412
  %v4417 = vand.u32 2147483647, %v4413
  %v4418 = vand.u32 2147483647, %v4414
  %v4419 = vsub.f32 1.0, %v4415
  %v4420 = vsub.f32 1.0, %v4416
  %v4421 = vsub.f32 1.0, %v4417
  %v4422 = vsub.f32 1.0, %v4418
  %v4423 = vmax.f32 %v4419, 0.0
  %v4424 = vmax.f32 %v4420, 0.0
  %v4425 = vmax.f32 %v4421, 0.0
  %v4426 = vmax.f32 %v4422, 0.0
  %v4428 = vsel %vm2853, %v4377, 0
  %v4431 = vsel %vm2853, %v4378, 0
  %4433 = vmatprep.subr.mxu0 0.0
  %4434 = vmatpush1.msra.mxu0 0.0
  %4435 = vmatprep.subr.mxu0 0.0
  %4436 = vmatpush1.msra.mxu0 0.0
  %4437 = vmatprep.subr.mxu0 0.0
  %4438 = vmatpush1.msra.mxu0 0.0
  %4439 = vmatprep.subr.mxu0 0.0
  %4440 = vmatpush1.msra.mxu0 0.0
  %4441 = vmatprep.subr.mxu0 0.0
  %4442 = vmatpush1.msra.mxu0 0.0
  %4443 = vmatprep.subr.mxu0 0.0
  %4444 = vmatpush1.msra.mxu0 0.0
  %4445 = vmatprep.subr.mxu0 0.0
  %4446 = vmatpush1.msra.mxu0 0.0
  %4447 = vmatprep.subr.mxu0 0.0
  %4448 = vmatpush1.msra.mxu0 0.0
  %4449 = vmatprep.subr.mxu0 0.0
  %4450 = vmatpush1.msra.mxu0 0.0
  %4451 = vmatprep.subr.mxu0 0.0
  %4452 = vmatpush1.msra.mxu0 0.0
  %4453 = vmatprep.subr.mxu0 0.0
  %4454 = vmatpush1.msra.mxu0 0.0
  %4455 = vmatprep.subr.mxu0 0.0
  %4456 = vmatpush1.msra.mxu0 0.0
  %4457 = vmatprep.subr.mxu0 0.0
  %4458 = vmatpush1.msra.mxu0 0.0
  %4459 = vmatprep.subr.mxu0 0.0
  %4460 = vmatpush1.msra.mxu0 0.0
  %4461 = vmatprep.subr.mxu0 %v4402
  %4462 = vmatpush1.msra.mxu0 %v4401
  %4463 = vmatprep.subr.mxu0 %v4400
  %4464 = vmatpush1.msra.mxu0 %v4399
  %4465 = vmatprep.subr.mxu0 0.0
  %4466 = vmatpush2.msra.mxu0 0.0
  %4467 = vmatprep.subr.mxu0 0.0
  %4468 = vmatpush2.msra.mxu0 0.0
  %4469 = vmatprep.subr.mxu0 0.0
  %4470 = vmatpush2.msra.mxu0 0.0
  %4471 = vmatprep.subr.mxu0 0.0
  %4472 = vmatpush2.msra.mxu0 0.0
  %4473 = vmatprep.subr.mxu0 0.0
  %4474 = vmatpush2.msra.mxu0 0.0
  %4475 = vmatprep.subr.mxu0 0.0
  %4476 = vmatpush2.msra.mxu0 0.0
  %4477 = vmatprep.subr.mxu0 0.0
  %4478 = vmatpush2.msra.mxu0 0.0
  %4479 = vmatprep.subr.mxu0 0.0
  %4480 = vmatpush2.msra.mxu0 0.0
  %4481 = vmatprep.subr.mxu0 0.0
  %4482 = vmatpush2.msra.mxu0 0.0
  %4483 = vmatprep.subr.mxu0 0.0
  %4484 = vmatpush2.msra.mxu0 0.0
  %4485 = vmatprep.subr.mxu0 0.0
  %4486 = vmatpush2.msra.mxu0 0.0
  %4487 = vmatprep.subr.mxu0 0.0
  %4488 = vmatpush2.msra.mxu0 0.0
  %4489 = vmatprep.subr.mxu0 0.0
  %4490 = vmatpush2.msra.mxu0 0.0
  %4491 = vmatprep.subr.mxu0 0.0
  %4492 = vmatpush2.msra.mxu0 0.0
  %4493 = vmatprep.subr.mxu0 0.0
  %4494 = vmatpush2.msra.mxu0 0.0
  %4495 = vmatprep.subr.mxu0 0.0
  %4496 = vmatpush2.msra.mxu0 0.0
  %4497 = vmatprep.mubr.f32.mxu0 0.0
  %4498 = vmatmul.mubr.f32.gmra.mxu0 %v4428
  %v4499 = vpop.f32.mrf.mxu0
  %v4500 = vadd.f32 0.0, %v4499
  %v4501 = vpop.f32.mrf.mxu0
  %v4502 = vadd.f32 0.0, %v4501
  %4503 = vmatprep.mubr.f32.mxu0 0.0
  %4504 = vmatmul.mubr.f32.gmra.mxu0 %v4431
  %v4505 = vpop.f32.mrf.mxu0
  %v4506 = vadd.f32 0.0, %v4505
  %v4507 = vpop.f32.mrf.mxu0
  %v4508 = vadd.f32 0.0, %v4507
  %4509 = vdwg.mxu0
  %v4510 = vmul.f32 %v4423, %v4500
  %v4511 = vmul.f32 %v4424, %v4502
  %v4512 = vmul.f32 %v4425, %v4506
  %v4513 = vmul.f32 %v4426, %v4508
  %v4514 = vadd.f32 %v4510, %v4512
  %v4515 = vrot.slane %v4514, 4
  %v4516 = vadd.f32 %v4514, %v4515
  %v4517 = vrot.slane %v4516, 2
  %v4518 = vadd.f32 %v4516, %v4517
  %v4519 = vrot.slane %v4518, 1
  %v4520 = vadd.f32 %v4518, %v4519
  %v4521 = vadd.f32 %v4511, %v4513
  %v4522 = vrot.slane %v4521, 4
  %v4523 = vadd.f32 %v4521, %v4522
  %v4524 = vrot.slane %v4523, 2
  %v4525 = vadd.f32 %v4523, %v4524
  %v4526 = vrot.slane %v4525, 1
  %v4527 = vadd.f32 %v4525, %v4526
  %v4530 = vcombine.low %v4520, %v4527
  %v4532 = vunpack.c.l.s4 1966171168
  %v4533 = vunpack.c.0.s8 %v4532
  %v4534 = vlaneseq
  %v4535 = vshrl.u32 %v4534, 7
  %v4536 = vsub.s32 %v4533, %v4535
  %v4537 = vrot.slane %v4530, %v4536
  %v4539 = vunpack.c.l.s4 1966171168
  %v4540 = vunpack.c.0.s8 %v4539
  %v4541 = vlaneseq
  %v4542 = vshrl.u32 %v4541, 7
  %v4543 = vsub.s32 %v4540, %v4542
  %v4544 = vrot.slane %v4537, %v4543
  %s4546 = scalar_lea.vmem %s10, 1
  %4547 = vst.msk [vmem:[%s4546] ss:$2 sm:$0x3] %vm2976, %v4544
  %v4548 = vld [vmem:[%s6] sm:$0xff]
  %v4549 = vld [vmem:[%s6 + $0x8] sm:$0xff]
  %v4550 = vlaneseq
  %v4551 = vshrl.u32 %v4550, 7
  %v4552 = vsub.s32 1, %v4551
  %v4553 = vrot.slane %v2394, %v4552
  %v4554 = vlaneseq
  %v4555 = vshrl.u32 %v4554, 7
  %v4556 = vsub.s32 1, %v4555
  %v4557 = vrot.slane %v2395, %v4556
  %v4558 = vsub.f32 %v4553, %v173
  %v4559 = vsub.f32 %v4557, %v173
  %v4560 = vsub.f32 %v4553, %v174
  %v4561 = vsub.f32 %v4557, %v174
  %v4562 = vand.u32 2147483647, %v4558
  %v4563 = vand.u32 2147483647, %v4559
  %v4564 = vand.u32 2147483647, %v4560
  %v4565 = vand.u32 2147483647, %v4561
  %v4566 = vsub.f32 1.0, %v4562
  %v4567 = vsub.f32 1.0, %v4563
  %v4568 = vsub.f32 1.0, %v4564
  %v4569 = vsub.f32 1.0, %v4565
  %v4570 = vmax.f32 %v4566, 0.0
  %v4571 = vmax.f32 %v4567, 0.0
  %v4572 = vmax.f32 %v4568, 0.0
  %v4573 = vmax.f32 %v4569, 0.0
  %v4574 = vlaneseq
  %v4575 = vshrl.u32 %v4574, 7
  %v4576 = vsub.s32 1, %v4575
  %v4577 = vrot.slane %v2458, %v4576
  %v4578 = vlaneseq
  %v4579 = vshrl.u32 %v4578, 7
  %v4580 = vsub.s32 1, %v4579
  %v4581 = vrot.slane %v2459, %v4580
  %v4582 = vsub.f32 %v4577, %v173
  %v4583 = vsub.f32 %v4581, %v173
  %v4584 = vsub.f32 %v4577, %v174
  %v4585 = vsub.f32 %v4581, %v174
  %v4586 = vand.u32 2147483647, %v4582
  %v4587 = vand.u32 2147483647, %v4583
  %v4588 = vand.u32 2147483647, %v4584
  %v4589 = vand.u32 2147483647, %v4585
  %v4590 = vsub.f32 1.0, %v4586
  %v4591 = vsub.f32 1.0, %v4587
  %v4592 = vsub.f32 1.0, %v4588
  %v4593 = vsub.f32 1.0, %v4589
  %v4594 = vmax.f32 %v4590, 0.0
  %v4595 = vmax.f32 %v4591, 0.0
  %v4596 = vmax.f32 %v4592, 0.0
  %v4597 = vmax.f32 %v4593, 0.0
  %v4599 = vsel %vm2853, %v4548, 0
  %v4602 = vsel %vm2853, %v4549, 0
  %4604 = vmatprep.subr.mxu0 0.0
  %4605 = vmatpush1.msra.mxu0 0.0
  %4606 = vmatprep.subr.mxu0 0.0
  %4607 = vmatpush1.msra.mxu0 0.0
  %4608 = vmatprep.subr.mxu0 0.0
  %4609 = vmatpush1.msra.mxu0 0.0
  %4610 = vmatprep.subr.mxu0 0.0
  %4611 = vmatpush1.msra.mxu0 0.0
  %4612 = vmatprep.subr.mxu0 0.0
  %4613 = vmatpush1.msra.mxu0 0.0
  %4614 = vmatprep.subr.mxu0 0.0
  %4615 = vmatpush1.msra.mxu0 0.0
  %4616 = vmatprep.subr.mxu0 0.0
  %4617 = vmatpush1.msra.mxu0 0.0
  %4618 = vmatprep.subr.mxu0 0.0
  %4619 = vmatpush1.msra.mxu0 0.0
  %4620 = vmatprep.subr.mxu0 0.0
  %4621 = vmatpush1.msra.mxu0 0.0
  %4622 = vmatprep.subr.mxu0 0.0
  %4623 = vmatpush1.msra.mxu0 0.0
  %4624 = vmatprep.subr.mxu0 0.0
  %4625 = vmatpush1.msra.mxu0 0.0
  %4626 = vmatprep.subr.mxu0 0.0
  %4627 = vmatpush1.msra.mxu0 0.0
  %4628 = vmatprep.subr.mxu0 0.0
  %4629 = vmatpush1.msra.mxu0 0.0
  %4630 = vmatprep.subr.mxu0 0.0
  %4631 = vmatpush1.msra.mxu0 0.0
  %4632 = vmatprep.subr.mxu0 %v4573
  %4633 = vmatpush1.msra.mxu0 %v4572
  %4634 = vmatprep.subr.mxu0 %v4571
  %4635 = vmatpush1.msra.mxu0 %v4570
  %4636 = vmatprep.subr.mxu0 0.0
  %4637 = vmatpush2.msra.mxu0 0.0
  %4638 = vmatprep.subr.mxu0 0.0
  %4639 = vmatpush2.msra.mxu0 0.0
  %4640 = vmatprep.subr.mxu0 0.0
  %4641 = vmatpush2.msra.mxu0 0.0
  %4642 = vmatprep.subr.mxu0 0.0
  %4643 = vmatpush2.msra.mxu0 0.0
  %4644 = vmatprep.subr.mxu0 0.0
  %4645 = vmatpush2.msra.mxu0 0.0
  %4646 = vmatprep.subr.mxu0 0.0
  %4647 = vmatpush2.msra.mxu0 0.0
  %4648 = vmatprep.subr.mxu0 0.0
  %4649 = vmatpush2.msra.mxu0 0.0
  %4650 = vmatprep.subr.mxu0 0.0
  %4651 = vmatpush2.msra.mxu0 0.0
  %4652 = vmatprep.subr.mxu0 0.0
  %4653 = vmatpush2.msra.mxu0 0.0
  %4654 = vmatprep.subr.mxu0 0.0
  %4655 = vmatpush2.msra.mxu0 0.0
  %4656 = vmatprep.subr.mxu0 0.0
  %4657 = vmatpush2.msra.mxu0 0.0
  %4658 = vmatprep.subr.mxu0 0.0
  %4659 = vmatpush2.msra.mxu0 0.0
  %4660 = vmatprep.subr.mxu0 0.0
  %4661 = vmatpush2.msra.mxu0 0.0
  %4662 = vmatprep.subr.mxu0 0.0
  %4663 = vmatpush2.msra.mxu0 0.0
  %4664 = vmatprep.subr.mxu0 0.0
  %4665 = vmatpush2.msra.mxu0 0.0
  %4666 = vmatprep.subr.mxu0 0.0
  %4667 = vmatpush2.msra.mxu0 0.0
  %4668 = vmatprep.mubr.f32.mxu0 0.0
  %4669 = vmatmul.mubr.f32.gmra.mxu0 %v4599
  %v4670 = vpop.f32.mrf.mxu0
  %v4671 = vadd.f32 0.0, %v4670
  %v4672 = vpop.f32.mrf.mxu0
  %v4673 = vadd.f32 0.0, %v4672
  %4674 = vmatprep.mubr.f32.mxu0 0.0
  %4675 = vmatmul.mubr.f32.gmra.mxu0 %v4602
  %v4676 = vpop.f32.mrf.mxu0
  %v4677 = vadd.f32 0.0, %v4676
  %v4678 = vpop.f32.mrf.mxu0
  %v4679 = vadd.f32 0.0, %v4678
  %4680 = vdwg.mxu0
  %v4681 = vmul.f32 %v4594, %v4671
  %v4682 = vmul.f32 %v4595, %v4673
  %v4683 = vmul.f32 %v4596, %v4677
  %v4684 = vmul.f32 %v4597, %v4679
  %v4685 = vadd.f32 %v4681, %v4683
  %v4686 = vrot.slane %v4685, 4
  %v4687 = vadd.f32 %v4685, %v4686
  %v4688 = vrot.slane %v4687, 2
  %v4689 = vadd.f32 %v4687, %v4688
  %v4690 = vrot.slane %v4689, 1
  %v4691 = vadd.f32 %v4689, %v4690
  %v4692 = vadd.f32 %v4682, %v4684
  %v4693 = vrot.slane %v4692, 4
  %v4694 = vadd.f32 %v4692, %v4693
  %v4695 = vrot.slane %v4694, 2
  %v4696 = vadd.f32 %v4694, %v4695
  %v4697 = vrot.slane %v4696, 1
  %v4698 = vadd.f32 %v4696, %v4697
  %v4699 = vmul.f32 %v4691, %v4520
  %v4700 = vmul.f32 %v4698, %v4527
  %s4701 = scalar_lea.vmem %s7, 80
  %v4702 = vld [vmem:[%s4701] sm:$0xff]
  %v4703 = vld [vmem:[%s4701 + $0x8] sm:$0xff]
  %v4704 = vlaneseq
  %v4705 = vshrl.u32 %v4704, 7
  %v4706 = vsub.s32 1, %v4705
  %v4707 = vrot.slane %v2500, %v4706
  %v4708 = vlaneseq
  %v4709 = vshrl.u32 %v4708, 7
  %v4710 = vsub.s32 1, %v4709
  %v4711 = vrot.slane %v2501, %v4710
  %v4712 = vsub.f32 %v4707, %v173
  %v4713 = vsub.f32 %v4711, %v173
  %v4714 = vsub.f32 %v4707, %v174
  %v4715 = vsub.f32 %v4711, %v174
  %v4716 = vand.u32 2147483647, %v4712
  %v4717 = vand.u32 2147483647, %v4713
  %v4718 = vand.u32 2147483647, %v4714
  %v4719 = vand.u32 2147483647, %v4715
  %v4720 = vsub.f32 1.0, %v4716
  %v4721 = vsub.f32 1.0, %v4717
  %v4722 = vsub.f32 1.0, %v4718
  %v4723 = vsub.f32 1.0, %v4719
  %v4724 = vmax.f32 %v4720, 0.0
  %v4725 = vmax.f32 %v4721, 0.0
  %v4726 = vmax.f32 %v4722, 0.0
  %v4727 = vmax.f32 %v4723, 0.0
  %v4728 = vlaneseq
  %v4729 = vshrl.u32 %v4728, 7
  %v4730 = vsub.s32 1, %v4729
  %v4731 = vrot.slane %v2540, %v4730
  %v4732 = vlaneseq
  %v4733 = vshrl.u32 %v4732, 7
  %v4734 = vsub.s32 1, %v4733
  %v4735 = vrot.slane %v2541, %v4734
  %v4736 = vsub.f32 %v4731, %v173
  %v4737 = vsub.f32 %v4735, %v173
  %v4738 = vsub.f32 %v4731, %v174
  %v4739 = vsub.f32 %v4735, %v174
  %v4740 = vand.u32 2147483647, %v4736
  %v4741 = vand.u32 2147483647, %v4737
  %v4742 = vand.u32 2147483647, %v4738
  %v4743 = vand.u32 2147483647, %v4739
  %v4744 = vsub.f32 1.0, %v4740
  %v4745 = vsub.f32 1.0, %v4741
  %v4746 = vsub.f32 1.0, %v4742
  %v4747 = vsub.f32 1.0, %v4743
  %v4748 = vmax.f32 %v4744, 0.0
  %v4749 = vmax.f32 %v4745, 0.0
  %v4750 = vmax.f32 %v4746, 0.0
  %v4751 = vmax.f32 %v4747, 0.0
  %v4753 = vsel %vm2853, %v4702, 0
  %v4756 = vsel %vm2853, %v4703, 0
  %4758 = vmatprep.subr.mxu0 0.0
  %4759 = vmatpush1.msra.mxu0 0.0
  %4760 = vmatprep.subr.mxu0 0.0
  %4761 = vmatpush1.msra.mxu0 0.0
  %4762 = vmatprep.subr.mxu0 0.0
  %4763 = vmatpush1.msra.mxu0 0.0
  %4764 = vmatprep.subr.mxu0 0.0
  %4765 = vmatpush1.msra.mxu0 0.0
  %4766 = vmatprep.subr.mxu0 0.0
  %4767 = vmatpush1.msra.mxu0 0.0
  %4768 = vmatprep.subr.mxu0 0.0
  %4769 = vmatpush1.msra.mxu0 0.0
  %4770 = vmatprep.subr.mxu0 0.0
  %4771 = vmatpush1.msra.mxu0 0.0
  %4772 = vmatprep.subr.mxu0 0.0
  %4773 = vmatpush1.msra.mxu0 0.0
  %4774 = vmatprep.subr.mxu0 0.0
  %4775 = vmatpush1.msra.mxu0 0.0
  %4776 = vmatprep.subr.mxu0 0.0
  %4777 = vmatpush1.msra.mxu0 0.0
  %4778 = vmatprep.subr.mxu0 0.0
  %4779 = vmatpush1.msra.mxu0 0.0
  %4780 = vmatprep.subr.mxu0 0.0
  %4781 = vmatpush1.msra.mxu0 0.0
  %4782 = vmatprep.subr.mxu0 0.0
  %4783 = vmatpush1.msra.mxu0 0.0
  %4784 = vmatprep.subr.mxu0 0.0
  %4785 = vmatpush1.msra.mxu0 0.0
  %4786 = vmatprep.subr.mxu0 %v4727
  %4787 = vmatpush1.msra.mxu0 %v4726
  %4788 = vmatprep.subr.mxu0 %v4725
  %4789 = vmatpush1.msra.mxu0 %v4724
  %4790 = vmatprep.subr.mxu0 0.0
  %4791 = vmatpush2.msra.mxu0 0.0
  %4792 = vmatprep.subr.mxu0 0.0
  %4793 = vmatpush2.msra.mxu0 0.0
  %4794 = vmatprep.subr.mxu0 0.0
  %4795 = vmatpush2.msra.mxu0 0.0
  %4796 = vmatprep.subr.mxu0 0.0
  %4797 = vmatpush2.msra.mxu0 0.0
  %4798 = vmatprep.subr.mxu0 0.0
  %4799 = vmatpush2.msra.mxu0 0.0
  %4800 = vmatprep.subr.mxu0 0.0
  %4801 = vmatpush2.msra.mxu0 0.0
  %4802 = vmatprep.subr.mxu0 0.0
  %4803 = vmatpush2.msra.mxu0 0.0
  %4804 = vmatprep.subr.mxu0 0.0
  %4805 = vmatpush2.msra.mxu0 0.0
  %4806 = vmatprep.subr.mxu0 0.0
  %4807 = vmatpush2.msra.mxu0 0.0
  %4808 = vmatprep.subr.mxu0 0.0
  %4809 = vmatpush2.msra.mxu0 0.0
  %4810 = vmatprep.subr.mxu0 0.0
  %4811 = vmatpush2.msra.mxu0 0.0
  %4812 = vmatprep.subr.mxu0 0.0
  %4813 = vmatpush2.msra.mxu0 0.0
  %4814 = vmatprep.subr.mxu0 0.0
  %4815 = vmatpush2.msra.mxu0 0.0
  %4816 = vmatprep.subr.mxu0 0.0
  %4817 = vmatpush2.msra.mxu0 0.0
  %4818 = vmatprep.subr.mxu0 0.0
  %4819 = vmatpush2.msra.mxu0 0.0
  %4820 = vmatprep.subr.mxu0 0.0
  %4821 = vmatpush2.msra.mxu0 0.0
  %4822 = vmatprep.mubr.f32.mxu0 0.0
  %4823 = vmatmul.mubr.f32.gmra.mxu0 %v4753
  %v4824 = vpop.f32.mrf.mxu0
  %v4825 = vadd.f32 0.0, %v4824
  %v4826 = vpop.f32.mrf.mxu0
  %v4827 = vadd.f32 0.0, %v4826
  %4828 = vmatprep.mubr.f32.mxu0 0.0
  %4829 = vmatmul.mubr.f32.gmra.mxu0 %v4756
  %v4830 = vpop.f32.mrf.mxu0
  %v4831 = vadd.f32 0.0, %v4830
  %v4832 = vpop.f32.mrf.mxu0
  %v4833 = vadd.f32 0.0, %v4832
  %4834 = vdwg.mxu0
  %v4835 = vmul.f32 %v4748, %v4825
  %v4836 = vmul.f32 %v4749, %v4827
  %v4837 = vmul.f32 %v4750, %v4831
  %v4838 = vmul.f32 %v4751, %v4833
  %v4839 = vadd.f32 %v4835, %v4837
  %v4840 = vrot.slane %v4839, 4
  %v4841 = vadd.f32 %v4839, %v4840
  %v4842 = vrot.slane %v4841, 2
  %v4843 = vadd.f32 %v4841, %v4842
  %v4844 = vrot.slane %v4843, 1
  %v4845 = vadd.f32 %v4843, %v4844
  %v4846 = vadd.f32 %v4836, %v4838
  %v4847 = vrot.slane %v4846, 4
  %v4848 = vadd.f32 %v4846, %v4847
  %v4849 = vrot.slane %v4848, 2
  %v4850 = vadd.f32 %v4848, %v4849
  %v4851 = vrot.slane %v4850, 1
  %v4852 = vadd.f32 %v4850, %v4851
  %v4855 = vcombine.low %v4845, %v4852
  %v4857 = vunpack.c.l.s4 1966171168
  %v4858 = vunpack.c.0.s8 %v4857
  %v4859 = vlaneseq
  %v4860 = vshrl.u32 %v4859, 7
  %v4861 = vsub.s32 %v4858, %v4860
  %v4862 = vrot.slane %v4855, %v4861
  %v4864 = vunpack.c.l.s4 1966171168
  %v4865 = vunpack.c.0.s8 %v4864
  %v4866 = vlaneseq
  %v4867 = vshrl.u32 %v4866, 7
  %v4868 = vsub.s32 %v4865, %v4867
  %v4869 = vrot.slane %v4862, %v4868
  %s4871 = scalar_lea.vmem %s10, 5
  %4872 = vst.msk [vmem:[%s4871] ss:$2 sm:$0x3] %vm2976, %v4869
  %v4873 = vld [vmem:[%s3303] sm:$0xff]
  %v4874 = vld [vmem:[%s3303 + $0x8] sm:$0xff]
  %v4875 = vlaneseq
  %v4876 = vshrl.u32 %v4875, 7
  %v4877 = vsub.s32 1, %v4876
  %v4878 = vrot.slane %v2396, %v4877
  %v4879 = vlaneseq
  %v4880 = vshrl.u32 %v4879, 7
  %v4881 = vsub.s32 1, %v4880
  %v4882 = vrot.slane %v2397, %v4881
  %v4883 = vsub.f32 %v4878, %v173
  %v4884 = vsub.f32 %v4882, %v173
  %v4885 = vsub.f32 %v4878, %v174
  %v4886 = vsub.f32 %v4882, %v174
  %v4887 = vand.u32 2147483647, %v4883
  %v4888 = vand.u32 2147483647, %v4884
  %v4889 = vand.u32 2147483647, %v4885
  %v4890 = vand.u32 2147483647, %v4886
  %v4891 = vsub.f32 1.0, %v4887
  %v4892 = vsub.f32 1.0, %v4888
  %v4893 = vsub.f32 1.0, %v4889
  %v4894 = vsub.f32 1.0, %v4890
  %v4895 = vmax.f32 %v4891, 0.0
  %v4896 = vmax.f32 %v4892, 0.0
  %v4897 = vmax.f32 %v4893, 0.0
  %v4898 = vmax.f32 %v4894, 0.0
  %v4899 = vlaneseq
  %v4900 = vshrl.u32 %v4899, 7
  %v4901 = vsub.s32 1, %v4900
  %v4902 = vrot.slane %v2460, %v4901
  %v4903 = vlaneseq
  %v4904 = vshrl.u32 %v4903, 7
  %v4905 = vsub.s32 1, %v4904
  %v4906 = vrot.slane %v2461, %v4905
  %v4907 = vsub.f32 %v4902, %v173
  %v4908 = vsub.f32 %v4906, %v173
  %v4909 = vsub.f32 %v4902, %v174
  %v4910 = vsub.f32 %v4906, %v174
  %v4911 = vand.u32 2147483647, %v4907
  %v4912 = vand.u32 2147483647, %v4908
  %v4913 = vand.u32 2147483647, %v4909
  %v4914 = vand.u32 2147483647, %v4910
  %v4915 = vsub.f32 1.0, %v4911
  %v4916 = vsub.f32 1.0, %v4912
  %v4917 = vsub.f32 1.0, %v4913
  %v4918 = vsub.f32 1.0, %v4914
  %v4919 = vmax.f32 %v4915, 0.0
  %v4920 = vmax.f32 %v4916, 0.0
  %v4921 = vmax.f32 %v4917, 0.0
  %v4922 = vmax.f32 %v4918, 0.0
  %v4924 = vsel %vm2853, %v4873, 0
  %v4927 = vsel %vm2853, %v4874, 0
  %4929 = vmatprep.subr.mxu0 0.0
  %4930 = vmatpush1.msra.mxu0 0.0
  %4931 = vmatprep.subr.mxu0 0.0
  %4932 = vmatpush1.msra.mxu0 0.0
  %4933 = vmatprep.subr.mxu0 0.0
  %4934 = vmatpush1.msra.mxu0 0.0
  %4935 = vmatprep.subr.mxu0 0.0
  %4936 = vmatpush1.msra.mxu0 0.0
  %4937 = vmatprep.subr.mxu0 0.0
  %4938 = vmatpush1.msra.mxu0 0.0
  %4939 = vmatprep.subr.mxu0 0.0
  %4940 = vmatpush1.msra.mxu0 0.0
  %4941 = vmatprep.subr.mxu0 0.0
  %4942 = vmatpush1.msra.mxu0 0.0
  %4943 = vmatprep.subr.mxu0 0.0
  %4944 = vmatpush1.msra.mxu0 0.0
  %4945 = vmatprep.subr.mxu0 0.0
  %4946 = vmatpush1.msra.mxu0 0.0
  %4947 = vmatprep.subr.mxu0 0.0
  %4948 = vmatpush1.msra.mxu0 0.0
  %4949 = vmatprep.subr.mxu0 0.0
  %4950 = vmatpush1.msra.mxu0 0.0
  %4951 = vmatprep.subr.mxu0 0.0
  %4952 = vmatpush1.msra.mxu0 0.0
  %4953 = vmatprep.subr.mxu0 0.0
  %4954 = vmatpush1.msra.mxu0 0.0
  %4955 = vmatprep.subr.mxu0 0.0
  %4956 = vmatpush1.msra.mxu0 0.0
  %4957 = vmatprep.subr.mxu0 %v4898
  %4958 = vmatpush1.msra.mxu0 %v4897
  %4959 = vmatprep.subr.mxu0 %v4896
  %4960 = vmatpush1.msra.mxu0 %v4895
  %4961 = vmatprep.subr.mxu0 0.0
  %4962 = vmatpush2.msra.mxu0 0.0
  %4963 = vmatprep.subr.mxu0 0.0
  %4964 = vmatpush2.msra.mxu0 0.0
  %4965 = vmatprep.subr.mxu0 0.0
  %4966 = vmatpush2.msra.mxu0 0.0
  %4967 = vmatprep.subr.mxu0 0.0
  %4968 = vmatpush2.msra.mxu0 0.0
  %4969 = vmatprep.subr.mxu0 0.0
  %4970 = vmatpush2.msra.mxu0 0.0
  %4971 = vmatprep.subr.mxu0 0.0
  %4972 = vmatpush2.msra.mxu0 0.0
  %4973 = vmatprep.subr.mxu0 0.0
  %4974 = vmatpush2.msra.mxu0 0.0
  %4975 = vmatprep.subr.mxu0 0.0
  %4976 = vmatpush2.msra.mxu0 0.0
  %4977 = vmatprep.subr.mxu0 0.0
  %4978 = vmatpush2.msra.mxu0 0.0
  %4979 = vmatprep.subr.mxu0 0.0
  %4980 = vmatpush2.msra.mxu0 0.0
  %4981 = vmatprep.subr.mxu0 0.0
  %4982 = vmatpush2.msra.mxu0 0.0
  %4983 = vmatprep.subr.mxu0 0.0
  %4984 = vmatpush2.msra.mxu0 0.0
  %4985 = vmatprep.subr.mxu0 0.0
  %4986 = vmatpush2.msra.mxu0 0.0
  %4987 = vmatprep.subr.mxu0 0.0
  %4988 = vmatpush2.msra.mxu0 0.0
  %4989 = vmatprep.subr.mxu0 0.0
  %4990 = vmatpush2.msra.mxu0 0.0
  %4991 = vmatprep.subr.mxu0 0.0
  %4992 = vmatpush2.msra.mxu0 0.0
  %4993 = vmatprep.mubr.f32.mxu0 0.0
  %4994 = vmatmul.mubr.f32.gmra.mxu0 %v4924
  %v4995 = vpop.f32.mrf.mxu0
  %v4996 = vadd.f32 0.0, %v4995
  %v4997 = vpop.f32.mrf.mxu0
  %v4998 = vadd.f32 0.0, %v4997
  %4999 = vmatprep.mubr.f32.mxu0 0.0
  %5000 = vmatmul.mubr.f32.gmra.mxu0 %v4927
  %v5001 = vpop.f32.mrf.mxu0
  %v5002 = vadd.f32 0.0, %v5001
  %v5003 = vpop.f32.mrf.mxu0
  %v5004 = vadd.f32 0.0, %v5003
  %5005 = vdwg.mxu0
  %v5006 = vmul.f32 %v4919, %v4996
  %v5007 = vmul.f32 %v4920, %v4998
  %v5008 = vmul.f32 %v4921, %v5002
  %v5009 = vmul.f32 %v4922, %v5004
  %v5010 = vadd.f32 %v5006, %v5008
  %v5011 = vrot.slane %v5010, 4
  %v5012 = vadd.f32 %v5010, %v5011
  %v5013 = vrot.slane %v5012, 2
  %v5014 = vadd.f32 %v5012, %v5013
  %v5015 = vrot.slane %v5014, 1
  %v5016 = vadd.f32 %v5014, %v5015
  %v5017 = vadd.f32 %v5007, %v5009
  %v5018 = vrot.slane %v5017, 4
  %v5019 = vadd.f32 %v5017, %v5018
  %v5020 = vrot.slane %v5019, 2
  %v5021 = vadd.f32 %v5019, %v5020
  %v5022 = vrot.slane %v5021, 1
  %v5023 = vadd.f32 %v5021, %v5022
  %v5024 = vmul.f32 %v5016, %v4845
  %v5025 = vmul.f32 %v5023, %v4852
  %v5026 = vadd.f32 %v4699, %v5024
  %v5027 = vadd.f32 %v4700, %v5025
  %v5028 = vadd.f32 %v4520, %v4845
  %v5029 = vadd.f32 %v4527, %v4852
  %s5030 = scalar_lea.vmem %s7, 96
  %v5031 = vld [vmem:[%s5030] sm:$0xff]
  %v5032 = vld [vmem:[%s5030 + $0x8] sm:$0xff]
  %v5033 = vlaneseq
  %v5034 = vshrl.u32 %v5033, 7
  %v5035 = vsub.s32 1, %v5034
  %v5036 = vrot.slane %v2502, %v5035
  %v5037 = vlaneseq
  %v5038 = vshrl.u32 %v5037, 7
  %v5039 = vsub.s32 1, %v5038
  %v5040 = vrot.slane %v2503, %v5039
  %v5041 = vsub.f32 %v5036, %v173
  %v5042 = vsub.f32 %v5040, %v173
  %v5043 = vsub.f32 %v5036, %v174
  %v5044 = vsub.f32 %v5040, %v174
  %v5045 = vand.u32 2147483647, %v5041
  %v5046 = vand.u32 2147483647, %v5042
  %v5047 = vand.u32 2147483647, %v5043
  %v5048 = vand.u32 2147483647, %v5044
  %v5049 = vsub.f32 1.0, %v5045
  %v5050 = vsub.f32 1.0, %v5046
  %v5051 = vsub.f32 1.0, %v5047
  %v5052 = vsub.f32 1.0, %v5048
  %v5053 = vmax.f32 %v5049, 0.0
  %v5054 = vmax.f32 %v5050, 0.0
  %v5055 = vmax.f32 %v5051, 0.0
  %v5056 = vmax.f32 %v5052, 0.0
  %v5057 = vlaneseq
  %v5058 = vshrl.u32 %v5057, 7
  %v5059 = vsub.s32 1, %v5058
  %v5060 = vrot.slane %v2542, %v5059
  %v5061 = vlaneseq
  %v5062 = vshrl.u32 %v5061, 7
  %v5063 = vsub.s32 1, %v5062
  %v5064 = vrot.slane %v2543, %v5063
  %v5065 = vsub.f32 %v5060, %v173
  %v5066 = vsub.f32 %v5064, %v173
  %v5067 = vsub.f32 %v5060, %v174
  %v5068 = vsub.f32 %v5064, %v174
  %v5069 = vand.u32 2147483647, %v5065
  %v5070 = vand.u32 2147483647, %v5066
  %v5071 = vand.u32 2147483647, %v5067
  %v5072 = vand.u32 2147483647, %v5068
  %v5073 = vsub.f32 1.0, %v5069
  %v5074 = vsub.f32 1.0, %v5070
  %v5075 = vsub.f32 1.0, %v5071
  %v5076 = vsub.f32 1.0, %v5072
  %v5077 = vmax.f32 %v5073, 0.0
  %v5078 = vmax.f32 %v5074, 0.0
  %v5079 = vmax.f32 %v5075, 0.0
  %v5080 = vmax.f32 %v5076, 0.0
  %v5082 = vsel %vm2853, %v5031, 0
  %v5085 = vsel %vm2853, %v5032, 0
  %5087 = vmatprep.subr.mxu0 0.0
  %5088 = vmatpush1.msra.mxu0 0.0
  %5089 = vmatprep.subr.mxu0 0.0
  %5090 = vmatpush1.msra.mxu0 0.0
  %5091 = vmatprep.subr.mxu0 0.0
  %5092 = vmatpush1.msra.mxu0 0.0
  %5093 = vmatprep.subr.mxu0 0.0
  %5094 = vmatpush1.msra.mxu0 0.0
  %5095 = vmatprep.subr.mxu0 0.0
  %5096 = vmatpush1.msra.mxu0 0.0
  %5097 = vmatprep.subr.mxu0 0.0
  %5098 = vmatpush1.msra.mxu0 0.0
  %5099 = vmatprep.subr.mxu0 0.0
  %5100 = vmatpush1.msra.mxu0 0.0
  %5101 = vmatprep.subr.mxu0 0.0
  %5102 = vmatpush1.msra.mxu0 0.0
  %5103 = vmatprep.subr.mxu0 0.0
  %5104 = vmatpush1.msra.mxu0 0.0
  %5105 = vmatprep.subr.mxu0 0.0
  %5106 = vmatpush1.msra.mxu0 0.0
  %5107 = vmatprep.subr.mxu0 0.0
  %5108 = vmatpush1.msra.mxu0 0.0
  %5109 = vmatprep.subr.mxu0 0.0
  %5110 = vmatpush1.msra.mxu0 0.0
  %5111 = vmatprep.subr.mxu0 0.0
  %5112 = vmatpush1.msra.mxu0 0.0
  %5113 = vmatprep.subr.mxu0 0.0
  %5114 = vmatpush1.msra.mxu0 0.0
  %5115 = vmatprep.subr.mxu0 %v5056
  %5116 = vmatpush1.msra.mxu0 %v5055
  %5117 = vmatprep.subr.mxu0 %v5054
  %5118 = vmatpush1.msra.mxu0 %v5053
  %5119 = vmatprep.subr.mxu0 0.0
  %5120 = vmatpush2.msra.mxu0 0.0
  %5121 = vmatprep.subr.mxu0 0.0
  %5122 = vmatpush2.msra.mxu0 0.0
  %5123 = vmatprep.subr.mxu0 0.0
  %5124 = vmatpush2.msra.mxu0 0.0
  %5125 = vmatprep.subr.mxu0 0.0
  %5126 = vmatpush2.msra.mxu0 0.0
  %5127 = vmatprep.subr.mxu0 0.0
  %5128 = vmatpush2.msra.mxu0 0.0
  %5129 = vmatprep.subr.mxu0 0.0
  %5130 = vmatpush2.msra.mxu0 0.0
  %5131 = vmatprep.subr.mxu0 0.0
  %5132 = vmatpush2.msra.mxu0 0.0
  %5133 = vmatprep.subr.mxu0 0.0
  %5134 = vmatpush2.msra.mxu0 0.0
  %5135 = vmatprep.subr.mxu0 0.0
  %5136 = vmatpush2.msra.mxu0 0.0
  %5137 = vmatprep.subr.mxu0 0.0
  %5138 = vmatpush2.msra.mxu0 0.0
  %5139 = vmatprep.subr.mxu0 0.0
  %5140 = vmatpush2.msra.mxu0 0.0
  %5141 = vmatprep.subr.mxu0 0.0
  %5142 = vmatpush2.msra.mxu0 0.0
  %5143 = vmatprep.subr.mxu0 0.0
  %5144 = vmatpush2.msra.mxu0 0.0
  %5145 = vmatprep.subr.mxu0 0.0
  %5146 = vmatpush2.msra.mxu0 0.0
  %5147 = vmatprep.subr.mxu0 0.0
  %5148 = vmatpush2.msra.mxu0 0.0
  %5149 = vmatprep.subr.mxu0 0.0
  %5150 = vmatpush2.msra.mxu0 0.0
  %5151 = vmatprep.mubr.f32.mxu0 0.0
  %5152 = vmatmul.mubr.f32.gmra.mxu0 %v5082
  %v5153 = vpop.f32.mrf.mxu0
  %v5154 = vadd.f32 0.0, %v5153
  %v5155 = vpop.f32.mrf.mxu0
  %v5156 = vadd.f32 0.0, %v5155
  %5157 = vmatprep.mubr.f32.mxu0 0.0
  %5158 = vmatmul.mubr.f32.gmra.mxu0 %v5085
  %v5159 = vpop.f32.mrf.mxu0
  %v5160 = vadd.f32 0.0, %v5159
  %v5161 = vpop.f32.mrf.mxu0
  %v5162 = vadd.f32 0.0, %v5161
  %5163 = vdwg.mxu0
  %v5164 = vmul.f32 %v5077, %v5154
  %v5165 = vmul.f32 %v5078, %v5156
  %v5166 = vmul.f32 %v5079, %v5160
  %v5167 = vmul.f32 %v5080, %v5162
  %v5168 = vadd.f32 %v5164, %v5166
  %v5169 = vrot.slane %v5168, 4
  %v5170 = vadd.f32 %v5168, %v5169
  %v5171 = vrot.slane %v5170, 2
  %v5172 = vadd.f32 %v5170, %v5171
  %v5173 = vrot.slane %v5172, 1
  %v5174 = vadd.f32 %v5172, %v5173
  %v5175 = vadd.f32 %v5165, %v5167
  %v5176 = vrot.slane %v5175, 4
  %v5177 = vadd.f32 %v5175, %v5176
  %v5178 = vrot.slane %v5177, 2
  %v5179 = vadd.f32 %v5177, %v5178
  %v5180 = vrot.slane %v5179, 1
  %v5181 = vadd.f32 %v5179, %v5180
  %v5184 = vcombine.low %v5174, %v5181
  %v5186 = vunpack.c.l.s4 1966171168
  %v5187 = vunpack.c.0.s8 %v5186
  %v5188 = vlaneseq
  %v5189 = vshrl.u32 %v5188, 7
  %v5190 = vsub.s32 %v5187, %v5189
  %v5191 = vrot.slane %v5184, %v5190
  %v5193 = vunpack.c.l.s4 1966171168
  %v5194 = vunpack.c.0.s8 %v5193
  %v5195 = vlaneseq
  %v5196 = vshrl.u32 %v5195, 7
  %v5197 = vsub.s32 %v5194, %v5196
  %v5198 = vrot.slane %v5191, %v5197
  %s5200 = scalar_lea.vmem %s10, 9
  %5201 = vst.msk [vmem:[%s5200] ss:$2 sm:$0x3] %vm2976, %v5198
  %v5202 = vld [vmem:[%s3633] sm:$0xff]
  %v5203 = vld [vmem:[%s3633 + $0x8] sm:$0xff]
  %v5204 = vlaneseq
  %v5205 = vshrl.u32 %v5204, 7
  %v5206 = vsub.s32 1, %v5205
  %v5207 = vrot.slane %v2398, %v5206
  %v5208 = vlaneseq
  %v5209 = vshrl.u32 %v5208, 7
  %v5210 = vsub.s32 1, %v5209
  %v5211 = vrot.slane %v2399, %v5210
  %v5212 = vsub.f32 %v5207, %v173
  %v5213 = vsub.f32 %v5211, %v173
  %v5214 = vsub.f32 %v5207, %v174
  %v5215 = vsub.f32 %v5211, %v174
  %v5216 = vand.u32 2147483647, %v5212
  %v5217 = vand.u32 2147483647, %v5213
  %v5218 = vand.u32 2147483647, %v5214
  %v5219 = vand.u32 2147483647, %v5215
  %v5220 = vsub.f32 1.0, %v5216
  %v5221 = vsub.f32 1.0, %v5217
  %v5222 = vsub.f32 1.0, %v5218
  %v5223 = vsub.f32 1.0, %v5219
  %v5224 = vmax.f32 %v5220, 0.0
  %v5225 = vmax.f32 %v5221, 0.0
  %v5226 = vmax.f32 %v5222, 0.0
  %v5227 = vmax.f32 %v5223, 0.0
  %v5228 = vlaneseq
  %v5229 = vshrl.u32 %v5228, 7
  %v5230 = vsub.s32 1, %v5229
  %v5231 = vrot.slane %v2462, %v5230
  %v5232 = vlaneseq
  %v5233 = vshrl.u32 %v5232, 7
  %v5234 = vsub.s32 1, %v5233
  %v5235 = vrot.slane %v2463, %v5234
  %v5236 = vsub.f32 %v5231, %v173
  %v5237 = vsub.f32 %v5235, %v173
  %v5238 = vsub.f32 %v5231, %v174
  %v5239 = vsub.f32 %v5235, %v174
  %v5240 = vand.u32 2147483647, %v5236
  %v5241 = vand.u32 2147483647, %v5237
  %v5242 = vand.u32 2147483647, %v5238
  %v5243 = vand.u32 2147483647, %v5239
  %v5244 = vsub.f32 1.0, %v5240
  %v5245 = vsub.f32 1.0, %v5241
  %v5246 = vsub.f32 1.0, %v5242
  %v5247 = vsub.f32 1.0, %v5243
  %v5248 = vmax.f32 %v5244, 0.0
  %v5249 = vmax.f32 %v5245, 0.0
  %v5250 = vmax.f32 %v5246, 0.0
  %v5251 = vmax.f32 %v5247, 0.0
  %v5253 = vsel %vm2853, %v5202, 0
  %v5256 = vsel %vm2853, %v5203, 0
  %5258 = vmatprep.subr.mxu0 0.0
  %5259 = vmatpush1.msra.mxu0 0.0
  %5260 = vmatprep.subr.mxu0 0.0
  %5261 = vmatpush1.msra.mxu0 0.0
  %5262 = vmatprep.subr.mxu0 0.0
  %5263 = vmatpush1.msra.mxu0 0.0
  %5264 = vmatprep.subr.mxu0 0.0
  %5265 = vmatpush1.msra.mxu0 0.0
  %5266 = vmatprep.subr.mxu0 0.0
  %5267 = vmatpush1.msra.mxu0 0.0
  %5268 = vmatprep.subr.mxu0 0.0
  %5269 = vmatpush1.msra.mxu0 0.0
  %5270 = vmatprep.subr.mxu0 0.0
  %5271 = vmatpush1.msra.mxu0 0.0
  %5272 = vmatprep.subr.mxu0 0.0
  %5273 = vmatpush1.msra.mxu0 0.0
  %5274 = vmatprep.subr.mxu0 0.0
  %5275 = vmatpush1.msra.mxu0 0.0
  %5276 = vmatprep.subr.mxu0 0.0
  %5277 = vmatpush1.msra.mxu0 0.0
  %5278 = vmatprep.subr.mxu0 0.0
  %5279 = vmatpush1.msra.mxu0 0.0
  %5280 = vmatprep.subr.mxu0 0.0
  %5281 = vmatpush1.msra.mxu0 0.0
  %5282 = vmatprep.subr.mxu0 0.0
  %5283 = vmatpush1.msra.mxu0 0.0
  %5284 = vmatprep.subr.mxu0 0.0
  %5285 = vmatpush1.msra.mxu0 0.0
  %5286 = vmatprep.subr.mxu0 %v5227
  %5287 = vmatpush1.msra.mxu0 %v5226
  %5288 = vmatprep.subr.mxu0 %v5225
  %5289 = vmatpush1.msra.mxu0 %v5224
  %5290 = vmatprep.subr.mxu0 0.0
  %5291 = vmatpush2.msra.mxu0 0.0
  %5292 = vmatprep.subr.mxu0 0.0
  %5293 = vmatpush2.msra.mxu0 0.0
  %5294 = vmatprep.subr.mxu0 0.0
  %5295 = vmatpush2.msra.mxu0 0.0
  %5296 = vmatprep.subr.mxu0 0.0
  %5297 = vmatpush2.msra.mxu0 0.0
  %5298 = vmatprep.subr.mxu0 0.0
  %5299 = vmatpush2.msra.mxu0 0.0
  %5300 = vmatprep.subr.mxu0 0.0
  %5301 = vmatpush2.msra.mxu0 0.0
  %5302 = vmatprep.subr.mxu0 0.0
  %5303 = vmatpush2.msra.mxu0 0.0
  %5304 = vmatprep.subr.mxu0 0.0
  %5305 = vmatpush2.msra.mxu0 0.0
  %5306 = vmatprep.subr.mxu0 0.0
  %5307 = vmatpush2.msra.mxu0 0.0
  %5308 = vmatprep.subr.mxu0 0.0
  %5309 = vmatpush2.msra.mxu0 0.0
  %5310 = vmatprep.subr.mxu0 0.0
  %5311 = vmatpush2.msra.mxu0 0.0
  %5312 = vmatprep.subr.mxu0 0.0
  %5313 = vmatpush2.msra.mxu0 0.0
  %5314 = vmatprep.subr.mxu0 0.0
  %5315 = vmatpush2.msra.mxu0 0.0
  %5316 = vmatprep.subr.mxu0 0.0
  %5317 = vmatpush2.msra.mxu0 0.0
  %5318 = vmatprep.subr.mxu0 0.0
  %5319 = vmatpush2.msra.mxu0 0.0
  %5320 = vmatprep.subr.mxu0 0.0
  %5321 = vmatpush2.msra.mxu0 0.0
  %5322 = vmatprep.mubr.f32.mxu0 0.0
  %5323 = vmatmul.mubr.f32.gmra.mxu0 %v5253
  %v5324 = vpop.f32.mrf.mxu0
  %v5325 = vadd.f32 0.0, %v5324
  %v5326 = vpop.f32.mrf.mxu0
  %v5327 = vadd.f32 0.0, %v5326
  %5328 = vmatprep.mubr.f32.mxu0 0.0
  %5329 = vmatmul.mubr.f32.gmra.mxu0 %v5256
  %v5330 = vpop.f32.mrf.mxu0
  %v5331 = vadd.f32 0.0, %v5330
  %v5332 = vpop.f32.mrf.mxu0
  %v5333 = vadd.f32 0.0, %v5332
  %5334 = vdwg.mxu0
  %v5335 = vmul.f32 %v5248, %v5325
  %v5336 = vmul.f32 %v5249, %v5327
  %v5337 = vmul.f32 %v5250, %v5331
  %v5338 = vmul.f32 %v5251, %v5333
  %v5339 = vadd.f32 %v5335, %v5337
  %v5340 = vrot.slane %v5339, 4
  %v5341 = vadd.f32 %v5339, %v5340
  %v5342 = vrot.slane %v5341, 2
  %v5343 = vadd.f32 %v5341, %v5342
  %v5344 = vrot.slane %v5343, 1
  %v5345 = vadd.f32 %v5343, %v5344
  %v5346 = vadd.f32 %v5336, %v5338
  %v5347 = vrot.slane %v5346, 4
  %v5348 = vadd.f32 %v5346, %v5347
  %v5349 = vrot.slane %v5348, 2
  %v5350 = vadd.f32 %v5348, %v5349
  %v5351 = vrot.slane %v5350, 1
  %v5352 = vadd.f32 %v5350, %v5351
  %v5353 = vmul.f32 %v5345, %v5174
  %v5354 = vmul.f32 %v5352, %v5181
  %v5355 = vadd.f32 %v5026, %v5353
  %v5356 = vadd.f32 %v5027, %v5354
  %v5357 = vadd.f32 %v5028, %v5174
  %v5358 = vadd.f32 %v5029, %v5181
  %s5359 = scalar_lea.vmem %s7, 112
  %v5360 = vld [vmem:[%s5359] sm:$0xff]
  %v5361 = vld [vmem:[%s5359 + $0x8] sm:$0xff]
  %v5362 = vlaneseq
  %v5363 = vshrl.u32 %v5362, 7
  %v5364 = vsub.s32 1, %v5363
  %v5365 = vrot.slane %v2504, %v5364
  %v5366 = vlaneseq
  %v5367 = vshrl.u32 %v5366, 7
  %v5368 = vsub.s32 1, %v5367
  %v5369 = vrot.slane %v2505, %v5368
  %v5370 = vsub.f32 %v5365, %v173
  %v5371 = vsub.f32 %v5369, %v173
  %v5372 = vsub.f32 %v5365, %v174
  %v5373 = vsub.f32 %v5369, %v174
  %v5374 = vand.u32 2147483647, %v5370
  %v5375 = vand.u32 2147483647, %v5371
  %v5376 = vand.u32 2147483647, %v5372
  %v5377 = vand.u32 2147483647, %v5373
  %v5378 = vsub.f32 1.0, %v5374
  %v5379 = vsub.f32 1.0, %v5375
  %v5380 = vsub.f32 1.0, %v5376
  %v5381 = vsub.f32 1.0, %v5377
  %v5382 = vmax.f32 %v5378, 0.0
  %v5383 = vmax.f32 %v5379, 0.0
  %v5384 = vmax.f32 %v5380, 0.0
  %v5385 = vmax.f32 %v5381, 0.0
  %v5386 = vlaneseq
  %v5387 = vshrl.u32 %v5386, 7
  %v5388 = vsub.s32 1, %v5387
  %v5389 = vrot.slane %v2544, %v5388
  %v5390 = vlaneseq
  %v5391 = vshrl.u32 %v5390, 7
  %v5392 = vsub.s32 1, %v5391
  %v5393 = vrot.slane %v2545, %v5392
  %v5394 = vsub.f32 %v5389, %v173
  %v5395 = vsub.f32 %v5393, %v173
  %v5396 = vsub.f32 %v5389, %v174
  %v5397 = vsub.f32 %v5393, %v174
  %v5398 = vand.u32 2147483647, %v5394
  %v5399 = vand.u32 2147483647, %v5395
  %v5400 = vand.u32 2147483647, %v5396
  %v5401 = vand.u32 2147483647, %v5397
  %v5402 = vsub.f32 1.0, %v5398
  %v5403 = vsub.f32 1.0, %v5399
  %v5404 = vsub.f32 1.0, %v5400
  %v5405 = vsub.f32 1.0, %v5401
  %v5406 = vmax.f32 %v5402, 0.0
  %v5407 = vmax.f32 %v5403, 0.0
  %v5408 = vmax.f32 %v5404, 0.0
  %v5409 = vmax.f32 %v5405, 0.0
  %v5411 = vsel %vm2853, %v5360, 0
  %v5414 = vsel %vm2853, %v5361, 0
  %5416 = vmatprep.subr.mxu0 0.0
  %5417 = vmatpush1.msra.mxu0 0.0
  %5418 = vmatprep.subr.mxu0 0.0
  %5419 = vmatpush1.msra.mxu0 0.0
  %5420 = vmatprep.subr.mxu0 0.0
  %5421 = vmatpush1.msra.mxu0 0.0
  %5422 = vmatprep.subr.mxu0 0.0
  %5423 = vmatpush1.msra.mxu0 0.0
  %5424 = vmatprep.subr.mxu0 0.0
  %5425 = vmatpush1.msra.mxu0 0.0
  %5426 = vmatprep.subr.mxu0 0.0
  %5427 = vmatpush1.msra.mxu0 0.0
  %5428 = vmatprep.subr.mxu0 0.0
  %5429 = vmatpush1.msra.mxu0 0.0
  %5430 = vmatprep.subr.mxu0 0.0
  %5431 = vmatpush1.msra.mxu0 0.0
  %5432 = vmatprep.subr.mxu0 0.0
  %5433 = vmatpush1.msra.mxu0 0.0
  %5434 = vmatprep.subr.mxu0 0.0
  %5435 = vmatpush1.msra.mxu0 0.0
  %5436 = vmatprep.subr.mxu0 0.0
  %5437 = vmatpush1.msra.mxu0 0.0
  %5438 = vmatprep.subr.mxu0 0.0
  %5439 = vmatpush1.msra.mxu0 0.0
  %5440 = vmatprep.subr.mxu0 0.0
  %5441 = vmatpush1.msra.mxu0 0.0
  %5442 = vmatprep.subr.mxu0 0.0
  %5443 = vmatpush1.msra.mxu0 0.0
  %5444 = vmatprep.subr.mxu0 %v5385
  %5445 = vmatpush1.msra.mxu0 %v5384
  %5446 = vmatprep.subr.mxu0 %v5383
  %5447 = vmatpush1.msra.mxu0 %v5382
  %5448 = vmatprep.subr.mxu0 0.0
  %5449 = vmatpush2.msra.mxu0 0.0
  %5450 = vmatprep.subr.mxu0 0.0
  %5451 = vmatpush2.msra.mxu0 0.0
  %5452 = vmatprep.subr.mxu0 0.0
  %5453 = vmatpush2.msra.mxu0 0.0
  %5454 = vmatprep.subr.mxu0 0.0
  %5455 = vmatpush2.msra.mxu0 0.0
  %5456 = vmatprep.subr.mxu0 0.0
  %5457 = vmatpush2.msra.mxu0 0.0
  %5458 = vmatprep.subr.mxu0 0.0
  %5459 = vmatpush2.msra.mxu0 0.0
  %5460 = vmatprep.subr.mxu0 0.0
  %5461 = vmatpush2.msra.mxu0 0.0
  %5462 = vmatprep.subr.mxu0 0.0
  %5463 = vmatpush2.msra.mxu0 0.0
  %5464 = vmatprep.subr.mxu0 0.0
  %5465 = vmatpush2.msra.mxu0 0.0
  %5466 = vmatprep.subr.mxu0 0.0
  %5467 = vmatpush2.msra.mxu0 0.0
  %5468 = vmatprep.subr.mxu0 0.0
  %5469 = vmatpush2.msra.mxu0 0.0
  %5470 = vmatprep.subr.mxu0 0.0
  %5471 = vmatpush2.msra.mxu0 0.0
  %5472 = vmatprep.subr.mxu0 0.0
  %5473 = vmatpush2.msra.mxu0 0.0
  %5474 = vmatprep.subr.mxu0 0.0
  %5475 = vmatpush2.msra.mxu0 0.0
  %5476 = vmatprep.subr.mxu0 0.0
  %5477 = vmatpush2.msra.mxu0 0.0
  %5478 = vmatprep.subr.mxu0 0.0
  %5479 = vmatpush2.msra.mxu0 0.0
  %5480 = vmatprep.mubr.f32.mxu0 0.0
  %5481 = vmatmul.mubr.f32.gmra.mxu0 %v5411
  %v5482 = vpop.f32.mrf.mxu0
  %v5483 = vadd.f32 0.0, %v5482
  %v5484 = vpop.f32.mrf.mxu0
  %v5485 = vadd.f32 0.0, %v5484
  %5486 = vmatprep.mubr.f32.mxu0 0.0
  %5487 = vmatmul.mubr.f32.gmra.mxu0 %v5414
  %v5488 = vpop.f32.mrf.mxu0
  %v5489 = vadd.f32 0.0, %v5488
  %v5490 = vpop.f32.mrf.mxu0
  %v5491 = vadd.f32 0.0, %v5490
  %5492 = vdwg.mxu0
  %v5493 = vmul.f32 %v5406, %v5483
  %v5494 = vmul.f32 %v5407, %v5485
  %v5495 = vmul.f32 %v5408, %v5489
  %v5496 = vmul.f32 %v5409, %v5491
  %v5497 = vadd.f32 %v5493, %v5495
  %v5498 = vrot.slane %v5497, 4
  %v5499 = vadd.f32 %v5497, %v5498
  %v5500 = vrot.slane %v5499, 2
  %v5501 = vadd.f32 %v5499, %v5500
  %v5502 = vrot.slane %v5501, 1
  %v5503 = vadd.f32 %v5501, %v5502
  %v5504 = vadd.f32 %v5494, %v5496
  %v5505 = vrot.slane %v5504, 4
  %v5506 = vadd.f32 %v5504, %v5505
  %v5507 = vrot.slane %v5506, 2
  %v5508 = vadd.f32 %v5506, %v5507
  %v5509 = vrot.slane %v5508, 1
  %v5510 = vadd.f32 %v5508, %v5509
  %v5513 = vcombine.low %v5503, %v5510
  %v5515 = vunpack.c.l.s4 1966171168
  %v5516 = vunpack.c.0.s8 %v5515
  %v5517 = vlaneseq
  %v5518 = vshrl.u32 %v5517, 7
  %v5519 = vsub.s32 %v5516, %v5518
  %v5520 = vrot.slane %v5513, %v5519
  %v5522 = vunpack.c.l.s4 1966171168
  %v5523 = vunpack.c.0.s8 %v5522
  %v5524 = vlaneseq
  %v5525 = vshrl.u32 %v5524, 7
  %v5526 = vsub.s32 %v5523, %v5525
  %v5527 = vrot.slane %v5520, %v5526
  %s5529 = scalar_lea.vmem %s10, 13
  %5530 = vst.msk [vmem:[%s5529] ss:$2 sm:$0x3] %vm2976, %v5527
  %v5531 = vld [vmem:[%s3963] sm:$0xff]
  %v5532 = vld [vmem:[%s3963 + $0x8] sm:$0xff]
  %v5533 = vlaneseq
  %v5534 = vshrl.u32 %v5533, 7
  %v5535 = vsub.s32 1, %v5534
  %v5536 = vrot.slane %v2400, %v5535
  %v5537 = vlaneseq
  %v5538 = vshrl.u32 %v5537, 7
  %v5539 = vsub.s32 1, %v5538
  %v5540 = vrot.slane %v2401, %v5539
  %v5541 = vsub.f32 %v5536, %v173
  %v5542 = vsub.f32 %v5540, %v173
  %v5543 = vsub.f32 %v5536, %v174
  %v5544 = vsub.f32 %v5540, %v174
  %v5545 = vand.u32 2147483647, %v5541
  %v5546 = vand.u32 2147483647, %v5542
  %v5547 = vand.u32 2147483647, %v5543
  %v5548 = vand.u32 2147483647, %v5544
  %v5549 = vsub.f32 1.0, %v5545
  %v5550 = vsub.f32 1.0, %v5546
  %v5551 = vsub.f32 1.0, %v5547
  %v5552 = vsub.f32 1.0, %v5548
  %v5553 = vmax.f32 %v5549, 0.0
  %v5554 = vmax.f32 %v5550, 0.0
  %v5555 = vmax.f32 %v5551, 0.0
  %v5556 = vmax.f32 %v5552, 0.0
  %v5557 = vlaneseq
  %v5558 = vshrl.u32 %v5557, 7
  %v5559 = vsub.s32 1, %v5558
  %v5560 = vrot.slane %v2464, %v5559
  %v5561 = vlaneseq
  %v5562 = vshrl.u32 %v5561, 7
  %v5563 = vsub.s32 1, %v5562
  %v5564 = vrot.slane %v2465, %v5563
  %v5565 = vsub.f32 %v5560, %v173
  %v5566 = vsub.f32 %v5564, %v173
  %v5567 = vsub.f32 %v5560, %v174
  %v5568 = vsub.f32 %v5564, %v174
  %v5569 = vand.u32 2147483647, %v5565
  %v5570 = vand.u32 2147483647, %v5566
  %v5571 = vand.u32 2147483647, %v5567
  %v5572 = vand.u32 2147483647, %v5568
  %v5573 = vsub.f32 1.0, %v5569
  %v5574 = vsub.f32 1.0, %v5570
  %v5575 = vsub.f32 1.0, %v5571
  %v5576 = vsub.f32 1.0, %v5572
  %v5577 = vmax.f32 %v5573, 0.0
  %v5578 = vmax.f32 %v5574, 0.0
  %v5579 = vmax.f32 %v5575, 0.0
  %v5580 = vmax.f32 %v5576, 0.0
  %v5582 = vsel %vm2853, %v5531, 0
  %v5585 = vsel %vm2853, %v5532, 0
  %5587 = vmatprep.subr.mxu0 0.0
  %5588 = vmatpush1.msra.mxu0 0.0
  %5589 = vmatprep.subr.mxu0 0.0
  %5590 = vmatpush1.msra.mxu0 0.0
  %5591 = vmatprep.subr.mxu0 0.0
  %5592 = vmatpush1.msra.mxu0 0.0
  %5593 = vmatprep.subr.mxu0 0.0
  %5594 = vmatpush1.msra.mxu0 0.0
  %5595 = vmatprep.subr.mxu0 0.0
  %5596 = vmatpush1.msra.mxu0 0.0
  %5597 = vmatprep.subr.mxu0 0.0
  %5598 = vmatpush1.msra.mxu0 0.0
  %5599 = vmatprep.subr.mxu0 0.0
  %5600 = vmatpush1.msra.mxu0 0.0
  %5601 = vmatprep.subr.mxu0 0.0
  %5602 = vmatpush1.msra.mxu0 0.0
  %5603 = vmatprep.subr.mxu0 0.0
  %5604 = vmatpush1.msra.mxu0 0.0
  %5605 = vmatprep.subr.mxu0 0.0
  %5606 = vmatpush1.msra.mxu0 0.0
  %5607 = vmatprep.subr.mxu0 0.0
  %5608 = vmatpush1.msra.mxu0 0.0
  %5609 = vmatprep.subr.mxu0 0.0
  %5610 = vmatpush1.msra.mxu0 0.0
  %5611 = vmatprep.subr.mxu0 0.0
  %5612 = vmatpush1.msra.mxu0 0.0
  %5613 = vmatprep.subr.mxu0 0.0
  %5614 = vmatpush1.msra.mxu0 0.0
  %5615 = vmatprep.subr.mxu0 %v5556
  %5616 = vmatpush1.msra.mxu0 %v5555
  %5617 = vmatprep.subr.mxu0 %v5554
  %5618 = vmatpush1.msra.mxu0 %v5553
  %5619 = vmatprep.subr.mxu0 0.0
  %5620 = vmatpush2.msra.mxu0 0.0
  %5621 = vmatprep.subr.mxu0 0.0
  %5622 = vmatpush2.msra.mxu0 0.0
  %5623 = vmatprep.subr.mxu0 0.0
  %5624 = vmatpush2.msra.mxu0 0.0
  %5625 = vmatprep.subr.mxu0 0.0
  %5626 = vmatpush2.msra.mxu0 0.0
  %5627 = vmatprep.subr.mxu0 0.0
  %5628 = vmatpush2.msra.mxu0 0.0
  %5629 = vmatprep.subr.mxu0 0.0
  %5630 = vmatpush2.msra.mxu0 0.0
  %5631 = vmatprep.subr.mxu0 0.0
  %5632 = vmatpush2.msra.mxu0 0.0
  %5633 = vmatprep.subr.mxu0 0.0
  %5634 = vmatpush2.msra.mxu0 0.0
  %5635 = vmatprep.subr.mxu0 0.0
  %5636 = vmatpush2.msra.mxu0 0.0
  %5637 = vmatprep.subr.mxu0 0.0
  %5638 = vmatpush2.msra.mxu0 0.0
  %5639 = vmatprep.subr.mxu0 0.0
  %5640 = vmatpush2.msra.mxu0 0.0
  %5641 = vmatprep.subr.mxu0 0.0
  %5642 = vmatpush2.msra.mxu0 0.0
  %5643 = vmatprep.subr.mxu0 0.0
  %5644 = vmatpush2.msra.mxu0 0.0
  %5645 = vmatprep.subr.mxu0 0.0
  %5646 = vmatpush2.msra.mxu0 0.0
  %5647 = vmatprep.subr.mxu0 0.0
  %5648 = vmatpush2.msra.mxu0 0.0
  %5649 = vmatprep.subr.mxu0 0.0
  %5650 = vmatpush2.msra.mxu0 0.0
  %5651 = vmatprep.mubr.f32.mxu0 0.0
  %5652 = vmatmul.mubr.f32.gmra.mxu0 %v5582
  %v5653 = vpop.f32.mrf.mxu0
  %v5654 = vadd.f32 0.0, %v5653
  %v5655 = vpop.f32.mrf.mxu0
  %v5656 = vadd.f32 0.0, %v5655
  %5657 = vmatprep.mubr.f32.mxu0 0.0
  %5658 = vmatmul.mubr.f32.gmra.mxu0 %v5585
  %v5659 = vpop.f32.mrf.mxu0
  %v5660 = vadd.f32 0.0, %v5659
  %v5661 = vpop.f32.mrf.mxu0
  %v5662 = vadd.f32 0.0, %v5661
  %5663 = vdwg.mxu0
  %v5664 = vmul.f32 %v5577, %v5654
  %v5665 = vmul.f32 %v5578, %v5656
  %v5666 = vmul.f32 %v5579, %v5660
  %v5667 = vmul.f32 %v5580, %v5662
  %v5668 = vadd.f32 %v5664, %v5666
  %v5669 = vrot.slane %v5668, 4
  %v5670 = vadd.f32 %v5668, %v5669
  %v5671 = vrot.slane %v5670, 2
  %v5672 = vadd.f32 %v5670, %v5671
  %v5673 = vrot.slane %v5672, 1
  %v5674 = vadd.f32 %v5672, %v5673
  %v5675 = vadd.f32 %v5665, %v5667
  %v5676 = vrot.slane %v5675, 4
  %v5677 = vadd.f32 %v5675, %v5676
  %v5678 = vrot.slane %v5677, 2
  %v5679 = vadd.f32 %v5677, %v5678
  %v5680 = vrot.slane %v5679, 1
  %v5681 = vadd.f32 %v5679, %v5680
  %v5682 = vmul.f32 %v5674, %v5503
  %v5683 = vmul.f32 %v5681, %v5510
  %v5684 = vadd.f32 %v5355, %v5682
  %v5685 = vadd.f32 %v5356, %v5683
  %v5686 = vadd.f32 %v5357, %v5503
  %v5687 = vadd.f32 %v5358, %v5510
  %vm5688 = vcmp.eq.f32.partialorder %v5686, 0.0
  %vm5689 = vcmp.eq.f32.partialorder %v5687, 0.0
  %v5690 = vsel %vm5688, 1.0, %v5686
  %v5691 = vsel %vm5689, 1.0, %v5687
  %v5692 = vrcp.pop %v5690
  %v5693 = vmul.f32 %v5684, %v5692
  %v5694 = vrcp.pop %v5691
  %v5695 = vmul.f32 %v5685, %v5694
  %v5696 = vmul.f32 %v183, %v5693
  %v5697 = vmul.f32 %v184, %v5695
  %v5698 = vmul.f32 %v185, %v5693
  %v5699 = vmul.f32 %v186, %v5695
  %5700 = vmatprep.subr.mxu0 0.0
  %5701 = vmatpush1.msra.mxu0 %v328
  %5702 = vmatprep.subr.mxu0 0.0
  %5703 = vmatpush1.msra.mxu0 %v327
  %5704 = vmatprep.subr.mxu0 0.0
  %5705 = vmatpush1.msra.mxu0 %v326
  %5706 = vmatprep.subr.mxu0 0.0
  %5707 = vmatpush1.msra.mxu0 %v325
  %5708 = vmatprep.subr.mxu0 0.0
  %5709 = vmatpush1.msra.mxu0 %v324
  %5710 = vmatprep.subr.mxu0 0.0
  %5711 = vmatpush1.msra.mxu0 %v323
  %5712 = vmatprep.subr.mxu0 0.0
  %5713 = vmatpush1.msra.mxu0 %v322
  %5714 = vmatprep.subr.mxu0 0.0
  %5715 = vmatpush1.msra.mxu0 %v321
  %5716 = vmatprep.subr.mxu0 0.0
  %5717 = vmatpush1.msra.mxu0 %v320
  %5718 = vmatprep.subr.mxu0 0.0
  %5719 = vmatpush1.msra.mxu0 %v319
  %5720 = vmatprep.subr.mxu0 0.0
  %5721 = vmatpush1.msra.mxu0 %v318
  %5722 = vmatprep.subr.mxu0 0.0
  %5723 = vmatpush1.msra.mxu0 %v317
  %5724 = vmatprep.subr.mxu0 0.0
  %5725 = vmatpush1.msra.mxu0 %v316
  %5726 = vmatprep.subr.mxu0 0.0
  %5727 = vmatpush1.msra.mxu0 %v315
  %5728 = vmatprep.subr.mxu0 0.0
  %5729 = vmatpush1.msra.mxu0 %v314
  %5730 = vmatprep.subr.mxu0 0.0
  %5731 = vmatpush1.msra.mxu0 %v313
  %5732 = vmatprep.subr.mxu0 0.0
  %5733 = vmatpush2.msra.mxu0 %v344
  %5734 = vmatprep.subr.mxu0 0.0
  %5735 = vmatpush2.msra.mxu0 %v343
  %5736 = vmatprep.subr.mxu0 0.0
  %5737 = vmatpush2.msra.mxu0 %v342
  %5738 = vmatprep.subr.mxu0 0.0
  %5739 = vmatpush2.msra.mxu0 %v341
  %5740 = vmatprep.subr.mxu0 0.0
  %5741 = vmatpush2.msra.mxu0 %v340
  %5742 = vmatprep.subr.mxu0 0.0
  %5743 = vmatpush2.msra.mxu0 %v339
  %5744 = vmatprep.subr.mxu0 0.0
  %5745 = vmatpush2.msra.mxu0 %v338
  %5746 = vmatprep.subr.mxu0 0.0
  %5747 = vmatpush2.msra.mxu0 %v337
  %5748 = vmatprep.subr.mxu0 0.0
  %5749 = vmatpush2.msra.mxu0 %v336
  %5750 = vmatprep.subr.mxu0 0.0
  %5751 = vmatpush2.msra.mxu0 %v335
  %5752 = vmatprep.subr.mxu0 0.0
  %5753 = vmatpush2.msra.mxu0 %v334
  %5754 = vmatprep.subr.mxu0 0.0
  %5755 = vmatpush2.msra.mxu0 %v333
  %5756 = vmatprep.subr.mxu0 0.0
  %5757 = vmatpush2.msra.mxu0 %v332
  %5758 = vmatprep.subr.mxu0 0.0
  %5759 = vmatpush2.msra.mxu0 %v331
  %5760 = vmatprep.subr.mxu0 0.0
  %5761 = vmatpush2.msra.mxu0 %v330
  %5762 = vmatprep.subr.mxu0 0.0
  %5763 = vmatpush2.msra.mxu0 %v329
  %5764 = vmatprep.mubr.f32.mxu0 %v5697
  %5765 = vmatmul.mubr.f32.gmra.mxu0 %v5696
  %v5766 = vpop.f32.mrf.mxu0
  %v5767 = vadd.f32 0.0, %v5766
  %v5768 = vpop.f32.mrf.mxu0
  %5769 = vmatprep.mubr.f32.mxu0 %v5699
  %5770 = vmatmul.mubr.f32.gmra.mxu0 %v5698
  %v5771 = vpop.f32.mrf.mxu0
  %v5772 = vadd.f32 0.0, %v5771
  %v5773 = vpop.f32.mrf.mxu0
  %5774 = vdwg.mxu0
  %v5775 = vlaneseq
  %v5776 = vshrl.u32 %v5775, 7
  %v5777 = vsub.s32 1, %v5776
  %v5778 = vrot.slane %v2781, %v5777
  %v5779 = vlaneseq
  %v5780 = vshrl.u32 %v5779, 7
  %v5781 = vsub.s32 1, %v5780
  %v5782 = vrot.slane %v2782, %v5781
  %v5783 = vsub.f32 %v5778, %v173
  %v5784 = vsub.f32 %v5782, %v173
  %v5785 = vsub.f32 %v5778, %v174
  %v5786 = vsub.f32 %v5782, %v174
  %v5787 = vand.u32 2147483647, %v5783
  %v5788 = vand.u32 2147483647, %v5784
  %v5789 = vand.u32 2147483647, %v5785
  %v5790 = vand.u32 2147483647, %v5786
  %v5791 = vsub.f32 1.0, %v5787
  %v5792 = vsub.f32 1.0, %v5788
  %v5793 = vsub.f32 1.0, %v5789
  %v5794 = vsub.f32 1.0, %v5790
  %v5795 = vmax.f32 %v5791, 0.0
  %v5796 = vmax.f32 %v5792, 0.0
  %v5797 = vmax.f32 %v5793, 0.0
  %v5798 = vmax.f32 %v5794, 0.0
  %v5799 = vlaneseq
  %v5800 = vshrl.u32 %v5799, 7
  %v5801 = vsub.s32 1, %v5800
  %v5802 = vrot.slane %v2801, %v5801
  %v5803 = vlaneseq
  %v5804 = vshrl.u32 %v5803, 7
  %v5805 = vsub.s32 1, %v5804
  %v5806 = vrot.slane %v2802, %v5805
  %v5807 = vsub.f32 %v5802, %v173
  %v5808 = vsub.f32 %v5806, %v173
  %v5809 = vsub.f32 %v5802, %v174
  %v5810 = vsub.f32 %v5806, %v174
  %v5811 = vand.u32 2147483647, %v5807
  %v5812 = vand.u32 2147483647, %v5808
  %v5813 = vand.u32 2147483647, %v5809
  %v5814 = vand.u32 2147483647, %v5810
  %v5815 = vsub.f32 1.0, %v5811
  %v5816 = vsub.f32 1.0, %v5812
  %v5817 = vsub.f32 1.0, %v5813
  %v5818 = vsub.f32 1.0, %v5814
  %v5819 = vmax.f32 %v5815, 0.0
  %v5820 = vmax.f32 %v5816, 0.0
  %v5821 = vmax.f32 %v5817, 0.0
  %v5822 = vmax.f32 %v5818, 0.0
  %v5824 = vsel %vm2853, %v5767, 0
  %v5827 = vsel %vm2853, %v5772, 0
  %5829 = vmatprep.subr.mxu0 0.0
  %5830 = vmatpush1.msra.mxu0 0.0
  %5831 = vmatprep.subr.mxu0 0.0
  %5832 = vmatpush1.msra.mxu0 0.0
  %5833 = vmatprep.subr.mxu0 0.0
  %5834 = vmatpush1.msra.mxu0 0.0
  %5835 = vmatprep.subr.mxu0 0.0
  %5836 = vmatpush1.msra.mxu0 0.0
  %5837 = vmatprep.subr.mxu0 0.0
  %5838 = vmatpush1.msra.mxu0 0.0
  %5839 = vmatprep.subr.mxu0 0.0
  %5840 = vmatpush1.msra.mxu0 0.0
  %5841 = vmatprep.subr.mxu0 0.0
  %5842 = vmatpush1.msra.mxu0 0.0
  %5843 = vmatprep.subr.mxu0 0.0
  %5844 = vmatpush1.msra.mxu0 0.0
  %5845 = vmatprep.subr.mxu0 0.0
  %5846 = vmatpush1.msra.mxu0 0.0
  %5847 = vmatprep.subr.mxu0 0.0
  %5848 = vmatpush1.msra.mxu0 0.0
  %5849 = vmatprep.subr.mxu0 0.0
  %5850 = vmatpush1.msra.mxu0 0.0
  %5851 = vmatprep.subr.mxu0 0.0
  %5852 = vmatpush1.msra.mxu0 0.0
  %5853 = vmatprep.subr.mxu0 0.0
  %5854 = vmatpush1.msra.mxu0 0.0
  %5855 = vmatprep.subr.mxu0 0.0
  %5856 = vmatpush1.msra.mxu0 0.0
  %5857 = vmatprep.subr.mxu0 %v5798
  %5858 = vmatpush1.msra.mxu0 %v5797
  %5859 = vmatprep.subr.mxu0 %v5796
  %5860 = vmatpush1.msra.mxu0 %v5795
  %5861 = vmatprep.subr.mxu0 0.0
  %5862 = vmatpush2.msra.mxu0 0.0
  %5863 = vmatprep.subr.mxu0 0.0
  %5864 = vmatpush2.msra.mxu0 0.0
  %5865 = vmatprep.subr.mxu0 0.0
  %5866 = vmatpush2.msra.mxu0 0.0
  %5867 = vmatprep.subr.mxu0 0.0
  %5868 = vmatpush2.msra.mxu0 0.0
  %5869 = vmatprep.subr.mxu0 0.0
  %5870 = vmatpush2.msra.mxu0 0.0
  %5871 = vmatprep.subr.mxu0 0.0
  %5872 = vmatpush2.msra.mxu0 0.0
  %5873 = vmatprep.subr.mxu0 0.0
  %5874 = vmatpush2.msra.mxu0 0.0
  %5875 = vmatprep.subr.mxu0 0.0
  %5876 = vmatpush2.msra.mxu0 0.0
  %5877 = vmatprep.subr.mxu0 0.0
  %5878 = vmatpush2.msra.mxu0 0.0
  %5879 = vmatprep.subr.mxu0 0.0
  %5880 = vmatpush2.msra.mxu0 0.0
  %5881 = vmatprep.subr.mxu0 0.0
  %5882 = vmatpush2.msra.mxu0 0.0
  %5883 = vmatprep.subr.mxu0 0.0
  %5884 = vmatpush2.msra.mxu0 0.0
  %5885 = vmatprep.subr.mxu0 0.0
  %5886 = vmatpush2.msra.mxu0 0.0
  %5887 = vmatprep.subr.mxu0 0.0
  %5888 = vmatpush2.msra.mxu0 0.0
  %5889 = vmatprep.subr.mxu0 0.0
  %5890 = vmatpush2.msra.mxu0 0.0
  %5891 = vmatprep.subr.mxu0 0.0
  %5892 = vmatpush2.msra.mxu0 0.0
  %5893 = vmatprep.mubr.f32.mxu0 0.0
  %5894 = vmatmul.mubr.f32.gmra.mxu0 %v5824
  %v5895 = vpop.f32.mrf.mxu0
  %v5896 = vadd.f32 0.0, %v5895
  %v5897 = vpop.f32.mrf.mxu0
  %v5898 = vadd.f32 0.0, %v5897
  %5899 = vmatprep.mubr.f32.mxu0 0.0
  %5900 = vmatmul.mubr.f32.gmra.mxu0 %v5827
  %v5901 = vpop.f32.mrf.mxu0
  %v5902 = vadd.f32 0.0, %v5901
  %v5903 = vpop.f32.mrf.mxu0
  %v5904 = vadd.f32 0.0, %v5903
  %5905 = vdwg.mxu0
  %v5906 = vmul.f32 %v5819, %v5896
  %v5907 = vmul.f32 %v5820, %v5898
  %v5908 = vmul.f32 %v5821, %v5902
  %v5909 = vmul.f32 %v5822, %v5904
  %v5910 = vadd.f32 %v5906, %v5908
  %v5911 = vrot.slane %v5910, 4
  %v5912 = vadd.f32 %v5910, %v5911
  %v5913 = vrot.slane %v5912, 2
  %v5914 = vadd.f32 %v5912, %v5913
  %v5915 = vrot.slane %v5914, 1
  %v5916 = vadd.f32 %v5914, %v5915
  %v5917 = vadd.f32 %v5907, %v5909
  %v5918 = vrot.slane %v5917, 4
  %v5919 = vadd.f32 %v5917, %v5918
  %v5920 = vrot.slane %v5919, 2
  %v5921 = vadd.f32 %v5919, %v5920
  %v5922 = vrot.slane %v5921, 1
  %v5923 = vadd.f32 %v5921, %v5922
  %v5926 = vcombine.low %v5916, %v5923
  %v5928 = vunpack.c.l.s4 1966171168
  %v5929 = vunpack.c.0.s8 %v5928
  %v5930 = vlaneseq
  %v5931 = vshrl.u32 %v5930, 7
  %v5932 = vsub.s32 %v5929, %v5931
  %v5933 = vrot.slane %v5926, %v5932
  %v5935 = vunpack.c.l.s4 1966171168
  %v5936 = vunpack.c.0.s8 %v5935
  %v5937 = vlaneseq
  %v5938 = vshrl.u32 %v5937, 7
  %v5939 = vsub.s32 %v5936, %v5938
  %v5940 = vrot.slane %v5933, %v5939
  %s5942 = scalar_lea.vmem %s9, 1
  %5943 = vst.msk [vmem:[%s5942] ss:$2 sm:$0x3] %vm2976, %v5940
  // Predicated region
  $region34: #{popvae_forward.1} parent=0 // pred_check
    _
  $region35: #{popvae_forward.1} parent=0 // pred_check_branch
    %5945 = sbr.rel (0) target = $region37
  $region36: #{popvae_forward.1} parent=0 // pred_region
    _
  $region37: #{popvae_forward.1} parent=0 // pred_fallthru
    _
  // Predicated region
  $region38: #{popvae_forward.1} parent=0 // pred_check
    _
  $region39: #{popvae_forward.1} parent=0 // pred_check_branch
    %5947 = sbr.rel (0) target = $region41
  $region40: #{popvae_forward.1} parent=0 // pred_region
    _
  $region41: #{popvae_forward.1} parent=0 // pred_fallthru
    _
  // Predicated region
  $region42: #{popvae_forward.1} parent=0 // pred_check
    _
  $region43: #{popvae_forward.1} parent=0 // pred_check_branch
    %5949 = sbr.rel (0) target = $region45
  $region44: #{popvae_forward.1} parent=0 // pred_region
    _
  $region45: #{popvae_forward.1} parent=0 // pred_fallthru
    _
  // Predicated region
  $region46: #{popvae_forward.1} parent=0 // pred_check
    _
  $region47: #{popvae_forward.1} parent=0 // pred_check_branch
    %5951 = sbr.rel (0) target = $region49
  $region48: #{popvae_forward.1} parent=0 // pred_region
    _
  $region49: #{popvae_forward.1} parent=0 // pred_fallthru
    _
  // Predicated region
  $region50: #{popvae_forward.1} parent=0 // pred_check
    _
  $region51: #{popvae_forward.1} parent=0 // pred_check_branch
    %5953 = sbr.rel (0) target = $region53
  $region52: #{popvae_forward.1} parent=0 // pred_region
    _
  $region53: #{popvae_forward.1} parent=0 // pred_fallthru
    _
  // Predicated region
  $region54: #{popvae_forward.1} parent=0 // pred_check
    _
  $region55: #{popvae_forward.1} parent=0 // pred_check_branch
    %5955 = sbr.rel (0) target = $region57
  $region56: #{popvae_forward.1} parent=0 // pred_region
    _
  $region57: #{popvae_forward.1} parent=0 // pred_fallthru
    _

</llo_original>
